<compile_context>
chip_gen: v7x
topology: tpu7x:2x2x1
jax: 0.10.0
libtpu: 0.0.40
codegen_flags: <defaults>
</compile_context>

<pallas_src>
import jax
import jax.numpy as jnp
import numpy as np
from jax.experimental import pallas as pl
from jax.experimental.pallas import tpu as pltpu


_B = 8          # samples per grid step
_LANES = 128    # per-sample lane width of each (pooled) conv activation


# ------------------------------- Pallas kernel --------------------------------

def _net_kernel(x_ref,
                bd1_ref, b1_ref, bd2_ref, b2_ref, bd3_ref, b3_ref,
                sel1_ref, sel2_ref,
                wfc1_ref, bf1_ref, wfc2_ref, bf2_ref, wfc3_ref, bf3_ref,
                o_ref, fc_ref):
    f32 = jnp.float32
    bf16 = jnp.bfloat16
    B = o_ref.shape[0]

    def band3(get_rows, bd_ref, ho):
        # sum of the 3 kernel-row band matmuls; bf16 operands, f32 accumulation
        y = jnp.dot(get_rows(0, ho), bd_ref[0], preferred_element_type=f32)
        y = y + jnp.dot(get_rows(1, ho), bd_ref[1], preferred_element_type=f32)
        y = y + jnp.dot(get_rows(2, ho), bd_ref[2], preferred_element_type=f32)
        return y                                                  # (ho, N)

    def wmax(y):
        # width half of the 2x2 max-pool: parity-0 lanes vs parity-1 lanes (128-aligned)
        return jnp.maximum(y[:, :_LANES], y[:, _LANES:])

    def hpool(yw_list, sel_ref):
        # height half of the pool, batched over all B samples with two 0/1 selection dots
        yw = jnp.concatenate(yw_list, axis=1).astype(bf16)        # (Ho, B*128)
        return jnp.maximum(
            jnp.dot(sel_ref[0], yw, preferred_element_type=f32),
            jnp.dot(sel_ref[1], yw, preferred_element_type=f32))  # (Hp, B*128)

    # ----------------- conv1 (3 -> 6) + 2x2 max-pool -----------------
    yw1 = []
    for b in range(B):
        rows = lambda kh, ho, _b=b: x_ref[_b, kh:kh + ho, :].astype(bf16)
        yw1.append(wmax(band3(rows, bd1_ref, 28)))                # (28, 128)
    p1 = hpool(yw1, sel1_ref)                                     # (14, B*128)

    # ----------------- conv2 (6 -> 12) + 2x2 max-pool -----------------
    b1 = b1_ref[...]
    yw2 = []
    for b in range(B):
        a = jnp.maximum(p1[:, b * _LANES:(b + 1) * _LANES] + b1, 0.0)   # bias+relu of conv1
        rows = lambda kh, ho, _a=a: _a[kh:kh + ho, :].astype(bf16)
        yw2.append(wmax(band3(rows, bd2_ref, 12)))                # (12, 128)
    p2 = hpool(yw2, sel2_ref)                                     # (6, B*128)

    # ----------------- conv3 (12 -> 32), no pool -----------------
    b2 = b2_ref[...]
    b3 = b3_ref[...]
    for b in range(B):
        a = jnp.maximum(p2[:, b * _LANES:(b + 1) * _LANES] + b2, 0.0)   # bias+relu of conv2
        rows = lambda kh, ho, _a=a: _a[kh:kh + ho, :].astype(bf16)
        y3 = band3(rows, bd3_ref, 4)                              # (4, 128), layout (h, w*32+c)
        y3 = jnp.maximum(y3 + b3, 0.0)
        fc_ref[:, b, :] = y3.astype(bf16)                         # stage for the batched FCs

    # ----------------- fc1 / fc2 / fc3, batched over B samples -----------------
    h1 = bf1_ref[...]                                             # (1, 120) broadcasts to (B, 120)
    for h in range(4):
        h1 = h1 + jnp.dot(fc_ref[h], wfc1_ref[h], preferred_element_type=f32)
    h1 = jnp.maximum(h1, 0.0).astype(bf16)                        # (B, 120)
    h2 = jnp.maximum(
        jnp.dot(h1, wfc2_ref[...], preferred_element_type=f32) + bf2_ref[...], 0.0
    ).astype(bf16)                                                # (B, 84)
    o_ref[...] = jnp.dot(h2, wfc3_ref[...], preferred_element_type=f32) + bf3_ref[...]


# ---------------------- one-time parameter preparation -------------------------

def prepare_params(p):
    """Convert PyTorch-layout params into kernel-ready constants (runs once)."""

    def banded(w, w_in, k_pad, n_pad, parity_split):
        # (Cout,Cin,3,3) -> (3, k_pad, n_pad) banded conv matrices.
        # Row index = input_w*Cin + cin; with parity_split, output columns are grouped by
        # output-w parity (parity 0 -> lanes [0,128), parity 1 -> lanes [128,256)) so the
        # width half of the 2x2 max-pool is one aligned lane-split elementwise max.
        w = np.asarray(w, np.float32)
        cout, cin, _, _ = w.shape
        wo = w_in - 2
        bd = np.zeros((3, k_pad, n_pad), np.float32)
        for kh in range(3):
            for kw in range(3):
                wk = w[:, :, kh, kw].T                   # (Cin, Cout)
                for iw in range(wo):
                    v = iw + kw                          # input width coordinate
                    if parity_split:
                        col = (iw % 2) * _LANES + (iw // 2) * cout
                    else:
                        col = iw * cout
                    bd[kh, v * cin:(v + 1) * cin, col:col + cout] = wk
        return jnp.asarray(bd, jnp.bfloat16)

    def row_sel(ho):
        # exact 0/1 selection matrices for even / odd conv-output rows (height pool)
        hp = ho // 2
        s = np.zeros((2, hp, ho), np.float32)
        s[0, np.arange(hp), 2 * np.arange(hp)] = 1.0
        s[1, np.arange(hp), 2 * np.arange(hp) + 1] = 1.0
        return jnp.asarray(s, jnp.bfloat16)

    def lane_bias(b, reps):
        v = np.zeros((1, _LANES), np.float32)
        t = np.tile(np.asarray(b, np.float32), reps)
        v[0, :t.size] = t
        return jnp.asarray(v)

    # fc1 weight (120, 512) rearranged to contract directly against conv3's (h, w*32+c)
    # layout; index math reproduces PyTorch's NCHW x.view(-1, 512) flatten.
    wfc1 = np.asarray(p['fc1_w'], np.float32).reshape(120, 32, 4, 4)
    wfc1 = jnp.asarray(wfc1.transpose(2, 3, 1, 0).reshape(4, 128, 120), jnp.bfloat16)

    return dict(
        bd1=banded(p['conv1_w'], 30, 90, 2 * _LANES, True),    b1=lane_bias(p['conv1_b'], 14),
        bd2=banded(p['conv2_w'], 14, _LANES, 2 * _LANES, True), b2=lane_bias(p['conv2_b'], 6),
        bd3=banded(p['conv3_w'], 6, _LANES, _LANES, False),    b3=lane_bias(p['conv3_b'], 4),
        sel1=row_sel(28), sel2=row_sel(12),
        wfc1=wfc1,
        bf1=jnp.asarray(np.asarray(p['fc1_b'], np.float32)[None, :]),
        wfc2=jnp.asarray(np.asarray(p['fc2_w'], np.float32).T, jnp.bfloat16),
        bf2=jnp.asarray(np.asarray(p['fc2_b'], np.float32)[None, :]),
        wfc3=jnp.asarray(np.asarray(p['fc3_w'], np.float32).T, jnp.bfloat16),
        bf3=jnp.asarray(np.asarray(p['fc3_b'], np.float32)[None, :]),
    )


_CONST_ORDER = ('bd1', 'b1', 'bd2', 'b2', 'bd3', 'b3', 'sel1', 'sel2',
                'wfc1', 'bf1', 'wfc2', 'bf2', 'wfc3', 'bf3')


@jax.jit
def net_forward(x_nchw, kparams):
    n = x_nchw.shape[0]
    # Single input relayout: NCHW -> (N, H, W*Cin) slab layout used by the kernel.
    x = jnp.transpose(x_nchw, (0, 2, 3, 1)).reshape(n, 30, 90)
    B = _B
    npad = ((n + B - 1) // B) * B
    if npad != n:
        x = jnp.pad(x, ((0, npad - n), (0, 0), (0, 0)))
    consts = [kparams[k] for k in _CONST_ORDER]

    def const_spec(a):
        nd = a.ndim
        return pl.BlockSpec(a.shape, lambda i, _nd=nd: (0,) * _nd)

    out = pl.pallas_call(
        _net_kernel,
        grid=(npad // B,),
        in_specs=[pl.BlockSpec((B, 30, 90), lambda i: (i, 0, 0))]
                 + [const_spec(a) for a in consts],
        out_specs=pl.BlockSpec((B, 10), lambda i: (i, 0)),
        out_shape=jax.ShapeDtypeStruct((npad, 10), jnp.float32),
        scratch_shapes=[pltpu.VMEM((4, B, _LANES), jnp.bfloat16)],
        compiler_params=pltpu.CompilerParams(dimension_semantics=("parallel",)),
    )(x, *consts)
    return out[:n]


# --------------------------- pure-JAX reference ------------------------------

def _ref_forward(x_nchw, p):
    hp = jax.lax.Precision.HIGHEST

    def conv(x, w, b):
        y = jax.lax.conv_general_dilated(
            x, w, (1, 1), 'VALID',
            dimension_numbers=('NCHW', 'OIHW', 'NCHW'), precision=hp)
        return jax.nn.relu(y + b[None, :, None, None])

    def pool(x):
        return jax.lax.reduce_window(x, -jnp.inf, jax.lax.max,
                                     (1, 1, 2, 2), (1, 1, 2, 2), 'VALID')

    x = pool(conv(x_nchw, p['conv1_w'], p['conv1_b']))
    x = pool(conv(x, p['conv2_w'], p['conv2_b']))
    x = conv(x, p['conv3_w'], p['conv3_b'])
    x = x.reshape(x.shape[0], -1)
    x = jax.nn.relu(jnp.dot(x, p['fc1_w'].T, precision=hp) + p['fc1_b'])
    x = jax.nn.relu(jnp.dot(x, p['fc2_w'].T, precision=hp) + p['fc2_b'])
    return jnp.dot(x, p['fc3_w'].T, precision=hp) + p['fc3_b']


# ---------------------------------- main -------------------------------------

if __name__ == "__main__":
    key = jax.random.PRNGKey(0)
    ks = jax.random.split(key, 13)

    def u(k, shape, fan_in):
        bound = 1.0 / (float(fan_in) ** 0.5)   # PyTorch default U(-1/sqrt(fan_in), 1/sqrt(fan_in))
        return jax.random.uniform(k, shape, jnp.float32, -bound, bound)

    params = {
        'conv1_w': u(ks[0], (6, 3, 3, 3), 3 * 9),    'conv1_b': u(ks[1], (6,), 3 * 9),
        'conv2_w': u(ks[2], (12, 6, 3, 3), 6 * 9),   'conv2_b': u(ks[3], (12,), 6 * 9),
        'conv3_w': u(ks[4], (32, 12, 3, 3), 12 * 9), 'conv3_b': u(ks[5], (32,), 12 * 9),
        'fc1_w': u(ks[6], (120, 512), 512),          'fc1_b': u(ks[7], (120,), 512),
        'fc2_w': u(ks[8], (84, 120), 120),           'fc2_b': u(ks[9], (84,), 120),
        'fc3_w': u(ks[10], (10, 84), 84),            'fc3_b': u(ks[11], (10,), 84),
    }
    # Input must be (N, 3, 30, 30) so the conv/pool chain yields 32*4*4 = 512 features.
    # N=16 with B=8 gives a 2-step grid (keeps both v7x TensorCores busy).
    x = jax.random.normal(ks[12], (16, 3, 30, 30), jnp.float32)

    kparams = prepare_params(params)          # one-time weight prep (off the hot path)

    out = jax.block_until_ready(net_forward(x, kparams))
    ref = jax.block_until_ready(_ref_forward(x, params))
    assert out.shape == (16, 10) and out.dtype == jnp.float32
    assert bool(jnp.allclose(out, ref, rtol=2e-2, atol=2e-2)), (out, ref)
    print("KERNEL_OK")
</pallas_src>

<mosaic_0001>
module attributes {stable_mosaic.version = 11 : i64} {
  func.func @_net_kernel(%arg0: i32, %arg1: memref<8x30x90xf32, #tpu.memory_space<vmem>>, %arg2: memref<3x90x256xbf16, #tpu.memory_space<vmem>>, %arg3: memref<1x128xf32, #tpu.memory_space<vmem>>, %arg4: memref<3x128x256xbf16, #tpu.memory_space<vmem>>, %arg5: memref<1x128xf32, #tpu.memory_space<vmem>>, %arg6: memref<3x128x128xbf16, #tpu.memory_space<vmem>>, %arg7: memref<1x128xf32, #tpu.memory_space<vmem>>, %arg8: memref<2x14x28xbf16, #tpu.memory_space<vmem>>, %arg9: memref<2x6x12xbf16, #tpu.memory_space<vmem>>, %arg10: memref<4x128x120xbf16, #tpu.memory_space<vmem>>, %arg11: memref<1x120xf32, #tpu.memory_space<vmem>>, %arg12: memref<120x84xbf16, #tpu.memory_space<vmem>>, %arg13: memref<1x84xf32, #tpu.memory_space<vmem>>, %arg14: memref<84x10xbf16, #tpu.memory_space<vmem>>, %arg15: memref<1x10xf32, #tpu.memory_space<vmem>>, %arg16: memref<8x10xf32, #tpu.memory_space<vmem>>, %arg17: memref<4x8x128xbf16, #tpu.memory_space<vmem>>) attributes {dimension_semantics = [#tpu.dimension_semantics<parallel>], iteration_bounds = array<i64: 2>, scalar_prefetch = 0 : i64, scratch_operands = 1 : i64, tpu.core_type = #tpu.core_type<tc>, window_params = [{transform_indices = @transform_0, window_bounds = array<i64: 8, 30, 90>}, {pipeline_mode = #tpu.pipeline_mode<synchronous>, transform_indices = @transform_1, window_bounds = array<i64: 3, 90, 256>}, {pipeline_mode = #tpu.pipeline_mode<synchronous>, transform_indices = @transform_2, window_bounds = array<i64: 1, 128>}, {pipeline_mode = #tpu.pipeline_mode<synchronous>, transform_indices = @transform_3, window_bounds = array<i64: 3, 128, 256>}, {pipeline_mode = #tpu.pipeline_mode<synchronous>, transform_indices = @transform_4, window_bounds = array<i64: 1, 128>}, {pipeline_mode = #tpu.pipeline_mode<synchronous>, transform_indices = @transform_5, window_bounds = array<i64: 3, 128, 128>}, {pipeline_mode = #tpu.pipeline_mode<synchronous>, transform_indices = @transform_6, window_bounds = array<i64: 1, 128>}, {pipeline_mode = #tpu.pipeline_mode<synchronous>, transform_indices = @transform_7, window_bounds = array<i64: 2, 14, 28>}, {pipeline_mode = #tpu.pipeline_mode<synchronous>, transform_indices = @transform_8, window_bounds = array<i64: 2, 6, 12>}, {pipeline_mode = #tpu.pipeline_mode<synchronous>, transform_indices = @transform_9, window_bounds = array<i64: 4, 128, 120>}, {pipeline_mode = #tpu.pipeline_mode<synchronous>, transform_indices = @transform_10, window_bounds = array<i64: 1, 120>}, {pipeline_mode = #tpu.pipeline_mode<synchronous>, transform_indices = @transform_11, window_bounds = array<i64: 120, 84>}, {pipeline_mode = #tpu.pipeline_mode<synchronous>, transform_indices = @transform_12, window_bounds = array<i64: 1, 84>}, {pipeline_mode = #tpu.pipeline_mode<synchronous>, transform_indices = @transform_13, window_bounds = array<i64: 84, 10>}, {pipeline_mode = #tpu.pipeline_mode<synchronous>, transform_indices = @transform_14, window_bounds = array<i64: 1, 10>}, {transform_indices = @transform_15, window_bounds = array<i64: 8, 10>}]} {
    %c0 = arith.constant 0 : index
    %c0_0 = arith.constant 0 : index
    %c0_1 = arith.constant 0 : index
    %0 = vector.load %arg1[%c0, %c0_0, %c0_1] : memref<8x30x90xf32, #tpu.memory_space<vmem>>, vector<1x28x90xf32>
    %1 = vector.shape_cast %0 : vector<1x28x90xf32> to vector<28x90xf32>
    %2 = arith.truncf %1 : vector<28x90xf32> to vector<28x90xbf16>
    %c0_2 = arith.constant 0 : index
    %c0_3 = arith.constant 0 : index
    %c0_4 = arith.constant 0 : index
    %3 = vector.load %arg2[%c0_2, %c0_3, %c0_4] : memref<3x90x256xbf16, #tpu.memory_space<vmem>>, vector<1x90x256xbf16>
    %4 = vector.shape_cast %3 : vector<1x90x256xbf16> to vector<90x256xbf16>
    %cst = arith.constant dense<0.000000e+00> : vector<28x256xf32>
    %5 = tpu.matmul %2, %4, %cst {dimension_numbers = #tpu.dot_dimension_numbers<[1], [0], [0], [1], [0, 0, 1, 1], [], []>} : vector<28x90xbf16>, vector<90x256xbf16>, vector<28x256xf32> -> vector<28x256xf32>
    %c0_5 = arith.constant 0 : index
    %c1 = arith.constant 1 : index
    %c0_6 = arith.constant 0 : index
    %6 = vector.load %arg1[%c0_5, %c1, %c0_6] : memref<8x30x90xf32, #tpu.memory_space<vmem>>, vector<1x28x90xf32>
    %7 = vector.shape_cast %6 : vector<1x28x90xf32> to vector<28x90xf32>
    %8 = arith.truncf %7 : vector<28x90xf32> to vector<28x90xbf16>
    %c1_7 = arith.constant 1 : index
    %c0_8 = arith.constant 0 : index
    %c0_9 = arith.constant 0 : index
    %9 = vector.load %arg2[%c1_7, %c0_8, %c0_9] : memref<3x90x256xbf16, #tpu.memory_space<vmem>>, vector<1x90x256xbf16>
    %10 = vector.shape_cast %9 : vector<1x90x256xbf16> to vector<90x256xbf16>
    %cst_10 = arith.constant dense<0.000000e+00> : vector<28x256xf32>
    %11 = tpu.matmul %8, %10, %cst_10 {dimension_numbers = #tpu.dot_dimension_numbers<[1], [0], [0], [1], [0, 0, 1, 1], [], []>} : vector<28x90xbf16>, vector<90x256xbf16>, vector<28x256xf32> -> vector<28x256xf32>
    %12 = arith.addf %5, %11 : vector<28x256xf32>
    %c0_11 = arith.constant 0 : index
    %c2 = arith.constant 2 : index
    %c0_12 = arith.constant 0 : index
    %13 = vector.load %arg1[%c0_11, %c2, %c0_12] : memref<8x30x90xf32, #tpu.memory_space<vmem>>, vector<1x28x90xf32>
    %14 = vector.shape_cast %13 : vector<1x28x90xf32> to vector<28x90xf32>
    %15 = arith.truncf %14 : vector<28x90xf32> to vector<28x90xbf16>
    %c2_13 = arith.constant 2 : index
    %c0_14 = arith.constant 0 : index
    %c0_15 = arith.constant 0 : index
    %16 = vector.load %arg2[%c2_13, %c0_14, %c0_15] : memref<3x90x256xbf16, #tpu.memory_space<vmem>>, vector<1x90x256xbf16>
    %17 = vector.shape_cast %16 : vector<1x90x256xbf16> to vector<90x256xbf16>
    %cst_16 = arith.constant dense<0.000000e+00> : vector<28x256xf32>
    %18 = tpu.matmul %15, %17, %cst_16 {dimension_numbers = #tpu.dot_dimension_numbers<[1], [0], [0], [1], [0, 0, 1, 1], [], []>} : vector<28x90xbf16>, vector<90x256xbf16>, vector<28x256xf32> -> vector<28x256xf32>
    %19 = arith.addf %12, %18 : vector<28x256xf32>
    %20 = vector.extract_strided_slice %19 {offsets = [0, 0], sizes = [28, 128], strides = [1, 1]} : vector<28x256xf32> to vector<28x128xf32>
    %21 = vector.extract_strided_slice %19 {offsets = [0, 128], sizes = [28, 128], strides = [1, 1]} : vector<28x256xf32> to vector<28x128xf32>
    %22 = arith.maximumf %20, %21 : vector<28x128xf32>
    %c1_17 = arith.constant 1 : index
    %c0_18 = arith.constant 0 : index
    %c0_19 = arith.constant 0 : index
    %23 = vector.load %arg1[%c1_17, %c0_18, %c0_19] : memref<8x30x90xf32, #tpu.memory_space<vmem>>, vector<1x28x90xf32>
    %24 = vector.shape_cast %23 : vector<1x28x90xf32> to vector<28x90xf32>
    %25 = arith.truncf %24 : vector<28x90xf32> to vector<28x90xbf16>
    %c0_20 = arith.constant 0 : index
    %c0_21 = arith.constant 0 : index
    %c0_22 = arith.constant 0 : index
    %26 = vector.load %arg2[%c0_20, %c0_21, %c0_22] : memref<3x90x256xbf16, #tpu.memory_space<vmem>>, vector<1x90x256xbf16>
    %27 = vector.shape_cast %26 : vector<1x90x256xbf16> to vector<90x256xbf16>
    %cst_23 = arith.constant dense<0.000000e+00> : vector<28x256xf32>
    %28 = tpu.matmul %25, %27, %cst_23 {dimension_numbers = #tpu.dot_dimension_numbers<[1], [0], [0], [1], [0, 0, 1, 1], [], []>} : vector<28x90xbf16>, vector<90x256xbf16>, vector<28x256xf32> -> vector<28x256xf32>
    %c1_24 = arith.constant 1 : index
    %c1_25 = arith.constant 1 : index
    %c0_26 = arith.constant 0 : index
    %29 = vector.load %arg1[%c1_24, %c1_25, %c0_26] : memref<8x30x90xf32, #tpu.memory_space<vmem>>, vector<1x28x90xf32>
    %30 = vector.shape_cast %29 : vector<1x28x90xf32> to vector<28x90xf32>
    %31 = arith.truncf %30 : vector<28x90xf32> to vector<28x90xbf16>
    %c1_27 = arith.constant 1 : index
    %c0_28 = arith.constant 0 : index
    %c0_29 = arith.constant 0 : index
    %32 = vector.load %arg2[%c1_27, %c0_28, %c0_29] : memref<3x90x256xbf16, #tpu.memory_space<vmem>>, vector<1x90x256xbf16>
    %33 = vector.shape_cast %32 : vector<1x90x256xbf16> to vector<90x256xbf16>
    %cst_30 = arith.constant dense<0.000000e+00> : vector<28x256xf32>
    %34 = tpu.matmul %31, %33, %cst_30 {dimension_numbers = #tpu.dot_dimension_numbers<[1], [0], [0], [1], [0, 0, 1, 1], [], []>} : vector<28x90xbf16>, vector<90x256xbf16>, vector<28x256xf32> -> vector<28x256xf32>
    %35 = arith.addf %28, %34 : vector<28x256xf32>
    %c1_31 = arith.constant 1 : index
    %c2_32 = arith.constant 2 : index
    %c0_33 = arith.constant 0 : index
    %36 = vector.load %arg1[%c1_31, %c2_32, %c0_33] : memref<8x30x90xf32, #tpu.memory_space<vmem>>, vector<1x28x90xf32>
    %37 = vector.shape_cast %36 : vector<1x28x90xf32> to vector<28x90xf32>
    %38 = arith.truncf %37 : vector<28x90xf32> to vector<28x90xbf16>
    %c2_34 = arith.constant 2 : index
    %c0_35 = arith.constant 0 : index
    %c0_36 = arith.constant 0 : index
    %39 = vector.load %arg2[%c2_34, %c0_35, %c0_36] : memref<3x90x256xbf16, #tpu.memory_space<vmem>>, vector<1x90x256xbf16>
    %40 = vector.shape_cast %39 : vector<1x90x256xbf16> to vector<90x256xbf16>
    %cst_37 = arith.constant dense<0.000000e+00> : vector<28x256xf32>
    %41 = tpu.matmul %38, %40, %cst_37 {dimension_numbers = #tpu.dot_dimension_numbers<[1], [0], [0], [1], [0, 0, 1, 1], [], []>} : vector<28x90xbf16>, vector<90x256xbf16>, vector<28x256xf32> -> vector<28x256xf32>
    %42 = arith.addf %35, %41 : vector<28x256xf32>
    %43 = vector.extract_strided_slice %42 {offsets = [0, 0], sizes = [28, 128], strides = [1, 1]} : vector<28x256xf32> to vector<28x128xf32>
    %44 = vector.extract_strided_slice %42 {offsets = [0, 128], sizes = [28, 128], strides = [1, 1]} : vector<28x256xf32> to vector<28x128xf32>
    %45 = arith.maximumf %43, %44 : vector<28x128xf32>
    %c2_38 = arith.constant 2 : index
    %c0_39 = arith.constant 0 : index
    %c0_40 = arith.constant 0 : index
    %46 = vector.load %arg1[%c2_38, %c0_39, %c0_40] : memref<8x30x90xf32, #tpu.memory_space<vmem>>, vector<1x28x90xf32>
    %47 = vector.shape_cast %46 : vector<1x28x90xf32> to vector<28x90xf32>
    %48 = arith.truncf %47 : vector<28x90xf32> to vector<28x90xbf16>
    %c0_41 = arith.constant 0 : index
    %c0_42 = arith.constant 0 : index
    %c0_43 = arith.constant 0 : index
    %49 = vector.load %arg2[%c0_41, %c0_42, %c0_43] : memref<3x90x256xbf16, #tpu.memory_space<vmem>>, vector<1x90x256xbf16>
    %50 = vector.shape_cast %49 : vector<1x90x256xbf16> to vector<90x256xbf16>
    %cst_44 = arith.constant dense<0.000000e+00> : vector<28x256xf32>
    %51 = tpu.matmul %48, %50, %cst_44 {dimension_numbers = #tpu.dot_dimension_numbers<[1], [0], [0], [1], [0, 0, 1, 1], [], []>} : vector<28x90xbf16>, vector<90x256xbf16>, vector<28x256xf32> -> vector<28x256xf32>
    %c2_45 = arith.constant 2 : index
    %c1_46 = arith.constant 1 : index
    %c0_47 = arith.constant 0 : index
    %52 = vector.load %arg1[%c2_45, %c1_46, %c0_47] : memref<8x30x90xf32, #tpu.memory_space<vmem>>, vector<1x28x90xf32>
    %53 = vector.shape_cast %52 : vector<1x28x90xf32> to vector<28x90xf32>
    %54 = arith.truncf %53 : vector<28x90xf32> to vector<28x90xbf16>
    %c1_48 = arith.constant 1 : index
    %c0_49 = arith.constant 0 : index
    %c0_50 = arith.constant 0 : index
    %55 = vector.load %arg2[%c1_48, %c0_49, %c0_50] : memref<3x90x256xbf16, #tpu.memory_space<vmem>>, vector<1x90x256xbf16>
    %56 = vector.shape_cast %55 : vector<1x90x256xbf16> to vector<90x256xbf16>
    %cst_51 = arith.constant dense<0.000000e+00> : vector<28x256xf32>
    %57 = tpu.matmul %54, %56, %cst_51 {dimension_numbers = #tpu.dot_dimension_numbers<[1], [0], [0], [1], [0, 0, 1, 1], [], []>} : vector<28x90xbf16>, vector<90x256xbf16>, vector<28x256xf32> -> vector<28x256xf32>
    %58 = arith.addf %51, %57 : vector<28x256xf32>
    %c2_52 = arith.constant 2 : index
    %c2_53 = arith.constant 2 : index
    %c0_54 = arith.constant 0 : index
    %59 = vector.load %arg1[%c2_52, %c2_53, %c0_54] : memref<8x30x90xf32, #tpu.memory_space<vmem>>, vector<1x28x90xf32>
    %60 = vector.shape_cast %59 : vector<1x28x90xf32> to vector<28x90xf32>
    %61 = arith.truncf %60 : vector<28x90xf32> to vector<28x90xbf16>
    %c2_55 = arith.constant 2 : index
    %c0_56 = arith.constant 0 : index
    %c0_57 = arith.constant 0 : index
    %62 = vector.load %arg2[%c2_55, %c0_56, %c0_57] : memref<3x90x256xbf16, #tpu.memory_space<vmem>>, vector<1x90x256xbf16>
    %63 = vector.shape_cast %62 : vector<1x90x256xbf16> to vector<90x256xbf16>
    %cst_58 = arith.constant dense<0.000000e+00> : vector<28x256xf32>
    %64 = tpu.matmul %61, %63, %cst_58 {dimension_numbers = #tpu.dot_dimension_numbers<[1], [0], [0], [1], [0, 0, 1, 1], [], []>} : vector<28x90xbf16>, vector<90x256xbf16>, vector<28x256xf32> -> vector<28x256xf32>
    %65 = arith.addf %58, %64 : vector<28x256xf32>
    %66 = vector.extract_strided_slice %65 {offsets = [0, 0], sizes = [28, 128], strides = [1, 1]} : vector<28x256xf32> to vector<28x128xf32>
    %67 = vector.extract_strided_slice %65 {offsets = [0, 128], sizes = [28, 128], strides = [1, 1]} : vector<28x256xf32> to vector<28x128xf32>
    %68 = arith.maximumf %66, %67 : vector<28x128xf32>
    %c3 = arith.constant 3 : index
    %c0_59 = arith.constant 0 : index
    %c0_60 = arith.constant 0 : index
    %69 = vector.load %arg1[%c3, %c0_59, %c0_60] : memref<8x30x90xf32, #tpu.memory_space<vmem>>, vector<1x28x90xf32>
    %70 = vector.shape_cast %69 : vector<1x28x90xf32> to vector<28x90xf32>
    %71 = arith.truncf %70 : vector<28x90xf32> to vector<28x90xbf16>
    %c0_61 = arith.constant 0 : index
    %c0_62 = arith.constant 0 : index
    %c0_63 = arith.constant 0 : index
    %72 = vector.load %arg2[%c0_61, %c0_62, %c0_63] : memref<3x90x256xbf16, #tpu.memory_space<vmem>>, vector<1x90x256xbf16>
    %73 = vector.shape_cast %72 : vector<1x90x256xbf16> to vector<90x256xbf16>
    %cst_64 = arith.constant dense<0.000000e+00> : vector<28x256xf32>
    %74 = tpu.matmul %71, %73, %cst_64 {dimension_numbers = #tpu.dot_dimension_numbers<[1], [0], [0], [1], [0, 0, 1, 1], [], []>} : vector<28x90xbf16>, vector<90x256xbf16>, vector<28x256xf32> -> vector<28x256xf32>
    %c3_65 = arith.constant 3 : index
    %c1_66 = arith.constant 1 : index
    %c0_67 = arith.constant 0 : index
    %75 = vector.load %arg1[%c3_65, %c1_66, %c0_67] : memref<8x30x90xf32, #tpu.memory_space<vmem>>, vector<1x28x90xf32>
    %76 = vector.shape_cast %75 : vector<1x28x90xf32> to vector<28x90xf32>
    %77 = arith.truncf %76 : vector<28x90xf32> to vector<28x90xbf16>
    %c1_68 = arith.constant 1 : index
    %c0_69 = arith.constant 0 : index
    %c0_70 = arith.constant 0 : index
    %78 = vector.load %arg2[%c1_68, %c0_69, %c0_70] : memref<3x90x256xbf16, #tpu.memory_space<vmem>>, vector<1x90x256xbf16>
    %79 = vector.shape_cast %78 : vector<1x90x256xbf16> to vector<90x256xbf16>
    %cst_71 = arith.constant dense<0.000000e+00> : vector<28x256xf32>
    %80 = tpu.matmul %77, %79, %cst_71 {dimension_numbers = #tpu.dot_dimension_numbers<[1], [0], [0], [1], [0, 0, 1, 1], [], []>} : vector<28x90xbf16>, vector<90x256xbf16>, vector<28x256xf32> -> vector<28x256xf32>
    %81 = arith.addf %74, %80 : vector<28x256xf32>
    %c3_72 = arith.constant 3 : index
    %c2_73 = arith.constant 2 : index
    %c0_74 = arith.constant 0 : index
    %82 = vector.load %arg1[%c3_72, %c2_73, %c0_74] : memref<8x30x90xf32, #tpu.memory_space<vmem>>, vector<1x28x90xf32>
    %83 = vector.shape_cast %82 : vector<1x28x90xf32> to vector<28x90xf32>
    %84 = arith.truncf %83 : vector<28x90xf32> to vector<28x90xbf16>
    %c2_75 = arith.constant 2 : index
    %c0_76 = arith.constant 0 : index
    %c0_77 = arith.constant 0 : index
    %85 = vector.load %arg2[%c2_75, %c0_76, %c0_77] : memref<3x90x256xbf16, #tpu.memory_space<vmem>>, vector<1x90x256xbf16>
    %86 = vector.shape_cast %85 : vector<1x90x256xbf16> to vector<90x256xbf16>
    %cst_78 = arith.constant dense<0.000000e+00> : vector<28x256xf32>
    %87 = tpu.matmul %84, %86, %cst_78 {dimension_numbers = #tpu.dot_dimension_numbers<[1], [0], [0], [1], [0, 0, 1, 1], [], []>} : vector<28x90xbf16>, vector<90x256xbf16>, vector<28x256xf32> -> vector<28x256xf32>
    %88 = arith.addf %81, %87 : vector<28x256xf32>
    %89 = vector.extract_strided_slice %88 {offsets = [0, 0], sizes = [28, 128], strides = [1, 1]} : vector<28x256xf32> to vector<28x128xf32>
    %90 = vector.extract_strided_slice %88 {offsets = [0, 128], sizes = [28, 128], strides = [1, 1]} : vector<28x256xf32> to vector<28x128xf32>
    %91 = arith.maximumf %89, %90 : vector<28x128xf32>
    %c4 = arith.constant 4 : index
    %c0_79 = arith.constant 0 : index
    %c0_80 = arith.constant 0 : index
    %92 = vector.load %arg1[%c4, %c0_79, %c0_80] : memref<8x30x90xf32, #tpu.memory_space<vmem>>, vector<1x28x90xf32>
    %93 = vector.shape_cast %92 : vector<1x28x90xf32> to vector<28x90xf32>
    %94 = arith.truncf %93 : vector<28x90xf32> to vector<28x90xbf16>
    %c0_81 = arith.constant 0 : index
    %c0_82 = arith.constant 0 : index
    %c0_83 = arith.constant 0 : index
    %95 = vector.load %arg2[%c0_81, %c0_82, %c0_83] : memref<3x90x256xbf16, #tpu.memory_space<vmem>>, vector<1x90x256xbf16>
    %96 = vector.shape_cast %95 : vector<1x90x256xbf16> to vector<90x256xbf16>
    %cst_84 = arith.constant dense<0.000000e+00> : vector<28x256xf32>
    %97 = tpu.matmul %94, %96, %cst_84 {dimension_numbers = #tpu.dot_dimension_numbers<[1], [0], [0], [1], [0, 0, 1, 1], [], []>} : vector<28x90xbf16>, vector<90x256xbf16>, vector<28x256xf32> -> vector<28x256xf32>
    %c4_85 = arith.constant 4 : index
    %c1_86 = arith.constant 1 : index
    %c0_87 = arith.constant 0 : index
    %98 = vector.load %arg1[%c4_85, %c1_86, %c0_87] : memref<8x30x90xf32, #tpu.memory_space<vmem>>, vector<1x28x90xf32>
    %99 = vector.shape_cast %98 : vector<1x28x90xf32> to vector<28x90xf32>
    %100 = arith.truncf %99 : vector<28x90xf32> to vector<28x90xbf16>
    %c1_88 = arith.constant 1 : index
    %c0_89 = arith.constant 0 : index
    %c0_90 = arith.constant 0 : index
    %101 = vector.load %arg2[%c1_88, %c0_89, %c0_90] : memref<3x90x256xbf16, #tpu.memory_space<vmem>>, vector<1x90x256xbf16>
    %102 = vector.shape_cast %101 : vector<1x90x256xbf16> to vector<90x256xbf16>
    %cst_91 = arith.constant dense<0.000000e+00> : vector<28x256xf32>
    %103 = tpu.matmul %100, %102, %cst_91 {dimension_numbers = #tpu.dot_dimension_numbers<[1], [0], [0], [1], [0, 0, 1, 1], [], []>} : vector<28x90xbf16>, vector<90x256xbf16>, vector<28x256xf32> -> vector<28x256xf32>
    %104 = arith.addf %97, %103 : vector<28x256xf32>
    %c4_92 = arith.constant 4 : index
    %c2_93 = arith.constant 2 : index
    %c0_94 = arith.constant 0 : index
    %105 = vector.load %arg1[%c4_92, %c2_93, %c0_94] : memref<8x30x90xf32, #tpu.memory_space<vmem>>, vector<1x28x90xf32>
    %106 = vector.shape_cast %105 : vector<1x28x90xf32> to vector<28x90xf32>
    %107 = arith.truncf %106 : vector<28x90xf32> to vector<28x90xbf16>
    %c2_95 = arith.constant 2 : index
    %c0_96 = arith.constant 0 : index
    %c0_97 = arith.constant 0 : index
    %108 = vector.load %arg2[%c2_95, %c0_96, %c0_97] : memref<3x90x256xbf16, #tpu.memory_space<vmem>>, vector<1x90x256xbf16>
    %109 = vector.shape_cast %108 : vector<1x90x256xbf16> to vector<90x256xbf16>
    %cst_98 = arith.constant dense<0.000000e+00> : vector<28x256xf32>
    %110 = tpu.matmul %107, %109, %cst_98 {dimension_numbers = #tpu.dot_dimension_numbers<[1], [0], [0], [1], [0, 0, 1, 1], [], []>} : vector<28x90xbf16>, vector<90x256xbf16>, vector<28x256xf32> -> vector<28x256xf32>
    %111 = arith.addf %104, %110 : vector<28x256xf32>
    %112 = vector.extract_strided_slice %111 {offsets = [0, 0], sizes = [28, 128], strides = [1, 1]} : vector<28x256xf32> to vector<28x128xf32>
    %113 = vector.extract_strided_slice %111 {offsets = [0, 128], sizes = [28, 128], strides = [1, 1]} : vector<28x256xf32> to vector<28x128xf32>
    %114 = arith.maximumf %112, %113 : vector<28x128xf32>
    %c5 = arith.constant 5 : index
    %c0_99 = arith.constant 0 : index
    %c0_100 = arith.constant 0 : index
    %115 = vector.load %arg1[%c5, %c0_99, %c0_100] : memref<8x30x90xf32, #tpu.memory_space<vmem>>, vector<1x28x90xf32>
    %116 = vector.shape_cast %115 : vector<1x28x90xf32> to vector<28x90xf32>
    %117 = arith.truncf %116 : vector<28x90xf32> to vector<28x90xbf16>
    %c0_101 = arith.constant 0 : index
    %c0_102 = arith.constant 0 : index
    %c0_103 = arith.constant 0 : index
    %118 = vector.load %arg2[%c0_101, %c0_102, %c0_103] : memref<3x90x256xbf16, #tpu.memory_space<vmem>>, vector<1x90x256xbf16>
    %119 = vector.shape_cast %118 : vector<1x90x256xbf16> to vector<90x256xbf16>
    %cst_104 = arith.constant dense<0.000000e+00> : vector<28x256xf32>
    %120 = tpu.matmul %117, %119, %cst_104 {dimension_numbers = #tpu.dot_dimension_numbers<[1], [0], [0], [1], [0, 0, 1, 1], [], []>} : vector<28x90xbf16>, vector<90x256xbf16>, vector<28x256xf32> -> vector<28x256xf32>
    %c5_105 = arith.constant 5 : index
    %c1_106 = arith.constant 1 : index
    %c0_107 = arith.constant 0 : index
    %121 = vector.load %arg1[%c5_105, %c1_106, %c0_107] : memref<8x30x90xf32, #tpu.memory_space<vmem>>, vector<1x28x90xf32>
    %122 = vector.shape_cast %121 : vector<1x28x90xf32> to vector<28x90xf32>
    %123 = arith.truncf %122 : vector<28x90xf32> to vector<28x90xbf16>
    %c1_108 = arith.constant 1 : index
    %c0_109 = arith.constant 0 : index
    %c0_110 = arith.constant 0 : index
    %124 = vector.load %arg2[%c1_108, %c0_109, %c0_110] : memref<3x90x256xbf16, #tpu.memory_space<vmem>>, vector<1x90x256xbf16>
    %125 = vector.shape_cast %124 : vector<1x90x256xbf16> to vector<90x256xbf16>
    %cst_111 = arith.constant dense<0.000000e+00> : vector<28x256xf32>
    %126 = tpu.matmul %123, %125, %cst_111 {dimension_numbers = #tpu.dot_dimension_numbers<[1], [0], [0], [1], [0, 0, 1, 1], [], []>} : vector<28x90xbf16>, vector<90x256xbf16>, vector<28x256xf32> -> vector<28x256xf32>
    %127 = arith.addf %120, %126 : vector<28x256xf32>
    %c5_112 = arith.constant 5 : index
    %c2_113 = arith.constant 2 : index
    %c0_114 = arith.constant 0 : index
    %128 = vector.load %arg1[%c5_112, %c2_113, %c0_114] : memref<8x30x90xf32, #tpu.memory_space<vmem>>, vector<1x28x90xf32>
    %129 = vector.shape_cast %128 : vector<1x28x90xf32> to vector<28x90xf32>
    %130 = arith.truncf %129 : vector<28x90xf32> to vector<28x90xbf16>
    %c2_115 = arith.constant 2 : index
    %c0_116 = arith.constant 0 : index
    %c0_117 = arith.constant 0 : index
    %131 = vector.load %arg2[%c2_115, %c0_116, %c0_117] : memref<3x90x256xbf16, #tpu.memory_space<vmem>>, vector<1x90x256xbf16>
    %132 = vector.shape_cast %131 : vector<1x90x256xbf16> to vector<90x256xbf16>
    %cst_118 = arith.constant dense<0.000000e+00> : vector<28x256xf32>
    %133 = tpu.matmul %130, %132, %cst_118 {dimension_numbers = #tpu.dot_dimension_numbers<[1], [0], [0], [1], [0, 0, 1, 1], [], []>} : vector<28x90xbf16>, vector<90x256xbf16>, vector<28x256xf32> -> vector<28x256xf32>
    %134 = arith.addf %127, %133 : vector<28x256xf32>
    %135 = vector.extract_strided_slice %134 {offsets = [0, 0], sizes = [28, 128], strides = [1, 1]} : vector<28x256xf32> to vector<28x128xf32>
    %136 = vector.extract_strided_slice %134 {offsets = [0, 128], sizes = [28, 128], strides = [1, 1]} : vector<28x256xf32> to vector<28x128xf32>
    %137 = arith.maximumf %135, %136 : vector<28x128xf32>
    %c6 = arith.constant 6 : index
    %c0_119 = arith.constant 0 : index
    %c0_120 = arith.constant 0 : index
    %138 = vector.load %arg1[%c6, %c0_119, %c0_120] : memref<8x30x90xf32, #tpu.memory_space<vmem>>, vector<1x28x90xf32>
    %139 = vector.shape_cast %138 : vector<1x28x90xf32> to vector<28x90xf32>
    %140 = arith.truncf %139 : vector<28x90xf32> to vector<28x90xbf16>
    %c0_121 = arith.constant 0 : index
    %c0_122 = arith.constant 0 : index
    %c0_123 = arith.constant 0 : index
    %141 = vector.load %arg2[%c0_121, %c0_122, %c0_123] : memref<3x90x256xbf16, #tpu.memory_space<vmem>>, vector<1x90x256xbf16>
    %142 = vector.shape_cast %141 : vector<1x90x256xbf16> to vector<90x256xbf16>
    %cst_124 = arith.constant dense<0.000000e+00> : vector<28x256xf32>
    %143 = tpu.matmul %140, %142, %cst_124 {dimension_numbers = #tpu.dot_dimension_numbers<[1], [0], [0], [1], [0, 0, 1, 1], [], []>} : vector<28x90xbf16>, vector<90x256xbf16>, vector<28x256xf32> -> vector<28x256xf32>
    %c6_125 = arith.constant 6 : index
    %c1_126 = arith.constant 1 : index
    %c0_127 = arith.constant 0 : index
    %144 = vector.load %arg1[%c6_125, %c1_126, %c0_127] : memref<8x30x90xf32, #tpu.memory_space<vmem>>, vector<1x28x90xf32>
    %145 = vector.shape_cast %144 : vector<1x28x90xf32> to vector<28x90xf32>
    %146 = arith.truncf %145 : vector<28x90xf32> to vector<28x90xbf16>
    %c1_128 = arith.constant 1 : index
    %c0_129 = arith.constant 0 : index
    %c0_130 = arith.constant 0 : index
    %147 = vector.load %arg2[%c1_128, %c0_129, %c0_130] : memref<3x90x256xbf16, #tpu.memory_space<vmem>>, vector<1x90x256xbf16>
    %148 = vector.shape_cast %147 : vector<1x90x256xbf16> to vector<90x256xbf16>
    %cst_131 = arith.constant dense<0.000000e+00> : vector<28x256xf32>
    %149 = tpu.matmul %146, %148, %cst_131 {dimension_numbers = #tpu.dot_dimension_numbers<[1], [0], [0], [1], [0, 0, 1, 1], [], []>} : vector<28x90xbf16>, vector<90x256xbf16>, vector<28x256xf32> -> vector<28x256xf32>
    %150 = arith.addf %143, %149 : vector<28x256xf32>
    %c6_132 = arith.constant 6 : index
    %c2_133 = arith.constant 2 : index
    %c0_134 = arith.constant 0 : index
    %151 = vector.load %arg1[%c6_132, %c2_133, %c0_134] : memref<8x30x90xf32, #tpu.memory_space<vmem>>, vector<1x28x90xf32>
    %152 = vector.shape_cast %151 : vector<1x28x90xf32> to vector<28x90xf32>
    %153 = arith.truncf %152 : vector<28x90xf32> to vector<28x90xbf16>
    %c2_135 = arith.constant 2 : index
    %c0_136 = arith.constant 0 : index
    %c0_137 = arith.constant 0 : index
    %154 = vector.load %arg2[%c2_135, %c0_136, %c0_137] : memref<3x90x256xbf16, #tpu.memory_space<vmem>>, vector<1x90x256xbf16>
    %155 = vector.shape_cast %154 : vector<1x90x256xbf16> to vector<90x256xbf16>
    %cst_138 = arith.constant dense<0.000000e+00> : vector<28x256xf32>
    %156 = tpu.matmul %153, %155, %cst_138 {dimension_numbers = #tpu.dot_dimension_numbers<[1], [0], [0], [1], [0, 0, 1, 1], [], []>} : vector<28x90xbf16>, vector<90x256xbf16>, vector<28x256xf32> -> vector<28x256xf32>
    %157 = arith.addf %150, %156 : vector<28x256xf32>
    %158 = vector.extract_strided_slice %157 {offsets = [0, 0], sizes = [28, 128], strides = [1, 1]} : vector<28x256xf32> to vector<28x128xf32>
    %159 = vector.extract_strided_slice %157 {offsets = [0, 128], sizes = [28, 128], strides = [1, 1]} : vector<28x256xf32> to vector<28x128xf32>
    %160 = arith.maximumf %158, %159 : vector<28x128xf32>
    %c7 = arith.constant 7 : index
    %c0_139 = arith.constant 0 : index
    %c0_140 = arith.constant 0 : index
    %161 = vector.load %arg1[%c7, %c0_139, %c0_140] : memref<8x30x90xf32, #tpu.memory_space<vmem>>, vector<1x28x90xf32>
    %162 = vector.shape_cast %161 : vector<1x28x90xf32> to vector<28x90xf32>
    %163 = arith.truncf %162 : vector<28x90xf32> to vector<28x90xbf16>
    %c0_141 = arith.constant 0 : index
    %c0_142 = arith.constant 0 : index
    %c0_143 = arith.constant 0 : index
    %164 = vector.load %arg2[%c0_141, %c0_142, %c0_143] : memref<3x90x256xbf16, #tpu.memory_space<vmem>>, vector<1x90x256xbf16>
    %165 = vector.shape_cast %164 : vector<1x90x256xbf16> to vector<90x256xbf16>
    %cst_144 = arith.constant dense<0.000000e+00> : vector<28x256xf32>
    %166 = tpu.matmul %163, %165, %cst_144 {dimension_numbers = #tpu.dot_dimension_numbers<[1], [0], [0], [1], [0, 0, 1, 1], [], []>} : vector<28x90xbf16>, vector<90x256xbf16>, vector<28x256xf32> -> vector<28x256xf32>
    %c7_145 = arith.constant 7 : index
    %c1_146 = arith.constant 1 : index
    %c0_147 = arith.constant 0 : index
    %167 = vector.load %arg1[%c7_145, %c1_146, %c0_147] : memref<8x30x90xf32, #tpu.memory_space<vmem>>, vector<1x28x90xf32>
    %168 = vector.shape_cast %167 : vector<1x28x90xf32> to vector<28x90xf32>
    %169 = arith.truncf %168 : vector<28x90xf32> to vector<28x90xbf16>
    %c1_148 = arith.constant 1 : index
    %c0_149 = arith.constant 0 : index
    %c0_150 = arith.constant 0 : index
    %170 = vector.load %arg2[%c1_148, %c0_149, %c0_150] : memref<3x90x256xbf16, #tpu.memory_space<vmem>>, vector<1x90x256xbf16>
    %171 = vector.shape_cast %170 : vector<1x90x256xbf16> to vector<90x256xbf16>
    %cst_151 = arith.constant dense<0.000000e+00> : vector<28x256xf32>
    %172 = tpu.matmul %169, %171, %cst_151 {dimension_numbers = #tpu.dot_dimension_numbers<[1], [0], [0], [1], [0, 0, 1, 1], [], []>} : vector<28x90xbf16>, vector<90x256xbf16>, vector<28x256xf32> -> vector<28x256xf32>
    %173 = arith.addf %166, %172 : vector<28x256xf32>
    %c7_152 = arith.constant 7 : index
    %c2_153 = arith.constant 2 : index
    %c0_154 = arith.constant 0 : index
    %174 = vector.load %arg1[%c7_152, %c2_153, %c0_154] : memref<8x30x90xf32, #tpu.memory_space<vmem>>, vector<1x28x90xf32>
    %175 = vector.shape_cast %174 : vector<1x28x90xf32> to vector<28x90xf32>
    %176 = arith.truncf %175 : vector<28x90xf32> to vector<28x90xbf16>
    %c2_155 = arith.constant 2 : index
    %c0_156 = arith.constant 0 : index
    %c0_157 = arith.constant 0 : index
    %177 = vector.load %arg2[%c2_155, %c0_156, %c0_157] : memref<3x90x256xbf16, #tpu.memory_space<vmem>>, vector<1x90x256xbf16>
    %178 = vector.shape_cast %177 : vector<1x90x256xbf16> to vector<90x256xbf16>
    %cst_158 = arith.constant dense<0.000000e+00> : vector<28x256xf32>
    %179 = tpu.matmul %176, %178, %cst_158 {dimension_numbers = #tpu.dot_dimension_numbers<[1], [0], [0], [1], [0, 0, 1, 1], [], []>} : vector<28x90xbf16>, vector<90x256xbf16>, vector<28x256xf32> -> vector<28x256xf32>
    %180 = arith.addf %173, %179 : vector<28x256xf32>
    %181 = vector.extract_strided_slice %180 {offsets = [0, 0], sizes = [28, 128], strides = [1, 1]} : vector<28x256xf32> to vector<28x128xf32>
    %182 = vector.extract_strided_slice %180 {offsets = [0, 128], sizes = [28, 128], strides = [1, 1]} : vector<28x256xf32> to vector<28x128xf32>
    %183 = arith.maximumf %181, %182 : vector<28x128xf32>
    %184 = tpu.concatenate %22, %45, %68, %91, %114, %137, %160, %183 in 1 : vector<28x128xf32>, vector<28x128xf32>, vector<28x128xf32>, vector<28x128xf32>, vector<28x128xf32>, vector<28x128xf32>, vector<28x128xf32>, vector<28x128xf32> -> vector<28x1024xf32>
    %185 = arith.truncf %184 : vector<28x1024xf32> to vector<28x1024xbf16>
    %c0_159 = arith.constant 0 : index
    %c0_160 = arith.constant 0 : index
    %c0_161 = arith.constant 0 : index
    %186 = vector.load %arg8[%c0_159, %c0_160, %c0_161] : memref<2x14x28xbf16, #tpu.memory_space<vmem>>, vector<1x14x28xbf16>
    %187 = vector.shape_cast %186 : vector<1x14x28xbf16> to vector<14x28xbf16>
    %cst_162 = arith.constant dense<0.000000e+00> : vector<14x1024xf32>
    %188 = tpu.matmul %187, %185, %cst_162 {dimension_numbers = #tpu.dot_dimension_numbers<[1], [0], [0], [1], [0, 0, 1, 1], [], []>} : vector<14x28xbf16>, vector<28x1024xbf16>, vector<14x1024xf32> -> vector<14x1024xf32>
    %c1_163 = arith.constant 1 : index
    %c0_164 = arith.constant 0 : index
    %c0_165 = arith.constant 0 : index
    %189 = vector.load %arg8[%c1_163, %c0_164, %c0_165] : memref<2x14x28xbf16, #tpu.memory_space<vmem>>, vector<1x14x28xbf16>
    %190 = vector.shape_cast %189 : vector<1x14x28xbf16> to vector<14x28xbf16>
    %cst_166 = arith.constant dense<0.000000e+00> : vector<14x1024xf32>
    %191 = tpu.matmul %190, %185, %cst_166 {dimension_numbers = #tpu.dot_dimension_numbers<[1], [0], [0], [1], [0, 0, 1, 1], [], []>} : vector<14x28xbf16>, vector<28x1024xbf16>, vector<14x1024xf32> -> vector<14x1024xf32>
    %192 = arith.maximumf %188, %191 : vector<14x1024xf32>
    %c0_167 = arith.constant 0 : index
    %c0_168 = arith.constant 0 : index
    %193 = vector.load %arg3[%c0_167, %c0_168] : memref<1x128xf32, #tpu.memory_space<vmem>>, vector<1x128xf32>
    %194 = vector.extract_strided_slice %192 {offsets = [0, 0], sizes = [14, 128], strides = [1, 1]} : vector<14x1024xf32> to vector<14x128xf32>
    %195 = vector.broadcast %193 : vector<1x128xf32> to vector<14x128xf32>
    %196 = arith.addf %194, %195 : vector<14x128xf32>
    %cst_169 = arith.constant 0.000000e+00 : f32
    %197 = vector.broadcast %cst_169 : f32 to vector<14x128xf32>
    %198 = arith.maximumf %196, %197 : vector<14x128xf32>
    %199 = vector.extract_strided_slice %198 {offsets = [0, 0], sizes = [12, 128], strides = [1, 1]} : vector<14x128xf32> to vector<12x128xf32>
    %200 = arith.truncf %199 : vector<12x128xf32> to vector<12x128xbf16>
    %c0_170 = arith.constant 0 : index
    %c0_171 = arith.constant 0 : index
    %c0_172 = arith.constant 0 : index
    %201 = vector.load %arg4[%c0_170, %c0_171, %c0_172] : memref<3x128x256xbf16, #tpu.memory_space<vmem>>, vector<1x128x256xbf16>
    %202 = vector.shape_cast %201 : vector<1x128x256xbf16> to vector<128x256xbf16>
    %cst_173 = arith.constant dense<0.000000e+00> : vector<12x256xf32>
    %203 = tpu.matmul %200, %202, %cst_173 {dimension_numbers = #tpu.dot_dimension_numbers<[1], [0], [0], [1], [0, 0, 1, 1], [], []>} : vector<12x128xbf16>, vector<128x256xbf16>, vector<12x256xf32> -> vector<12x256xf32>
    %204 = vector.extract_strided_slice %198 {offsets = [1, 0], sizes = [12, 128], strides = [1, 1]} : vector<14x128xf32> to vector<12x128xf32>
    %205 = arith.truncf %204 : vector<12x128xf32> to vector<12x128xbf16>
    %c1_174 = arith.constant 1 : index
    %c0_175 = arith.constant 0 : index
    %c0_176 = arith.constant 0 : index
    %206 = vector.load %arg4[%c1_174, %c0_175, %c0_176] : memref<3x128x256xbf16, #tpu.memory_space<vmem>>, vector<1x128x256xbf16>
    %207 = vector.shape_cast %206 : vector<1x128x256xbf16> to vector<128x256xbf16>
    %cst_177 = arith.constant dense<0.000000e+00> : vector<12x256xf32>
    %208 = tpu.matmul %205, %207, %cst_177 {dimension_numbers = #tpu.dot_dimension_numbers<[1], [0], [0], [1], [0, 0, 1, 1], [], []>} : vector<12x128xbf16>, vector<128x256xbf16>, vector<12x256xf32> -> vector<12x256xf32>
    %209 = arith.addf %203, %208 : vector<12x256xf32>
    %210 = vector.extract_strided_slice %198 {offsets = [2, 0], sizes = [12, 128], strides = [1, 1]} : vector<14x128xf32> to vector<12x128xf32>
    %211 = arith.truncf %210 : vector<12x128xf32> to vector<12x128xbf16>
    %c2_178 = arith.constant 2 : index
    %c0_179 = arith.constant 0 : index
    %c0_180 = arith.constant 0 : index
    %212 = vector.load %arg4[%c2_178, %c0_179, %c0_180] : memref<3x128x256xbf16, #tpu.memory_space<vmem>>, vector<1x128x256xbf16>
    %213 = vector.shape_cast %212 : vector<1x128x256xbf16> to vector<128x256xbf16>
    %cst_181 = arith.constant dense<0.000000e+00> : vector<12x256xf32>
    %214 = tpu.matmul %211, %213, %cst_181 {dimension_numbers = #tpu.dot_dimension_numbers<[1], [0], [0], [1], [0, 0, 1, 1], [], []>} : vector<12x128xbf16>, vector<128x256xbf16>, vector<12x256xf32> -> vector<12x256xf32>
    %215 = arith.addf %209, %214 : vector<12x256xf32>
    %216 = vector.extract_strided_slice %215 {offsets = [0, 0], sizes = [12, 128], strides = [1, 1]} : vector<12x256xf32> to vector<12x128xf32>
    %217 = vector.extract_strided_slice %215 {offsets = [0, 128], sizes = [12, 128], strides = [1, 1]} : vector<12x256xf32> to vector<12x128xf32>
    %218 = arith.maximumf %216, %217 : vector<12x128xf32>
    %219 = vector.extract_strided_slice %192 {offsets = [0, 128], sizes = [14, 128], strides = [1, 1]} : vector<14x1024xf32> to vector<14x128xf32>
    %220 = vector.broadcast %193 : vector<1x128xf32> to vector<14x128xf32>
    %221 = arith.addf %219, %220 : vector<14x128xf32>
    %cst_182 = arith.constant 0.000000e+00 : f32
    %222 = vector.broadcast %cst_182 : f32 to vector<14x128xf32>
    %223 = arith.maximumf %221, %222 : vector<14x128xf32>
    %224 = vector.extract_strided_slice %223 {offsets = [0, 0], sizes = [12, 128], strides = [1, 1]} : vector<14x128xf32> to vector<12x128xf32>
    %225 = arith.truncf %224 : vector<12x128xf32> to vector<12x128xbf16>
    %c0_183 = arith.constant 0 : index
    %c0_184 = arith.constant 0 : index
    %c0_185 = arith.constant 0 : index
    %226 = vector.load %arg4[%c0_183, %c0_184, %c0_185] : memref<3x128x256xbf16, #tpu.memory_space<vmem>>, vector<1x128x256xbf16>
    %227 = vector.shape_cast %226 : vector<1x128x256xbf16> to vector<128x256xbf16>
    %cst_186 = arith.constant dense<0.000000e+00> : vector<12x256xf32>
    %228 = tpu.matmul %225, %227, %cst_186 {dimension_numbers = #tpu.dot_dimension_numbers<[1], [0], [0], [1], [0, 0, 1, 1], [], []>} : vector<12x128xbf16>, vector<128x256xbf16>, vector<12x256xf32> -> vector<12x256xf32>
    %229 = vector.extract_strided_slice %223 {offsets = [1, 0], sizes = [12, 128], strides = [1, 1]} : vector<14x128xf32> to vector<12x128xf32>
    %230 = arith.truncf %229 : vector<12x128xf32> to vector<12x128xbf16>
    %c1_187 = arith.constant 1 : index
    %c0_188 = arith.constant 0 : index
    %c0_189 = arith.constant 0 : index
    %231 = vector.load %arg4[%c1_187, %c0_188, %c0_189] : memref<3x128x256xbf16, #tpu.memory_space<vmem>>, vector<1x128x256xbf16>
    %232 = vector.shape_cast %231 : vector<1x128x256xbf16> to vector<128x256xbf16>
    %cst_190 = arith.constant dense<0.000000e+00> : vector<12x256xf32>
    %233 = tpu.matmul %230, %232, %cst_190 {dimension_numbers = #tpu.dot_dimension_numbers<[1], [0], [0], [1], [0, 0, 1, 1], [], []>} : vector<12x128xbf16>, vector<128x256xbf16>, vector<12x256xf32> -> vector<12x256xf32>
    %234 = arith.addf %228, %233 : vector<12x256xf32>
    %235 = vector.extract_strided_slice %223 {offsets = [2, 0], sizes = [12, 128], strides = [1, 1]} : vector<14x128xf32> to vector<12x128xf32>
    %236 = arith.truncf %235 : vector<12x128xf32> to vector<12x128xbf16>
    %c2_191 = arith.constant 2 : index
    %c0_192 = arith.constant 0 : index
    %c0_193 = arith.constant 0 : index
    %237 = vector.load %arg4[%c2_191, %c0_192, %c0_193] : memref<3x128x256xbf16, #tpu.memory_space<vmem>>, vector<1x128x256xbf16>
    %238 = vector.shape_cast %237 : vector<1x128x256xbf16> to vector<128x256xbf16>
    %cst_194 = arith.constant dense<0.000000e+00> : vector<12x256xf32>
    %239 = tpu.matmul %236, %238, %cst_194 {dimension_numbers = #tpu.dot_dimension_numbers<[1], [0], [0], [1], [0, 0, 1, 1], [], []>} : vector<12x128xbf16>, vector<128x256xbf16>, vector<12x256xf32> -> vector<12x256xf32>
    %240 = arith.addf %234, %239 : vector<12x256xf32>
    %241 = vector.extract_strided_slice %240 {offsets = [0, 0], sizes = [12, 128], strides = [1, 1]} : vector<12x256xf32> to vector<12x128xf32>
    %242 = vector.extract_strided_slice %240 {offsets = [0, 128], sizes = [12, 128], strides = [1, 1]} : vector<12x256xf32> to vector<12x128xf32>
    %243 = arith.maximumf %241, %242 : vector<12x128xf32>
    %244 = vector.extract_strided_slice %192 {offsets = [0, 256], sizes = [14, 128], strides = [1, 1]} : vector<14x1024xf32> to vector<14x128xf32>
    %245 = vector.broadcast %193 : vector<1x128xf32> to vector<14x128xf32>
    %246 = arith.addf %244, %245 : vector<14x128xf32>
    %cst_195 = arith.constant 0.000000e+00 : f32
    %247 = vector.broadcast %cst_195 : f32 to vector<14x128xf32>
    %248 = arith.maximumf %246, %247 : vector<14x128xf32>
    %249 = vector.extract_strided_slice %248 {offsets = [0, 0], sizes = [12, 128], strides = [1, 1]} : vector<14x128xf32> to vector<12x128xf32>
    %250 = arith.truncf %249 : vector<12x128xf32> to vector<12x128xbf16>
    %c0_196 = arith.constant 0 : index
    %c0_197 = arith.constant 0 : index
    %c0_198 = arith.constant 0 : index
    %251 = vector.load %arg4[%c0_196, %c0_197, %c0_198] : memref<3x128x256xbf16, #tpu.memory_space<vmem>>, vector<1x128x256xbf16>
    %252 = vector.shape_cast %251 : vector<1x128x256xbf16> to vector<128x256xbf16>
    %cst_199 = arith.constant dense<0.000000e+00> : vector<12x256xf32>
    %253 = tpu.matmul %250, %252, %cst_199 {dimension_numbers = #tpu.dot_dimension_numbers<[1], [0], [0], [1], [0, 0, 1, 1], [], []>} : vector<12x128xbf16>, vector<128x256xbf16>, vector<12x256xf32> -> vector<12x256xf32>
    %254 = vector.extract_strided_slice %248 {offsets = [1, 0], sizes = [12, 128], strides = [1, 1]} : vector<14x128xf32> to vector<12x128xf32>
    %255 = arith.truncf %254 : vector<12x128xf32> to vector<12x128xbf16>
    %c1_200 = arith.constant 1 : index
    %c0_201 = arith.constant 0 : index
    %c0_202 = arith.constant 0 : index
    %256 = vector.load %arg4[%c1_200, %c0_201, %c0_202] : memref<3x128x256xbf16, #tpu.memory_space<vmem>>, vector<1x128x256xbf16>
    %257 = vector.shape_cast %256 : vector<1x128x256xbf16> to vector<128x256xbf16>
    %cst_203 = arith.constant dense<0.000000e+00> : vector<12x256xf32>
    %258 = tpu.matmul %255, %257, %cst_203 {dimension_numbers = #tpu.dot_dimension_numbers<[1], [0], [0], [1], [0, 0, 1, 1], [], []>} : vector<12x128xbf16>, vector<128x256xbf16>, vector<12x256xf32> -> vector<12x256xf32>
    %259 = arith.addf %253, %258 : vector<12x256xf32>
    %260 = vector.extract_strided_slice %248 {offsets = [2, 0], sizes = [12, 128], strides = [1, 1]} : vector<14x128xf32> to vector<12x128xf32>
    %261 = arith.truncf %260 : vector<12x128xf32> to vector<12x128xbf16>
    %c2_204 = arith.constant 2 : index
    %c0_205 = arith.constant 0 : index
    %c0_206 = arith.constant 0 : index
    %262 = vector.load %arg4[%c2_204, %c0_205, %c0_206] : memref<3x128x256xbf16, #tpu.memory_space<vmem>>, vector<1x128x256xbf16>
    %263 = vector.shape_cast %262 : vector<1x128x256xbf16> to vector<128x256xbf16>
    %cst_207 = arith.constant dense<0.000000e+00> : vector<12x256xf32>
    %264 = tpu.matmul %261, %263, %cst_207 {dimension_numbers = #tpu.dot_dimension_numbers<[1], [0], [0], [1], [0, 0, 1, 1], [], []>} : vector<12x128xbf16>, vector<128x256xbf16>, vector<12x256xf32> -> vector<12x256xf32>
    %265 = arith.addf %259, %264 : vector<12x256xf32>
    %266 = vector.extract_strided_slice %265 {offsets = [0, 0], sizes = [12, 128], strides = [1, 1]} : vector<12x256xf32> to vector<12x128xf32>
    %267 = vector.extract_strided_slice %265 {offsets = [0, 128], sizes = [12, 128], strides = [1, 1]} : vector<12x256xf32> to vector<12x128xf32>
    %268 = arith.maximumf %266, %267 : vector<12x128xf32>
    %269 = vector.extract_strided_slice %192 {offsets = [0, 384], sizes = [14, 128], strides = [1, 1]} : vector<14x1024xf32> to vector<14x128xf32>
    %270 = vector.broadcast %193 : vector<1x128xf32> to vector<14x128xf32>
    %271 = arith.addf %269, %270 : vector<14x128xf32>
    %cst_208 = arith.constant 0.000000e+00 : f32
    %272 = vector.broadcast %cst_208 : f32 to vector<14x128xf32>
    %273 = arith.maximumf %271, %272 : vector<14x128xf32>
    %274 = vector.extract_strided_slice %273 {offsets = [0, 0], sizes = [12, 128], strides = [1, 1]} : vector<14x128xf32> to vector<12x128xf32>
    %275 = arith.truncf %274 : vector<12x128xf32> to vector<12x128xbf16>
    %c0_209 = arith.constant 0 : index
    %c0_210 = arith.constant 0 : index
    %c0_211 = arith.constant 0 : index
    %276 = vector.load %arg4[%c0_209, %c0_210, %c0_211] : memref<3x128x256xbf16, #tpu.memory_space<vmem>>, vector<1x128x256xbf16>
    %277 = vector.shape_cast %276 : vector<1x128x256xbf16> to vector<128x256xbf16>
    %cst_212 = arith.constant dense<0.000000e+00> : vector<12x256xf32>
    %278 = tpu.matmul %275, %277, %cst_212 {dimension_numbers = #tpu.dot_dimension_numbers<[1], [0], [0], [1], [0, 0, 1, 1], [], []>} : vector<12x128xbf16>, vector<128x256xbf16>, vector<12x256xf32> -> vector<12x256xf32>
    %279 = vector.extract_strided_slice %273 {offsets = [1, 0], sizes = [12, 128], strides = [1, 1]} : vector<14x128xf32> to vector<12x128xf32>
    %280 = arith.truncf %279 : vector<12x128xf32> to vector<12x128xbf16>
    %c1_213 = arith.constant 1 : index
    %c0_214 = arith.constant 0 : index
    %c0_215 = arith.constant 0 : index
    %281 = vector.load %arg4[%c1_213, %c0_214, %c0_215] : memref<3x128x256xbf16, #tpu.memory_space<vmem>>, vector<1x128x256xbf16>
    %282 = vector.shape_cast %281 : vector<1x128x256xbf16> to vector<128x256xbf16>
    %cst_216 = arith.constant dense<0.000000e+00> : vector<12x256xf32>
    %283 = tpu.matmul %280, %282, %cst_216 {dimension_numbers = #tpu.dot_dimension_numbers<[1], [0], [0], [1], [0, 0, 1, 1], [], []>} : vector<12x128xbf16>, vector<128x256xbf16>, vector<12x256xf32> -> vector<12x256xf32>
    %284 = arith.addf %278, %283 : vector<12x256xf32>
    %285 = vector.extract_strided_slice %273 {offsets = [2, 0], sizes = [12, 128], strides = [1, 1]} : vector<14x128xf32> to vector<12x128xf32>
    %286 = arith.truncf %285 : vector<12x128xf32> to vector<12x128xbf16>
    %c2_217 = arith.constant 2 : index
    %c0_218 = arith.constant 0 : index
    %c0_219 = arith.constant 0 : index
    %287 = vector.load %arg4[%c2_217, %c0_218, %c0_219] : memref<3x128x256xbf16, #tpu.memory_space<vmem>>, vector<1x128x256xbf16>
    %288 = vector.shape_cast %287 : vector<1x128x256xbf16> to vector<128x256xbf16>
    %cst_220 = arith.constant dense<0.000000e+00> : vector<12x256xf32>
    %289 = tpu.matmul %286, %288, %cst_220 {dimension_numbers = #tpu.dot_dimension_numbers<[1], [0], [0], [1], [0, 0, 1, 1], [], []>} : vector<12x128xbf16>, vector<128x256xbf16>, vector<12x256xf32> -> vector<12x256xf32>
    %290 = arith.addf %284, %289 : vector<12x256xf32>
    %291 = vector.extract_strided_slice %290 {offsets = [0, 0], sizes = [12, 128], strides = [1, 1]} : vector<12x256xf32> to vector<12x128xf32>
    %292 = vector.extract_strided_slice %290 {offsets = [0, 128], sizes = [12, 128], strides = [1, 1]} : vector<12x256xf32> to vector<12x128xf32>
    %293 = arith.maximumf %291, %292 : vector<12x128xf32>
    %294 = vector.extract_strided_slice %192 {offsets = [0, 512], sizes = [14, 128], strides = [1, 1]} : vector<14x1024xf32> to vector<14x128xf32>
    %295 = vector.broadcast %193 : vector<1x128xf32> to vector<14x128xf32>
    %296 = arith.addf %294, %295 : vector<14x128xf32>
    %cst_221 = arith.constant 0.000000e+00 : f32
    %297 = vector.broadcast %cst_221 : f32 to vector<14x128xf32>
    %298 = arith.maximumf %296, %297 : vector<14x128xf32>
    %299 = vector.extract_strided_slice %298 {offsets = [0, 0], sizes = [12, 128], strides = [1, 1]} : vector<14x128xf32> to vector<12x128xf32>
    %300 = arith.truncf %299 : vector<12x128xf32> to vector<12x128xbf16>
    %c0_222 = arith.constant 0 : index
    %c0_223 = arith.constant 0 : index
    %c0_224 = arith.constant 0 : index
    %301 = vector.load %arg4[%c0_222, %c0_223, %c0_224] : memref<3x128x256xbf16, #tpu.memory_space<vmem>>, vector<1x128x256xbf16>
    %302 = vector.shape_cast %301 : vector<1x128x256xbf16> to vector<128x256xbf16>
    %cst_225 = arith.constant dense<0.000000e+00> : vector<12x256xf32>
    %303 = tpu.matmul %300, %302, %cst_225 {dimension_numbers = #tpu.dot_dimension_numbers<[1], [0], [0], [1], [0, 0, 1, 1], [], []>} : vector<12x128xbf16>, vector<128x256xbf16>, vector<12x256xf32> -> vector<12x256xf32>
    %304 = vector.extract_strided_slice %298 {offsets = [1, 0], sizes = [12, 128], strides = [1, 1]} : vector<14x128xf32> to vector<12x128xf32>
    %305 = arith.truncf %304 : vector<12x128xf32> to vector<12x128xbf16>
    %c1_226 = arith.constant 1 : index
    %c0_227 = arith.constant 0 : index
    %c0_228 = arith.constant 0 : index
    %306 = vector.load %arg4[%c1_226, %c0_227, %c0_228] : memref<3x128x256xbf16, #tpu.memory_space<vmem>>, vector<1x128x256xbf16>
    %307 = vector.shape_cast %306 : vector<1x128x256xbf16> to vector<128x256xbf16>
    %cst_229 = arith.constant dense<0.000000e+00> : vector<12x256xf32>
    %308 = tpu.matmul %305, %307, %cst_229 {dimension_numbers = #tpu.dot_dimension_numbers<[1], [0], [0], [1], [0, 0, 1, 1], [], []>} : vector<12x128xbf16>, vector<128x256xbf16>, vector<12x256xf32> -> vector<12x256xf32>
    %309 = arith.addf %303, %308 : vector<12x256xf32>
    %310 = vector.extract_strided_slice %298 {offsets = [2, 0], sizes = [12, 128], strides = [1, 1]} : vector<14x128xf32> to vector<12x128xf32>
    %311 = arith.truncf %310 : vector<12x128xf32> to vector<12x128xbf16>
    %c2_230 = arith.constant 2 : index
    %c0_231 = arith.constant 0 : index
    %c0_232 = arith.constant 0 : index
    %312 = vector.load %arg4[%c2_230, %c0_231, %c0_232] : memref<3x128x256xbf16, #tpu.memory_space<vmem>>, vector<1x128x256xbf16>
    %313 = vector.shape_cast %312 : vector<1x128x256xbf16> to vector<128x256xbf16>
    %cst_233 = arith.constant dense<0.000000e+00> : vector<12x256xf32>
    %314 = tpu.matmul %311, %313, %cst_233 {dimension_numbers = #tpu.dot_dimension_numbers<[1], [0], [0], [1], [0, 0, 1, 1], [], []>} : vector<12x128xbf16>, vector<128x256xbf16>, vector<12x256xf32> -> vector<12x256xf32>
    %315 = arith.addf %309, %314 : vector<12x256xf32>
    %316 = vector.extract_strided_slice %315 {offsets = [0, 0], sizes = [12, 128], strides = [1, 1]} : vector<12x256xf32> to vector<12x128xf32>
    %317 = vector.extract_strided_slice %315 {offsets = [0, 128], sizes = [12, 128], strides = [1, 1]} : vector<12x256xf32> to vector<12x128xf32>
    %318 = arith.maximumf %316, %317 : vector<12x128xf32>
    %319 = vector.extract_strided_slice %192 {offsets = [0, 640], sizes = [14, 128], strides = [1, 1]} : vector<14x1024xf32> to vector<14x128xf32>
    %320 = vector.broadcast %193 : vector<1x128xf32> to vector<14x128xf32>
    %321 = arith.addf %319, %320 : vector<14x128xf32>
    %cst_234 = arith.constant 0.000000e+00 : f32
    %322 = vector.broadcast %cst_234 : f32 to vector<14x128xf32>
    %323 = arith.maximumf %321, %322 : vector<14x128xf32>
    %324 = vector.extract_strided_slice %323 {offsets = [0, 0], sizes = [12, 128], strides = [1, 1]} : vector<14x128xf32> to vector<12x128xf32>
    %325 = arith.truncf %324 : vector<12x128xf32> to vector<12x128xbf16>
    %c0_235 = arith.constant 0 : index
    %c0_236 = arith.constant 0 : index
    %c0_237 = arith.constant 0 : index
    %326 = vector.load %arg4[%c0_235, %c0_236, %c0_237] : memref<3x128x256xbf16, #tpu.memory_space<vmem>>, vector<1x128x256xbf16>
    %327 = vector.shape_cast %326 : vector<1x128x256xbf16> to vector<128x256xbf16>
    %cst_238 = arith.constant dense<0.000000e+00> : vector<12x256xf32>
    %328 = tpu.matmul %325, %327, %cst_238 {dimension_numbers = #tpu.dot_dimension_numbers<[1], [0], [0], [1], [0, 0, 1, 1], [], []>} : vector<12x128xbf16>, vector<128x256xbf16>, vector<12x256xf32> -> vector<12x256xf32>
    %329 = vector.extract_strided_slice %323 {offsets = [1, 0], sizes = [12, 128], strides = [1, 1]} : vector<14x128xf32> to vector<12x128xf32>
    %330 = arith.truncf %329 : vector<12x128xf32> to vector<12x128xbf16>
    %c1_239 = arith.constant 1 : index
    %c0_240 = arith.constant 0 : index
    %c0_241 = arith.constant 0 : index
    %331 = vector.load %arg4[%c1_239, %c0_240, %c0_241] : memref<3x128x256xbf16, #tpu.memory_space<vmem>>, vector<1x128x256xbf16>
    %332 = vector.shape_cast %331 : vector<1x128x256xbf16> to vector<128x256xbf16>
    %cst_242 = arith.constant dense<0.000000e+00> : vector<12x256xf32>
    %333 = tpu.matmul %330, %332, %cst_242 {dimension_numbers = #tpu.dot_dimension_numbers<[1], [0], [0], [1], [0, 0, 1, 1], [], []>} : vector<12x128xbf16>, vector<128x256xbf16>, vector<12x256xf32> -> vector<12x256xf32>
    %334 = arith.addf %328, %333 : vector<12x256xf32>
    %335 = vector.extract_strided_slice %323 {offsets = [2, 0], sizes = [12, 128], strides = [1, 1]} : vector<14x128xf32> to vector<12x128xf32>
    %336 = arith.truncf %335 : vector<12x128xf32> to vector<12x128xbf16>
    %c2_243 = arith.constant 2 : index
    %c0_244 = arith.constant 0 : index
    %c0_245 = arith.constant 0 : index
    %337 = vector.load %arg4[%c2_243, %c0_244, %c0_245] : memref<3x128x256xbf16, #tpu.memory_space<vmem>>, vector<1x128x256xbf16>
    %338 = vector.shape_cast %337 : vector<1x128x256xbf16> to vector<128x256xbf16>
    %cst_246 = arith.constant dense<0.000000e+00> : vector<12x256xf32>
    %339 = tpu.matmul %336, %338, %cst_246 {dimension_numbers = #tpu.dot_dimension_numbers<[1], [0], [0], [1], [0, 0, 1, 1], [], []>} : vector<12x128xbf16>, vector<128x256xbf16>, vector<12x256xf32> -> vector<12x256xf32>
    %340 = arith.addf %334, %339 : vector<12x256xf32>
    %341 = vector.extract_strided_slice %340 {offsets = [0, 0], sizes = [12, 128], strides = [1, 1]} : vector<12x256xf32> to vector<12x128xf32>
    %342 = vector.extract_strided_slice %340 {offsets = [0, 128], sizes = [12, 128], strides = [1, 1]} : vector<12x256xf32> to vector<12x128xf32>
    %343 = arith.maximumf %341, %342 : vector<12x128xf32>
    %344 = vector.extract_strided_slice %192 {offsets = [0, 768], sizes = [14, 128], strides = [1, 1]} : vector<14x1024xf32> to vector<14x128xf32>
    %345 = vector.broadcast %193 : vector<1x128xf32> to vector<14x128xf32>
    %346 = arith.addf %344, %345 : vector<14x128xf32>
    %cst_247 = arith.constant 0.000000e+00 : f32
    %347 = vector.broadcast %cst_247 : f32 to vector<14x128xf32>
    %348 = arith.maximumf %346, %347 : vector<14x128xf32>
    %349 = vector.extract_strided_slice %348 {offsets = [0, 0], sizes = [12, 128], strides = [1, 1]} : vector<14x128xf32> to vector<12x128xf32>
    %350 = arith.truncf %349 : vector<12x128xf32> to vector<12x128xbf16>
    %c0_248 = arith.constant 0 : index
    %c0_249 = arith.constant 0 : index
    %c0_250 = arith.constant 0 : index
    %351 = vector.load %arg4[%c0_248, %c0_249, %c0_250] : memref<3x128x256xbf16, #tpu.memory_space<vmem>>, vector<1x128x256xbf16>
    %352 = vector.shape_cast %351 : vector<1x128x256xbf16> to vector<128x256xbf16>
    %cst_251 = arith.constant dense<0.000000e+00> : vector<12x256xf32>
    %353 = tpu.matmul %350, %352, %cst_251 {dimension_numbers = #tpu.dot_dimension_numbers<[1], [0], [0], [1], [0, 0, 1, 1], [], []>} : vector<12x128xbf16>, vector<128x256xbf16>, vector<12x256xf32> -> vector<12x256xf32>
    %354 = vector.extract_strided_slice %348 {offsets = [1, 0], sizes = [12, 128], strides = [1, 1]} : vector<14x128xf32> to vector<12x128xf32>
    %355 = arith.truncf %354 : vector<12x128xf32> to vector<12x128xbf16>
    %c1_252 = arith.constant 1 : index
    %c0_253 = arith.constant 0 : index
    %c0_254 = arith.constant 0 : index
    %356 = vector.load %arg4[%c1_252, %c0_253, %c0_254] : memref<3x128x256xbf16, #tpu.memory_space<vmem>>, vector<1x128x256xbf16>
    %357 = vector.shape_cast %356 : vector<1x128x256xbf16> to vector<128x256xbf16>
    %cst_255 = arith.constant dense<0.000000e+00> : vector<12x256xf32>
    %358 = tpu.matmul %355, %357, %cst_255 {dimension_numbers = #tpu.dot_dimension_numbers<[1], [0], [0], [1], [0, 0, 1, 1], [], []>} : vector<12x128xbf16>, vector<128x256xbf16>, vector<12x256xf32> -> vector<12x256xf32>
    %359 = arith.addf %353, %358 : vector<12x256xf32>
    %360 = vector.extract_strided_slice %348 {offsets = [2, 0], sizes = [12, 128], strides = [1, 1]} : vector<14x128xf32> to vector<12x128xf32>
    %361 = arith.truncf %360 : vector<12x128xf32> to vector<12x128xbf16>
    %c2_256 = arith.constant 2 : index
    %c0_257 = arith.constant 0 : index
    %c0_258 = arith.constant 0 : index
    %362 = vector.load %arg4[%c2_256, %c0_257, %c0_258] : memref<3x128x256xbf16, #tpu.memory_space<vmem>>, vector<1x128x256xbf16>
    %363 = vector.shape_cast %362 : vector<1x128x256xbf16> to vector<128x256xbf16>
    %cst_259 = arith.constant dense<0.000000e+00> : vector<12x256xf32>
    %364 = tpu.matmul %361, %363, %cst_259 {dimension_numbers = #tpu.dot_dimension_numbers<[1], [0], [0], [1], [0, 0, 1, 1], [], []>} : vector<12x128xbf16>, vector<128x256xbf16>, vector<12x256xf32> -> vector<12x256xf32>
    %365 = arith.addf %359, %364 : vector<12x256xf32>
    %366 = vector.extract_strided_slice %365 {offsets = [0, 0], sizes = [12, 128], strides = [1, 1]} : vector<12x256xf32> to vector<12x128xf32>
    %367 = vector.extract_strided_slice %365 {offsets = [0, 128], sizes = [12, 128], strides = [1, 1]} : vector<12x256xf32> to vector<12x128xf32>
    %368 = arith.maximumf %366, %367 : vector<12x128xf32>
    %369 = vector.extract_strided_slice %192 {offsets = [0, 896], sizes = [14, 128], strides = [1, 1]} : vector<14x1024xf32> to vector<14x128xf32>
    %370 = vector.broadcast %193 : vector<1x128xf32> to vector<14x128xf32>
    %371 = arith.addf %369, %370 : vector<14x128xf32>
    %cst_260 = arith.constant 0.000000e+00 : f32
    %372 = vector.broadcast %cst_260 : f32 to vector<14x128xf32>
    %373 = arith.maximumf %371, %372 : vector<14x128xf32>
    %374 = vector.extract_strided_slice %373 {offsets = [0, 0], sizes = [12, 128], strides = [1, 1]} : vector<14x128xf32> to vector<12x128xf32>
    %375 = arith.truncf %374 : vector<12x128xf32> to vector<12x128xbf16>
    %c0_261 = arith.constant 0 : index
    %c0_262 = arith.constant 0 : index
    %c0_263 = arith.constant 0 : index
    %376 = vector.load %arg4[%c0_261, %c0_262, %c0_263] : memref<3x128x256xbf16, #tpu.memory_space<vmem>>, vector<1x128x256xbf16>
    %377 = vector.shape_cast %376 : vector<1x128x256xbf16> to vector<128x256xbf16>
    %cst_264 = arith.constant dense<0.000000e+00> : vector<12x256xf32>
    %378 = tpu.matmul %375, %377, %cst_264 {dimension_numbers = #tpu.dot_dimension_numbers<[1], [0], [0], [1], [0, 0, 1, 1], [], []>} : vector<12x128xbf16>, vector<128x256xbf16>, vector<12x256xf32> -> vector<12x256xf32>
    %379 = vector.extract_strided_slice %373 {offsets = [1, 0], sizes = [12, 128], strides = [1, 1]} : vector<14x128xf32> to vector<12x128xf32>
    %380 = arith.truncf %379 : vector<12x128xf32> to vector<12x128xbf16>
    %c1_265 = arith.constant 1 : index
    %c0_266 = arith.constant 0 : index
    %c0_267 = arith.constant 0 : index
    %381 = vector.load %arg4[%c1_265, %c0_266, %c0_267] : memref<3x128x256xbf16, #tpu.memory_space<vmem>>, vector<1x128x256xbf16>
    %382 = vector.shape_cast %381 : vector<1x128x256xbf16> to vector<128x256xbf16>
    %cst_268 = arith.constant dense<0.000000e+00> : vector<12x256xf32>
    %383 = tpu.matmul %380, %382, %cst_268 {dimension_numbers = #tpu.dot_dimension_numbers<[1], [0], [0], [1], [0, 0, 1, 1], [], []>} : vector<12x128xbf16>, vector<128x256xbf16>, vector<12x256xf32> -> vector<12x256xf32>
    %384 = arith.addf %378, %383 : vector<12x256xf32>
    %385 = vector.extract_strided_slice %373 {offsets = [2, 0], sizes = [12, 128], strides = [1, 1]} : vector<14x128xf32> to vector<12x128xf32>
    %386 = arith.truncf %385 : vector<12x128xf32> to vector<12x128xbf16>
    %c2_269 = arith.constant 2 : index
    %c0_270 = arith.constant 0 : index
    %c0_271 = arith.constant 0 : index
    %387 = vector.load %arg4[%c2_269, %c0_270, %c0_271] : memref<3x128x256xbf16, #tpu.memory_space<vmem>>, vector<1x128x256xbf16>
    %388 = vector.shape_cast %387 : vector<1x128x256xbf16> to vector<128x256xbf16>
    %cst_272 = arith.constant dense<0.000000e+00> : vector<12x256xf32>
    %389 = tpu.matmul %386, %388, %cst_272 {dimension_numbers = #tpu.dot_dimension_numbers<[1], [0], [0], [1], [0, 0, 1, 1], [], []>} : vector<12x128xbf16>, vector<128x256xbf16>, vector<12x256xf32> -> vector<12x256xf32>
    %390 = arith.addf %384, %389 : vector<12x256xf32>
    %391 = vector.extract_strided_slice %390 {offsets = [0, 0], sizes = [12, 128], strides = [1, 1]} : vector<12x256xf32> to vector<12x128xf32>
    %392 = vector.extract_strided_slice %390 {offsets = [0, 128], sizes = [12, 128], strides = [1, 1]} : vector<12x256xf32> to vector<12x128xf32>
    %393 = arith.maximumf %391, %392 : vector<12x128xf32>
    %394 = tpu.concatenate %218, %243, %268, %293, %318, %343, %368, %393 in 1 : vector<12x128xf32>, vector<12x128xf32>, vector<12x128xf32>, vector<12x128xf32>, vector<12x128xf32>, vector<12x128xf32>, vector<12x128xf32>, vector<12x128xf32> -> vector<12x1024xf32>
    %395 = arith.truncf %394 : vector<12x1024xf32> to vector<12x1024xbf16>
    %c0_273 = arith.constant 0 : index
    %c0_274 = arith.constant 0 : index
    %c0_275 = arith.constant 0 : index
    %396 = vector.load %arg9[%c0_273, %c0_274, %c0_275] : memref<2x6x12xbf16, #tpu.memory_space<vmem>>, vector<1x6x12xbf16>
    %397 = vector.shape_cast %396 : vector<1x6x12xbf16> to vector<6x12xbf16>
    %cst_276 = arith.constant dense<0.000000e+00> : vector<6x1024xf32>
    %398 = tpu.matmul %397, %395, %cst_276 {dimension_numbers = #tpu.dot_dimension_numbers<[1], [0], [0], [1], [0, 0, 1, 1], [], []>} : vector<6x12xbf16>, vector<12x1024xbf16>, vector<6x1024xf32> -> vector<6x1024xf32>
    %c1_277 = arith.constant 1 : index
    %c0_278 = arith.constant 0 : index
    %c0_279 = arith.constant 0 : index
    %399 = vector.load %arg9[%c1_277, %c0_278, %c0_279] : memref<2x6x12xbf16, #tpu.memory_space<vmem>>, vector<1x6x12xbf16>
    %400 = vector.shape_cast %399 : vector<1x6x12xbf16> to vector<6x12xbf16>
    %cst_280 = arith.constant dense<0.000000e+00> : vector<6x1024xf32>
    %401 = tpu.matmul %400, %395, %cst_280 {dimension_numbers = #tpu.dot_dimension_numbers<[1], [0], [0], [1], [0, 0, 1, 1], [], []>} : vector<6x12xbf16>, vector<12x1024xbf16>, vector<6x1024xf32> -> vector<6x1024xf32>
    %402 = arith.maximumf %398, %401 : vector<6x1024xf32>
    %c0_281 = arith.constant 0 : index
    %c0_282 = arith.constant 0 : index
    %403 = vector.load %arg5[%c0_281, %c0_282] : memref<1x128xf32, #tpu.memory_space<vmem>>, vector<1x128xf32>
    %c0_283 = arith.constant 0 : index
    %c0_284 = arith.constant 0 : index
    %404 = vector.load %arg7[%c0_283, %c0_284] : memref<1x128xf32, #tpu.memory_space<vmem>>, vector<1x128xf32>
    %405 = vector.extract_strided_slice %402 {offsets = [0, 0], sizes = [6, 128], strides = [1, 1]} : vector<6x1024xf32> to vector<6x128xf32>
    %406 = vector.broadcast %403 : vector<1x128xf32> to vector<6x128xf32>
    %407 = arith.addf %405, %406 : vector<6x128xf32>
    %cst_285 = arith.constant 0.000000e+00 : f32
    %408 = vector.broadcast %cst_285 : f32 to vector<6x128xf32>
    %409 = arith.maximumf %407, %408 : vector<6x128xf32>
    %410 = vector.extract_strided_slice %409 {offsets = [0, 0], sizes = [4, 128], strides = [1, 1]} : vector<6x128xf32> to vector<4x128xf32>
    %411 = arith.truncf %410 : vector<4x128xf32> to vector<4x128xbf16>
    %c0_286 = arith.constant 0 : index
    %c0_287 = arith.constant 0 : index
    %c0_288 = arith.constant 0 : index
    %412 = vector.load %arg6[%c0_286, %c0_287, %c0_288] : memref<3x128x128xbf16, #tpu.memory_space<vmem>>, vector<1x128x128xbf16>
    %413 = vector.shape_cast %412 : vector<1x128x128xbf16> to vector<128x128xbf16>
    %cst_289 = arith.constant dense<0.000000e+00> : vector<4x128xf32>
    %414 = tpu.matmul %411, %413, %cst_289 {dimension_numbers = #tpu.dot_dimension_numbers<[1], [0], [0], [1], [0, 0, 1, 1], [], []>} : vector<4x128xbf16>, vector<128x128xbf16>, vector<4x128xf32> -> vector<4x128xf32>
    %415 = vector.extract_strided_slice %409 {offsets = [1, 0], sizes = [4, 128], strides = [1, 1]} : vector<6x128xf32> to vector<4x128xf32>
    %416 = arith.truncf %415 : vector<4x128xf32> to vector<4x128xbf16>
    %c1_290 = arith.constant 1 : index
    %c0_291 = arith.constant 0 : index
    %c0_292 = arith.constant 0 : index
    %417 = vector.load %arg6[%c1_290, %c0_291, %c0_292] : memref<3x128x128xbf16, #tpu.memory_space<vmem>>, vector<1x128x128xbf16>
    %418 = vector.shape_cast %417 : vector<1x128x128xbf16> to vector<128x128xbf16>
    %cst_293 = arith.constant dense<0.000000e+00> : vector<4x128xf32>
    %419 = tpu.matmul %416, %418, %cst_293 {dimension_numbers = #tpu.dot_dimension_numbers<[1], [0], [0], [1], [0, 0, 1, 1], [], []>} : vector<4x128xbf16>, vector<128x128xbf16>, vector<4x128xf32> -> vector<4x128xf32>
    %420 = arith.addf %414, %419 : vector<4x128xf32>
    %421 = vector.extract_strided_slice %409 {offsets = [2, 0], sizes = [4, 128], strides = [1, 1]} : vector<6x128xf32> to vector<4x128xf32>
    %422 = arith.truncf %421 : vector<4x128xf32> to vector<4x128xbf16>
    %c2_294 = arith.constant 2 : index
    %c0_295 = arith.constant 0 : index
    %c0_296 = arith.constant 0 : index
    %423 = vector.load %arg6[%c2_294, %c0_295, %c0_296] : memref<3x128x128xbf16, #tpu.memory_space<vmem>>, vector<1x128x128xbf16>
    %424 = vector.shape_cast %423 : vector<1x128x128xbf16> to vector<128x128xbf16>
    %cst_297 = arith.constant dense<0.000000e+00> : vector<4x128xf32>
    %425 = tpu.matmul %422, %424, %cst_297 {dimension_numbers = #tpu.dot_dimension_numbers<[1], [0], [0], [1], [0, 0, 1, 1], [], []>} : vector<4x128xbf16>, vector<128x128xbf16>, vector<4x128xf32> -> vector<4x128xf32>
    %426 = arith.addf %420, %425 : vector<4x128xf32>
    %427 = vector.broadcast %404 : vector<1x128xf32> to vector<4x128xf32>
    %428 = arith.addf %426, %427 : vector<4x128xf32>
    %cst_298 = arith.constant 0.000000e+00 : f32
    %429 = vector.broadcast %cst_298 : f32 to vector<4x128xf32>
    %430 = arith.maximumf %428, %429 : vector<4x128xf32>
    %431 = arith.truncf %430 : vector<4x128xf32> to vector<4x128xbf16>
    %c0_299 = arith.constant 0 : index
    %c0_300 = arith.constant 0 : index
    %c0_301 = arith.constant 0 : index
    %432 = vector.load %arg17[%c0_299, %c0_300, %c0_301] : memref<4x8x128xbf16, #tpu.memory_space<vmem>>, vector<4x1x128xbf16>
    %433 = vector.shape_cast %432 : vector<4x1x128xbf16> to vector<4x128xbf16>
    %434 = vector.shape_cast %431 : vector<4x128xbf16> to vector<4x1x128xbf16>
    tpu.vector_store %arg17[%c0_299, %c0_300, %c0_301], %434 {strides = array<i32>} : memref<4x8x128xbf16, #tpu.memory_space<vmem>>, vector<4x1x128xbf16>,
    %435 = vector.extract_strided_slice %402 {offsets = [0, 128], sizes = [6, 128], strides = [1, 1]} : vector<6x1024xf32> to vector<6x128xf32>
    %436 = vector.broadcast %403 : vector<1x128xf32> to vector<6x128xf32>
    %437 = arith.addf %435, %436 : vector<6x128xf32>
    %cst_302 = arith.constant 0.000000e+00 : f32
    %438 = vector.broadcast %cst_302 : f32 to vector<6x128xf32>
    %439 = arith.maximumf %437, %438 : vector<6x128xf32>
    %440 = vector.extract_strided_slice %439 {offsets = [0, 0], sizes = [4, 128], strides = [1, 1]} : vector<6x128xf32> to vector<4x128xf32>
    %441 = arith.truncf %440 : vector<4x128xf32> to vector<4x128xbf16>
    %c0_303 = arith.constant 0 : index
    %c0_304 = arith.constant 0 : index
    %c0_305 = arith.constant 0 : index
    %442 = vector.load %arg6[%c0_303, %c0_304, %c0_305] : memref<3x128x128xbf16, #tpu.memory_space<vmem>>, vector<1x128x128xbf16>
    %443 = vector.shape_cast %442 : vector<1x128x128xbf16> to vector<128x128xbf16>
    %cst_306 = arith.constant dense<0.000000e+00> : vector<4x128xf32>
    %444 = tpu.matmul %441, %443, %cst_306 {dimension_numbers = #tpu.dot_dimension_numbers<[1], [0], [0], [1], [0, 0, 1, 1], [], []>} : vector<4x128xbf16>, vector<128x128xbf16>, vector<4x128xf32> -> vector<4x128xf32>
    %445 = vector.extract_strided_slice %439 {offsets = [1, 0], sizes = [4, 128], strides = [1, 1]} : vector<6x128xf32> to vector<4x128xf32>
    %446 = arith.truncf %445 : vector<4x128xf32> to vector<4x128xbf16>
    %c1_307 = arith.constant 1 : index
    %c0_308 = arith.constant 0 : index
    %c0_309 = arith.constant 0 : index
    %447 = vector.load %arg6[%c1_307, %c0_308, %c0_309] : memref<3x128x128xbf16, #tpu.memory_space<vmem>>, vector<1x128x128xbf16>
    %448 = vector.shape_cast %447 : vector<1x128x128xbf16> to vector<128x128xbf16>
    %cst_310 = arith.constant dense<0.000000e+00> : vector<4x128xf32>
    %449 = tpu.matmul %446, %448, %cst_310 {dimension_numbers = #tpu.dot_dimension_numbers<[1], [0], [0], [1], [0, 0, 1, 1], [], []>} : vector<4x128xbf16>, vector<128x128xbf16>, vector<4x128xf32> -> vector<4x128xf32>
    %450 = arith.addf %444, %449 : vector<4x128xf32>
    %451 = vector.extract_strided_slice %439 {offsets = [2, 0], sizes = [4, 128], strides = [1, 1]} : vector<6x128xf32> to vector<4x128xf32>
    %452 = arith.truncf %451 : vector<4x128xf32> to vector<4x128xbf16>
    %c2_311 = arith.constant 2 : index
    %c0_312 = arith.constant 0 : index
    %c0_313 = arith.constant 0 : index
    %453 = vector.load %arg6[%c2_311, %c0_312, %c0_313] : memref<3x128x128xbf16, #tpu.memory_space<vmem>>, vector<1x128x128xbf16>
    %454 = vector.shape_cast %453 : vector<1x128x128xbf16> to vector<128x128xbf16>
    %cst_314 = arith.constant dense<0.000000e+00> : vector<4x128xf32>
    %455 = tpu.matmul %452, %454, %cst_314 {dimension_numbers = #tpu.dot_dimension_numbers<[1], [0], [0], [1], [0, 0, 1, 1], [], []>} : vector<4x128xbf16>, vector<128x128xbf16>, vector<4x128xf32> -> vector<4x128xf32>
    %456 = arith.addf %450, %455 : vector<4x128xf32>
    %457 = vector.broadcast %404 : vector<1x128xf32> to vector<4x128xf32>
    %458 = arith.addf %456, %457 : vector<4x128xf32>
    %cst_315 = arith.constant 0.000000e+00 : f32
    %459 = vector.broadcast %cst_315 : f32 to vector<4x128xf32>
    %460 = arith.maximumf %458, %459 : vector<4x128xf32>
    %461 = arith.truncf %460 : vector<4x128xf32> to vector<4x128xbf16>
    %c0_316 = arith.constant 0 : index
    %c1_317 = arith.constant 1 : index
    %c0_318 = arith.constant 0 : index
    %462 = vector.load %arg17[%c0_316, %c1_317, %c0_318] : memref<4x8x128xbf16, #tpu.memory_space<vmem>>, vector<4x1x128xbf16>
    %463 = vector.shape_cast %462 : vector<4x1x128xbf16> to vector<4x128xbf16>
    %464 = vector.shape_cast %461 : vector<4x128xbf16> to vector<4x1x128xbf16>
    tpu.vector_store %arg17[%c0_316, %c1_317, %c0_318], %464 {strides = array<i32>} : memref<4x8x128xbf16, #tpu.memory_space<vmem>>, vector<4x1x128xbf16>,
    %465 = vector.extract_strided_slice %402 {offsets = [0, 256], sizes = [6, 128], strides = [1, 1]} : vector<6x1024xf32> to vector<6x128xf32>
    %466 = vector.broadcast %403 : vector<1x128xf32> to vector<6x128xf32>
    %467 = arith.addf %465, %466 : vector<6x128xf32>
    %cst_319 = arith.constant 0.000000e+00 : f32
    %468 = vector.broadcast %cst_319 : f32 to vector<6x128xf32>
    %469 = arith.maximumf %467, %468 : vector<6x128xf32>
    %470 = vector.extract_strided_slice %469 {offsets = [0, 0], sizes = [4, 128], strides = [1, 1]} : vector<6x128xf32> to vector<4x128xf32>
    %471 = arith.truncf %470 : vector<4x128xf32> to vector<4x128xbf16>
    %c0_320 = arith.constant 0 : index
    %c0_321 = arith.constant 0 : index
    %c0_322 = arith.constant 0 : index
    %472 = vector.load %arg6[%c0_320, %c0_321, %c0_322] : memref<3x128x128xbf16, #tpu.memory_space<vmem>>, vector<1x128x128xbf16>
    %473 = vector.shape_cast %472 : vector<1x128x128xbf16> to vector<128x128xbf16>
    %cst_323 = arith.constant dense<0.000000e+00> : vector<4x128xf32>
    %474 = tpu.matmul %471, %473, %cst_323 {dimension_numbers = #tpu.dot_dimension_numbers<[1], [0], [0], [1], [0, 0, 1, 1], [], []>} : vector<4x128xbf16>, vector<128x128xbf16>, vector<4x128xf32> -> vector<4x128xf32>
    %475 = vector.extract_strided_slice %469 {offsets = [1, 0], sizes = [4, 128], strides = [1, 1]} : vector<6x128xf32> to vector<4x128xf32>
    %476 = arith.truncf %475 : vector<4x128xf32> to vector<4x128xbf16>
    %c1_324 = arith.constant 1 : index
    %c0_325 = arith.constant 0 : index
    %c0_326 = arith.constant 0 : index
    %477 = vector.load %arg6[%c1_324, %c0_325, %c0_326] : memref<3x128x128xbf16, #tpu.memory_space<vmem>>, vector<1x128x128xbf16>
    %478 = vector.shape_cast %477 : vector<1x128x128xbf16> to vector<128x128xbf16>
    %cst_327 = arith.constant dense<0.000000e+00> : vector<4x128xf32>
    %479 = tpu.matmul %476, %478, %cst_327 {dimension_numbers = #tpu.dot_dimension_numbers<[1], [0], [0], [1], [0, 0, 1, 1], [], []>} : vector<4x128xbf16>, vector<128x128xbf16>, vector<4x128xf32> -> vector<4x128xf32>
    %480 = arith.addf %474, %479 : vector<4x128xf32>
    %481 = vector.extract_strided_slice %469 {offsets = [2, 0], sizes = [4, 128], strides = [1, 1]} : vector<6x128xf32> to vector<4x128xf32>
    %482 = arith.truncf %481 : vector<4x128xf32> to vector<4x128xbf16>
    %c2_328 = arith.constant 2 : index
    %c0_329 = arith.constant 0 : index
    %c0_330 = arith.constant 0 : index
    %483 = vector.load %arg6[%c2_328, %c0_329, %c0_330] : memref<3x128x128xbf16, #tpu.memory_space<vmem>>, vector<1x128x128xbf16>
    %484 = vector.shape_cast %483 : vector<1x128x128xbf16> to vector<128x128xbf16>
    %cst_331 = arith.constant dense<0.000000e+00> : vector<4x128xf32>
    %485 = tpu.matmul %482, %484, %cst_331 {dimension_numbers = #tpu.dot_dimension_numbers<[1], [0], [0], [1], [0, 0, 1, 1], [], []>} : vector<4x128xbf16>, vector<128x128xbf16>, vector<4x128xf32> -> vector<4x128xf32>
    %486 = arith.addf %480, %485 : vector<4x128xf32>
    %487 = vector.broadcast %404 : vector<1x128xf32> to vector<4x128xf32>
    %488 = arith.addf %486, %487 : vector<4x128xf32>
    %cst_332 = arith.constant 0.000000e+00 : f32
    %489 = vector.broadcast %cst_332 : f32 to vector<4x128xf32>
    %490 = arith.maximumf %488, %489 : vector<4x128xf32>
    %491 = arith.truncf %490 : vector<4x128xf32> to vector<4x128xbf16>
    %c0_333 = arith.constant 0 : index
    %c2_334 = arith.constant 2 : index
    %c0_335 = arith.constant 0 : index
    %492 = vector.load %arg17[%c0_333, %c2_334, %c0_335] : memref<4x8x128xbf16, #tpu.memory_space<vmem>>, vector<4x1x128xbf16>
    %493 = vector.shape_cast %492 : vector<4x1x128xbf16> to vector<4x128xbf16>
    %494 = vector.shape_cast %491 : vector<4x128xbf16> to vector<4x1x128xbf16>
    tpu.vector_store %arg17[%c0_333, %c2_334, %c0_335], %494 {strides = array<i32>} : memref<4x8x128xbf16, #tpu.memory_space<vmem>>, vector<4x1x128xbf16>,
    %495 = vector.extract_strided_slice %402 {offsets = [0, 384], sizes = [6, 128], strides = [1, 1]} : vector<6x1024xf32> to vector<6x128xf32>
    %496 = vector.broadcast %403 : vector<1x128xf32> to vector<6x128xf32>
    %497 = arith.addf %495, %496 : vector<6x128xf32>
    %cst_336 = arith.constant 0.000000e+00 : f32
    %498 = vector.broadcast %cst_336 : f32 to vector<6x128xf32>
    %499 = arith.maximumf %497, %498 : vector<6x128xf32>
    %500 = vector.extract_strided_slice %499 {offsets = [0, 0], sizes = [4, 128], strides = [1, 1]} : vector<6x128xf32> to vector<4x128xf32>
    %501 = arith.truncf %500 : vector<4x128xf32> to vector<4x128xbf16>
    %c0_337 = arith.constant 0 : index
    %c0_338 = arith.constant 0 : index
    %c0_339 = arith.constant 0 : index
    %502 = vector.load %arg6[%c0_337, %c0_338, %c0_339] : memref<3x128x128xbf16, #tpu.memory_space<vmem>>, vector<1x128x128xbf16>
    %503 = vector.shape_cast %502 : vector<1x128x128xbf16> to vector<128x128xbf16>
    %cst_340 = arith.constant dense<0.000000e+00> : vector<4x128xf32>
    %504 = tpu.matmul %501, %503, %cst_340 {dimension_numbers = #tpu.dot_dimension_numbers<[1], [0], [0], [1], [0, 0, 1, 1], [], []>} : vector<4x128xbf16>, vector<128x128xbf16>, vector<4x128xf32> -> vector<4x128xf32>
    %505 = vector.extract_strided_slice %499 {offsets = [1, 0], sizes = [4, 128], strides = [1, 1]} : vector<6x128xf32> to vector<4x128xf32>
    %506 = arith.truncf %505 : vector<4x128xf32> to vector<4x128xbf16>
    %c1_341 = arith.constant 1 : index
    %c0_342 = arith.constant 0 : index
    %c0_343 = arith.constant 0 : index
    %507 = vector.load %arg6[%c1_341, %c0_342, %c0_343] : memref<3x128x128xbf16, #tpu.memory_space<vmem>>, vector<1x128x128xbf16>
    %508 = vector.shape_cast %507 : vector<1x128x128xbf16> to vector<128x128xbf16>
    %cst_344 = arith.constant dense<0.000000e+00> : vector<4x128xf32>
    %509 = tpu.matmul %506, %508, %cst_344 {dimension_numbers = #tpu.dot_dimension_numbers<[1], [0], [0], [1], [0, 0, 1, 1], [], []>} : vector<4x128xbf16>, vector<128x128xbf16>, vector<4x128xf32> -> vector<4x128xf32>
    %510 = arith.addf %504, %509 : vector<4x128xf32>
    %511 = vector.extract_strided_slice %499 {offsets = [2, 0], sizes = [4, 128], strides = [1, 1]} : vector<6x128xf32> to vector<4x128xf32>
    %512 = arith.truncf %511 : vector<4x128xf32> to vector<4x128xbf16>
    %c2_345 = arith.constant 2 : index
    %c0_346 = arith.constant 0 : index
    %c0_347 = arith.constant 0 : index
    %513 = vector.load %arg6[%c2_345, %c0_346, %c0_347] : memref<3x128x128xbf16, #tpu.memory_space<vmem>>, vector<1x128x128xbf16>
    %514 = vector.shape_cast %513 : vector<1x128x128xbf16> to vector<128x128xbf16>
    %cst_348 = arith.constant dense<0.000000e+00> : vector<4x128xf32>
    %515 = tpu.matmul %512, %514, %cst_348 {dimension_numbers = #tpu.dot_dimension_numbers<[1], [0], [0], [1], [0, 0, 1, 1], [], []>} : vector<4x128xbf16>, vector<128x128xbf16>, vector<4x128xf32> -> vector<4x128xf32>
    %516 = arith.addf %510, %515 : vector<4x128xf32>
    %517 = vector.broadcast %404 : vector<1x128xf32> to vector<4x128xf32>
    %518 = arith.addf %516, %517 : vector<4x128xf32>
    %cst_349 = arith.constant 0.000000e+00 : f32
    %519 = vector.broadcast %cst_349 : f32 to vector<4x128xf32>
    %520 = arith.maximumf %518, %519 : vector<4x128xf32>
    %521 = arith.truncf %520 : vector<4x128xf32> to vector<4x128xbf16>
    %c0_350 = arith.constant 0 : index
    %c3_351 = arith.constant 3 : index
    %c0_352 = arith.constant 0 : index
    %522 = vector.load %arg17[%c0_350, %c3_351, %c0_352] : memref<4x8x128xbf16, #tpu.memory_space<vmem>>, vector<4x1x128xbf16>
    %523 = vector.shape_cast %522 : vector<4x1x128xbf16> to vector<4x128xbf16>
    %524 = vector.shape_cast %521 : vector<4x128xbf16> to vector<4x1x128xbf16>
    tpu.vector_store %arg17[%c0_350, %c3_351, %c0_352], %524 {strides = array<i32>} : memref<4x8x128xbf16, #tpu.memory_space<vmem>>, vector<4x1x128xbf16>,
    %525 = vector.extract_strided_slice %402 {offsets = [0, 512], sizes = [6, 128], strides = [1, 1]} : vector<6x1024xf32> to vector<6x128xf32>
    %526 = vector.broadcast %403 : vector<1x128xf32> to vector<6x128xf32>
    %527 = arith.addf %525, %526 : vector<6x128xf32>
    %cst_353 = arith.constant 0.000000e+00 : f32
    %528 = vector.broadcast %cst_353 : f32 to vector<6x128xf32>
    %529 = arith.maximumf %527, %528 : vector<6x128xf32>
    %530 = vector.extract_strided_slice %529 {offsets = [0, 0], sizes = [4, 128], strides = [1, 1]} : vector<6x128xf32> to vector<4x128xf32>
    %531 = arith.truncf %530 : vector<4x128xf32> to vector<4x128xbf16>
    %c0_354 = arith.constant 0 : index
    %c0_355 = arith.constant 0 : index
    %c0_356 = arith.constant 0 : index
    %532 = vector.load %arg6[%c0_354, %c0_355, %c0_356] : memref<3x128x128xbf16, #tpu.memory_space<vmem>>, vector<1x128x128xbf16>
    %533 = vector.shape_cast %532 : vector<1x128x128xbf16> to vector<128x128xbf16>
    %cst_357 = arith.constant dense<0.000000e+00> : vector<4x128xf32>
    %534 = tpu.matmul %531, %533, %cst_357 {dimension_numbers = #tpu.dot_dimension_numbers<[1], [0], [0], [1], [0, 0, 1, 1], [], []>} : vector<4x128xbf16>, vector<128x128xbf16>, vector<4x128xf32> -> vector<4x128xf32>
    %535 = vector.extract_strided_slice %529 {offsets = [1, 0], sizes = [4, 128], strides = [1, 1]} : vector<6x128xf32> to vector<4x128xf32>
    %536 = arith.truncf %535 : vector<4x128xf32> to vector<4x128xbf16>
    %c1_358 = arith.constant 1 : index
    %c0_359 = arith.constant 0 : index
    %c0_360 = arith.constant 0 : index
    %537 = vector.load %arg6[%c1_358, %c0_359, %c0_360] : memref<3x128x128xbf16, #tpu.memory_space<vmem>>, vector<1x128x128xbf16>
    %538 = vector.shape_cast %537 : vector<1x128x128xbf16> to vector<128x128xbf16>
    %cst_361 = arith.constant dense<0.000000e+00> : vector<4x128xf32>
    %539 = tpu.matmul %536, %538, %cst_361 {dimension_numbers = #tpu.dot_dimension_numbers<[1], [0], [0], [1], [0, 0, 1, 1], [], []>} : vector<4x128xbf16>, vector<128x128xbf16>, vector<4x128xf32> -> vector<4x128xf32>
    %540 = arith.addf %534, %539 : vector<4x128xf32>
    %541 = vector.extract_strided_slice %529 {offsets = [2, 0], sizes = [4, 128], strides = [1, 1]} : vector<6x128xf32> to vector<4x128xf32>
    %542 = arith.truncf %541 : vector<4x128xf32> to vector<4x128xbf16>
    %c2_362 = arith.constant 2 : index
    %c0_363 = arith.constant 0 : index
    %c0_364 = arith.constant 0 : index
    %543 = vector.load %arg6[%c2_362, %c0_363, %c0_364] : memref<3x128x128xbf16, #tpu.memory_space<vmem>>, vector<1x128x128xbf16>
    %544 = vector.shape_cast %543 : vector<1x128x128xbf16> to vector<128x128xbf16>
    %cst_365 = arith.constant dense<0.000000e+00> : vector<4x128xf32>
    %545 = tpu.matmul %542, %544, %cst_365 {dimension_numbers = #tpu.dot_dimension_numbers<[1], [0], [0], [1], [0, 0, 1, 1], [], []>} : vector<4x128xbf16>, vector<128x128xbf16>, vector<4x128xf32> -> vector<4x128xf32>
    %546 = arith.addf %540, %545 : vector<4x128xf32>
    %547 = vector.broadcast %404 : vector<1x128xf32> to vector<4x128xf32>
    %548 = arith.addf %546, %547 : vector<4x128xf32>
    %cst_366 = arith.constant 0.000000e+00 : f32
    %549 = vector.broadcast %cst_366 : f32 to vector<4x128xf32>
    %550 = arith.maximumf %548, %549 : vector<4x128xf32>
    %551 = arith.truncf %550 : vector<4x128xf32> to vector<4x128xbf16>
    %c0_367 = arith.constant 0 : index
    %c4_368 = arith.constant 4 : index
    %c0_369 = arith.constant 0 : index
    %552 = vector.load %arg17[%c0_367, %c4_368, %c0_369] : memref<4x8x128xbf16, #tpu.memory_space<vmem>>, vector<4x1x128xbf16>
    %553 = vector.shape_cast %552 : vector<4x1x128xbf16> to vector<4x128xbf16>
    %554 = vector.shape_cast %551 : vector<4x128xbf16> to vector<4x1x128xbf16>
    tpu.vector_store %arg17[%c0_367, %c4_368, %c0_369], %554 {strides = array<i32>} : memref<4x8x128xbf16, #tpu.memory_space<vmem>>, vector<4x1x128xbf16>,
    %555 = vector.extract_strided_slice %402 {offsets = [0, 640], sizes = [6, 128], strides = [1, 1]} : vector<6x1024xf32> to vector<6x128xf32>
    %556 = vector.broadcast %403 : vector<1x128xf32> to vector<6x128xf32>
    %557 = arith.addf %555, %556 : vector<6x128xf32>
    %cst_370 = arith.constant 0.000000e+00 : f32
    %558 = vector.broadcast %cst_370 : f32 to vector<6x128xf32>
    %559 = arith.maximumf %557, %558 : vector<6x128xf32>
    %560 = vector.extract_strided_slice %559 {offsets = [0, 0], sizes = [4, 128], strides = [1, 1]} : vector<6x128xf32> to vector<4x128xf32>
    %561 = arith.truncf %560 : vector<4x128xf32> to vector<4x128xbf16>
    %c0_371 = arith.constant 0 : index
    %c0_372 = arith.constant 0 : index
    %c0_373 = arith.constant 0 : index
    %562 = vector.load %arg6[%c0_371, %c0_372, %c0_373] : memref<3x128x128xbf16, #tpu.memory_space<vmem>>, vector<1x128x128xbf16>
    %563 = vector.shape_cast %562 : vector<1x128x128xbf16> to vector<128x128xbf16>
    %cst_374 = arith.constant dense<0.000000e+00> : vector<4x128xf32>
    %564 = tpu.matmul %561, %563, %cst_374 {dimension_numbers = #tpu.dot_dimension_numbers<[1], [0], [0], [1], [0, 0, 1, 1], [], []>} : vector<4x128xbf16>, vector<128x128xbf16>, vector<4x128xf32> -> vector<4x128xf32>
    %565 = vector.extract_strided_slice %559 {offsets = [1, 0], sizes = [4, 128], strides = [1, 1]} : vector<6x128xf32> to vector<4x128xf32>
    %566 = arith.truncf %565 : vector<4x128xf32> to vector<4x128xbf16>
    %c1_375 = arith.constant 1 : index
    %c0_376 = arith.constant 0 : index
    %c0_377 = arith.constant 0 : index
    %567 = vector.load %arg6[%c1_375, %c0_376, %c0_377] : memref<3x128x128xbf16, #tpu.memory_space<vmem>>, vector<1x128x128xbf16>
    %568 = vector.shape_cast %567 : vector<1x128x128xbf16> to vector<128x128xbf16>
    %cst_378 = arith.constant dense<0.000000e+00> : vector<4x128xf32>
    %569 = tpu.matmul %566, %568, %cst_378 {dimension_numbers = #tpu.dot_dimension_numbers<[1], [0], [0], [1], [0, 0, 1, 1], [], []>} : vector<4x128xbf16>, vector<128x128xbf16>, vector<4x128xf32> -> vector<4x128xf32>
    %570 = arith.addf %564, %569 : vector<4x128xf32>
    %571 = vector.extract_strided_slice %559 {offsets = [2, 0], sizes = [4, 128], strides = [1, 1]} : vector<6x128xf32> to vector<4x128xf32>
    %572 = arith.truncf %571 : vector<4x128xf32> to vector<4x128xbf16>
    %c2_379 = arith.constant 2 : index
    %c0_380 = arith.constant 0 : index
    %c0_381 = arith.constant 0 : index
    %573 = vector.load %arg6[%c2_379, %c0_380, %c0_381] : memref<3x128x128xbf16, #tpu.memory_space<vmem>>, vector<1x128x128xbf16>
    %574 = vector.shape_cast %573 : vector<1x128x128xbf16> to vector<128x128xbf16>
    %cst_382 = arith.constant dense<0.000000e+00> : vector<4x128xf32>
    %575 = tpu.matmul %572, %574, %cst_382 {dimension_numbers = #tpu.dot_dimension_numbers<[1], [0], [0], [1], [0, 0, 1, 1], [], []>} : vector<4x128xbf16>, vector<128x128xbf16>, vector<4x128xf32> -> vector<4x128xf32>
    %576 = arith.addf %570, %575 : vector<4x128xf32>
    %577 = vector.broadcast %404 : vector<1x128xf32> to vector<4x128xf32>
    %578 = arith.addf %576, %577 : vector<4x128xf32>
    %cst_383 = arith.constant 0.000000e+00 : f32
    %579 = vector.broadcast %cst_383 : f32 to vector<4x128xf32>
    %580 = arith.maximumf %578, %579 : vector<4x128xf32>
    %581 = arith.truncf %580 : vector<4x128xf32> to vector<4x128xbf16>
    %c0_384 = arith.constant 0 : index
    %c5_385 = arith.constant 5 : index
    %c0_386 = arith.constant 0 : index
    %582 = vector.load %arg17[%c0_384, %c5_385, %c0_386] : memref<4x8x128xbf16, #tpu.memory_space<vmem>>, vector<4x1x128xbf16>
    %583 = vector.shape_cast %582 : vector<4x1x128xbf16> to vector<4x128xbf16>
    %584 = vector.shape_cast %581 : vector<4x128xbf16> to vector<4x1x128xbf16>
    tpu.vector_store %arg17[%c0_384, %c5_385, %c0_386], %584 {strides = array<i32>} : memref<4x8x128xbf16, #tpu.memory_space<vmem>>, vector<4x1x128xbf16>,
    %585 = vector.extract_strided_slice %402 {offsets = [0, 768], sizes = [6, 128], strides = [1, 1]} : vector<6x1024xf32> to vector<6x128xf32>
    %586 = vector.broadcast %403 : vector<1x128xf32> to vector<6x128xf32>
    %587 = arith.addf %585, %586 : vector<6x128xf32>
    %cst_387 = arith.constant 0.000000e+00 : f32
    %588 = vector.broadcast %cst_387 : f32 to vector<6x128xf32>
    %589 = arith.maximumf %587, %588 : vector<6x128xf32>
    %590 = vector.extract_strided_slice %589 {offsets = [0, 0], sizes = [4, 128], strides = [1, 1]} : vector<6x128xf32> to vector<4x128xf32>
    %591 = arith.truncf %590 : vector<4x128xf32> to vector<4x128xbf16>
    %c0_388 = arith.constant 0 : index
    %c0_389 = arith.constant 0 : index
    %c0_390 = arith.constant 0 : index
    %592 = vector.load %arg6[%c0_388, %c0_389, %c0_390] : memref<3x128x128xbf16, #tpu.memory_space<vmem>>, vector<1x128x128xbf16>
    %593 = vector.shape_cast %592 : vector<1x128x128xbf16> to vector<128x128xbf16>
    %cst_391 = arith.constant dense<0.000000e+00> : vector<4x128xf32>
    %594 = tpu.matmul %591, %593, %cst_391 {dimension_numbers = #tpu.dot_dimension_numbers<[1], [0], [0], [1], [0, 0, 1, 1], [], []>} : vector<4x128xbf16>, vector<128x128xbf16>, vector<4x128xf32> -> vector<4x128xf32>
    %595 = vector.extract_strided_slice %589 {offsets = [1, 0], sizes = [4, 128], strides = [1, 1]} : vector<6x128xf32> to vector<4x128xf32>
    %596 = arith.truncf %595 : vector<4x128xf32> to vector<4x128xbf16>
    %c1_392 = arith.constant 1 : index
    %c0_393 = arith.constant 0 : index
    %c0_394 = arith.constant 0 : index
    %597 = vector.load %arg6[%c1_392, %c0_393, %c0_394] : memref<3x128x128xbf16, #tpu.memory_space<vmem>>, vector<1x128x128xbf16>
    %598 = vector.shape_cast %597 : vector<1x128x128xbf16> to vector<128x128xbf16>
    %cst_395 = arith.constant dense<0.000000e+00> : vector<4x128xf32>
    %599 = tpu.matmul %596, %598, %cst_395 {dimension_numbers = #tpu.dot_dimension_numbers<[1], [0], [0], [1], [0, 0, 1, 1], [], []>} : vector<4x128xbf16>, vector<128x128xbf16>, vector<4x128xf32> -> vector<4x128xf32>
    %600 = arith.addf %594, %599 : vector<4x128xf32>
    %601 = vector.extract_strided_slice %589 {offsets = [2, 0], sizes = [4, 128], strides = [1, 1]} : vector<6x128xf32> to vector<4x128xf32>
    %602 = arith.truncf %601 : vector<4x128xf32> to vector<4x128xbf16>
    %c2_396 = arith.constant 2 : index
    %c0_397 = arith.constant 0 : index
    %c0_398 = arith.constant 0 : index
    %603 = vector.load %arg6[%c2_396, %c0_397, %c0_398] : memref<3x128x128xbf16, #tpu.memory_space<vmem>>, vector<1x128x128xbf16>
    %604 = vector.shape_cast %603 : vector<1x128x128xbf16> to vector<128x128xbf16>
    %cst_399 = arith.constant dense<0.000000e+00> : vector<4x128xf32>
    %605 = tpu.matmul %602, %604, %cst_399 {dimension_numbers = #tpu.dot_dimension_numbers<[1], [0], [0], [1], [0, 0, 1, 1], [], []>} : vector<4x128xbf16>, vector<128x128xbf16>, vector<4x128xf32> -> vector<4x128xf32>
    %606 = arith.addf %600, %605 : vector<4x128xf32>
    %607 = vector.broadcast %404 : vector<1x128xf32> to vector<4x128xf32>
    %608 = arith.addf %606, %607 : vector<4x128xf32>
    %cst_400 = arith.constant 0.000000e+00 : f32
    %609 = vector.broadcast %cst_400 : f32 to vector<4x128xf32>
    %610 = arith.maximumf %608, %609 : vector<4x128xf32>
    %611 = arith.truncf %610 : vector<4x128xf32> to vector<4x128xbf16>
    %c0_401 = arith.constant 0 : index
    %c6_402 = arith.constant 6 : index
    %c0_403 = arith.constant 0 : index
    %612 = vector.load %arg17[%c0_401, %c6_402, %c0_403] : memref<4x8x128xbf16, #tpu.memory_space<vmem>>, vector<4x1x128xbf16>
    %613 = vector.shape_cast %612 : vector<4x1x128xbf16> to vector<4x128xbf16>
    %614 = vector.shape_cast %611 : vector<4x128xbf16> to vector<4x1x128xbf16>
    tpu.vector_store %arg17[%c0_401, %c6_402, %c0_403], %614 {strides = array<i32>} : memref<4x8x128xbf16, #tpu.memory_space<vmem>>, vector<4x1x128xbf16>,
    %615 = vector.extract_strided_slice %402 {offsets = [0, 896], sizes = [6, 128], strides = [1, 1]} : vector<6x1024xf32> to vector<6x128xf32>
    %616 = vector.broadcast %403 : vector<1x128xf32> to vector<6x128xf32>
    %617 = arith.addf %615, %616 : vector<6x128xf32>
    %cst_404 = arith.constant 0.000000e+00 : f32
    %618 = vector.broadcast %cst_404 : f32 to vector<6x128xf32>
    %619 = arith.maximumf %617, %618 : vector<6x128xf32>
    %620 = vector.extract_strided_slice %619 {offsets = [0, 0], sizes = [4, 128], strides = [1, 1]} : vector<6x128xf32> to vector<4x128xf32>
    %621 = arith.truncf %620 : vector<4x128xf32> to vector<4x128xbf16>
    %c0_405 = arith.constant 0 : index
    %c0_406 = arith.constant 0 : index
    %c0_407 = arith.constant 0 : index
    %622 = vector.load %arg6[%c0_405, %c0_406, %c0_407] : memref<3x128x128xbf16, #tpu.memory_space<vmem>>, vector<1x128x128xbf16>
    %623 = vector.shape_cast %622 : vector<1x128x128xbf16> to vector<128x128xbf16>
    %cst_408 = arith.constant dense<0.000000e+00> : vector<4x128xf32>
    %624 = tpu.matmul %621, %623, %cst_408 {dimension_numbers = #tpu.dot_dimension_numbers<[1], [0], [0], [1], [0, 0, 1, 1], [], []>} : vector<4x128xbf16>, vector<128x128xbf16>, vector<4x128xf32> -> vector<4x128xf32>
    %625 = vector.extract_strided_slice %619 {offsets = [1, 0], sizes = [4, 128], strides = [1, 1]} : vector<6x128xf32> to vector<4x128xf32>
    %626 = arith.truncf %625 : vector<4x128xf32> to vector<4x128xbf16>
    %c1_409 = arith.constant 1 : index
    %c0_410 = arith.constant 0 : index
    %c0_411 = arith.constant 0 : index
    %627 = vector.load %arg6[%c1_409, %c0_410, %c0_411] : memref<3x128x128xbf16, #tpu.memory_space<vmem>>, vector<1x128x128xbf16>
    %628 = vector.shape_cast %627 : vector<1x128x128xbf16> to vector<128x128xbf16>
    %cst_412 = arith.constant dense<0.000000e+00> : vector<4x128xf32>
    %629 = tpu.matmul %626, %628, %cst_412 {dimension_numbers = #tpu.dot_dimension_numbers<[1], [0], [0], [1], [0, 0, 1, 1], [], []>} : vector<4x128xbf16>, vector<128x128xbf16>, vector<4x128xf32> -> vector<4x128xf32>
    %630 = arith.addf %624, %629 : vector<4x128xf32>
    %631 = vector.extract_strided_slice %619 {offsets = [2, 0], sizes = [4, 128], strides = [1, 1]} : vector<6x128xf32> to vector<4x128xf32>
    %632 = arith.truncf %631 : vector<4x128xf32> to vector<4x128xbf16>
    %c2_413 = arith.constant 2 : index
    %c0_414 = arith.constant 0 : index
    %c0_415 = arith.constant 0 : index
    %633 = vector.load %arg6[%c2_413, %c0_414, %c0_415] : memref<3x128x128xbf16, #tpu.memory_space<vmem>>, vector<1x128x128xbf16>
    %634 = vector.shape_cast %633 : vector<1x128x128xbf16> to vector<128x128xbf16>
    %cst_416 = arith.constant dense<0.000000e+00> : vector<4x128xf32>
    %635 = tpu.matmul %632, %634, %cst_416 {dimension_numbers = #tpu.dot_dimension_numbers<[1], [0], [0], [1], [0, 0, 1, 1], [], []>} : vector<4x128xbf16>, vector<128x128xbf16>, vector<4x128xf32> -> vector<4x128xf32>
    %636 = arith.addf %630, %635 : vector<4x128xf32>
    %637 = vector.broadcast %404 : vector<1x128xf32> to vector<4x128xf32>
    %638 = arith.addf %636, %637 : vector<4x128xf32>
    %cst_417 = arith.constant 0.000000e+00 : f32
    %639 = vector.broadcast %cst_417 : f32 to vector<4x128xf32>
    %640 = arith.maximumf %638, %639 : vector<4x128xf32>
    %641 = arith.truncf %640 : vector<4x128xf32> to vector<4x128xbf16>
    %c0_418 = arith.constant 0 : index
    %c7_419 = arith.constant 7 : index
    %c0_420 = arith.constant 0 : index
    %642 = vector.load %arg17[%c0_418, %c7_419, %c0_420] : memref<4x8x128xbf16, #tpu.memory_space<vmem>>, vector<4x1x128xbf16>
    %643 = vector.shape_cast %642 : vector<4x1x128xbf16> to vector<4x128xbf16>
    %644 = vector.shape_cast %641 : vector<4x128xbf16> to vector<4x1x128xbf16>
    tpu.vector_store %arg17[%c0_418, %c7_419, %c0_420], %644 {strides = array<i32>} : memref<4x8x128xbf16, #tpu.memory_space<vmem>>, vector<4x1x128xbf16>,
    %c0_421 = arith.constant 0 : index
    %c0_422 = arith.constant 0 : index
    %645 = vector.load %arg11[%c0_421, %c0_422] : memref<1x120xf32, #tpu.memory_space<vmem>>, vector<1x120xf32>
    %c0_423 = arith.constant 0 : index
    %c0_424 = arith.constant 0 : index
    %c0_425 = arith.constant 0 : index
    %646 = vector.load %arg17[%c0_423, %c0_424, %c0_425] : memref<4x8x128xbf16, #tpu.memory_space<vmem>>, vector<1x8x128xbf16>
    %647 = vector.shape_cast %646 : vector<1x8x128xbf16> to vector<8x128xbf16>
    %c0_426 = arith.constant 0 : index
    %c0_427 = arith.constant 0 : index
    %c0_428 = arith.constant 0 : index
    %648 = vector.load %arg10[%c0_426, %c0_427, %c0_428] : memref<4x128x120xbf16, #tpu.memory_space<vmem>>, vector<1x128x120xbf16>
    %649 = vector.shape_cast %648 : vector<1x128x120xbf16> to vector<128x120xbf16>
    %cst_429 = arith.constant dense<0.000000e+00> : vector<8x120xf32>
    %650 = tpu.matmul %647, %649, %cst_429 {dimension_numbers = #tpu.dot_dimension_numbers<[1], [0], [0], [1], [0, 0, 1, 1], [], []>} : vector<8x128xbf16>, vector<128x120xbf16>, vector<8x120xf32> -> vector<8x120xf32>
    %651 = vector.broadcast %645 : vector<1x120xf32> to vector<8x120xf32>
    %652 = arith.addf %651, %650 : vector<8x120xf32>
    %c1_430 = arith.constant 1 : index
    %c0_431 = arith.constant 0 : index
    %c0_432 = arith.constant 0 : index
    %653 = vector.load %arg17[%c1_430, %c0_431, %c0_432] : memref<4x8x128xbf16, #tpu.memory_space<vmem>>, vector<1x8x128xbf16>
    %654 = vector.shape_cast %653 : vector<1x8x128xbf16> to vector<8x128xbf16>
    %c1_433 = arith.constant 1 : index
    %c0_434 = arith.constant 0 : index
    %c0_435 = arith.constant 0 : index
    %655 = vector.load %arg10[%c1_433, %c0_434, %c0_435] : memref<4x128x120xbf16, #tpu.memory_space<vmem>>, vector<1x128x120xbf16>
    %656 = vector.shape_cast %655 : vector<1x128x120xbf16> to vector<128x120xbf16>
    %cst_436 = arith.constant dense<0.000000e+00> : vector<8x120xf32>
    %657 = tpu.matmul %654, %656, %cst_436 {dimension_numbers = #tpu.dot_dimension_numbers<[1], [0], [0], [1], [0, 0, 1, 1], [], []>} : vector<8x128xbf16>, vector<128x120xbf16>, vector<8x120xf32> -> vector<8x120xf32>
    %658 = arith.addf %652, %657 : vector<8x120xf32>
    %c2_437 = arith.constant 2 : index
    %c0_438 = arith.constant 0 : index
    %c0_439 = arith.constant 0 : index
    %659 = vector.load %arg17[%c2_437, %c0_438, %c0_439] : memref<4x8x128xbf16, #tpu.memory_space<vmem>>, vector<1x8x128xbf16>
    %660 = vector.shape_cast %659 : vector<1x8x128xbf16> to vector<8x128xbf16>
    %c2_440 = arith.constant 2 : index
    %c0_441 = arith.constant 0 : index
    %c0_442 = arith.constant 0 : index
    %661 = vector.load %arg10[%c2_440, %c0_441, %c0_442] : memref<4x128x120xbf16, #tpu.memory_space<vmem>>, vector<1x128x120xbf16>
    %662 = vector.shape_cast %661 : vector<1x128x120xbf16> to vector<128x120xbf16>
    %cst_443 = arith.constant dense<0.000000e+00> : vector<8x120xf32>
    %663 = tpu.matmul %660, %662, %cst_443 {dimension_numbers = #tpu.dot_dimension_numbers<[1], [0], [0], [1], [0, 0, 1, 1], [], []>} : vector<8x128xbf16>, vector<128x120xbf16>, vector<8x120xf32> -> vector<8x120xf32>
    %664 = arith.addf %658, %663 : vector<8x120xf32>
    %c3_444 = arith.constant 3 : index
    %c0_445 = arith.constant 0 : index
    %c0_446 = arith.constant 0 : index
    %665 = vector.load %arg17[%c3_444, %c0_445, %c0_446] : memref<4x8x128xbf16, #tpu.memory_space<vmem>>, vector<1x8x128xbf16>
    %666 = vector.shape_cast %665 : vector<1x8x128xbf16> to vector<8x128xbf16>
    %c3_447 = arith.constant 3 : index
    %c0_448 = arith.constant 0 : index
    %c0_449 = arith.constant 0 : index
    %667 = vector.load %arg10[%c3_447, %c0_448, %c0_449] : memref<4x128x120xbf16, #tpu.memory_space<vmem>>, vector<1x128x120xbf16>
    %668 = vector.shape_cast %667 : vector<1x128x120xbf16> to vector<128x120xbf16>
    %cst_450 = arith.constant dense<0.000000e+00> : vector<8x120xf32>
    %669 = tpu.matmul %666, %668, %cst_450 {dimension_numbers = #tpu.dot_dimension_numbers<[1], [0], [0], [1], [0, 0, 1, 1], [], []>} : vector<8x128xbf16>, vector<128x120xbf16>, vector<8x120xf32> -> vector<8x120xf32>
    %670 = arith.addf %664, %669 : vector<8x120xf32>
    %cst_451 = arith.constant 0.000000e+00 : f32
    %671 = vector.broadcast %cst_451 : f32 to vector<8x120xf32>
    %672 = arith.maximumf %670, %671 : vector<8x120xf32>
    %673 = arith.truncf %672 : vector<8x120xf32> to vector<8x120xbf16>
    %c0_452 = arith.constant 0 : index
    %c0_453 = arith.constant 0 : index
    %674 = vector.load %arg12[%c0_452, %c0_453] : memref<120x84xbf16, #tpu.memory_space<vmem>>, vector<120x84xbf16>
    %cst_454 = arith.constant dense<0.000000e+00> : vector<8x84xf32>
    %675 = tpu.matmul %673, %674, %cst_454 {dimension_numbers = #tpu.dot_dimension_numbers<[1], [0], [0], [1], [0, 0, 1, 1], [], []>} : vector<8x120xbf16>, vector<120x84xbf16>, vector<8x84xf32> -> vector<8x84xf32>
    %c0_455 = arith.constant 0 : index
    %c0_456 = arith.constant 0 : index
    %676 = vector.load %arg13[%c0_455, %c0_456] : memref<1x84xf32, #tpu.memory_space<vmem>>, vector<1x84xf32>
    %677 = vector.broadcast %676 : vector<1x84xf32> to vector<8x84xf32>
    %678 = arith.addf %675, %677 : vector<8x84xf32>
    %cst_457 = arith.constant 0.000000e+00 : f32
    %679 = vector.broadcast %cst_457 : f32 to vector<8x84xf32>
    %680 = arith.maximumf %678, %679 : vector<8x84xf32>
    %681 = arith.truncf %680 : vector<8x84xf32> to vector<8x84xbf16>
    %c0_458 = arith.constant 0 : index
    %c0_459 = arith.constant 0 : index
    %682 = vector.load %arg14[%c0_458, %c0_459] : memref<84x10xbf16, #tpu.memory_space<vmem>>, vector<84x10xbf16>
    %cst_460 = arith.constant dense<0.000000e+00> : vector<8x10xf32>
    %683 = tpu.matmul %681, %682, %cst_460 {dimension_numbers = #tpu.dot_dimension_numbers<[1], [0], [0], [1], [0, 0, 1, 1], [], []>} : vector<8x84xbf16>, vector<84x10xbf16>, vector<8x10xf32> -> vector<8x10xf32>
    %c0_461 = arith.constant 0 : index
    %c0_462 = arith.constant 0 : index
    %684 = vector.load %arg15[%c0_461, %c0_462] : memref<1x10xf32, #tpu.memory_space<vmem>>, vector<1x10xf32>
    %685 = vector.broadcast %684 : vector<1x10xf32> to vector<8x10xf32>
    %686 = arith.addf %683, %685 : vector<8x10xf32>
    %c0_463 = arith.constant 0 : index
    %c0_464 = arith.constant 0 : index
    %687 = vector.load %arg16[%c0_463, %c0_464] : memref<8x10xf32, #tpu.memory_space<vmem>>, vector<8x10xf32>
    tpu.vector_store %arg16[%c0_463, %c0_464], %686 {strides = array<i32>} : memref<8x10xf32, #tpu.memory_space<vmem>>, vector<8x10xf32>,
    return
  }
  func.func @transform_0(%arg0: i32) -> (i32, i32, i32) {
    %c0_i32 = arith.constant 0 : i32
    %c0_i32_0 = arith.constant 0 : i32
    %c0_i32_1 = arith.constant 0 : i32
    return %arg0, %c0_i32, %c0_i32_0 : i32, i32, i32
  }
  func.func @transform_1(%arg0: i32) -> (i32, i32, i32) {
    %c0_i32 = arith.constant 0 : i32
    %c0_i32_0 = arith.constant 0 : i32
    %c0_i32_1 = arith.constant 0 : i32
    %c0_i32_2 = arith.constant 0 : i32
    return %c0_i32, %c0_i32_0, %c0_i32_1 : i32, i32, i32
  }
  func.func @transform_2(%arg0: i32) -> (i32, i32) {
    %c0_i32 = arith.constant 0 : i32
    %c0_i32_0 = arith.constant 0 : i32
    %c0_i32_1 = arith.constant 0 : i32
    return %c0_i32, %c0_i32_0 : i32, i32
  }
  func.func @transform_3(%arg0: i32) -> (i32, i32, i32) {
    %c0_i32 = arith.constant 0 : i32
    %c0_i32_0 = arith.constant 0 : i32
    %c0_i32_1 = arith.constant 0 : i32
    %c0_i32_2 = arith.constant 0 : i32
    return %c0_i32, %c0_i32_0, %c0_i32_1 : i32, i32, i32
  }
  func.func @transform_4(%arg0: i32) -> (i32, i32) {
    %c0_i32 = arith.constant 0 : i32
    %c0_i32_0 = arith.constant 0 : i32
    %c0_i32_1 = arith.constant 0 : i32
    return %c0_i32, %c0_i32_0 : i32, i32
  }
  func.func @transform_5(%arg0: i32) -> (i32, i32, i32) {
    %c0_i32 = arith.constant 0 : i32
    %c0_i32_0 = arith.constant 0 : i32
    %c0_i32_1 = arith.constant 0 : i32
    %c0_i32_2 = arith.constant 0 : i32
    return %c0_i32, %c0_i32_0, %c0_i32_1 : i32, i32, i32
  }
  func.func @transform_6(%arg0: i32) -> (i32, i32) {
    %c0_i32 = arith.constant 0 : i32
    %c0_i32_0 = arith.constant 0 : i32
    %c0_i32_1 = arith.constant 0 : i32
    return %c0_i32, %c0_i32_0 : i32, i32
  }
  func.func @transform_7(%arg0: i32) -> (i32, i32, i32) {
    %c0_i32 = arith.constant 0 : i32
    %c0_i32_0 = arith.constant 0 : i32
    %c0_i32_1 = arith.constant 0 : i32
    %c0_i32_2 = arith.constant 0 : i32
    return %c0_i32, %c0_i32_0, %c0_i32_1 : i32, i32, i32
  }
  func.func @transform_8(%arg0: i32) -> (i32, i32, i32) {
    %c0_i32 = arith.constant 0 : i32
    %c0_i32_0 = arith.constant 0 : i32
    %c0_i32_1 = arith.constant 0 : i32
    %c0_i32_2 = arith.constant 0 : i32
    return %c0_i32, %c0_i32_0, %c0_i32_1 : i32, i32, i32
  }
  func.func @transform_9(%arg0: i32) -> (i32, i32, i32) {
    %c0_i32 = arith.constant 0 : i32
    %c0_i32_0 = arith.constant 0 : i32
    %c0_i32_1 = arith.constant 0 : i32
    %c0_i32_2 = arith.constant 0 : i32
    return %c0_i32, %c0_i32_0, %c0_i32_1 : i32, i32, i32
  }
  func.func @transform_10(%arg0: i32) -> (i32, i32) {
    %c0_i32 = arith.constant 0 : i32
    %c0_i32_0 = arith.constant 0 : i32
    %c0_i32_1 = arith.constant 0 : i32
    return %c0_i32, %c0_i32_0 : i32, i32
  }
  func.func @transform_11(%arg0: i32) -> (i32, i32) {
    %c0_i32 = arith.constant 0 : i32
    %c0_i32_0 = arith.constant 0 : i32
    %c0_i32_1 = arith.constant 0 : i32
    return %c0_i32, %c0_i32_0 : i32, i32
  }
  func.func @transform_12(%arg0: i32) -> (i32, i32) {
    %c0_i32 = arith.constant 0 : i32
    %c0_i32_0 = arith.constant 0 : i32
    %c0_i32_1 = arith.constant 0 : i32
    return %c0_i32, %c0_i32_0 : i32, i32
  }
  func.func @transform_13(%arg0: i32) -> (i32, i32) {
    %c0_i32 = arith.constant 0 : i32
    %c0_i32_0 = arith.constant 0 : i32
    %c0_i32_1 = arith.constant 0 : i32
    return %c0_i32, %c0_i32_0 : i32, i32
  }
  func.func @transform_14(%arg0: i32) -> (i32, i32) {
    %c0_i32 = arith.constant 0 : i32
    %c0_i32_0 = arith.constant 0 : i32
    %c0_i32_1 = arith.constant 0 : i32
    return %c0_i32, %c0_i32_0 : i32, i32
  }
  func.func @transform_15(%arg0: i32) -> (i32, i32) {
    %c0_i32 = arith.constant 0 : i32
    %c0_i32_0 = arith.constant 0 : i32
    return %arg0, %c0_i32 : i32, i32
  }
}

</mosaic_0001>

<llo_original>
// kernel: net_forward.1
$region0: #{net_forward.1}
  #allocation0 [shape = 'u32[]', space=smem, size = 0x4, offset = 0x4, fixed_abs, tag = 'smem constant byte address 0x4 - core index']
  #allocation1 [shape = 'u32[144,128]{1,0:T(1,128)}', space=vmem, size = 0x12000, scoped, tag = 'internal scratch']
  #allocation2 [shape = 'bf16[4,8,128]{2,1,0:T(8,128)(2,1)}', space=vmem, size = 0x2000, scoped, tag = 'scratch operand']
  %s0 = inlined_call_operand.vmem [shape: f32[16,30,90], index: 0, kind: input, shape index: {}]
  %s1 = inlined_call_operand.vmem [shape: bf16[3,90,256], index: 1, kind: input, shape index: {}]
  %s2 = inlined_call_operand.vmem [shape: f32[1,128], index: 2, kind: input, shape index: {}]
  %s3 = inlined_call_operand.vmem [shape: bf16[3,128,256], index: 3, kind: input, shape index: {}]
  %s4 = inlined_call_operand.vmem [shape: f32[1,128], index: 4, kind: input, shape index: {}]
  %s5 = inlined_call_operand.vmem [shape: bf16[3,128,128], index: 5, kind: input, shape index: {}]
  %s6 = inlined_call_operand.vmem [shape: f32[1,128], index: 6, kind: input, shape index: {}]
  %s7 = inlined_call_operand.vmem [shape: bf16[2,14,28], index: 7, kind: input, shape index: {}]
  %s8 = inlined_call_operand.vmem [shape: bf16[2,6,12], index: 8, kind: input, shape index: {}]
  %s9 = inlined_call_operand.vmem [shape: bf16[4,128,120], index: 9, kind: input, shape index: {}]
  %s10 = inlined_call_operand.vmem [shape: f32[1,120], index: 10, kind: input, shape index: {}]
  %s11 = inlined_call_operand.vmem [shape: bf16[120,84], index: 11, kind: input, shape index: {}]
  %s12 = inlined_call_operand.vmem [shape: f32[1,84], index: 12, kind: input, shape index: {}]
  %s13 = inlined_call_operand.vmem [shape: bf16[84,10], index: 13, kind: input, shape index: {}]
  %s14 = inlined_call_operand.vmem [shape: f32[1,10], index: 14, kind: input, shape index: {}]
  %s15 = inlined_call_operand.hbm [shape: f32[16,10], index: 15, kind: output, shape index: {}]
  %s16 = sld [smem:[#allocation0]]
  $region93: #{net_forward.1} parent=0
    _
  %s18 = ssub.s32 1, %s16
  %s19 = scalar_select 0, %s18, %s16
  $region1: #{net_forward.1} parent=0
    #allocation3 [shape = 'u8[8192]{0}', space=vmem, size = 0x2000, scoped, tag = 'output window, operand 0']
    #allocation4 [shape = 's32[2]{0}', space=sflag, size = 0x8, scoped, tag = 'scoped memory for net_forward.1']
    %20 = vsyncpa [#allocation4], 0
    %s21 = scalar_lea.sflag [#allocation4], 1
    %22 = vsyncpa %s21, 0
    loop: start=0, step=1, limit=4
    $region2: #{net_forward.1} parent=1 // loop_pre_header
      _
    $region3: #{net_forward.1} parent=1 // loop_header
      %s24 = sphi 0, %s28
      %p25 = scmp.ge.s32.totalorder %s24, 4
      %s34 = sphi 0, %s36
      %s37 = sphi 0, %s34
      %s38 = sphi 0, %s37
      %s54 = sphi 0, %s38
      %s58 = sphi 0, %s58
      %s60 = sphi 0, %s58
      %s61 = sphi 0, %s60
      %s75 = sphi 0, %s61
      %s79 = sphi 0, %s79
      %s81 = sphi 0, %s79
      %s82 = sphi 0, %s81
      %s96 = sphi 0, %s82
      %s100 = sphi 0, %s100
      %s102 = sphi 0, %s100
      %s103 = sphi 0, %s102
      %s117 = sphi 0, %s103
      %s121 = sphi 0, %s121
      %s123 = sphi 0, %s121
      %s124 = sphi 0, %s123
      %s138 = sphi 0, %s124
      %s142 = sphi 0, %s142
      %s144 = sphi 0, %s142
      %s145 = sphi 0, %s144
      %s159 = sphi 0, %s145
      %s163 = sphi 0, %s163
      %s165 = sphi 0, %s163
      %s166 = sphi 0, %s165
      %s180 = sphi 0, %s166
      %s184 = sphi 0, %s184
      %s186 = sphi 0, %s184
      %s187 = sphi 0, %s186
      %s201 = sphi 0, %s187
      %s205 = sphi 0, %s205
      %s207 = sphi 0, %s205
      %s208 = sphi 0, %s207
      %s222 = sphi 0, %s208
      %s226 = sphi 0, %s226
      %s228 = sphi 0, %s226
      %s229 = sphi 0, %s228
      %s243 = sphi 0, %s229
      %s247 = sphi 0, %s247
      %s249 = sphi 0, %s247
      %s250 = sphi 0, %s249
      %s264 = sphi 0, %s250
      %s268 = sphi 0, %s268
      %s270 = sphi 0, %s268
      %s271 = sphi 0, %s270
      %s285 = sphi 0, %s271
      %s289 = sphi 0, %s289
      %s291 = sphi 0, %s289
      %s292 = sphi 0, %s291
      %s306 = sphi 0, %s292
      %s310 = sphi 0, %s310
      %s312 = sphi 0, %s310
      %s313 = sphi 0, %s312
      %s327 = sphi 0, %s313
      %s331 = sphi 0, %s331
      %s333 = sphi 0, %s331
      %s334 = sphi 0, %s333
      %s348 = sphi 0, %s334
      %s354 = sphi 0, %s356
      %s357 = sphi 0, %s354
      %s358 = sphi 0, %s357
      %s374 = sphi 0, %s358
    $region4: #{net_forward.1} parent=1 // loop_header_branch
      %27 = sbr.rel (%p25) target = $region8
    $region5: #{net_forward.1} parent=1 // loop_body
      %s29 = ssub.s32 %s24, 1
      %s30 = ssub.s32 %s24, 2
      %s31 = sadd.s32 %s24, 1
      %s32 = ssub.s32 %s24, %s31
      %p33 = scmp.eq.s32.totalorder %s32, 0
      %s35 = sadd.s32 %s34, 1
      %s36 = scalar_select %p33, %s34, %s35
      %p39 = pneg %p33
      %p40 = scmp.eq.s32.totalorder %s24, 1
      %p41 = por %p39, %p40
      %p42 = scmp.ne.s32.totalorder %s34, %s37
      %p43 = scmp.eq.s32.totalorder %s24, 0
      %p44 = por %p42, %p43
      %p45 = scmp.ne.s32.totalorder %s34, %s37
      %p46 = scmp.eq.s32.totalorder %s29, 1
      %p47 = por %p45, %p46
      %p48 = scmp.ne.s32.totalorder %s37, %s38
      %p49 = scmp.eq.s32.totalorder %s29, 0
      %p50 = por %p48, %p49
      %p51 = scmp.ne.s32.totalorder %s37, %s38
      %p52 = scmp.eq.s32.totalorder %s30, 1
      %p53 = por %p51, %p52
      %p55 = scmp.ne.s32.totalorder %s38, %s54
      %p56 = scmp.eq.s32.totalorder %s30, 0
      %p57 = por %p55, %p56
      %s59 = sadd.s32 %s58, 1
      %p62 = scmp.eq.s32.totalorder %s24, 1
      %p63 = scmp.ne.s32.totalorder %s58, %s60
      %p64 = scmp.eq.s32.totalorder %s24, 0
      %p65 = por %p63, %p64
      %p66 = scmp.ne.s32.totalorder %s58, %s60
      %p67 = scmp.eq.s32.totalorder %s29, 1
      %p68 = por %p66, %p67
      %p69 = scmp.ne.s32.totalorder %s60, %s61
      %p70 = scmp.eq.s32.totalorder %s29, 0
      %p71 = por %p69, %p70
      %p72 = scmp.ne.s32.totalorder %s60, %s61
      %p73 = scmp.eq.s32.totalorder %s30, 1
      %p74 = por %p72, %p73
      %p76 = scmp.ne.s32.totalorder %s61, %s75
      %p77 = scmp.eq.s32.totalorder %s30, 0
      %p78 = por %p76, %p77
      %s80 = sadd.s32 %s79, 1
      %p83 = scmp.eq.s32.totalorder %s24, 1
      %p84 = scmp.ne.s32.totalorder %s79, %s81
      %p85 = scmp.eq.s32.totalorder %s24, 0
      %p86 = por %p84, %p85
      %p87 = scmp.ne.s32.totalorder %s79, %s81
      %p88 = scmp.eq.s32.totalorder %s29, 1
      %p89 = por %p87, %p88
      %p90 = scmp.ne.s32.totalorder %s81, %s82
      %p91 = scmp.eq.s32.totalorder %s29, 0
      %p92 = por %p90, %p91
      %p93 = scmp.ne.s32.totalorder %s81, %s82
      %p94 = scmp.eq.s32.totalorder %s30, 1
      %p95 = por %p93, %p94
      %p97 = scmp.ne.s32.totalorder %s82, %s96
      %p98 = scmp.eq.s32.totalorder %s30, 0
      %p99 = por %p97, %p98
      %s101 = sadd.s32 %s100, 1
      %p104 = scmp.eq.s32.totalorder %s24, 1
      %p105 = scmp.ne.s32.totalorder %s100, %s102
      %p106 = scmp.eq.s32.totalorder %s24, 0
      %p107 = por %p105, %p106
      %p108 = scmp.ne.s32.totalorder %s100, %s102
      %p109 = scmp.eq.s32.totalorder %s29, 1
      %p110 = por %p108, %p109
      %p111 = scmp.ne.s32.totalorder %s102, %s103
      %p112 = scmp.eq.s32.totalorder %s29, 0
      %p113 = por %p111, %p112
      %p114 = scmp.ne.s32.totalorder %s102, %s103
      %p115 = scmp.eq.s32.totalorder %s30, 1
      %p116 = por %p114, %p115
      %p118 = scmp.ne.s32.totalorder %s103, %s117
      %p119 = scmp.eq.s32.totalorder %s30, 0
      %p120 = por %p118, %p119
      %s122 = sadd.s32 %s121, 1
      %p125 = scmp.eq.s32.totalorder %s24, 1
      %p126 = scmp.ne.s32.totalorder %s121, %s123
      %p127 = scmp.eq.s32.totalorder %s24, 0
      %p128 = por %p126, %p127
      %p129 = scmp.ne.s32.totalorder %s121, %s123
      %p130 = scmp.eq.s32.totalorder %s29, 1
      %p131 = por %p129, %p130
      %p132 = scmp.ne.s32.totalorder %s123, %s124
      %p133 = scmp.eq.s32.totalorder %s29, 0
      %p134 = por %p132, %p133
      %p135 = scmp.ne.s32.totalorder %s123, %s124
      %p136 = scmp.eq.s32.totalorder %s30, 1
      %p137 = por %p135, %p136
      %p139 = scmp.ne.s32.totalorder %s124, %s138
      %p140 = scmp.eq.s32.totalorder %s30, 0
      %p141 = por %p139, %p140
      %s143 = sadd.s32 %s142, 1
      %p146 = scmp.eq.s32.totalorder %s24, 1
      %p147 = scmp.ne.s32.totalorder %s142, %s144
      %p148 = scmp.eq.s32.totalorder %s24, 0
      %p149 = por %p147, %p148
      %p150 = scmp.ne.s32.totalorder %s142, %s144
      %p151 = scmp.eq.s32.totalorder %s29, 1
      %p152 = por %p150, %p151
      %p153 = scmp.ne.s32.totalorder %s144, %s145
      %p154 = scmp.eq.s32.totalorder %s29, 0
      %p155 = por %p153, %p154
      %p156 = scmp.ne.s32.totalorder %s144, %s145
      %p157 = scmp.eq.s32.totalorder %s30, 1
      %p158 = por %p156, %p157
      %p160 = scmp.ne.s32.totalorder %s145, %s159
      %p161 = scmp.eq.s32.totalorder %s30, 0
      %p162 = por %p160, %p161
      %s164 = sadd.s32 %s163, 1
      %p167 = scmp.eq.s32.totalorder %s24, 1
      %p168 = scmp.ne.s32.totalorder %s163, %s165
      %p169 = scmp.eq.s32.totalorder %s24, 0
      %p170 = por %p168, %p169
      %p171 = scmp.ne.s32.totalorder %s163, %s165
      %p172 = scmp.eq.s32.totalorder %s29, 1
      %p173 = por %p171, %p172
      %p174 = scmp.ne.s32.totalorder %s165, %s166
      %p175 = scmp.eq.s32.totalorder %s29, 0
      %p176 = por %p174, %p175
      %p177 = scmp.ne.s32.totalorder %s165, %s166
      %p178 = scmp.eq.s32.totalorder %s30, 1
      %p179 = por %p177, %p178
      %p181 = scmp.ne.s32.totalorder %s166, %s180
      %p182 = scmp.eq.s32.totalorder %s30, 0
      %p183 = por %p181, %p182
      %s185 = sadd.s32 %s184, 1
      %p188 = scmp.eq.s32.totalorder %s24, 1
      %p189 = scmp.ne.s32.totalorder %s184, %s186
      %p190 = scmp.eq.s32.totalorder %s24, 0
      %p191 = por %p189, %p190
      %p192 = scmp.ne.s32.totalorder %s184, %s186
      %p193 = scmp.eq.s32.totalorder %s29, 1
      %p194 = por %p192, %p193
      %p195 = scmp.ne.s32.totalorder %s186, %s187
      %p196 = scmp.eq.s32.totalorder %s29, 0
      %p197 = por %p195, %p196
      %p198 = scmp.ne.s32.totalorder %s186, %s187
      %p199 = scmp.eq.s32.totalorder %s30, 1
      %p200 = por %p198, %p199
      %p202 = scmp.ne.s32.totalorder %s187, %s201
      %p203 = scmp.eq.s32.totalorder %s30, 0
      %p204 = por %p202, %p203
      %s206 = sadd.s32 %s205, 1
      %p209 = scmp.eq.s32.totalorder %s24, 1
      %p210 = scmp.ne.s32.totalorder %s205, %s207
      %p211 = scmp.eq.s32.totalorder %s24, 0
      %p212 = por %p210, %p211
      %p213 = scmp.ne.s32.totalorder %s205, %s207
      %p214 = scmp.eq.s32.totalorder %s29, 1
      %p215 = por %p213, %p214
      %p216 = scmp.ne.s32.totalorder %s207, %s208
      %p217 = scmp.eq.s32.totalorder %s29, 0
      %p218 = por %p216, %p217
      %p219 = scmp.ne.s32.totalorder %s207, %s208
      %p220 = scmp.eq.s32.totalorder %s30, 1
      %p221 = por %p219, %p220
      %p223 = scmp.ne.s32.totalorder %s208, %s222
      %p224 = scmp.eq.s32.totalorder %s30, 0
      %p225 = por %p223, %p224
      %s227 = sadd.s32 %s226, 1
      %p230 = scmp.eq.s32.totalorder %s24, 1
      %p231 = scmp.ne.s32.totalorder %s226, %s228
      %p232 = scmp.eq.s32.totalorder %s24, 0
      %p233 = por %p231, %p232
      %p234 = scmp.ne.s32.totalorder %s226, %s228
      %p235 = scmp.eq.s32.totalorder %s29, 1
      %p236 = por %p234, %p235
      %p237 = scmp.ne.s32.totalorder %s228, %s229
      %p238 = scmp.eq.s32.totalorder %s29, 0
      %p239 = por %p237, %p238
      %p240 = scmp.ne.s32.totalorder %s228, %s229
      %p241 = scmp.eq.s32.totalorder %s30, 1
      %p242 = por %p240, %p241
      %p244 = scmp.ne.s32.totalorder %s229, %s243
      %p245 = scmp.eq.s32.totalorder %s30, 0
      %p246 = por %p244, %p245
      %s248 = sadd.s32 %s247, 1
      %p251 = scmp.eq.s32.totalorder %s24, 1
      %p252 = scmp.ne.s32.totalorder %s247, %s249
      %p253 = scmp.eq.s32.totalorder %s24, 0
      %p254 = por %p252, %p253
      %p255 = scmp.ne.s32.totalorder %s247, %s249
      %p256 = scmp.eq.s32.totalorder %s29, 1
      %p257 = por %p255, %p256
      %p258 = scmp.ne.s32.totalorder %s249, %s250
      %p259 = scmp.eq.s32.totalorder %s29, 0
      %p260 = por %p258, %p259
      %p261 = scmp.ne.s32.totalorder %s249, %s250
      %p262 = scmp.eq.s32.totalorder %s30, 1
      %p263 = por %p261, %p262
      %p265 = scmp.ne.s32.totalorder %s250, %s264
      %p266 = scmp.eq.s32.totalorder %s30, 0
      %p267 = por %p265, %p266
      %s269 = sadd.s32 %s268, 1
      %p272 = scmp.eq.s32.totalorder %s24, 1
      %p273 = scmp.ne.s32.totalorder %s268, %s270
      %p274 = scmp.eq.s32.totalorder %s24, 0
      %p275 = por %p273, %p274
      %p276 = scmp.ne.s32.totalorder %s268, %s270
      %p277 = scmp.eq.s32.totalorder %s29, 1
      %p278 = por %p276, %p277
      %p279 = scmp.ne.s32.totalorder %s270, %s271
      %p280 = scmp.eq.s32.totalorder %s29, 0
      %p281 = por %p279, %p280
      %p282 = scmp.ne.s32.totalorder %s270, %s271
      %p283 = scmp.eq.s32.totalorder %s30, 1
      %p284 = por %p282, %p283
      %p286 = scmp.ne.s32.totalorder %s271, %s285
      %p287 = scmp.eq.s32.totalorder %s30, 0
      %p288 = por %p286, %p287
      %s290 = sadd.s32 %s289, 1
      %p293 = scmp.eq.s32.totalorder %s24, 1
      %p294 = scmp.ne.s32.totalorder %s289, %s291
      %p295 = scmp.eq.s32.totalorder %s24, 0
      %p296 = por %p294, %p295
      %p297 = scmp.ne.s32.totalorder %s289, %s291
      %p298 = scmp.eq.s32.totalorder %s29, 1
      %p299 = por %p297, %p298
      %p300 = scmp.ne.s32.totalorder %s291, %s292
      %p301 = scmp.eq.s32.totalorder %s29, 0
      %p302 = por %p300, %p301
      %p303 = scmp.ne.s32.totalorder %s291, %s292
      %p304 = scmp.eq.s32.totalorder %s30, 1
      %p305 = por %p303, %p304
      %p307 = scmp.ne.s32.totalorder %s292, %s306
      %p308 = scmp.eq.s32.totalorder %s30, 0
      %p309 = por %p307, %p308
      %s311 = sadd.s32 %s310, 1
      %p314 = scmp.eq.s32.totalorder %s24, 1
      %p315 = scmp.ne.s32.totalorder %s310, %s312
      %p316 = scmp.eq.s32.totalorder %s24, 0
      %p317 = por %p315, %p316
      %p318 = scmp.ne.s32.totalorder %s310, %s312
      %p319 = scmp.eq.s32.totalorder %s29, 1
      %p320 = por %p318, %p319
      %p321 = scmp.ne.s32.totalorder %s312, %s313
      %p322 = scmp.eq.s32.totalorder %s29, 0
      %p323 = por %p321, %p322
      %p324 = scmp.ne.s32.totalorder %s312, %s313
      %p325 = scmp.eq.s32.totalorder %s30, 1
      %p326 = por %p324, %p325
      %p328 = scmp.ne.s32.totalorder %s313, %s327
      %p329 = scmp.eq.s32.totalorder %s30, 0
      %p330 = por %p328, %p329
      %s332 = sadd.s32 %s331, 1
      %p335 = scmp.eq.s32.totalorder %s24, 1
      %p336 = scmp.ne.s32.totalorder %s331, %s333
      %p337 = scmp.eq.s32.totalorder %s24, 0
      %p338 = por %p336, %p337
      %p339 = scmp.ne.s32.totalorder %s331, %s333
      %p340 = scmp.eq.s32.totalorder %s29, 1
      %p341 = por %p339, %p340
      %p342 = scmp.ne.s32.totalorder %s333, %s334
      %p343 = scmp.eq.s32.totalorder %s29, 0
      %p344 = por %p342, %p343
      %p345 = scmp.ne.s32.totalorder %s333, %s334
      %p346 = scmp.eq.s32.totalorder %s30, 1
      %p347 = por %p345, %p346
      %p349 = scmp.ne.s32.totalorder %s334, %s348
      %p350 = scmp.eq.s32.totalorder %s30, 0
      %p351 = por %p349, %p350
      %s352 = ssub.s32 %s24, %s31
      %p353 = scmp.eq.s32.totalorder %s352, 0
      %s355 = sadd.s32 %s354, 1
      %s356 = scalar_select %p353, %s354, %s355
      %p359 = pneg %p353
      %p360 = scmp.eq.s32.totalorder %s24, 1
      %p361 = por %p359, %p360
      %p362 = scmp.ne.s32.totalorder %s354, %s357
      %p363 = scmp.eq.s32.totalorder %s24, 0
      %p364 = por %p362, %p363
      %p365 = scmp.ne.s32.totalorder %s354, %s357
      %p366 = scmp.eq.s32.totalorder %s29, 1
      %p367 = por %p365, %p366
      %p368 = scmp.ne.s32.totalorder %s357, %s358
      %p369 = scmp.eq.s32.totalorder %s29, 0
      %p370 = por %p368, %p369
      %p371 = scmp.ne.s32.totalorder %s357, %s358
      %p372 = scmp.eq.s32.totalorder %s30, 1
      %p373 = por %p371, %p372
      %p375 = scmp.ne.s32.totalorder %s358, %s374
      %p376 = scmp.eq.s32.totalorder %s30, 0
      %p377 = por %p375, %p376
      %p378 = scmp.le.s32.totalorder 1, %s24
      %p379 = scmp.lt.s32.totalorder %s24, 3
      %p380 = pnand %p378, %p379
      %p381 = pneg %p380
      // Predicated region
      $region9: #{net_forward.1} parent=5 // pred_check
        _
      $region10: #{net_forward.1} parent=5 // pred_check_branch
        %383 = sbr.rel (%p380) target = $region12
      $region11: #{net_forward.1} parent=5 // pred_region
        %s384 = ssub.s32 %s24, 1
        // Predicated region
        $region13: #{net_forward.1} parent=11 // pred_check
          %p385 = pneg %p71
        $region14: #{net_forward.1} parent=11 // pred_check_branch
          %387 = sbr.rel (%p385) target = $region16
        $region15: #{net_forward.1} parent=11 // pred_region
          _
        $region16: #{net_forward.1} parent=11 // pred_fallthru
          _
        // Predicated region
        $region17: #{net_forward.1} parent=11 // pred_check
          %p388 = pneg %p92
        $region18: #{net_forward.1} parent=11 // pred_check_branch
          %390 = sbr.rel (%p388) target = $region20
        $region19: #{net_forward.1} parent=11 // pred_region
          _
        $region20: #{net_forward.1} parent=11 // pred_fallthru
          _
        // Predicated region
        $region21: #{net_forward.1} parent=11 // pred_check
          %p391 = pneg %p113
        $region22: #{net_forward.1} parent=11 // pred_check_branch
          %393 = sbr.rel (%p391) target = $region24
        $region23: #{net_forward.1} parent=11 // pred_region
          _
        $region24: #{net_forward.1} parent=11 // pred_fallthru
          _
        // Predicated region
        $region25: #{net_forward.1} parent=11 // pred_check
          %p394 = pneg %p134
        $region26: #{net_forward.1} parent=11 // pred_check_branch
          %396 = sbr.rel (%p394) target = $region28
        $region27: #{net_forward.1} parent=11 // pred_region
          _
        $region28: #{net_forward.1} parent=11 // pred_fallthru
          _
        // Predicated region
        $region29: #{net_forward.1} parent=11 // pred_check
          %p397 = pneg %p155
        $region30: #{net_forward.1} parent=11 // pred_check_branch
          %399 = sbr.rel (%p397) target = $region32
        $region31: #{net_forward.1} parent=11 // pred_region
          _
        $region32: #{net_forward.1} parent=11 // pred_fallthru
          _
        // Predicated region
        $region33: #{net_forward.1} parent=11 // pred_check
          %p400 = pneg %p176
        $region34: #{net_forward.1} parent=11 // pred_check_branch
          %402 = sbr.rel (%p400) target = $region36
        $region35: #{net_forward.1} parent=11 // pred_region
          _
        $region36: #{net_forward.1} parent=11 // pred_fallthru
          _
        // Predicated region
        $region37: #{net_forward.1} parent=11 // pred_check
          %p403 = pneg %p197
        $region38: #{net_forward.1} parent=11 // pred_check_branch
          %405 = sbr.rel (%p403) target = $region40
        $region39: #{net_forward.1} parent=11 // pred_region
          _
        $region40: #{net_forward.1} parent=11 // pred_fallthru
          _
        // Predicated region
        $region41: #{net_forward.1} parent=11 // pred_check
          %p406 = pneg %p218
        $region42: #{net_forward.1} parent=11 // pred_check_branch
          %408 = sbr.rel (%p406) target = $region44
        $region43: #{net_forward.1} parent=11 // pred_region
          _
        $region44: #{net_forward.1} parent=11 // pred_fallthru
          _
        // Predicated region
        $region45: #{net_forward.1} parent=11 // pred_check
          %p409 = pneg %p239
        $region46: #{net_forward.1} parent=11 // pred_check_branch
          %411 = sbr.rel (%p409) target = $region48
        $region47: #{net_forward.1} parent=11 // pred_region
          _
        $region48: #{net_forward.1} parent=11 // pred_fallthru
          _
        // Predicated region
        $region49: #{net_forward.1} parent=11 // pred_check
          %p412 = pneg %p260
        $region50: #{net_forward.1} parent=11 // pred_check_branch
          %414 = sbr.rel (%p412) target = $region52
        $region51: #{net_forward.1} parent=11 // pred_region
          _
        $region52: #{net_forward.1} parent=11 // pred_fallthru
          _
        // Predicated region
        $region53: #{net_forward.1} parent=11 // pred_check
          %p415 = pneg %p281
        $region54: #{net_forward.1} parent=11 // pred_check_branch
          %417 = sbr.rel (%p415) target = $region56
        $region55: #{net_forward.1} parent=11 // pred_region
          _
        $region56: #{net_forward.1} parent=11 // pred_fallthru
          _
        // Predicated region
        $region57: #{net_forward.1} parent=11 // pred_check
          %p418 = pneg %p302
        $region58: #{net_forward.1} parent=11 // pred_check_branch
          %420 = sbr.rel (%p418) target = $region60
        $region59: #{net_forward.1} parent=11 // pred_region
          _
        $region60: #{net_forward.1} parent=11 // pred_fallthru
          _
        // Predicated region
        $region61: #{net_forward.1} parent=11 // pred_check
          %p421 = pneg %p323
        $region62: #{net_forward.1} parent=11 // pred_check_branch
          %423 = sbr.rel (%p421) target = $region64
        $region63: #{net_forward.1} parent=11 // pred_region
          _
        $region64: #{net_forward.1} parent=11 // pred_fallthru
          _
        // Predicated region
        $region65: #{net_forward.1} parent=11 // pred_check
          %p424 = pneg %p344
        $region66: #{net_forward.1} parent=11 // pred_check_branch
          %426 = sbr.rel (%p424) target = $region68
        $region67: #{net_forward.1} parent=11 // pred_region
          _
        $region68: #{net_forward.1} parent=11 // pred_fallthru
          _
      $region12: #{net_forward.1} parent=5 // pred_fallthru
        _
      %p427 = scmp.lt.s32.totalorder %s24, 2
      // Predicated region
      $region69: #{net_forward.1} parent=5 // pred_check
        %p428 = pneg %p427
      $region70: #{net_forward.1} parent=5 // pred_check_branch
        %430 = sbr.rel (%p428) target = $region72
      $region71: #{net_forward.1} parent=5 // pred_region
        // Predicated region
        $region73: #{net_forward.1} parent=71 // pred_check
          %p431 = pneg %p44
        $region74: #{net_forward.1} parent=71 // pred_check_branch
          %433 = sbr.rel (%p431) target = $region76
        $region75: #{net_forward.1} parent=71 // pred_region
          %s434 = smul.u32 8, %s24
          %p435 = scmp.lt.s32.totalorder %s434, 15
          %s436 = scalar_select %p435, %s434, 15
          %s437 = smul.addr %s436, 4
          %s438 = smul.addr %s437, 8
          %s439 = scalar_lea.vmem %s0, %s438
          %s440 = smul.u32 8, %s24
        $region76: #{net_forward.1} parent=71 // pred_fallthru
          _
      $region72: #{net_forward.1} parent=5 // pred_fallthru
        _
      %p441 = scmp.le.s32.totalorder 1, %s24
      %p442 = scmp.lt.s32.totalorder %s24, 3
      %p443 = pnand %p441, %p442
      %p444 = pneg %p443
      // Predicated region
      $region77: #{net_forward.1} parent=5 // pred_check
        _
      $region78: #{net_forward.1} parent=5 // pred_check_branch
        %446 = sbr.rel (%p443) target = $region80
      $region79: #{net_forward.1} parent=5 // pred_region
        %s447 = ssub.s32 %s24, 1
        %s448 = smul.u32 8, %s29
        %p449 = scmp.lt.s32.totalorder %s448, 15
        %s450 = scalar_select %p449, %s448, 15
        %s451 = smul.addr %s450, 4
        %s452 = smul.addr %s451, 8
        %s453 = scalar_lea.vmem %s0, %s452
        %p454 = pneg %p50
        %p455 = pneg %p47
        %p456 = pneg %p71
        %p457 = pneg %p68
        %p458 = pneg %p92
        %p459 = pneg %p89
        %p460 = pneg %p113
        %p461 = pneg %p110
        %p462 = pneg %p134
        %p463 = pneg %p131
        %p464 = pneg %p155
        %p465 = pneg %p152
        %p466 = pneg %p176
        %p467 = pneg %p173
        %p468 = pneg %p197
        %p469 = pneg %p194
        %p470 = pneg %p218
        %p471 = pneg %p215
        %p472 = pneg %p239
        %p473 = pneg %p236
        %p474 = pneg %p260
        %p475 = pneg %p257
        %p476 = pneg %p281
        %p477 = pneg %p278
        %p478 = pneg %p302
        %p479 = pneg %p299
        %p480 = pneg %p323
        %p481 = pneg %p320
        %p482 = pneg %p344
        %p483 = pneg %p341
        %p484 = pneg %p370
        %p485 = pneg %p367
        %s486 = sand.u32 %s357, 1
        %s487 = scalar_lea.sflag [#allocation4], %s486
        %s488 = sand.u32 %s357, 1
        %s489 = smul.addr %s488, 8
        %s490 = scalar_lea.vmem [#allocation3], %s489
        %s491 = smul.u32 8, %s29
        %p492 = scmp.lt.s32.totalorder %s491, 15
        %s493 = scalar_select %p492, %s491, 15
        %s494 = smul.addr %s493, 4
        %s495 = smul.addr %s494, 8
        %s496 = scalar_lea.vmem %s0, %s495
        %s497 = smul.u32 8, %s29
        %v499 = vld [vmem:[%s496] sm:$0xff]
        %v500 = vld [vmem:[%s496 + $0x8] sm:$0xff]
        %v501 = vld [vmem:[%s496 + $0x10] sm:$0xff]
        %v502 = vld [vmem:[%s496 + $0x18] sm:$0xf]
        %v503 = vpack.c.bf16 %v500, %v499
        %v504 = vpack.c.bf16 %v502, %v501
        %v505 = vld [vmem:[%s1] sm:$0xff]
        %v506 = vld [vmem:[%s1 + $0x8] sm:$0xff]
        %v507 = vld [vmem:[%s1 + $0x10] sm:$0xff]
        %v508 = vld [vmem:[%s1 + $0x18] sm:$0xff]
        %v509 = vld [vmem:[%s1 + $0x20] sm:$0xff]
        %v510 = vld [vmem:[%s1 + $0x28] sm:$0xff]
        %v511 = vld [vmem:[%s1 + $0x30] sm:$0xff]
        %v512 = vld [vmem:[%s1 + $0x38] sm:$0xff]
        %v513 = vld [vmem:[%s1 + $0x40] sm:$0xff]
        %v514 = vld [vmem:[%s1 + $0x48] sm:$0xff]
        %v515 = vld [vmem:[%s1 + $0x50] sm:$0xff]
        %v516 = vld [vmem:[%s1 + $0x58] sm:$0x11]
        %v517 = vld [vmem:[%s496 + $0x1] sm:$0xff]
        %v518 = vld [vmem:[%s496 + $0x9] sm:$0xff]
        %v519 = vld [vmem:[%s496 + $0x11] sm:$0xff]
        %v520 = vld [vmem:[%s496 + $0x19] sm:$0xf]
        %v521 = vpack.c.bf16 %v518, %v517
        %v522 = vpack.c.bf16 %v520, %v519
        %s523 = scalar_lea.vmem %s1, 96
        %v524 = vld [vmem:[%s523] sm:$0xff]
        %v525 = vld [vmem:[%s523 + $0x8] sm:$0xff]
        %v526 = vld [vmem:[%s523 + $0x10] sm:$0xff]
        %v527 = vld [vmem:[%s523 + $0x18] sm:$0xff]
        %v528 = vld [vmem:[%s523 + $0x20] sm:$0xff]
        %v529 = vld [vmem:[%s523 + $0x28] sm:$0xff]
        %v530 = vld [vmem:[%s523 + $0x30] sm:$0xff]
        %v531 = vld [vmem:[%s523 + $0x38] sm:$0xff]
        %v532 = vld [vmem:[%s523 + $0x40] sm:$0xff]
        %v533 = vld [vmem:[%s523 + $0x48] sm:$0xff]
        %v534 = vld [vmem:[%s523 + $0x50] sm:$0xff]
        %v535 = vld [vmem:[%s523 + $0x58] sm:$0x11]
        %v548 = vunpack.c.l.b16 %v524
        %v549 = vunpack.c.h.b16 %v524
        %v550 = vunpack.c.l.b16 %v525
        %v551 = vunpack.c.h.b16 %v525
        %v552 = vunpack.c.l.b16 %v526
        %v553 = vunpack.c.h.b16 %v526
        %v554 = vunpack.c.l.b16 %v527
        %v555 = vunpack.c.h.b16 %v527
        %v556 = vunpack.c.l.b16 %v528
        %v557 = vunpack.c.h.b16 %v528
        %v558 = vunpack.c.l.b16 %v529
        %v559 = vunpack.c.h.b16 %v529
        %v560 = vunpack.c.l.b16 %v530
        %v561 = vunpack.c.h.b16 %v530
        %v562 = vunpack.c.l.b16 %v531
        %v563 = vunpack.c.h.b16 %v531
        %v564 = vunpack.c.l.b16 %v532
        %v565 = vunpack.c.h.b16 %v532
        %v566 = vunpack.c.l.b16 %v533
        %v567 = vunpack.c.h.b16 %v533
        %v568 = vunpack.c.l.b16 %v534
        %v569 = vunpack.c.h.b16 %v534
        %v570 = vunpack.c.l.b16 %v535
        %v571 = vunpack.c.h.b16 %v535
        %v572 = vpack.c.b16 %v550, %v548
        %v573 = vpack.c.b16 %v551, %v549
        %v574 = vpack.c.b16 %v554, %v552
        %v575 = vpack.c.b16 %v555, %v553
        %v576 = vpack.c.b16 %v558, %v556
        %v577 = vpack.c.b16 %v559, %v557
        %v578 = vpack.c.b16 %v562, %v560
        %v579 = vpack.c.b16 %v563, %v561
        %v580 = vpack.c.b16 %v566, %v564
        %v581 = vpack.c.b16 %v567, %v565
        %v582 = vpack.c.b16 %v570, %v568
        %v583 = vpack.c.b16 %v571, %v569
        %vm594 = vcmask 736256
        %v596 = vsel %vm594, %v521, 0
        %v599 = vsel %vm594, %v522, 0
        %vm601 = vcmask 1044480
        %v603 = vsel %vm601, %v582, 0
        %v606 = vsel %vm601, %v583, 0
        %608 = vmatprep.subr.bf16.mxu0 %v573
        %609 = vmatpush1.bf16.msra.mxu0 %v572
        %610 = vmatprep.subr.bf16.mxu0 %v575
        %611 = vmatpush1.bf16.msra.mxu0 %v574
        %612 = vmatprep.subr.bf16.mxu0 %v577
        %613 = vmatpush1.bf16.msra.mxu0 %v576
        %614 = vmatprep.subr.bf16.mxu0 %v579
        %615 = vmatpush1.bf16.msra.mxu0 %v578
        %616 = vmatprep.subr.bf16.mxu0 %v581
        %617 = vmatpush1.bf16.msra.mxu0 %v580
        %618 = vmatprep.subr.bf16.mxu0 %v606
        %619 = vmatpush1.bf16.msra.mxu0 %v603
        %620 = vmatprep.subr.bf16.mxu0 0
        %621 = vmatpush1.bf16.msra.mxu0 0
        %622 = vmatprep.subr.bf16.mxu0 0
        %623 = vmatpush1.bf16.msra.mxu0 0
        %624 = vmatprep.subr.bf16.mxu0 0
        %625 = vmatpush1.bf16.msra.mxu0 0
        %626 = vmatprep.subr.bf16.mxu0 0
        %627 = vmatpush1.bf16.msra.mxu0 0
        %628 = vmatprep.subr.bf16.mxu0 0
        %629 = vmatpush1.bf16.msra.mxu0 0
        %630 = vmatprep.subr.bf16.mxu0 0
        %631 = vmatpush1.bf16.msra.mxu0 0
        %632 = vmatprep.subr.bf16.mxu0 0
        %633 = vmatpush1.bf16.msra.mxu0 0
        %634 = vmatprep.subr.bf16.mxu0 0
        %635 = vmatpush1.bf16.msra.mxu0 0
        %636 = vmatprep.subr.bf16.mxu0 0
        %637 = vmatpush1.bf16.msra.mxu0 0
        %638 = vmatprep.subr.bf16.mxu0 0
        %639 = vmatpush1.bf16.msra.mxu0 0
        %640 = vmatprep.mubr.bf16.mxu0 0
        %641 = vmatmul.mubr.bf16.gmra.mrb[0].mxu0 %v596
        %v642 = vpop.f32.mrb[0].mxu0
        %v643 = vadd.f32 0.0, %v642
        %v644 = vpop.f32.mrb[0].mxu0
        %v645 = vadd.f32 0.0, %v644
        %v646 = vpop.f32.mrb[0].mxu0
        %v647 = vadd.f32 0.0, %v646
        %v648 = vpop.f32.mrb[0].mxu0
        %v649 = vadd.f32 0.0, %v648
        %650 = vmatprep.mubr.bf16.mxu0 0
        %651 = vmatmul.mubr.bf16.gmra.mrb[0].mxu0 %v599
        %v652 = vpop.f32.mrb[0].mxu0
        %v653 = vadd.f32 0.0, %v652
        %v654 = vpop.f32.mrb[0].mxu0
        %v655 = vadd.f32 0.0, %v654
        %v656 = vpop.f32.mrb[0].mxu0
        %v657 = vadd.f32 0.0, %v656
        %v658 = vpop.f32.mrb[0].mxu0
        %v659 = vadd.f32 0.0, %v658
        %660 = vdwg.mxu0
        %v673 = vunpack.c.l.b16 %v505
        %v674 = vunpack.c.h.b16 %v505
        %v675 = vunpack.c.l.b16 %v506
        %v676 = vunpack.c.h.b16 %v506
        %v677 = vunpack.c.l.b16 %v507
        %v678 = vunpack.c.h.b16 %v507
        %v679 = vunpack.c.l.b16 %v508
        %v680 = vunpack.c.h.b16 %v508
        %v681 = vunpack.c.l.b16 %v509
        %v682 = vunpack.c.h.b16 %v509
        %v683 = vunpack.c.l.b16 %v510
        %v684 = vunpack.c.h.b16 %v510
        %v685 = vunpack.c.l.b16 %v511
        %v686 = vunpack.c.h.b16 %v511
        %v687 = vunpack.c.l.b16 %v512
        %v688 = vunpack.c.h.b16 %v512
        %v689 = vunpack.c.l.b16 %v513
        %v690 = vunpack.c.h.b16 %v513
        %v691 = vunpack.c.l.b16 %v514
        %v692 = vunpack.c.h.b16 %v514
        %v693 = vunpack.c.l.b16 %v515
        %v694 = vunpack.c.h.b16 %v515
        %v695 = vunpack.c.l.b16 %v516
        %v696 = vunpack.c.h.b16 %v516
        %v697 = vpack.c.b16 %v675, %v673
        %v698 = vpack.c.b16 %v676, %v674
        %v699 = vpack.c.b16 %v679, %v677
        %v700 = vpack.c.b16 %v680, %v678
        %v701 = vpack.c.b16 %v683, %v681
        %v702 = vpack.c.b16 %v684, %v682
        %v703 = vpack.c.b16 %v687, %v685
        %v704 = vpack.c.b16 %v688, %v686
        %v705 = vpack.c.b16 %v691, %v689
        %v706 = vpack.c.b16 %v692, %v690
        %v707 = vpack.c.b16 %v695, %v693
        %v708 = vpack.c.b16 %v696, %v694
        %v720 = vsel %vm594, %v503, 0
        %v723 = vsel %vm594, %v504, 0
        %v726 = vsel %vm601, %v707, 0
        %v729 = vsel %vm601, %v708, 0
        %731 = vmatprep.subr.bf16.mxu0 %v698
        %732 = vmatpush1.bf16.msra.mxu0 %v697
        %733 = vmatprep.subr.bf16.mxu0 %v700
        %734 = vmatpush1.bf16.msra.mxu0 %v699
        %735 = vmatprep.subr.bf16.mxu0 %v702
        %736 = vmatpush1.bf16.msra.mxu0 %v701
        %737 = vmatprep.subr.bf16.mxu0 %v704
        %738 = vmatpush1.bf16.msra.mxu0 %v703
        %739 = vmatprep.subr.bf16.mxu0 %v706
        %740 = vmatpush1.bf16.msra.mxu0 %v705
        %741 = vmatprep.subr.bf16.mxu0 %v729
        %742 = vmatpush1.bf16.msra.mxu0 %v726
        %743 = vmatprep.subr.bf16.mxu0 0
        %744 = vmatpush1.bf16.msra.mxu0 0
        %745 = vmatprep.subr.bf16.mxu0 0
        %746 = vmatpush1.bf16.msra.mxu0 0
        %747 = vmatprep.subr.bf16.mxu0 0
        %748 = vmatpush1.bf16.msra.mxu0 0
        %749 = vmatprep.subr.bf16.mxu0 0
        %750 = vmatpush1.bf16.msra.mxu0 0
        %751 = vmatprep.subr.bf16.mxu0 0
        %752 = vmatpush1.bf16.msra.mxu0 0
        %753 = vmatprep.subr.bf16.mxu0 0
        %754 = vmatpush1.bf16.msra.mxu0 0
        %755 = vmatprep.subr.bf16.mxu0 0
        %756 = vmatpush1.bf16.msra.mxu0 0
        %757 = vmatprep.subr.bf16.mxu0 0
        %758 = vmatpush1.bf16.msra.mxu0 0
        %759 = vmatprep.subr.bf16.mxu0 0
        %760 = vmatpush1.bf16.msra.mxu0 0
        %761 = vmatprep.subr.bf16.mxu0 0
        %762 = vmatpush1.bf16.msra.mxu0 0
        %763 = vmatprep.mubr.bf16.mxu0 0
        %764 = vmatmul.mubr.bf16.gmra.mrb[0].mxu0 %v720
        %v765 = vpop.f32.mrb[0].mxu0
        %v766 = vadd.f32 %v643, %v765
        %v767 = vpop.f32.mrb[0].mxu0
        %v768 = vadd.f32 %v645, %v767
        %v769 = vpop.f32.mrb[0].mxu0
        %v770 = vadd.f32 %v647, %v769
        %v771 = vpop.f32.mrb[0].mxu0
        %v772 = vadd.f32 %v649, %v771
        %773 = vmatprep.mubr.bf16.mxu0 0
        %774 = vmatmul.mubr.bf16.gmra.mrb[0].mxu0 %v723
        %v775 = vpop.f32.mrb[0].mxu0
        %v776 = vadd.f32 %v653, %v775
        %v777 = vpop.f32.mrb[0].mxu0
        %v778 = vadd.f32 %v655, %v777
        %v779 = vpop.f32.mrb[0].mxu0
        %v780 = vadd.f32 %v657, %v779
        %v781 = vpop.f32.mrb[0].mxu0
        %v782 = vadd.f32 %v659, %v781
        %783 = vdwg.mxu0
        %v784 = vld [vmem:[%s496 + $0x2] sm:$0xff]
        %v785 = vld [vmem:[%s496 + $0xa] sm:$0xff]
        %v786 = vld [vmem:[%s496 + $0x12] sm:$0xff]
        %v787 = vld [vmem:[%s496 + $0x1a] sm:$0xf]
        %v788 = vpack.c.bf16 %v785, %v784
        %v789 = vpack.c.bf16 %v787, %v786
        %s790 = scalar_lea.vmem %s1, 192
        %v791 = vld [vmem:[%s790] sm:$0xff]
        %v792 = vld [vmem:[%s790 + $0x8] sm:$0xff]
        %v793 = vld [vmem:[%s790 + $0x10] sm:$0xff]
        %v794 = vld [vmem:[%s790 + $0x18] sm:$0xff]
        %v795 = vld [vmem:[%s790 + $0x20] sm:$0xff]
        %v796 = vld [vmem:[%s790 + $0x28] sm:$0xff]
        %v797 = vld [vmem:[%s790 + $0x30] sm:$0xff]
        %v798 = vld [vmem:[%s790 + $0x38] sm:$0xff]
        %v799 = vld [vmem:[%s790 + $0x40] sm:$0xff]
        %v800 = vld [vmem:[%s790 + $0x48] sm:$0xff]
        %v801 = vld [vmem:[%s790 + $0x50] sm:$0xff]
        %v802 = vld [vmem:[%s790 + $0x58] sm:$0x11]
        %v815 = vunpack.c.l.b16 %v791
        %v816 = vunpack.c.h.b16 %v791
        %v817 = vunpack.c.l.b16 %v792
        %v818 = vunpack.c.h.b16 %v792
        %v819 = vunpack.c.l.b16 %v793
        %v820 = vunpack.c.h.b16 %v793
        %v821 = vunpack.c.l.b16 %v794
        %v822 = vunpack.c.h.b16 %v794
        %v823 = vunpack.c.l.b16 %v795
        %v824 = vunpack.c.h.b16 %v795
        %v825 = vunpack.c.l.b16 %v796
        %v826 = vunpack.c.h.b16 %v796
        %v827 = vunpack.c.l.b16 %v797
        %v828 = vunpack.c.h.b16 %v797
        %v829 = vunpack.c.l.b16 %v798
        %v830 = vunpack.c.h.b16 %v798
        %v831 = vunpack.c.l.b16 %v799
        %v832 = vunpack.c.h.b16 %v799
        %v833 = vunpack.c.l.b16 %v800
        %v834 = vunpack.c.h.b16 %v800
        %v835 = vunpack.c.l.b16 %v801
        %v836 = vunpack.c.h.b16 %v801
        %v837 = vunpack.c.l.b16 %v802
        %v838 = vunpack.c.h.b16 %v802
        %v839 = vpack.c.b16 %v817, %v815
        %v840 = vpack.c.b16 %v818, %v816
        %v841 = vpack.c.b16 %v821, %v819
        %v842 = vpack.c.b16 %v822, %v820
        %v843 = vpack.c.b16 %v825, %v823
        %v844 = vpack.c.b16 %v826, %v824
        %v845 = vpack.c.b16 %v829, %v827
        %v846 = vpack.c.b16 %v830, %v828
        %v847 = vpack.c.b16 %v833, %v831
        %v848 = vpack.c.b16 %v834, %v832
        %v849 = vpack.c.b16 %v837, %v835
        %v850 = vpack.c.b16 %v838, %v836
        %v862 = vsel %vm594, %v788, 0
        %v865 = vsel %vm594, %v789, 0
        %v868 = vsel %vm601, %v849, 0
        %v871 = vsel %vm601, %v850, 0
        %873 = vmatprep.subr.bf16.mxu0 %v840
        %874 = vmatpush1.bf16.msra.mxu0 %v839
        %875 = vmatprep.subr.bf16.mxu0 %v842
        %876 = vmatpush1.bf16.msra.mxu0 %v841
        %877 = vmatprep.subr.bf16.mxu0 %v844
        %878 = vmatpush1.bf16.msra.mxu0 %v843
        %879 = vmatprep.subr.bf16.mxu0 %v846
        %880 = vmatpush1.bf16.msra.mxu0 %v845
        %881 = vmatprep.subr.bf16.mxu0 %v848
        %882 = vmatpush1.bf16.msra.mxu0 %v847
        %883 = vmatprep.subr.bf16.mxu0 %v871
        %884 = vmatpush1.bf16.msra.mxu0 %v868
        %885 = vmatprep.subr.bf16.mxu0 0
        %886 = vmatpush1.bf16.msra.mxu0 0
        %887 = vmatprep.subr.bf16.mxu0 0
        %888 = vmatpush1.bf16.msra.mxu0 0
        %889 = vmatprep.subr.bf16.mxu0 0
        %890 = vmatpush1.bf16.msra.mxu0 0
        %891 = vmatprep.subr.bf16.mxu0 0
        %892 = vmatpush1.bf16.msra.mxu0 0
        %893 = vmatprep.subr.bf16.mxu0 0
        %894 = vmatpush1.bf16.msra.mxu0 0
        %895 = vmatprep.subr.bf16.mxu0 0
        %896 = vmatpush1.bf16.msra.mxu0 0
        %897 = vmatprep.subr.bf16.mxu0 0
        %898 = vmatpush1.bf16.msra.mxu0 0
        %899 = vmatprep.subr.bf16.mxu0 0
        %900 = vmatpush1.bf16.msra.mxu0 0
        %901 = vmatprep.subr.bf16.mxu0 0
        %902 = vmatpush1.bf16.msra.mxu0 0
        %903 = vmatprep.subr.bf16.mxu0 0
        %904 = vmatpush1.bf16.msra.mxu0 0
        %905 = vmatprep.mubr.bf16.mxu0 0
        %906 = vmatmul.mubr.bf16.gmra.mrb[0].mxu0 %v862
        %v907 = vpop.f32.mrb[0].mxu0
        %v908 = vadd.f32 0.0, %v907
        %v909 = vpop.f32.mrb[0].mxu0
        %v910 = vadd.f32 0.0, %v909
        %v911 = vpop.f32.mrb[0].mxu0
        %v912 = vadd.f32 0.0, %v911
        %v913 = vpop.f32.mrb[0].mxu0
        %v914 = vadd.f32 0.0, %v913
        %915 = vmatprep.mubr.bf16.mxu0 0
        %916 = vmatmul.mubr.bf16.gmra.mrb[0].mxu0 %v865
        %v917 = vpop.f32.mrb[0].mxu0
        %v918 = vadd.f32 0.0, %v917
        %v919 = vpop.f32.mrb[0].mxu0
        %v920 = vadd.f32 0.0, %v919
        %v921 = vpop.f32.mrb[0].mxu0
        %v922 = vadd.f32 0.0, %v921
        %v923 = vpop.f32.mrb[0].mxu0
        %v924 = vadd.f32 0.0, %v923
        %925 = vdwg.mxu0
        %v926 = vadd.f32 %v766, %v908
        %v927 = vadd.f32 %v768, %v910
        %v928 = vadd.f32 %v770, %v912
        %v929 = vadd.f32 %v772, %v914
        %v930 = vadd.f32 %v776, %v918
        %v931 = vadd.f32 %v778, %v920
        %v932 = vadd.f32 %v780, %v922
        %v933 = vadd.f32 %v782, %v924
        %v934 = vmax.f32 %v926, %v927
        %v935 = vmax.f32 %v928, %v929
        %v936 = vmax.f32 %v930, %v931
        %v937 = vmax.f32 %v932, %v933
        %s938 = scalar_lea.vmem %s496, 32
        %v939 = vld [vmem:[%s938] sm:$0xff]
        %v940 = vld [vmem:[%s938 + $0x8] sm:$0xff]
        %v941 = vld [vmem:[%s938 + $0x10] sm:$0xff]
        %v942 = vld [vmem:[%s938 + $0x18] sm:$0xf]
        %v943 = vpack.c.bf16 %v940, %v939
        %v944 = vpack.c.bf16 %v942, %v941
        %v945 = vld [vmem:[%s938 + $0x1] sm:$0xff]
        %v946 = vld [vmem:[%s938 + $0x9] sm:$0xff]
        %v947 = vld [vmem:[%s938 + $0x11] sm:$0xff]
        %v948 = vld [vmem:[%s938 + $0x19] sm:$0xf]
        %v949 = vpack.c.bf16 %v946, %v945
        %v950 = vpack.c.bf16 %v948, %v947
        %v952 = vsel %vm594, %v949, 0
        %v955 = vsel %vm594, %v950, 0
        %957 = vmatprep.subr.bf16.mxu0 %v573
        %958 = vmatpush1.bf16.msra.mxu0 %v572
        %959 = vmatprep.subr.bf16.mxu0 %v575
        %960 = vmatpush1.bf16.msra.mxu0 %v574
        %961 = vmatprep.subr.bf16.mxu0 %v577
        %962 = vmatpush1.bf16.msra.mxu0 %v576
        %963 = vmatprep.subr.bf16.mxu0 %v579
        %964 = vmatpush1.bf16.msra.mxu0 %v578
        %965 = vmatprep.subr.bf16.mxu0 %v581
        %966 = vmatpush1.bf16.msra.mxu0 %v580
        %967 = vmatprep.subr.bf16.mxu0 %v606
        %968 = vmatpush1.bf16.msra.mxu0 %v603
        %969 = vmatprep.subr.bf16.mxu0 0
        %970 = vmatpush1.bf16.msra.mxu0 0
        %971 = vmatprep.subr.bf16.mxu0 0
        %972 = vmatpush1.bf16.msra.mxu0 0
        %973 = vmatprep.subr.bf16.mxu0 0
        %974 = vmatpush1.bf16.msra.mxu0 0
        %975 = vmatprep.subr.bf16.mxu0 0
        %976 = vmatpush1.bf16.msra.mxu0 0
        %977 = vmatprep.subr.bf16.mxu0 0
        %978 = vmatpush1.bf16.msra.mxu0 0
        %979 = vmatprep.subr.bf16.mxu0 0
        %980 = vmatpush1.bf16.msra.mxu0 0
        %981 = vmatprep.subr.bf16.mxu0 0
        %982 = vmatpush1.bf16.msra.mxu0 0
        %983 = vmatprep.subr.bf16.mxu0 0
        %984 = vmatpush1.bf16.msra.mxu0 0
        %985 = vmatprep.subr.bf16.mxu0 0
        %986 = vmatpush1.bf16.msra.mxu0 0
        %987 = vmatprep.subr.bf16.mxu0 0
        %988 = vmatpush1.bf16.msra.mxu0 0
        %989 = vmatprep.mubr.bf16.mxu0 0
        %990 = vmatmul.mubr.bf16.gmra.mrb[0].mxu0 %v952
        %v991 = vpop.f32.mrb[0].mxu0
        %v992 = vadd.f32 0.0, %v991
        %v993 = vpop.f32.mrb[0].mxu0
        %v994 = vadd.f32 0.0, %v993
        %v995 = vpop.f32.mrb[0].mxu0
        %v996 = vadd.f32 0.0, %v995
        %v997 = vpop.f32.mrb[0].mxu0
        %v998 = vadd.f32 0.0, %v997
        %999 = vmatprep.mubr.bf16.mxu0 0
        %1000 = vmatmul.mubr.bf16.gmra.mrb[0].mxu0 %v955
        %v1001 = vpop.f32.mrb[0].mxu0
        %v1002 = vadd.f32 0.0, %v1001
        %v1003 = vpop.f32.mrb[0].mxu0
        %v1004 = vadd.f32 0.0, %v1003
        %v1005 = vpop.f32.mrb[0].mxu0
        %v1006 = vadd.f32 0.0, %v1005
        %v1007 = vpop.f32.mrb[0].mxu0
        %v1008 = vadd.f32 0.0, %v1007
        %1009 = vdwg.mxu0
        %v1011 = vsel %vm594, %v943, 0
        %v1014 = vsel %vm594, %v944, 0
        %1016 = vmatprep.subr.bf16.mxu0 %v698
        %1017 = vmatpush1.bf16.msra.mxu0 %v697
        %1018 = vmatprep.subr.bf16.mxu0 %v700
        %1019 = vmatpush1.bf16.msra.mxu0 %v699
        %1020 = vmatprep.subr.bf16.mxu0 %v702
        %1021 = vmatpush1.bf16.msra.mxu0 %v701
        %1022 = vmatprep.subr.bf16.mxu0 %v704
        %1023 = vmatpush1.bf16.msra.mxu0 %v703
        %1024 = vmatprep.subr.bf16.mxu0 %v706
        %1025 = vmatpush1.bf16.msra.mxu0 %v705
        %1026 = vmatprep.subr.bf16.mxu0 %v729
        %1027 = vmatpush1.bf16.msra.mxu0 %v726
        %1028 = vmatprep.subr.bf16.mxu0 0
        %1029 = vmatpush1.bf16.msra.mxu0 0
        %1030 = vmatprep.subr.bf16.mxu0 0
        %1031 = vmatpush1.bf16.msra.mxu0 0
        %1032 = vmatprep.subr.bf16.mxu0 0
        %1033 = vmatpush1.bf16.msra.mxu0 0
        %1034 = vmatprep.subr.bf16.mxu0 0
        %1035 = vmatpush1.bf16.msra.mxu0 0
        %1036 = vmatprep.subr.bf16.mxu0 0
        %1037 = vmatpush1.bf16.msra.mxu0 0
        %1038 = vmatprep.subr.bf16.mxu0 0
        %1039 = vmatpush1.bf16.msra.mxu0 0
        %1040 = vmatprep.subr.bf16.mxu0 0
        %1041 = vmatpush1.bf16.msra.mxu0 0
        %1042 = vmatprep.subr.bf16.mxu0 0
        %1043 = vmatpush1.bf16.msra.mxu0 0
        %1044 = vmatprep.subr.bf16.mxu0 0
        %1045 = vmatpush1.bf16.msra.mxu0 0
        %1046 = vmatprep.subr.bf16.mxu0 0
        %1047 = vmatpush1.bf16.msra.mxu0 0
        %1048 = vmatprep.mubr.bf16.mxu0 0
        %1049 = vmatmul.mubr.bf16.gmra.mrb[0].mxu0 %v1011
        %v1050 = vpop.f32.mrb[0].mxu0
        %v1051 = vadd.f32 %v992, %v1050
        %v1052 = vpop.f32.mrb[0].mxu0
        %v1053 = vadd.f32 %v994, %v1052
        %v1054 = vpop.f32.mrb[0].mxu0
        %v1055 = vadd.f32 %v996, %v1054
        %v1056 = vpop.f32.mrb[0].mxu0
        %v1057 = vadd.f32 %v998, %v1056
        %1058 = vmatprep.mubr.bf16.mxu0 0
        %1059 = vmatmul.mubr.bf16.gmra.mrb[0].mxu0 %v1014
        %v1060 = vpop.f32.mrb[0].mxu0
        %v1061 = vadd.f32 %v1002, %v1060
        %v1062 = vpop.f32.mrb[0].mxu0
        %v1063 = vadd.f32 %v1004, %v1062
        %v1064 = vpop.f32.mrb[0].mxu0
        %v1065 = vadd.f32 %v1006, %v1064
        %v1066 = vpop.f32.mrb[0].mxu0
        %v1067 = vadd.f32 %v1008, %v1066
        %1068 = vdwg.mxu0
        %v1069 = vld [vmem:[%s938 + $0x2] sm:$0xff]
        %v1070 = vld [vmem:[%s938 + $0xa] sm:$0xff]
        %v1071 = vld [vmem:[%s938 + $0x12] sm:$0xff]
        %v1072 = vld [vmem:[%s938 + $0x1a] sm:$0xf]
        %v1073 = vpack.c.bf16 %v1070, %v1069
        %v1074 = vpack.c.bf16 %v1072, %v1071
        %v1076 = vsel %vm594, %v1073, 0
        %v1079 = vsel %vm594, %v1074, 0
        %1081 = vmatprep.subr.bf16.mxu0 %v840
        %1082 = vmatpush1.bf16.msra.mxu0 %v839
        %1083 = vmatprep.subr.bf16.mxu0 %v842
        %1084 = vmatpush1.bf16.msra.mxu0 %v841
        %1085 = vmatprep.subr.bf16.mxu0 %v844
        %1086 = vmatpush1.bf16.msra.mxu0 %v843
        %1087 = vmatprep.subr.bf16.mxu0 %v846
        %1088 = vmatpush1.bf16.msra.mxu0 %v845
        %1089 = vmatprep.subr.bf16.mxu0 %v848
        %1090 = vmatpush1.bf16.msra.mxu0 %v847
        %1091 = vmatprep.subr.bf16.mxu0 %v871
        %1092 = vmatpush1.bf16.msra.mxu0 %v868
        %1093 = vmatprep.subr.bf16.mxu0 0
        %1094 = vmatpush1.bf16.msra.mxu0 0
        %1095 = vmatprep.subr.bf16.mxu0 0
        %1096 = vmatpush1.bf16.msra.mxu0 0
        %1097 = vmatprep.subr.bf16.mxu0 0
        %1098 = vmatpush1.bf16.msra.mxu0 0
        %1099 = vmatprep.subr.bf16.mxu0 0
        %1100 = vmatpush1.bf16.msra.mxu0 0
        %1101 = vmatprep.subr.bf16.mxu0 0
        %1102 = vmatpush1.bf16.msra.mxu0 0
        %1103 = vmatprep.subr.bf16.mxu0 0
        %1104 = vmatpush1.bf16.msra.mxu0 0
        %1105 = vmatprep.subr.bf16.mxu0 0
        %1106 = vmatpush1.bf16.msra.mxu0 0
        %1107 = vmatprep.subr.bf16.mxu0 0
        %1108 = vmatpush1.bf16.msra.mxu0 0
        %1109 = vmatprep.subr.bf16.mxu0 0
        %1110 = vmatpush1.bf16.msra.mxu0 0
        %1111 = vmatprep.subr.bf16.mxu0 0
        %1112 = vmatpush1.bf16.msra.mxu0 0
        %1113 = vmatprep.mubr.bf16.mxu0 0
        %1114 = vmatmul.mubr.bf16.gmra.mrb[0].mxu0 %v1076
        %v1115 = vpop.f32.mrb[0].mxu0
        %v1116 = vadd.f32 0.0, %v1115
        %v1117 = vpop.f32.mrb[0].mxu0
        %v1118 = vadd.f32 0.0, %v1117
        %v1119 = vpop.f32.mrb[0].mxu0
        %v1120 = vadd.f32 0.0, %v1119
        %v1121 = vpop.f32.mrb[0].mxu0
        %v1122 = vadd.f32 0.0, %v1121
        %1123 = vmatprep.mubr.bf16.mxu0 0
        %1124 = vmatmul.mubr.bf16.gmra.mrb[0].mxu0 %v1079
        %v1125 = vpop.f32.mrb[0].mxu0
        %v1126 = vadd.f32 0.0, %v1125
        %v1127 = vpop.f32.mrb[0].mxu0
        %v1128 = vadd.f32 0.0, %v1127
        %v1129 = vpop.f32.mrb[0].mxu0
        %v1130 = vadd.f32 0.0, %v1129
        %v1131 = vpop.f32.mrb[0].mxu0
        %v1132 = vadd.f32 0.0, %v1131
        %1133 = vdwg.mxu0
        %v1134 = vadd.f32 %v1051, %v1116
        %v1135 = vadd.f32 %v1053, %v1118
        %v1136 = vadd.f32 %v1055, %v1120
        %v1137 = vadd.f32 %v1057, %v1122
        %v1138 = vadd.f32 %v1061, %v1126
        %v1139 = vadd.f32 %v1063, %v1128
        %v1140 = vadd.f32 %v1065, %v1130
        %v1141 = vadd.f32 %v1067, %v1132
        %v1142 = vmax.f32 %v1134, %v1135
        %v1143 = vmax.f32 %v1136, %v1137
        %v1144 = vmax.f32 %v1138, %v1139
        %v1145 = vmax.f32 %v1140, %v1141
        %s1146 = scalar_lea.vmem %s496, 64
        %v1147 = vld [vmem:[%s1146] sm:$0xff]
        %v1148 = vld [vmem:[%s1146 + $0x8] sm:$0xff]
        %v1149 = vld [vmem:[%s1146 + $0x10] sm:$0xff]
        %v1150 = vld [vmem:[%s1146 + $0x18] sm:$0xf]
        %v1151 = vpack.c.bf16 %v1148, %v1147
        %v1152 = vpack.c.bf16 %v1150, %v1149
        %v1153 = vld [vmem:[%s1146 + $0x1] sm:$0xff]
        %v1154 = vld [vmem:[%s1146 + $0x9] sm:$0xff]
        %v1155 = vld [vmem:[%s1146 + $0x11] sm:$0xff]
        %v1156 = vld [vmem:[%s1146 + $0x19] sm:$0xf]
        %v1157 = vpack.c.bf16 %v1154, %v1153
        %v1158 = vpack.c.bf16 %v1156, %v1155
        %v1160 = vsel %vm594, %v1157, 0
        %v1163 = vsel %vm594, %v1158, 0
        %1165 = vmatprep.subr.bf16.mxu0 %v573
        %1166 = vmatpush1.bf16.msra.mxu0 %v572
        %1167 = vmatprep.subr.bf16.mxu0 %v575
        %1168 = vmatpush1.bf16.msra.mxu0 %v574
        %1169 = vmatprep.subr.bf16.mxu0 %v577
        %1170 = vmatpush1.bf16.msra.mxu0 %v576
        %1171 = vmatprep.subr.bf16.mxu0 %v579
        %1172 = vmatpush1.bf16.msra.mxu0 %v578
        %1173 = vmatprep.subr.bf16.mxu0 %v581
        %1174 = vmatpush1.bf16.msra.mxu0 %v580
        %1175 = vmatprep.subr.bf16.mxu0 %v606
        %1176 = vmatpush1.bf16.msra.mxu0 %v603
        %1177 = vmatprep.subr.bf16.mxu0 0
        %1178 = vmatpush1.bf16.msra.mxu0 0
        %1179 = vmatprep.subr.bf16.mxu0 0
        %1180 = vmatpush1.bf16.msra.mxu0 0
        %1181 = vmatprep.subr.bf16.mxu0 0
        %1182 = vmatpush1.bf16.msra.mxu0 0
        %1183 = vmatprep.subr.bf16.mxu0 0
        %1184 = vmatpush1.bf16.msra.mxu0 0
        %1185 = vmatprep.subr.bf16.mxu0 0
        %1186 = vmatpush1.bf16.msra.mxu0 0
        %1187 = vmatprep.subr.bf16.mxu0 0
        %1188 = vmatpush1.bf16.msra.mxu0 0
        %1189 = vmatprep.subr.bf16.mxu0 0
        %1190 = vmatpush1.bf16.msra.mxu0 0
        %1191 = vmatprep.subr.bf16.mxu0 0
        %1192 = vmatpush1.bf16.msra.mxu0 0
        %1193 = vmatprep.subr.bf16.mxu0 0
        %1194 = vmatpush1.bf16.msra.mxu0 0
        %1195 = vmatprep.subr.bf16.mxu0 0
        %1196 = vmatpush1.bf16.msra.mxu0 0
        %1197 = vmatprep.mubr.bf16.mxu0 0
        %1198 = vmatmul.mubr.bf16.gmra.mrb[0].mxu0 %v1160
        %v1199 = vpop.f32.mrb[0].mxu0
        %v1200 = vadd.f32 0.0, %v1199
        %v1201 = vpop.f32.mrb[0].mxu0
        %v1202 = vadd.f32 0.0, %v1201
        %v1203 = vpop.f32.mrb[0].mxu0
        %v1204 = vadd.f32 0.0, %v1203
        %v1205 = vpop.f32.mrb[0].mxu0
        %v1206 = vadd.f32 0.0, %v1205
        %1207 = vmatprep.mubr.bf16.mxu0 0
        %1208 = vmatmul.mubr.bf16.gmra.mrb[0].mxu0 %v1163
        %v1209 = vpop.f32.mrb[0].mxu0
        %v1210 = vadd.f32 0.0, %v1209
        %v1211 = vpop.f32.mrb[0].mxu0
        %v1212 = vadd.f32 0.0, %v1211
        %v1213 = vpop.f32.mrb[0].mxu0
        %v1214 = vadd.f32 0.0, %v1213
        %v1215 = vpop.f32.mrb[0].mxu0
        %v1216 = vadd.f32 0.0, %v1215
        %1217 = vdwg.mxu0
        %v1219 = vsel %vm594, %v1151, 0
        %v1222 = vsel %vm594, %v1152, 0
        %1224 = vmatprep.subr.bf16.mxu0 %v698
        %1225 = vmatpush1.bf16.msra.mxu0 %v697
        %1226 = vmatprep.subr.bf16.mxu0 %v700
        %1227 = vmatpush1.bf16.msra.mxu0 %v699
        %1228 = vmatprep.subr.bf16.mxu0 %v702
        %1229 = vmatpush1.bf16.msra.mxu0 %v701
        %1230 = vmatprep.subr.bf16.mxu0 %v704
        %1231 = vmatpush1.bf16.msra.mxu0 %v703
        %1232 = vmatprep.subr.bf16.mxu0 %v706
        %1233 = vmatpush1.bf16.msra.mxu0 %v705
        %1234 = vmatprep.subr.bf16.mxu0 %v729
        %1235 = vmatpush1.bf16.msra.mxu0 %v726
        %1236 = vmatprep.subr.bf16.mxu0 0
        %1237 = vmatpush1.bf16.msra.mxu0 0
        %1238 = vmatprep.subr.bf16.mxu0 0
        %1239 = vmatpush1.bf16.msra.mxu0 0
        %1240 = vmatprep.subr.bf16.mxu0 0
        %1241 = vmatpush1.bf16.msra.mxu0 0
        %1242 = vmatprep.subr.bf16.mxu0 0
        %1243 = vmatpush1.bf16.msra.mxu0 0
        %1244 = vmatprep.subr.bf16.mxu0 0
        %1245 = vmatpush1.bf16.msra.mxu0 0
        %1246 = vmatprep.subr.bf16.mxu0 0
        %1247 = vmatpush1.bf16.msra.mxu0 0
        %1248 = vmatprep.subr.bf16.mxu0 0
        %1249 = vmatpush1.bf16.msra.mxu0 0
        %1250 = vmatprep.subr.bf16.mxu0 0
        %1251 = vmatpush1.bf16.msra.mxu0 0
        %1252 = vmatprep.subr.bf16.mxu0 0
        %1253 = vmatpush1.bf16.msra.mxu0 0
        %1254 = vmatprep.subr.bf16.mxu0 0
        %1255 = vmatpush1.bf16.msra.mxu0 0
        %1256 = vmatprep.mubr.bf16.mxu0 0
        %1257 = vmatmul.mubr.bf16.gmra.mrb[0].mxu0 %v1219
        %v1258 = vpop.f32.mrb[0].mxu0
        %v1259 = vadd.f32 %v1200, %v1258
        %v1260 = vpop.f32.mrb[0].mxu0
        %v1261 = vadd.f32 %v1202, %v1260
        %v1262 = vpop.f32.mrb[0].mxu0
        %v1263 = vadd.f32 %v1204, %v1262
        %v1264 = vpop.f32.mrb[0].mxu0
        %v1265 = vadd.f32 %v1206, %v1264
        %1266 = vmatprep.mubr.bf16.mxu0 0
        %1267 = vmatmul.mubr.bf16.gmra.mrb[0].mxu0 %v1222
        %v1268 = vpop.f32.mrb[0].mxu0
        %v1269 = vadd.f32 %v1210, %v1268
        %v1270 = vpop.f32.mrb[0].mxu0
        %v1271 = vadd.f32 %v1212, %v1270
        %v1272 = vpop.f32.mrb[0].mxu0
        %v1273 = vadd.f32 %v1214, %v1272
        %v1274 = vpop.f32.mrb[0].mxu0
        %v1275 = vadd.f32 %v1216, %v1274
        %1276 = vdwg.mxu0
        %v1277 = vld [vmem:[%s1146 + $0x2] sm:$0xff]
        %v1278 = vld [vmem:[%s1146 + $0xa] sm:$0xff]
        %v1279 = vld [vmem:[%s1146 + $0x12] sm:$0xff]
        %v1280 = vld [vmem:[%s1146 + $0x1a] sm:$0xf]
        %v1281 = vpack.c.bf16 %v1278, %v1277
        %v1282 = vpack.c.bf16 %v1280, %v1279
        %v1284 = vsel %vm594, %v1281, 0
        %v1287 = vsel %vm594, %v1282, 0
        %1289 = vmatprep.subr.bf16.mxu0 %v840
        %1290 = vmatpush1.bf16.msra.mxu0 %v839
        %1291 = vmatprep.subr.bf16.mxu0 %v842
        %1292 = vmatpush1.bf16.msra.mxu0 %v841
        %1293 = vmatprep.subr.bf16.mxu0 %v844
        %1294 = vmatpush1.bf16.msra.mxu0 %v843
        %1295 = vmatprep.subr.bf16.mxu0 %v846
        %1296 = vmatpush1.bf16.msra.mxu0 %v845
        %1297 = vmatprep.subr.bf16.mxu0 %v848
        %1298 = vmatpush1.bf16.msra.mxu0 %v847
        %1299 = vmatprep.subr.bf16.mxu0 %v871
        %1300 = vmatpush1.bf16.msra.mxu0 %v868
        %1301 = vmatprep.subr.bf16.mxu0 0
        %1302 = vmatpush1.bf16.msra.mxu0 0
        %1303 = vmatprep.subr.bf16.mxu0 0
        %1304 = vmatpush1.bf16.msra.mxu0 0
        %1305 = vmatprep.subr.bf16.mxu0 0
        %1306 = vmatpush1.bf16.msra.mxu0 0
        %1307 = vmatprep.subr.bf16.mxu0 0
        %1308 = vmatpush1.bf16.msra.mxu0 0
        %1309 = vmatprep.subr.bf16.mxu0 0
        %1310 = vmatpush1.bf16.msra.mxu0 0
        %1311 = vmatprep.subr.bf16.mxu0 0
        %1312 = vmatpush1.bf16.msra.mxu0 0
        %1313 = vmatprep.subr.bf16.mxu0 0
        %1314 = vmatpush1.bf16.msra.mxu0 0
        %1315 = vmatprep.subr.bf16.mxu0 0
        %1316 = vmatpush1.bf16.msra.mxu0 0
        %1317 = vmatprep.subr.bf16.mxu0 0
        %1318 = vmatpush1.bf16.msra.mxu0 0
        %1319 = vmatprep.subr.bf16.mxu0 0
        %1320 = vmatpush1.bf16.msra.mxu0 0
        %1321 = vmatprep.mubr.bf16.mxu0 0
        %1322 = vmatmul.mubr.bf16.gmra.mrb[0].mxu0 %v1284
        %v1323 = vpop.f32.mrb[0].mxu0
        %v1324 = vadd.f32 0.0, %v1323
        %v1325 = vpop.f32.mrb[0].mxu0
        %v1326 = vadd.f32 0.0, %v1325
        %v1327 = vpop.f32.mrb[0].mxu0
        %v1328 = vadd.f32 0.0, %v1327
        %v1329 = vpop.f32.mrb[0].mxu0
        %v1330 = vadd.f32 0.0, %v1329
        %1331 = vmatprep.mubr.bf16.mxu0 0
        %1332 = vmatmul.mubr.bf16.gmra.mrb[0].mxu0 %v1287
        %v1333 = vpop.f32.mrb[0].mxu0
        %v1334 = vadd.f32 0.0, %v1333
        %v1335 = vpop.f32.mrb[0].mxu0
        %v1336 = vadd.f32 0.0, %v1335
        %v1337 = vpop.f32.mrb[0].mxu0
        %v1338 = vadd.f32 0.0, %v1337
        %v1339 = vpop.f32.mrb[0].mxu0
        %v1340 = vadd.f32 0.0, %v1339
        %1341 = vdwg.mxu0
        %v1342 = vadd.f32 %v1259, %v1324
        %v1343 = vadd.f32 %v1261, %v1326
        %v1344 = vadd.f32 %v1263, %v1328
        %v1345 = vadd.f32 %v1265, %v1330
        %v1346 = vadd.f32 %v1269, %v1334
        %v1347 = vadd.f32 %v1271, %v1336
        %v1348 = vadd.f32 %v1273, %v1338
        %v1349 = vadd.f32 %v1275, %v1340
        %v1350 = vmax.f32 %v1342, %v1343
        %v1351 = vmax.f32 %v1344, %v1345
        %v1352 = vmax.f32 %v1346, %v1347
        %v1353 = vmax.f32 %v1348, %v1349
        %s1354 = scalar_lea.vmem %s496, 96
        %v1355 = vld [vmem:[%s1354] sm:$0xff]
        %v1356 = vld [vmem:[%s1354 + $0x8] sm:$0xff]
        %v1357 = vld [vmem:[%s1354 + $0x10] sm:$0xff]
        %v1358 = vld [vmem:[%s1354 + $0x18] sm:$0xf]
        %v1359 = vpack.c.bf16 %v1356, %v1355
        %v1360 = vpack.c.bf16 %v1358, %v1357
        %v1361 = vld [vmem:[%s1354 + $0x1] sm:$0xff]
        %v1362 = vld [vmem:[%s1354 + $0x9] sm:$0xff]
        %v1363 = vld [vmem:[%s1354 + $0x11] sm:$0xff]
        %v1364 = vld [vmem:[%s1354 + $0x19] sm:$0xf]
        %v1365 = vpack.c.bf16 %v1362, %v1361
        %v1366 = vpack.c.bf16 %v1364, %v1363
        %v1368 = vsel %vm594, %v1365, 0
        %v1371 = vsel %vm594, %v1366, 0
        %1373 = vmatprep.subr.bf16.mxu0 %v573
        %1374 = vmatpush1.bf16.msra.mxu0 %v572
        %1375 = vmatprep.subr.bf16.mxu0 %v575
        %1376 = vmatpush1.bf16.msra.mxu0 %v574
        %1377 = vmatprep.subr.bf16.mxu0 %v577
        %1378 = vmatpush1.bf16.msra.mxu0 %v576
        %1379 = vmatprep.subr.bf16.mxu0 %v579
        %1380 = vmatpush1.bf16.msra.mxu0 %v578
        %1381 = vmatprep.subr.bf16.mxu0 %v581
        %1382 = vmatpush1.bf16.msra.mxu0 %v580
        %1383 = vmatprep.subr.bf16.mxu0 %v606
        %1384 = vmatpush1.bf16.msra.mxu0 %v603
        %1385 = vmatprep.subr.bf16.mxu0 0
        %1386 = vmatpush1.bf16.msra.mxu0 0
        %1387 = vmatprep.subr.bf16.mxu0 0
        %1388 = vmatpush1.bf16.msra.mxu0 0
        %1389 = vmatprep.subr.bf16.mxu0 0
        %1390 = vmatpush1.bf16.msra.mxu0 0
        %1391 = vmatprep.subr.bf16.mxu0 0
        %1392 = vmatpush1.bf16.msra.mxu0 0
        %1393 = vmatprep.subr.bf16.mxu0 0
        %1394 = vmatpush1.bf16.msra.mxu0 0
        %1395 = vmatprep.subr.bf16.mxu0 0
        %1396 = vmatpush1.bf16.msra.mxu0 0
        %1397 = vmatprep.subr.bf16.mxu0 0
        %1398 = vmatpush1.bf16.msra.mxu0 0
        %1399 = vmatprep.subr.bf16.mxu0 0
        %1400 = vmatpush1.bf16.msra.mxu0 0
        %1401 = vmatprep.subr.bf16.mxu0 0
        %1402 = vmatpush1.bf16.msra.mxu0 0
        %1403 = vmatprep.subr.bf16.mxu0 0
        %1404 = vmatpush1.bf16.msra.mxu0 0
        %1405 = vmatprep.mubr.bf16.mxu0 0
        %1406 = vmatmul.mubr.bf16.gmra.mrb[0].mxu0 %v1368
        %v1407 = vpop.f32.mrb[0].mxu0
        %v1408 = vadd.f32 0.0, %v1407
        %v1409 = vpop.f32.mrb[0].mxu0
        %v1410 = vadd.f32 0.0, %v1409
        %v1411 = vpop.f32.mrb[0].mxu0
        %v1412 = vadd.f32 0.0, %v1411
        %v1413 = vpop.f32.mrb[0].mxu0
        %v1414 = vadd.f32 0.0, %v1413
        %1415 = vmatprep.mubr.bf16.mxu0 0
        %1416 = vmatmul.mubr.bf16.gmra.mrb[0].mxu0 %v1371
        %v1417 = vpop.f32.mrb[0].mxu0
        %v1418 = vadd.f32 0.0, %v1417
        %v1419 = vpop.f32.mrb[0].mxu0
        %v1420 = vadd.f32 0.0, %v1419
        %v1421 = vpop.f32.mrb[0].mxu0
        %v1422 = vadd.f32 0.0, %v1421
        %v1423 = vpop.f32.mrb[0].mxu0
        %v1424 = vadd.f32 0.0, %v1423
        %1425 = vdwg.mxu0
        %v1427 = vsel %vm594, %v1359, 0
        %v1430 = vsel %vm594, %v1360, 0
        %1432 = vmatprep.subr.bf16.mxu0 %v698
        %1433 = vmatpush1.bf16.msra.mxu0 %v697
        %1434 = vmatprep.subr.bf16.mxu0 %v700
        %1435 = vmatpush1.bf16.msra.mxu0 %v699
        %1436 = vmatprep.subr.bf16.mxu0 %v702
        %1437 = vmatpush1.bf16.msra.mxu0 %v701
        %1438 = vmatprep.subr.bf16.mxu0 %v704
        %1439 = vmatpush1.bf16.msra.mxu0 %v703
        %1440 = vmatprep.subr.bf16.mxu0 %v706
        %1441 = vmatpush1.bf16.msra.mxu0 %v705
        %1442 = vmatprep.subr.bf16.mxu0 %v729
        %1443 = vmatpush1.bf16.msra.mxu0 %v726
        %1444 = vmatprep.subr.bf16.mxu0 0
        %1445 = vmatpush1.bf16.msra.mxu0 0
        %1446 = vmatprep.subr.bf16.mxu0 0
        %1447 = vmatpush1.bf16.msra.mxu0 0
        %1448 = vmatprep.subr.bf16.mxu0 0
        %1449 = vmatpush1.bf16.msra.mxu0 0
        %1450 = vmatprep.subr.bf16.mxu0 0
        %1451 = vmatpush1.bf16.msra.mxu0 0
        %1452 = vmatprep.subr.bf16.mxu0 0
        %1453 = vmatpush1.bf16.msra.mxu0 0
        %1454 = vmatprep.subr.bf16.mxu0 0
        %1455 = vmatpush1.bf16.msra.mxu0 0
        %1456 = vmatprep.subr.bf16.mxu0 0
        %1457 = vmatpush1.bf16.msra.mxu0 0
        %1458 = vmatprep.subr.bf16.mxu0 0
        %1459 = vmatpush1.bf16.msra.mxu0 0
        %1460 = vmatprep.subr.bf16.mxu0 0
        %1461 = vmatpush1.bf16.msra.mxu0 0
        %1462 = vmatprep.subr.bf16.mxu0 0
        %1463 = vmatpush1.bf16.msra.mxu0 0
        %1464 = vmatprep.mubr.bf16.mxu0 0
        %1465 = vmatmul.mubr.bf16.gmra.mrb[0].mxu0 %v1427
        %v1466 = vpop.f32.mrb[0].mxu0
        %v1467 = vadd.f32 %v1408, %v1466
        %v1468 = vpop.f32.mrb[0].mxu0
        %v1469 = vadd.f32 %v1410, %v1468
        %v1470 = vpop.f32.mrb[0].mxu0
        %v1471 = vadd.f32 %v1412, %v1470
        %v1472 = vpop.f32.mrb[0].mxu0
        %v1473 = vadd.f32 %v1414, %v1472
        %1474 = vmatprep.mubr.bf16.mxu0 0
        %1475 = vmatmul.mubr.bf16.gmra.mrb[0].mxu0 %v1430
        %v1476 = vpop.f32.mrb[0].mxu0
        %v1477 = vadd.f32 %v1418, %v1476
        %v1478 = vpop.f32.mrb[0].mxu0
        %v1479 = vadd.f32 %v1420, %v1478
        %v1480 = vpop.f32.mrb[0].mxu0
        %v1481 = vadd.f32 %v1422, %v1480
        %v1482 = vpop.f32.mrb[0].mxu0
        %v1483 = vadd.f32 %v1424, %v1482
        %1484 = vdwg.mxu0
        %v1485 = vld [vmem:[%s1354 + $0x2] sm:$0xff]
        %v1486 = vld [vmem:[%s1354 + $0xa] sm:$0xff]
        %v1487 = vld [vmem:[%s1354 + $0x12] sm:$0xff]
        %v1488 = vld [vmem:[%s1354 + $0x1a] sm:$0xf]
        %v1489 = vpack.c.bf16 %v1486, %v1485
        %v1490 = vpack.c.bf16 %v1488, %v1487
        %v1492 = vsel %vm594, %v1489, 0
        %v1495 = vsel %vm594, %v1490, 0
        %1497 = vmatprep.subr.bf16.mxu0 %v840
        %1498 = vmatpush1.bf16.msra.mxu0 %v839
        %1499 = vmatprep.subr.bf16.mxu0 %v842
        %1500 = vmatpush1.bf16.msra.mxu0 %v841
        %1501 = vmatprep.subr.bf16.mxu0 %v844
        %1502 = vmatpush1.bf16.msra.mxu0 %v843
        %1503 = vmatprep.subr.bf16.mxu0 %v846
        %1504 = vmatpush1.bf16.msra.mxu0 %v845
        %1505 = vmatprep.subr.bf16.mxu0 %v848
        %1506 = vmatpush1.bf16.msra.mxu0 %v847
        %1507 = vmatprep.subr.bf16.mxu0 %v871
        %1508 = vmatpush1.bf16.msra.mxu0 %v868
        %1509 = vmatprep.subr.bf16.mxu0 0
        %1510 = vmatpush1.bf16.msra.mxu0 0
        %1511 = vmatprep.subr.bf16.mxu0 0
        %1512 = vmatpush1.bf16.msra.mxu0 0
        %1513 = vmatprep.subr.bf16.mxu0 0
        %1514 = vmatpush1.bf16.msra.mxu0 0
        %1515 = vmatprep.subr.bf16.mxu0 0
        %1516 = vmatpush1.bf16.msra.mxu0 0
        %1517 = vmatprep.subr.bf16.mxu0 0
        %1518 = vmatpush1.bf16.msra.mxu0 0
        %1519 = vmatprep.subr.bf16.mxu0 0
        %1520 = vmatpush1.bf16.msra.mxu0 0
        %1521 = vmatprep.subr.bf16.mxu0 0
        %1522 = vmatpush1.bf16.msra.mxu0 0
        %1523 = vmatprep.subr.bf16.mxu0 0
        %1524 = vmatpush1.bf16.msra.mxu0 0
        %1525 = vmatprep.subr.bf16.mxu0 0
        %1526 = vmatpush1.bf16.msra.mxu0 0
        %1527 = vmatprep.subr.bf16.mxu0 0
        %1528 = vmatpush1.bf16.msra.mxu0 0
        %1529 = vmatprep.mubr.bf16.mxu0 0
        %1530 = vmatmul.mubr.bf16.gmra.mrb[0].mxu0 %v1492
        %v1531 = vpop.f32.mrb[0].mxu0
        %v1532 = vadd.f32 0.0, %v1531
        %v1533 = vpop.f32.mrb[0].mxu0
        %v1534 = vadd.f32 0.0, %v1533
        %v1535 = vpop.f32.mrb[0].mxu0
        %v1536 = vadd.f32 0.0, %v1535
        %v1537 = vpop.f32.mrb[0].mxu0
        %v1538 = vadd.f32 0.0, %v1537
        %1539 = vmatprep.mubr.bf16.mxu0 0
        %1540 = vmatmul.mubr.bf16.gmra.mrb[0].mxu0 %v1495
        %v1541 = vpop.f32.mrb[0].mxu0
        %v1542 = vadd.f32 0.0, %v1541
        %v1543 = vpop.f32.mrb[0].mxu0
        %v1544 = vadd.f32 0.0, %v1543
        %v1545 = vpop.f32.mrb[0].mxu0
        %v1546 = vadd.f32 0.0, %v1545
        %v1547 = vpop.f32.mrb[0].mxu0
        %v1548 = vadd.f32 0.0, %v1547
        %1549 = vdwg.mxu0
        %v1550 = vadd.f32 %v1467, %v1532
        %v1551 = vadd.f32 %v1469, %v1534
        %v1552 = vadd.f32 %v1471, %v1536
        %v1553 = vadd.f32 %v1473, %v1538
        %v1554 = vadd.f32 %v1477, %v1542
        %v1555 = vadd.f32 %v1479, %v1544
        %v1556 = vadd.f32 %v1481, %v1546
        %v1557 = vadd.f32 %v1483, %v1548
        %v1558 = vmax.f32 %v1550, %v1551
        %v1559 = vmax.f32 %v1552, %v1553
        %v1560 = vmax.f32 %v1554, %v1555
        %v1561 = vmax.f32 %v1556, %v1557
        %s1562 = scalar_lea.vmem %s496, 128
        %v1563 = vld [vmem:[%s1562] sm:$0xff]
        %v1564 = vld [vmem:[%s1562 + $0x8] sm:$0xff]
        %v1565 = vld [vmem:[%s1562 + $0x10] sm:$0xff]
        %v1566 = vld [vmem:[%s1562 + $0x18] sm:$0xf]
        %v1567 = vpack.c.bf16 %v1564, %v1563
        %v1568 = vpack.c.bf16 %v1566, %v1565
        %v1569 = vld [vmem:[%s1562 + $0x1] sm:$0xff]
        %v1570 = vld [vmem:[%s1562 + $0x9] sm:$0xff]
        %v1571 = vld [vmem:[%s1562 + $0x11] sm:$0xff]
        %v1572 = vld [vmem:[%s1562 + $0x19] sm:$0xf]
        %v1573 = vpack.c.bf16 %v1570, %v1569
        %v1574 = vpack.c.bf16 %v1572, %v1571
        %v1576 = vsel %vm594, %v1573, 0
        %v1579 = vsel %vm594, %v1574, 0
        %1581 = vmatprep.subr.bf16.mxu0 %v573
        %1582 = vmatpush1.bf16.msra.mxu0 %v572
        %1583 = vmatprep.subr.bf16.mxu0 %v575
        %1584 = vmatpush1.bf16.msra.mxu0 %v574
        %1585 = vmatprep.subr.bf16.mxu0 %v577
        %1586 = vmatpush1.bf16.msra.mxu0 %v576
        %1587 = vmatprep.subr.bf16.mxu0 %v579
        %1588 = vmatpush1.bf16.msra.mxu0 %v578
        %1589 = vmatprep.subr.bf16.mxu0 %v581
        %1590 = vmatpush1.bf16.msra.mxu0 %v580
        %1591 = vmatprep.subr.bf16.mxu0 %v606
        %1592 = vmatpush1.bf16.msra.mxu0 %v603
        %1593 = vmatprep.subr.bf16.mxu0 0
        %1594 = vmatpush1.bf16.msra.mxu0 0
        %1595 = vmatprep.subr.bf16.mxu0 0
        %1596 = vmatpush1.bf16.msra.mxu0 0
        %1597 = vmatprep.subr.bf16.mxu0 0
        %1598 = vmatpush1.bf16.msra.mxu0 0
        %1599 = vmatprep.subr.bf16.mxu0 0
        %1600 = vmatpush1.bf16.msra.mxu0 0
        %1601 = vmatprep.subr.bf16.mxu0 0
        %1602 = vmatpush1.bf16.msra.mxu0 0
        %1603 = vmatprep.subr.bf16.mxu0 0
        %1604 = vmatpush1.bf16.msra.mxu0 0
        %1605 = vmatprep.subr.bf16.mxu0 0
        %1606 = vmatpush1.bf16.msra.mxu0 0
        %1607 = vmatprep.subr.bf16.mxu0 0
        %1608 = vmatpush1.bf16.msra.mxu0 0
        %1609 = vmatprep.subr.bf16.mxu0 0
        %1610 = vmatpush1.bf16.msra.mxu0 0
        %1611 = vmatprep.subr.bf16.mxu0 0
        %1612 = vmatpush1.bf16.msra.mxu0 0
        %1613 = vmatprep.mubr.bf16.mxu0 0
        %1614 = vmatmul.mubr.bf16.gmra.mrb[0].mxu0 %v1576
        %v1615 = vpop.f32.mrb[0].mxu0
        %v1616 = vadd.f32 0.0, %v1615
        %v1617 = vpop.f32.mrb[0].mxu0
        %v1618 = vadd.f32 0.0, %v1617
        %v1619 = vpop.f32.mrb[0].mxu0
        %v1620 = vadd.f32 0.0, %v1619
        %v1621 = vpop.f32.mrb[0].mxu0
        %v1622 = vadd.f32 0.0, %v1621
        %1623 = vmatprep.mubr.bf16.mxu0 0
        %1624 = vmatmul.mubr.bf16.gmra.mrb[0].mxu0 %v1579
        %v1625 = vpop.f32.mrb[0].mxu0
        %v1626 = vadd.f32 0.0, %v1625
        %v1627 = vpop.f32.mrb[0].mxu0
        %v1628 = vadd.f32 0.0, %v1627
        %v1629 = vpop.f32.mrb[0].mxu0
        %v1630 = vadd.f32 0.0, %v1629
        %v1631 = vpop.f32.mrb[0].mxu0
        %v1632 = vadd.f32 0.0, %v1631
        %1633 = vdwg.mxu0
        %v1635 = vsel %vm594, %v1567, 0
        %v1638 = vsel %vm594, %v1568, 0
        %1640 = vmatprep.subr.bf16.mxu0 %v698
        %1641 = vmatpush1.bf16.msra.mxu0 %v697
        %1642 = vmatprep.subr.bf16.mxu0 %v700
        %1643 = vmatpush1.bf16.msra.mxu0 %v699
        %1644 = vmatprep.subr.bf16.mxu0 %v702
        %1645 = vmatpush1.bf16.msra.mxu0 %v701
        %1646 = vmatprep.subr.bf16.mxu0 %v704
        %1647 = vmatpush1.bf16.msra.mxu0 %v703
        %1648 = vmatprep.subr.bf16.mxu0 %v706
        %1649 = vmatpush1.bf16.msra.mxu0 %v705
        %1650 = vmatprep.subr.bf16.mxu0 %v729
        %1651 = vmatpush1.bf16.msra.mxu0 %v726
        %1652 = vmatprep.subr.bf16.mxu0 0
        %1653 = vmatpush1.bf16.msra.mxu0 0
        %1654 = vmatprep.subr.bf16.mxu0 0
        %1655 = vmatpush1.bf16.msra.mxu0 0
        %1656 = vmatprep.subr.bf16.mxu0 0
        %1657 = vmatpush1.bf16.msra.mxu0 0
        %1658 = vmatprep.subr.bf16.mxu0 0
        %1659 = vmatpush1.bf16.msra.mxu0 0
        %1660 = vmatprep.subr.bf16.mxu0 0
        %1661 = vmatpush1.bf16.msra.mxu0 0
        %1662 = vmatprep.subr.bf16.mxu0 0
        %1663 = vmatpush1.bf16.msra.mxu0 0
        %1664 = vmatprep.subr.bf16.mxu0 0
        %1665 = vmatpush1.bf16.msra.mxu0 0
        %1666 = vmatprep.subr.bf16.mxu0 0
        %1667 = vmatpush1.bf16.msra.mxu0 0
        %1668 = vmatprep.subr.bf16.mxu0 0
        %1669 = vmatpush1.bf16.msra.mxu0 0
        %1670 = vmatprep.subr.bf16.mxu0 0
        %1671 = vmatpush1.bf16.msra.mxu0 0
        %1672 = vmatprep.mubr.bf16.mxu0 0
        %1673 = vmatmul.mubr.bf16.gmra.mrb[0].mxu0 %v1635
        %v1674 = vpop.f32.mrb[0].mxu0
        %v1675 = vadd.f32 %v1616, %v1674
        %v1676 = vpop.f32.mrb[0].mxu0
        %v1677 = vadd.f32 %v1618, %v1676
        %v1678 = vpop.f32.mrb[0].mxu0
        %v1679 = vadd.f32 %v1620, %v1678
        %v1680 = vpop.f32.mrb[0].mxu0
        %v1681 = vadd.f32 %v1622, %v1680
        %1682 = vmatprep.mubr.bf16.mxu0 0
        %1683 = vmatmul.mubr.bf16.gmra.mrb[0].mxu0 %v1638
        %v1684 = vpop.f32.mrb[0].mxu0
        %v1685 = vadd.f32 %v1626, %v1684
        %v1686 = vpop.f32.mrb[0].mxu0
        %v1687 = vadd.f32 %v1628, %v1686
        %v1688 = vpop.f32.mrb[0].mxu0
        %v1689 = vadd.f32 %v1630, %v1688
        %v1690 = vpop.f32.mrb[0].mxu0
        %v1691 = vadd.f32 %v1632, %v1690
        %1692 = vdwg.mxu0
        %v1693 = vld [vmem:[%s1562 + $0x2] sm:$0xff]
        %v1694 = vld [vmem:[%s1562 + $0xa] sm:$0xff]
        %v1695 = vld [vmem:[%s1562 + $0x12] sm:$0xff]
        %v1696 = vld [vmem:[%s1562 + $0x1a] sm:$0xf]
        %v1697 = vpack.c.bf16 %v1694, %v1693
        %v1698 = vpack.c.bf16 %v1696, %v1695
        %v1700 = vsel %vm594, %v1697, 0
        %v1703 = vsel %vm594, %v1698, 0
        %1705 = vmatprep.subr.bf16.mxu0 %v840
        %1706 = vmatpush1.bf16.msra.mxu0 %v839
        %1707 = vmatprep.subr.bf16.mxu0 %v842
        %1708 = vmatpush1.bf16.msra.mxu0 %v841
        %1709 = vmatprep.subr.bf16.mxu0 %v844
        %1710 = vmatpush1.bf16.msra.mxu0 %v843
        %1711 = vmatprep.subr.bf16.mxu0 %v846
        %1712 = vmatpush1.bf16.msra.mxu0 %v845
        %1713 = vmatprep.subr.bf16.mxu0 %v848
        %1714 = vmatpush1.bf16.msra.mxu0 %v847
        %1715 = vmatprep.subr.bf16.mxu0 %v871
        %1716 = vmatpush1.bf16.msra.mxu0 %v868
        %1717 = vmatprep.subr.bf16.mxu0 0
        %1718 = vmatpush1.bf16.msra.mxu0 0
        %1719 = vmatprep.subr.bf16.mxu0 0
        %1720 = vmatpush1.bf16.msra.mxu0 0
        %1721 = vmatprep.subr.bf16.mxu0 0
        %1722 = vmatpush1.bf16.msra.mxu0 0
        %1723 = vmatprep.subr.bf16.mxu0 0
        %1724 = vmatpush1.bf16.msra.mxu0 0
        %1725 = vmatprep.subr.bf16.mxu0 0
        %1726 = vmatpush1.bf16.msra.mxu0 0
        %1727 = vmatprep.subr.bf16.mxu0 0
        %1728 = vmatpush1.bf16.msra.mxu0 0
        %1729 = vmatprep.subr.bf16.mxu0 0
        %1730 = vmatpush1.bf16.msra.mxu0 0
        %1731 = vmatprep.subr.bf16.mxu0 0
        %1732 = vmatpush1.bf16.msra.mxu0 0
        %1733 = vmatprep.subr.bf16.mxu0 0
        %1734 = vmatpush1.bf16.msra.mxu0 0
        %1735 = vmatprep.subr.bf16.mxu0 0
        %1736 = vmatpush1.bf16.msra.mxu0 0
        %1737 = vmatprep.mubr.bf16.mxu0 0
        %1738 = vmatmul.mubr.bf16.gmra.mrb[0].mxu0 %v1700
        %v1739 = vpop.f32.mrb[0].mxu0
        %v1740 = vadd.f32 0.0, %v1739
        %v1741 = vpop.f32.mrb[0].mxu0
        %v1742 = vadd.f32 0.0, %v1741
        %v1743 = vpop.f32.mrb[0].mxu0
        %v1744 = vadd.f32 0.0, %v1743
        %v1745 = vpop.f32.mrb[0].mxu0
        %v1746 = vadd.f32 0.0, %v1745
        %1747 = vmatprep.mubr.bf16.mxu0 0
        %1748 = vmatmul.mubr.bf16.gmra.mrb[0].mxu0 %v1703
        %v1749 = vpop.f32.mrb[0].mxu0
        %v1750 = vadd.f32 0.0, %v1749
        %v1751 = vpop.f32.mrb[0].mxu0
        %v1752 = vadd.f32 0.0, %v1751
        %v1753 = vpop.f32.mrb[0].mxu0
        %v1754 = vadd.f32 0.0, %v1753
        %v1755 = vpop.f32.mrb[0].mxu0
        %v1756 = vadd.f32 0.0, %v1755
        %1757 = vdwg.mxu0
        %v1758 = vadd.f32 %v1675, %v1740
        %v1759 = vadd.f32 %v1677, %v1742
        %v1760 = vadd.f32 %v1679, %v1744
        %v1761 = vadd.f32 %v1681, %v1746
        %v1762 = vadd.f32 %v1685, %v1750
        %v1763 = vadd.f32 %v1687, %v1752
        %v1764 = vadd.f32 %v1689, %v1754
        %v1765 = vadd.f32 %v1691, %v1756
        %v1766 = vmax.f32 %v1758, %v1759
        %v1767 = vmax.f32 %v1760, %v1761
        %v1768 = vmax.f32 %v1762, %v1763
        %v1769 = vmax.f32 %v1764, %v1765
        %s1770 = scalar_lea.vmem %s496, 160
        %v1771 = vld [vmem:[%s1770] sm:$0xff]
        %v1772 = vld [vmem:[%s1770 + $0x8] sm:$0xff]
        %v1773 = vld [vmem:[%s1770 + $0x10] sm:$0xff]
        %v1774 = vld [vmem:[%s1770 + $0x18] sm:$0xf]
        %v1775 = vpack.c.bf16 %v1772, %v1771
        %v1776 = vpack.c.bf16 %v1774, %v1773
        %v1777 = vld [vmem:[%s1770 + $0x1] sm:$0xff]
        %v1778 = vld [vmem:[%s1770 + $0x9] sm:$0xff]
        %v1779 = vld [vmem:[%s1770 + $0x11] sm:$0xff]
        %v1780 = vld [vmem:[%s1770 + $0x19] sm:$0xf]
        %v1781 = vpack.c.bf16 %v1778, %v1777
        %v1782 = vpack.c.bf16 %v1780, %v1779
        %v1784 = vsel %vm594, %v1781, 0
        %v1787 = vsel %vm594, %v1782, 0
        %1789 = vmatprep.subr.bf16.mxu0 %v573
        %1790 = vmatpush1.bf16.msra.mxu0 %v572
        %1791 = vmatprep.subr.bf16.mxu0 %v575
        %1792 = vmatpush1.bf16.msra.mxu0 %v574
        %1793 = vmatprep.subr.bf16.mxu0 %v577
        %1794 = vmatpush1.bf16.msra.mxu0 %v576
        %1795 = vmatprep.subr.bf16.mxu0 %v579
        %1796 = vmatpush1.bf16.msra.mxu0 %v578
        %1797 = vmatprep.subr.bf16.mxu0 %v581
        %1798 = vmatpush1.bf16.msra.mxu0 %v580
        %1799 = vmatprep.subr.bf16.mxu0 %v606
        %1800 = vmatpush1.bf16.msra.mxu0 %v603
        %1801 = vmatprep.subr.bf16.mxu0 0
        %1802 = vmatpush1.bf16.msra.mxu0 0
        %1803 = vmatprep.subr.bf16.mxu0 0
        %1804 = vmatpush1.bf16.msra.mxu0 0
        %1805 = vmatprep.subr.bf16.mxu0 0
        %1806 = vmatpush1.bf16.msra.mxu0 0
        %1807 = vmatprep.subr.bf16.mxu0 0
        %1808 = vmatpush1.bf16.msra.mxu0 0
        %1809 = vmatprep.subr.bf16.mxu0 0
        %1810 = vmatpush1.bf16.msra.mxu0 0
        %1811 = vmatprep.subr.bf16.mxu0 0
        %1812 = vmatpush1.bf16.msra.mxu0 0
        %1813 = vmatprep.subr.bf16.mxu0 0
        %1814 = vmatpush1.bf16.msra.mxu0 0
        %1815 = vmatprep.subr.bf16.mxu0 0
        %1816 = vmatpush1.bf16.msra.mxu0 0
        %1817 = vmatprep.subr.bf16.mxu0 0
        %1818 = vmatpush1.bf16.msra.mxu0 0
        %1819 = vmatprep.subr.bf16.mxu0 0
        %1820 = vmatpush1.bf16.msra.mxu0 0
        %1821 = vmatprep.mubr.bf16.mxu0 0
        %1822 = vmatmul.mubr.bf16.gmra.mrb[0].mxu0 %v1784
        %v1823 = vpop.f32.mrb[0].mxu0
        %v1824 = vadd.f32 0.0, %v1823
        %v1825 = vpop.f32.mrb[0].mxu0
        %v1826 = vadd.f32 0.0, %v1825
        %v1827 = vpop.f32.mrb[0].mxu0
        %v1828 = vadd.f32 0.0, %v1827
        %v1829 = vpop.f32.mrb[0].mxu0
        %v1830 = vadd.f32 0.0, %v1829
        %1831 = vmatprep.mubr.bf16.mxu0 0
        %1832 = vmatmul.mubr.bf16.gmra.mrb[0].mxu0 %v1787
        %v1833 = vpop.f32.mrb[0].mxu0
        %v1834 = vadd.f32 0.0, %v1833
        %v1835 = vpop.f32.mrb[0].mxu0
        %v1836 = vadd.f32 0.0, %v1835
        %v1837 = vpop.f32.mrb[0].mxu0
        %v1838 = vadd.f32 0.0, %v1837
        %v1839 = vpop.f32.mrb[0].mxu0
        %v1840 = vadd.f32 0.0, %v1839
        %1841 = vdwg.mxu0
        %v1843 = vsel %vm594, %v1775, 0
        %v1846 = vsel %vm594, %v1776, 0
        %1848 = vmatprep.subr.bf16.mxu0 %v698
        %1849 = vmatpush1.bf16.msra.mxu0 %v697
        %1850 = vmatprep.subr.bf16.mxu0 %v700
        %1851 = vmatpush1.bf16.msra.mxu0 %v699
        %1852 = vmatprep.subr.bf16.mxu0 %v702
        %1853 = vmatpush1.bf16.msra.mxu0 %v701
        %1854 = vmatprep.subr.bf16.mxu0 %v704
        %1855 = vmatpush1.bf16.msra.mxu0 %v703
        %1856 = vmatprep.subr.bf16.mxu0 %v706
        %1857 = vmatpush1.bf16.msra.mxu0 %v705
        %1858 = vmatprep.subr.bf16.mxu0 %v729
        %1859 = vmatpush1.bf16.msra.mxu0 %v726
        %1860 = vmatprep.subr.bf16.mxu0 0
        %1861 = vmatpush1.bf16.msra.mxu0 0
        %1862 = vmatprep.subr.bf16.mxu0 0
        %1863 = vmatpush1.bf16.msra.mxu0 0
        %1864 = vmatprep.subr.bf16.mxu0 0
        %1865 = vmatpush1.bf16.msra.mxu0 0
        %1866 = vmatprep.subr.bf16.mxu0 0
        %1867 = vmatpush1.bf16.msra.mxu0 0
        %1868 = vmatprep.subr.bf16.mxu0 0
        %1869 = vmatpush1.bf16.msra.mxu0 0
        %1870 = vmatprep.subr.bf16.mxu0 0
        %1871 = vmatpush1.bf16.msra.mxu0 0
        %1872 = vmatprep.subr.bf16.mxu0 0
        %1873 = vmatpush1.bf16.msra.mxu0 0
        %1874 = vmatprep.subr.bf16.mxu0 0
        %1875 = vmatpush1.bf16.msra.mxu0 0
        %1876 = vmatprep.subr.bf16.mxu0 0
        %1877 = vmatpush1.bf16.msra.mxu0 0
        %1878 = vmatprep.subr.bf16.mxu0 0
        %1879 = vmatpush1.bf16.msra.mxu0 0
        %1880 = vmatprep.mubr.bf16.mxu0 0
        %1881 = vmatmul.mubr.bf16.gmra.mrb[0].mxu0 %v1843
        %v1882 = vpop.f32.mrb[0].mxu0
        %v1883 = vadd.f32 %v1824, %v1882
        %v1884 = vpop.f32.mrb[0].mxu0
        %v1885 = vadd.f32 %v1826, %v1884
        %v1886 = vpop.f32.mrb[0].mxu0
        %v1887 = vadd.f32 %v1828, %v1886
        %v1888 = vpop.f32.mrb[0].mxu0
        %v1889 = vadd.f32 %v1830, %v1888
        %1890 = vmatprep.mubr.bf16.mxu0 0
        %1891 = vmatmul.mubr.bf16.gmra.mrb[0].mxu0 %v1846
        %v1892 = vpop.f32.mrb[0].mxu0
        %v1893 = vadd.f32 %v1834, %v1892
        %v1894 = vpop.f32.mrb[0].mxu0
        %v1895 = vadd.f32 %v1836, %v1894
        %v1896 = vpop.f32.mrb[0].mxu0
        %v1897 = vadd.f32 %v1838, %v1896
        %v1898 = vpop.f32.mrb[0].mxu0
        %v1899 = vadd.f32 %v1840, %v1898
        %1900 = vdwg.mxu0
        %v1901 = vld [vmem:[%s1770 + $0x2] sm:$0xff]
        %v1902 = vld [vmem:[%s1770 + $0xa] sm:$0xff]
        %v1903 = vld [vmem:[%s1770 + $0x12] sm:$0xff]
        %v1904 = vld [vmem:[%s1770 + $0x1a] sm:$0xf]
        %v1905 = vpack.c.bf16 %v1902, %v1901
        %v1906 = vpack.c.bf16 %v1904, %v1903
        %v1908 = vsel %vm594, %v1905, 0
        %v1911 = vsel %vm594, %v1906, 0
        %1913 = vmatprep.subr.bf16.mxu0 %v840
        %1914 = vmatpush1.bf16.msra.mxu0 %v839
        %1915 = vmatprep.subr.bf16.mxu0 %v842
        %1916 = vmatpush1.bf16.msra.mxu0 %v841
        %1917 = vmatprep.subr.bf16.mxu0 %v844
        %1918 = vmatpush1.bf16.msra.mxu0 %v843
        %1919 = vmatprep.subr.bf16.mxu0 %v846
        %1920 = vmatpush1.bf16.msra.mxu0 %v845
        %1921 = vmatprep.subr.bf16.mxu0 %v848
        %1922 = vmatpush1.bf16.msra.mxu0 %v847
        %1923 = vmatprep.subr.bf16.mxu0 %v871
        %1924 = vmatpush1.bf16.msra.mxu0 %v868
        %1925 = vmatprep.subr.bf16.mxu0 0
        %1926 = vmatpush1.bf16.msra.mxu0 0
        %1927 = vmatprep.subr.bf16.mxu0 0
        %1928 = vmatpush1.bf16.msra.mxu0 0
        %1929 = vmatprep.subr.bf16.mxu0 0
        %1930 = vmatpush1.bf16.msra.mxu0 0
        %1931 = vmatprep.subr.bf16.mxu0 0
        %1932 = vmatpush1.bf16.msra.mxu0 0
        %1933 = vmatprep.subr.bf16.mxu0 0
        %1934 = vmatpush1.bf16.msra.mxu0 0
        %1935 = vmatprep.subr.bf16.mxu0 0
        %1936 = vmatpush1.bf16.msra.mxu0 0
        %1937 = vmatprep.subr.bf16.mxu0 0
        %1938 = vmatpush1.bf16.msra.mxu0 0
        %1939 = vmatprep.subr.bf16.mxu0 0
        %1940 = vmatpush1.bf16.msra.mxu0 0
        %1941 = vmatprep.subr.bf16.mxu0 0
        %1942 = vmatpush1.bf16.msra.mxu0 0
        %1943 = vmatprep.subr.bf16.mxu0 0
        %1944 = vmatpush1.bf16.msra.mxu0 0
        %1945 = vmatprep.mubr.bf16.mxu0 0
        %1946 = vmatmul.mubr.bf16.gmra.mrb[0].mxu0 %v1908
        %v1947 = vpop.f32.mrb[0].mxu0
        %v1948 = vadd.f32 0.0, %v1947
        %v1949 = vpop.f32.mrb[0].mxu0
        %v1950 = vadd.f32 0.0, %v1949
        %v1951 = vpop.f32.mrb[0].mxu0
        %v1952 = vadd.f32 0.0, %v1951
        %v1953 = vpop.f32.mrb[0].mxu0
        %v1954 = vadd.f32 0.0, %v1953
        %1955 = vmatprep.mubr.bf16.mxu0 0
        %1956 = vmatmul.mubr.bf16.gmra.mrb[0].mxu0 %v1911
        %v1957 = vpop.f32.mrb[0].mxu0
        %v1958 = vadd.f32 0.0, %v1957
        %v1959 = vpop.f32.mrb[0].mxu0
        %v1960 = vadd.f32 0.0, %v1959
        %v1961 = vpop.f32.mrb[0].mxu0
        %v1962 = vadd.f32 0.0, %v1961
        %v1963 = vpop.f32.mrb[0].mxu0
        %v1964 = vadd.f32 0.0, %v1963
        %1965 = vdwg.mxu0
        %v1966 = vadd.f32 %v1883, %v1948
        %v1967 = vadd.f32 %v1885, %v1950
        %v1968 = vadd.f32 %v1887, %v1952
        %v1969 = vadd.f32 %v1889, %v1954
        %v1970 = vadd.f32 %v1893, %v1958
        %v1971 = vadd.f32 %v1895, %v1960
        %v1972 = vadd.f32 %v1897, %v1962
        %v1973 = vadd.f32 %v1899, %v1964
        %v1974 = vmax.f32 %v1966, %v1967
        %v1975 = vmax.f32 %v1968, %v1969
        %v1976 = vmax.f32 %v1970, %v1971
        %v1977 = vmax.f32 %v1972, %v1973
        %s1978 = scalar_lea.vmem %s496, 192
        %v1979 = vld [vmem:[%s1978] sm:$0xff]
        %v1980 = vld [vmem:[%s1978 + $0x8] sm:$0xff]
        %v1981 = vld [vmem:[%s1978 + $0x10] sm:$0xff]
        %v1982 = vld [vmem:[%s1978 + $0x18] sm:$0xf]
        %v1983 = vpack.c.bf16 %v1980, %v1979
        %v1984 = vpack.c.bf16 %v1982, %v1981
        %v1985 = vld [vmem:[%s1978 + $0x1] sm:$0xff]
        %v1986 = vld [vmem:[%s1978 + $0x9] sm:$0xff]
        %v1987 = vld [vmem:[%s1978 + $0x11] sm:$0xff]
        %v1988 = vld [vmem:[%s1978 + $0x19] sm:$0xf]
        %v1989 = vpack.c.bf16 %v1986, %v1985
        %v1990 = vpack.c.bf16 %v1988, %v1987
        %v1992 = vsel %vm594, %v1989, 0
        %v1995 = vsel %vm594, %v1990, 0
        %1997 = vmatprep.subr.bf16.mxu0 %v573
        %1998 = vmatpush1.bf16.msra.mxu0 %v572
        %1999 = vmatprep.subr.bf16.mxu0 %v575
        %2000 = vmatpush1.bf16.msra.mxu0 %v574
        %2001 = vmatprep.subr.bf16.mxu0 %v577
        %2002 = vmatpush1.bf16.msra.mxu0 %v576
        %2003 = vmatprep.subr.bf16.mxu0 %v579
        %2004 = vmatpush1.bf16.msra.mxu0 %v578
        %2005 = vmatprep.subr.bf16.mxu0 %v581
        %2006 = vmatpush1.bf16.msra.mxu0 %v580
        %2007 = vmatprep.subr.bf16.mxu0 %v606
        %2008 = vmatpush1.bf16.msra.mxu0 %v603
        %2009 = vmatprep.subr.bf16.mxu0 0
        %2010 = vmatpush1.bf16.msra.mxu0 0
        %2011 = vmatprep.subr.bf16.mxu0 0
        %2012 = vmatpush1.bf16.msra.mxu0 0
        %2013 = vmatprep.subr.bf16.mxu0 0
        %2014 = vmatpush1.bf16.msra.mxu0 0
        %2015 = vmatprep.subr.bf16.mxu0 0
        %2016 = vmatpush1.bf16.msra.mxu0 0
        %2017 = vmatprep.subr.bf16.mxu0 0
        %2018 = vmatpush1.bf16.msra.mxu0 0
        %2019 = vmatprep.subr.bf16.mxu0 0
        %2020 = vmatpush1.bf16.msra.mxu0 0
        %2021 = vmatprep.subr.bf16.mxu0 0
        %2022 = vmatpush1.bf16.msra.mxu0 0
        %2023 = vmatprep.subr.bf16.mxu0 0
        %2024 = vmatpush1.bf16.msra.mxu0 0
        %2025 = vmatprep.subr.bf16.mxu0 0
        %2026 = vmatpush1.bf16.msra.mxu0 0
        %2027 = vmatprep.subr.bf16.mxu0 0
        %2028 = vmatpush1.bf16.msra.mxu0 0
        %2029 = vmatprep.mubr.bf16.mxu0 0
        %2030 = vmatmul.mubr.bf16.gmra.mrb[0].mxu0 %v1992
        %v2031 = vpop.f32.mrb[0].mxu0
        %v2032 = vadd.f32 0.0, %v2031
        %v2033 = vpop.f32.mrb[0].mxu0
        %v2034 = vadd.f32 0.0, %v2033
        %v2035 = vpop.f32.mrb[0].mxu0
        %v2036 = vadd.f32 0.0, %v2035
        %v2037 = vpop.f32.mrb[0].mxu0
        %v2038 = vadd.f32 0.0, %v2037
        %2039 = vmatprep.mubr.bf16.mxu0 0
        %2040 = vmatmul.mubr.bf16.gmra.mrb[0].mxu0 %v1995
        %v2041 = vpop.f32.mrb[0].mxu0
        %v2042 = vadd.f32 0.0, %v2041
        %v2043 = vpop.f32.mrb[0].mxu0
        %v2044 = vadd.f32 0.0, %v2043
        %v2045 = vpop.f32.mrb[0].mxu0
        %v2046 = vadd.f32 0.0, %v2045
        %v2047 = vpop.f32.mrb[0].mxu0
        %v2048 = vadd.f32 0.0, %v2047
        %2049 = vdwg.mxu0
        %v2051 = vsel %vm594, %v1983, 0
        %v2054 = vsel %vm594, %v1984, 0
        %2056 = vmatprep.subr.bf16.mxu0 %v698
        %2057 = vmatpush1.bf16.msra.mxu0 %v697
        %2058 = vmatprep.subr.bf16.mxu0 %v700
        %2059 = vmatpush1.bf16.msra.mxu0 %v699
        %2060 = vmatprep.subr.bf16.mxu0 %v702
        %2061 = vmatpush1.bf16.msra.mxu0 %v701
        %2062 = vmatprep.subr.bf16.mxu0 %v704
        %2063 = vmatpush1.bf16.msra.mxu0 %v703
        %2064 = vmatprep.subr.bf16.mxu0 %v706
        %2065 = vmatpush1.bf16.msra.mxu0 %v705
        %2066 = vmatprep.subr.bf16.mxu0 %v729
        %2067 = vmatpush1.bf16.msra.mxu0 %v726
        %2068 = vmatprep.subr.bf16.mxu0 0
        %2069 = vmatpush1.bf16.msra.mxu0 0
        %2070 = vmatprep.subr.bf16.mxu0 0
        %2071 = vmatpush1.bf16.msra.mxu0 0
        %2072 = vmatprep.subr.bf16.mxu0 0
        %2073 = vmatpush1.bf16.msra.mxu0 0
        %2074 = vmatprep.subr.bf16.mxu0 0
        %2075 = vmatpush1.bf16.msra.mxu0 0
        %2076 = vmatprep.subr.bf16.mxu0 0
        %2077 = vmatpush1.bf16.msra.mxu0 0
        %2078 = vmatprep.subr.bf16.mxu0 0
        %2079 = vmatpush1.bf16.msra.mxu0 0
        %2080 = vmatprep.subr.bf16.mxu0 0
        %2081 = vmatpush1.bf16.msra.mxu0 0
        %2082 = vmatprep.subr.bf16.mxu0 0
        %2083 = vmatpush1.bf16.msra.mxu0 0
        %2084 = vmatprep.subr.bf16.mxu0 0
        %2085 = vmatpush1.bf16.msra.mxu0 0
        %2086 = vmatprep.subr.bf16.mxu0 0
        %2087 = vmatpush1.bf16.msra.mxu0 0
        %2088 = vmatprep.mubr.bf16.mxu0 0
        %2089 = vmatmul.mubr.bf16.gmra.mrb[0].mxu0 %v2051
        %v2090 = vpop.f32.mrb[0].mxu0
        %v2091 = vadd.f32 %v2032, %v2090
        %v2092 = vpop.f32.mrb[0].mxu0
        %v2093 = vadd.f32 %v2034, %v2092
        %v2094 = vpop.f32.mrb[0].mxu0
        %v2095 = vadd.f32 %v2036, %v2094
        %v2096 = vpop.f32.mrb[0].mxu0
        %v2097 = vadd.f32 %v2038, %v2096
        %2098 = vmatprep.mubr.bf16.mxu0 0
        %2099 = vmatmul.mubr.bf16.gmra.mrb[0].mxu0 %v2054
        %v2100 = vpop.f32.mrb[0].mxu0
        %v2101 = vadd.f32 %v2042, %v2100
        %v2102 = vpop.f32.mrb[0].mxu0
        %v2103 = vadd.f32 %v2044, %v2102
        %v2104 = vpop.f32.mrb[0].mxu0
        %v2105 = vadd.f32 %v2046, %v2104
        %v2106 = vpop.f32.mrb[0].mxu0
        %v2107 = vadd.f32 %v2048, %v2106
        %2108 = vdwg.mxu0
        %v2109 = vld [vmem:[%s1978 + $0x2] sm:$0xff]
        %v2110 = vld [vmem:[%s1978 + $0xa] sm:$0xff]
        %v2111 = vld [vmem:[%s1978 + $0x12] sm:$0xff]
        %v2112 = vld [vmem:[%s1978 + $0x1a] sm:$0xf]
        %v2113 = vpack.c.bf16 %v2110, %v2109
        %v2114 = vpack.c.bf16 %v2112, %v2111
        %v2116 = vsel %vm594, %v2113, 0
        %v2119 = vsel %vm594, %v2114, 0
        %2121 = vmatprep.subr.bf16.mxu0 %v840
        %2122 = vmatpush1.bf16.msra.mxu0 %v839
        %2123 = vmatprep.subr.bf16.mxu0 %v842
        %2124 = vmatpush1.bf16.msra.mxu0 %v841
        %2125 = vmatprep.subr.bf16.mxu0 %v844
        %2126 = vmatpush1.bf16.msra.mxu0 %v843
        %2127 = vmatprep.subr.bf16.mxu0 %v846
        %2128 = vmatpush1.bf16.msra.mxu0 %v845
        %2129 = vmatprep.subr.bf16.mxu0 %v848
        %2130 = vmatpush1.bf16.msra.mxu0 %v847
        %2131 = vmatprep.subr.bf16.mxu0 %v871
        %2132 = vmatpush1.bf16.msra.mxu0 %v868
        %2133 = vmatprep.subr.bf16.mxu0 0
        %2134 = vmatpush1.bf16.msra.mxu0 0
        %2135 = vmatprep.subr.bf16.mxu0 0
        %2136 = vmatpush1.bf16.msra.mxu0 0
        %2137 = vmatprep.subr.bf16.mxu0 0
        %2138 = vmatpush1.bf16.msra.mxu0 0
        %2139 = vmatprep.subr.bf16.mxu0 0
        %2140 = vmatpush1.bf16.msra.mxu0 0
        %2141 = vmatprep.subr.bf16.mxu0 0
        %2142 = vmatpush1.bf16.msra.mxu0 0
        %2143 = vmatprep.subr.bf16.mxu0 0
        %2144 = vmatpush1.bf16.msra.mxu0 0
        %2145 = vmatprep.subr.bf16.mxu0 0
        %2146 = vmatpush1.bf16.msra.mxu0 0
        %2147 = vmatprep.subr.bf16.mxu0 0
        %2148 = vmatpush1.bf16.msra.mxu0 0
        %2149 = vmatprep.subr.bf16.mxu0 0
        %2150 = vmatpush1.bf16.msra.mxu0 0
        %2151 = vmatprep.subr.bf16.mxu0 0
        %2152 = vmatpush1.bf16.msra.mxu0 0
        %2153 = vmatprep.mubr.bf16.mxu0 0
        %2154 = vmatmul.mubr.bf16.gmra.mrb[0].mxu0 %v2116
        %v2155 = vpop.f32.mrb[0].mxu0
        %v2156 = vadd.f32 0.0, %v2155
        %v2157 = vpop.f32.mrb[0].mxu0
        %v2158 = vadd.f32 0.0, %v2157
        %v2159 = vpop.f32.mrb[0].mxu0
        %v2160 = vadd.f32 0.0, %v2159
        %v2161 = vpop.f32.mrb[0].mxu0
        %v2162 = vadd.f32 0.0, %v2161
        %2163 = vmatprep.mubr.bf16.mxu0 0
        %2164 = vmatmul.mubr.bf16.gmra.mrb[0].mxu0 %v2119
        %v2165 = vpop.f32.mrb[0].mxu0
        %v2166 = vadd.f32 0.0, %v2165
        %v2167 = vpop.f32.mrb[0].mxu0
        %v2168 = vadd.f32 0.0, %v2167
        %v2169 = vpop.f32.mrb[0].mxu0
        %v2170 = vadd.f32 0.0, %v2169
        %v2171 = vpop.f32.mrb[0].mxu0
        %v2172 = vadd.f32 0.0, %v2171
        %2173 = vdwg.mxu0
        %v2174 = vadd.f32 %v2091, %v2156
        %v2175 = vadd.f32 %v2093, %v2158
        %v2176 = vadd.f32 %v2095, %v2160
        %v2177 = vadd.f32 %v2097, %v2162
        %v2178 = vadd.f32 %v2101, %v2166
        %v2179 = vadd.f32 %v2103, %v2168
        %v2180 = vadd.f32 %v2105, %v2170
        %v2181 = vadd.f32 %v2107, %v2172
        %v2182 = vmax.f32 %v2174, %v2175
        %v2183 = vmax.f32 %v2176, %v2177
        %v2184 = vmax.f32 %v2178, %v2179
        %v2185 = vmax.f32 %v2180, %v2181
        %s2186 = scalar_lea.vmem %s496, 224
        %v2187 = vld [vmem:[%s2186] sm:$0xff]
        %v2188 = vld [vmem:[%s2186 + $0x8] sm:$0xff]
        %v2189 = vld [vmem:[%s2186 + $0x10] sm:$0xff]
        %v2190 = vld [vmem:[%s2186 + $0x18] sm:$0xf]
        %v2191 = vpack.c.bf16 %v2188, %v2187
        %v2192 = vpack.c.bf16 %v2190, %v2189
        %v2193 = vld [vmem:[%s2186 + $0x1] sm:$0xff]
        %v2194 = vld [vmem:[%s2186 + $0x9] sm:$0xff]
        %v2195 = vld [vmem:[%s2186 + $0x11] sm:$0xff]
        %v2196 = vld [vmem:[%s2186 + $0x19] sm:$0xf]
        %v2197 = vpack.c.bf16 %v2194, %v2193
        %v2198 = vpack.c.bf16 %v2196, %v2195
        %v2200 = vsel %vm594, %v2197, 0
        %v2203 = vsel %vm594, %v2198, 0
        %2205 = vmatprep.subr.bf16.mxu0 %v573
        %2206 = vmatpush1.bf16.msra.mxu0 %v572
        %2207 = vmatprep.subr.bf16.mxu0 %v575
        %2208 = vmatpush1.bf16.msra.mxu0 %v574
        %2209 = vmatprep.subr.bf16.mxu0 %v577
        %2210 = vmatpush1.bf16.msra.mxu0 %v576
        %2211 = vmatprep.subr.bf16.mxu0 %v579
        %2212 = vmatpush1.bf16.msra.mxu0 %v578
        %2213 = vmatprep.subr.bf16.mxu0 %v581
        %2214 = vmatpush1.bf16.msra.mxu0 %v580
        %2215 = vmatprep.subr.bf16.mxu0 %v606
        %2216 = vmatpush1.bf16.msra.mxu0 %v603
        %2217 = vmatprep.subr.bf16.mxu0 0
        %2218 = vmatpush1.bf16.msra.mxu0 0
        %2219 = vmatprep.subr.bf16.mxu0 0
        %2220 = vmatpush1.bf16.msra.mxu0 0
        %2221 = vmatprep.subr.bf16.mxu0 0
        %2222 = vmatpush1.bf16.msra.mxu0 0
        %2223 = vmatprep.subr.bf16.mxu0 0
        %2224 = vmatpush1.bf16.msra.mxu0 0
        %2225 = vmatprep.subr.bf16.mxu0 0
        %2226 = vmatpush1.bf16.msra.mxu0 0
        %2227 = vmatprep.subr.bf16.mxu0 0
        %2228 = vmatpush1.bf16.msra.mxu0 0
        %2229 = vmatprep.subr.bf16.mxu0 0
        %2230 = vmatpush1.bf16.msra.mxu0 0
        %2231 = vmatprep.subr.bf16.mxu0 0
        %2232 = vmatpush1.bf16.msra.mxu0 0
        %2233 = vmatprep.subr.bf16.mxu0 0
        %2234 = vmatpush1.bf16.msra.mxu0 0
        %2235 = vmatprep.subr.bf16.mxu0 0
        %2236 = vmatpush1.bf16.msra.mxu0 0
        %2237 = vmatprep.mubr.bf16.mxu0 0
        %2238 = vmatmul.mubr.bf16.gmra.mrb[0].mxu0 %v2200
        %v2239 = vpop.f32.mrb[0].mxu0
        %v2240 = vadd.f32 0.0, %v2239
        %v2241 = vpop.f32.mrb[0].mxu0
        %v2242 = vadd.f32 0.0, %v2241
        %v2243 = vpop.f32.mrb[0].mxu0
        %v2244 = vadd.f32 0.0, %v2243
        %v2245 = vpop.f32.mrb[0].mxu0
        %v2246 = vadd.f32 0.0, %v2245
        %2247 = vmatprep.mubr.bf16.mxu0 0
        %2248 = vmatmul.mubr.bf16.gmra.mrb[0].mxu0 %v2203
        %v2249 = vpop.f32.mrb[0].mxu0
        %v2250 = vadd.f32 0.0, %v2249
        %v2251 = vpop.f32.mrb[0].mxu0
        %v2252 = vadd.f32 0.0, %v2251
        %v2253 = vpop.f32.mrb[0].mxu0
        %v2254 = vadd.f32 0.0, %v2253
        %v2255 = vpop.f32.mrb[0].mxu0
        %v2256 = vadd.f32 0.0, %v2255
        %2257 = vdwg.mxu0
        %v2259 = vsel %vm594, %v2191, 0
        %v2262 = vsel %vm594, %v2192, 0
        %2264 = vmatprep.subr.bf16.mxu0 %v698
        %2265 = vmatpush1.bf16.msra.mxu0 %v697
        %2266 = vmatprep.subr.bf16.mxu0 %v700
        %2267 = vmatpush1.bf16.msra.mxu0 %v699
        %2268 = vmatprep.subr.bf16.mxu0 %v702
        %2269 = vmatpush1.bf16.msra.mxu0 %v701
        %2270 = vmatprep.subr.bf16.mxu0 %v704
        %2271 = vmatpush1.bf16.msra.mxu0 %v703
        %2272 = vmatprep.subr.bf16.mxu0 %v706
        %2273 = vmatpush1.bf16.msra.mxu0 %v705
        %2274 = vmatprep.subr.bf16.mxu0 %v729
        %2275 = vmatpush1.bf16.msra.mxu0 %v726
        %2276 = vmatprep.subr.bf16.mxu0 0
        %2277 = vmatpush1.bf16.msra.mxu0 0
        %2278 = vmatprep.subr.bf16.mxu0 0
        %2279 = vmatpush1.bf16.msra.mxu0 0
        %2280 = vmatprep.subr.bf16.mxu0 0
        %2281 = vmatpush1.bf16.msra.mxu0 0
        %2282 = vmatprep.subr.bf16.mxu0 0
        %2283 = vmatpush1.bf16.msra.mxu0 0
        %2284 = vmatprep.subr.bf16.mxu0 0
        %2285 = vmatpush1.bf16.msra.mxu0 0
        %2286 = vmatprep.subr.bf16.mxu0 0
        %2287 = vmatpush1.bf16.msra.mxu0 0
        %2288 = vmatprep.subr.bf16.mxu0 0
        %2289 = vmatpush1.bf16.msra.mxu0 0
        %2290 = vmatprep.subr.bf16.mxu0 0
        %2291 = vmatpush1.bf16.msra.mxu0 0
        %2292 = vmatprep.subr.bf16.mxu0 0
        %2293 = vmatpush1.bf16.msra.mxu0 0
        %2294 = vmatprep.subr.bf16.mxu0 0
        %2295 = vmatpush1.bf16.msra.mxu0 0
        %2296 = vmatprep.mubr.bf16.mxu0 0
        %2297 = vmatmul.mubr.bf16.gmra.mrb[0].mxu0 %v2259
        %v2298 = vpop.f32.mrb[0].mxu0
        %v2299 = vadd.f32 %v2240, %v2298
        %v2300 = vpop.f32.mrb[0].mxu0
        %v2301 = vadd.f32 %v2242, %v2300
        %v2302 = vpop.f32.mrb[0].mxu0
        %v2303 = vadd.f32 %v2244, %v2302
        %v2304 = vpop.f32.mrb[0].mxu0
        %v2305 = vadd.f32 %v2246, %v2304
        %2306 = vmatprep.mubr.bf16.mxu0 0
        %2307 = vmatmul.mubr.bf16.gmra.mrb[0].mxu0 %v2262
        %v2308 = vpop.f32.mrb[0].mxu0
        %v2309 = vadd.f32 %v2250, %v2308
        %v2310 = vpop.f32.mrb[0].mxu0
        %v2311 = vadd.f32 %v2252, %v2310
        %v2312 = vpop.f32.mrb[0].mxu0
        %v2313 = vadd.f32 %v2254, %v2312
        %v2314 = vpop.f32.mrb[0].mxu0
        %v2315 = vadd.f32 %v2256, %v2314
        %2316 = vdwg.mxu0
        %v2317 = vld [vmem:[%s2186 + $0x2] sm:$0xff]
        %v2318 = vld [vmem:[%s2186 + $0xa] sm:$0xff]
        %v2319 = vld [vmem:[%s2186 + $0x12] sm:$0xff]
        %v2320 = vld [vmem:[%s2186 + $0x1a] sm:$0xf]
        %v2321 = vpack.c.bf16 %v2318, %v2317
        %v2322 = vpack.c.bf16 %v2320, %v2319
        %v2324 = vsel %vm594, %v2321, 0
        %v2327 = vsel %vm594, %v2322, 0
        %2329 = vmatprep.subr.bf16.mxu0 %v840
        %2330 = vmatpush1.bf16.msra.mxu0 %v839
        %2331 = vmatprep.subr.bf16.mxu0 %v842
        %2332 = vmatpush1.bf16.msra.mxu0 %v841
        %2333 = vmatprep.subr.bf16.mxu0 %v844
        %2334 = vmatpush1.bf16.msra.mxu0 %v843
        %2335 = vmatprep.subr.bf16.mxu0 %v846
        %2336 = vmatpush1.bf16.msra.mxu0 %v845
        %2337 = vmatprep.subr.bf16.mxu0 %v848
        %2338 = vmatpush1.bf16.msra.mxu0 %v847
        %2339 = vmatprep.subr.bf16.mxu0 %v871
        %2340 = vmatpush1.bf16.msra.mxu0 %v868
        %2341 = vmatprep.subr.bf16.mxu0 0
        %2342 = vmatpush1.bf16.msra.mxu0 0
        %2343 = vmatprep.subr.bf16.mxu0 0
        %2344 = vmatpush1.bf16.msra.mxu0 0
        %2345 = vmatprep.subr.bf16.mxu0 0
        %2346 = vmatpush1.bf16.msra.mxu0 0
        %2347 = vmatprep.subr.bf16.mxu0 0
        %2348 = vmatpush1.bf16.msra.mxu0 0
        %2349 = vmatprep.subr.bf16.mxu0 0
        %2350 = vmatpush1.bf16.msra.mxu0 0
        %2351 = vmatprep.subr.bf16.mxu0 0
        %2352 = vmatpush1.bf16.msra.mxu0 0
        %2353 = vmatprep.subr.bf16.mxu0 0
        %2354 = vmatpush1.bf16.msra.mxu0 0
        %2355 = vmatprep.subr.bf16.mxu0 0
        %2356 = vmatpush1.bf16.msra.mxu0 0
        %2357 = vmatprep.subr.bf16.mxu0 0
        %2358 = vmatpush1.bf16.msra.mxu0 0
        %2359 = vmatprep.subr.bf16.mxu0 0
        %2360 = vmatpush1.bf16.msra.mxu0 0
        %2361 = vmatprep.mubr.bf16.mxu0 0
        %2362 = vmatmul.mubr.bf16.gmra.mrb[0].mxu0 %v2324
        %v2363 = vpop.f32.mrb[0].mxu0
        %v2364 = vadd.f32 0.0, %v2363
        %v2365 = vpop.f32.mrb[0].mxu0
        %v2366 = vadd.f32 0.0, %v2365
        %v2367 = vpop.f32.mrb[0].mxu0
        %v2368 = vadd.f32 0.0, %v2367
        %v2369 = vpop.f32.mrb[0].mxu0
        %v2370 = vadd.f32 0.0, %v2369
        %2371 = vmatprep.mubr.bf16.mxu0 0
        %2372 = vmatmul.mubr.bf16.gmra.mrb[0].mxu0 %v2327
        %v2373 = vpop.f32.mrb[0].mxu0
        %v2374 = vadd.f32 0.0, %v2373
        %v2375 = vpop.f32.mrb[0].mxu0
        %v2376 = vadd.f32 0.0, %v2375
        %v2377 = vpop.f32.mrb[0].mxu0
        %v2378 = vadd.f32 0.0, %v2377
        %v2379 = vpop.f32.mrb[0].mxu0
        %v2380 = vadd.f32 0.0, %v2379
        %2381 = vdwg.mxu0
        %v2382 = vadd.f32 %v2299, %v2364
        %v2383 = vadd.f32 %v2301, %v2366
        %v2384 = vadd.f32 %v2303, %v2368
        %v2385 = vadd.f32 %v2305, %v2370
        %v2386 = vadd.f32 %v2309, %v2374
        %v2387 = vadd.f32 %v2311, %v2376
        %v2388 = vadd.f32 %v2313, %v2378
        %v2389 = vadd.f32 %v2315, %v2380
        %v2390 = vmax.f32 %v2382, %v2383
        %v2391 = vmax.f32 %v2384, %v2385
        %v2392 = vmax.f32 %v2386, %v2387
        %v2393 = vmax.f32 %v2388, %v2389
        %v2394 = vpack.c.bf16 %v935, %v934
        %v2395 = vpack.c.bf16 %v1143, %v1142
        %v2396 = vpack.c.bf16 %v1351, %v1350
        %v2397 = vpack.c.bf16 %v1559, %v1558
        %v2398 = vpack.c.bf16 %v1767, %v1766
        %v2399 = vpack.c.bf16 %v1975, %v1974
        %v2400 = vpack.c.bf16 %v2183, %v2182
        %v2401 = vpack.c.bf16 %v2391, %v2390
        %v2402 = vpack.c.bf16 %v937, %v936
        %v2403 = vpack.c.bf16 %v1145, %v1144
        %v2404 = vpack.c.bf16 %v1353, %v1352
        %v2405 = vpack.c.bf16 %v1561, %v1560
        %v2406 = vpack.c.bf16 %v1769, %v1768
        %v2407 = vpack.c.bf16 %v1977, %v1976
        %v2408 = vpack.c.bf16 %v2185, %v2184
        %v2409 = vpack.c.bf16 %v2393, %v2392
        %v2410 = vld [vmem:[%s7] sm:$0xf]
        %v2411 = vld [vmem:[%s7 + $0x4] sm:$0x7]
        %v2414 = vunpack.c.l.b16 %v2410
        %v2415 = vunpack.c.l.b16 %v2411
        %v2416 = vpack.c.b16 %v2415, %v2414
        %vm2417 = vcmask 228352
        %v2419 = vsel %vm2417, %v2416, 0
        %vm2421 = vcmask 1045504
        %v2423 = vsel %vm2421, %v2402, 0
        %v2426 = vsel %vm2421, %v2403, 0
        %v2429 = vsel %vm2421, %v2404, 0
        %v2432 = vsel %vm2421, %v2405, 0
        %v2435 = vsel %vm2421, %v2406, 0
        %v2438 = vsel %vm2421, %v2407, 0
        %v2441 = vsel %vm2421, %v2408, 0
        %v2444 = vsel %vm2421, %v2409, 0
        %2446 = vmatprep.subr.bf16.mxu0 %v2395
        %2447 = vmatpush1.bf16.msra.mxu0 %v2394
        %2448 = vmatprep.subr.bf16.mxu0 %v2426
        %2449 = vmatpush1.bf16.msra.mxu0 %v2423
        %2450 = vmatprep.subr.bf16.mxu0 0
        %2451 = vmatpush1.bf16.msra.mxu0 0
        %2452 = vmatprep.subr.bf16.mxu0 0
        %2453 = vmatpush1.bf16.msra.mxu0 0
        %2454 = vmatprep.subr.bf16.mxu0 0
        %2455 = vmatpush1.bf16.msra.mxu0 0
        %2456 = vmatprep.subr.bf16.mxu0 0
        %2457 = vmatpush1.bf16.msra.mxu0 0
        %2458 = vmatprep.subr.bf16.mxu0 0
        %2459 = vmatpush1.bf16.msra.mxu0 0
        %2460 = vmatprep.subr.bf16.mxu0 0
        %2461 = vmatpush1.bf16.msra.mxu0 0
        %2462 = vmatprep.subr.bf16.mxu0 0
        %2463 = vmatpush1.bf16.msra.mxu0 0
        %2464 = vmatprep.subr.bf16.mxu0 0
        %2465 = vmatpush1.bf16.msra.mxu0 0
        %2466 = vmatprep.subr.bf16.mxu0 0
        %2467 = vmatpush1.bf16.msra.mxu0 0
        %2468 = vmatprep.subr.bf16.mxu0 0
        %2469 = vmatpush1.bf16.msra.mxu0 0
        %2470 = vmatprep.subr.bf16.mxu0 0
        %2471 = vmatpush1.bf16.msra.mxu0 0
        %2472 = vmatprep.subr.bf16.mxu0 0
        %2473 = vmatpush1.bf16.msra.mxu0 0
        %2474 = vmatprep.subr.bf16.mxu0 0
        %2475 = vmatpush1.bf16.msra.mxu0 0
        %2476 = vmatprep.subr.bf16.mxu0 0
        %2477 = vmatpush1.bf16.msra.mxu0 0
        %2478 = vmatprep.mubr.bf16.mxu0 0
        %2479 = vmatmul.mubr.bf16.gmra.mrb[0].mxu0 %v2419
        %v2480 = vpop.f32.mrb[0].mxu0
        %v2481 = vadd.f32 0.0, %v2480
        %v2482 = vpop.f32.mrb[0].mxu0
        %v2483 = vadd.f32 0.0, %v2482
        %v2484 = vpop.f32.mrb[0].mxu0
        %v2485 = vadd.f32 0.0, %v2484
        %v2486 = vpop.f32.mrb[0].mxu0
        %v2487 = vadd.f32 0.0, %v2486
        %2488 = vdwg.mxu0
        %2489 = vmatprep.subr.bf16.mxu0 %v2397
        %2490 = vmatpush1.bf16.msra.mxu0 %v2396
        %2491 = vmatprep.subr.bf16.mxu0 %v2432
        %2492 = vmatpush1.bf16.msra.mxu0 %v2429
        %2493 = vmatprep.subr.bf16.mxu0 0
        %2494 = vmatpush1.bf16.msra.mxu0 0
        %2495 = vmatprep.subr.bf16.mxu0 0
        %2496 = vmatpush1.bf16.msra.mxu0 0
        %2497 = vmatprep.subr.bf16.mxu0 0
        %2498 = vmatpush1.bf16.msra.mxu0 0
        %2499 = vmatprep.subr.bf16.mxu0 0
        %2500 = vmatpush1.bf16.msra.mxu0 0
        %2501 = vmatprep.subr.bf16.mxu0 0
        %2502 = vmatpush1.bf16.msra.mxu0 0
        %2503 = vmatprep.subr.bf16.mxu0 0
        %2504 = vmatpush1.bf16.msra.mxu0 0
        %2505 = vmatprep.subr.bf16.mxu0 0
        %2506 = vmatpush1.bf16.msra.mxu0 0
        %2507 = vmatprep.subr.bf16.mxu0 0
        %2508 = vmatpush1.bf16.msra.mxu0 0
        %2509 = vmatprep.subr.bf16.mxu0 0
        %2510 = vmatpush1.bf16.msra.mxu0 0
        %2511 = vmatprep.subr.bf16.mxu0 0
        %2512 = vmatpush1.bf16.msra.mxu0 0
        %2513 = vmatprep.subr.bf16.mxu0 0
        %2514 = vmatpush1.bf16.msra.mxu0 0
        %2515 = vmatprep.subr.bf16.mxu0 0
        %2516 = vmatpush1.bf16.msra.mxu0 0
        %2517 = vmatprep.subr.bf16.mxu0 0
        %2518 = vmatpush1.bf16.msra.mxu0 0
        %2519 = vmatprep.subr.bf16.mxu0 0
        %2520 = vmatpush1.bf16.msra.mxu0 0
        %2521 = vmatprep.mubr.bf16.mxu0 0
        %2522 = vmatmul.mubr.bf16.gmra.mrb[0].mxu0 %v2419
        %v2523 = vpop.f32.mrb[0].mxu0
        %v2524 = vadd.f32 0.0, %v2523
        %v2525 = vpop.f32.mrb[0].mxu0
        %v2526 = vadd.f32 0.0, %v2525
        %v2527 = vpop.f32.mrb[0].mxu0
        %v2528 = vadd.f32 0.0, %v2527
        %v2529 = vpop.f32.mrb[0].mxu0
        %v2530 = vadd.f32 0.0, %v2529
        %2531 = vdwg.mxu0
        %2532 = vmatprep.subr.bf16.mxu0 %v2399
        %2533 = vmatpush1.bf16.msra.mxu0 %v2398
        %2534 = vmatprep.subr.bf16.mxu0 %v2438
        %2535 = vmatpush1.bf16.msra.mxu0 %v2435
        %2536 = vmatprep.subr.bf16.mxu0 0
        %2537 = vmatpush1.bf16.msra.mxu0 0
        %2538 = vmatprep.subr.bf16.mxu0 0
        %2539 = vmatpush1.bf16.msra.mxu0 0
        %2540 = vmatprep.subr.bf16.mxu0 0
        %2541 = vmatpush1.bf16.msra.mxu0 0
        %2542 = vmatprep.subr.bf16.mxu0 0
        %2543 = vmatpush1.bf16.msra.mxu0 0
        %2544 = vmatprep.subr.bf16.mxu0 0
        %2545 = vmatpush1.bf16.msra.mxu0 0
        %2546 = vmatprep.subr.bf16.mxu0 0
        %2547 = vmatpush1.bf16.msra.mxu0 0
        %2548 = vmatprep.subr.bf16.mxu0 0
        %2549 = vmatpush1.bf16.msra.mxu0 0
        %2550 = vmatprep.subr.bf16.mxu0 0
        %2551 = vmatpush1.bf16.msra.mxu0 0
        %2552 = vmatprep.subr.bf16.mxu0 0
        %2553 = vmatpush1.bf16.msra.mxu0 0
        %2554 = vmatprep.subr.bf16.mxu0 0
        %2555 = vmatpush1.bf16.msra.mxu0 0
        %2556 = vmatprep.subr.bf16.mxu0 0
        %2557 = vmatpush1.bf16.msra.mxu0 0
        %2558 = vmatprep.subr.bf16.mxu0 0
        %2559 = vmatpush1.bf16.msra.mxu0 0
        %2560 = vmatprep.subr.bf16.mxu0 0
        %2561 = vmatpush1.bf16.msra.mxu0 0
        %2562 = vmatprep.subr.bf16.mxu0 0
        %2563 = vmatpush1.bf16.msra.mxu0 0
        %2564 = vmatprep.mubr.bf16.mxu0 0
        %2565 = vmatmul.mubr.bf16.gmra.mrb[0].mxu0 %v2419
        %v2566 = vpop.f32.mrb[0].mxu0
        %v2567 = vadd.f32 0.0, %v2566
        %v2568 = vpop.f32.mrb[0].mxu0
        %v2569 = vadd.f32 0.0, %v2568
        %v2570 = vpop.f32.mrb[0].mxu0
        %v2571 = vadd.f32 0.0, %v2570
        %v2572 = vpop.f32.mrb[0].mxu0
        %v2573 = vadd.f32 0.0, %v2572
        %2574 = vdwg.mxu0
        %2575 = vmatprep.subr.bf16.mxu0 %v2401
        %2576 = vmatpush1.bf16.msra.mxu0 %v2400
        %2577 = vmatprep.subr.bf16.mxu0 %v2444
        %2578 = vmatpush1.bf16.msra.mxu0 %v2441
        %2579 = vmatprep.subr.bf16.mxu0 0
        %2580 = vmatpush1.bf16.msra.mxu0 0
        %2581 = vmatprep.subr.bf16.mxu0 0
        %2582 = vmatpush1.bf16.msra.mxu0 0
        %2583 = vmatprep.subr.bf16.mxu0 0
        %2584 = vmatpush1.bf16.msra.mxu0 0
        %2585 = vmatprep.subr.bf16.mxu0 0
        %2586 = vmatpush1.bf16.msra.mxu0 0
        %2587 = vmatprep.subr.bf16.mxu0 0
        %2588 = vmatpush1.bf16.msra.mxu0 0
        %2589 = vmatprep.subr.bf16.mxu0 0
        %2590 = vmatpush1.bf16.msra.mxu0 0
        %2591 = vmatprep.subr.bf16.mxu0 0
        %2592 = vmatpush1.bf16.msra.mxu0 0
        %2593 = vmatprep.subr.bf16.mxu0 0
        %2594 = vmatpush1.bf16.msra.mxu0 0
        %2595 = vmatprep.subr.bf16.mxu0 0
        %2596 = vmatpush1.bf16.msra.mxu0 0
        %2597 = vmatprep.subr.bf16.mxu0 0
        %2598 = vmatpush1.bf16.msra.mxu0 0
        %2599 = vmatprep.subr.bf16.mxu0 0
        %2600 = vmatpush1.bf16.msra.mxu0 0
        %2601 = vmatprep.subr.bf16.mxu0 0
        %2602 = vmatpush1.bf16.msra.mxu0 0
        %2603 = vmatprep.subr.bf16.mxu0 0
        %2604 = vmatpush1.bf16.msra.mxu0 0
        %2605 = vmatprep.subr.bf16.mxu0 0
        %2606 = vmatpush1.bf16.msra.mxu0 0
        %2607 = vmatprep.mubr.bf16.mxu0 0
        %2608 = vmatmul.mubr.bf16.gmra.mrb[0].mxu0 %v2419
        %v2609 = vpop.f32.mrb[0].mxu0
        %v2610 = vadd.f32 0.0, %v2609
        %v2611 = vpop.f32.mrb[0].mxu0
        %v2612 = vadd.f32 0.0, %v2611
        %v2613 = vpop.f32.mrb[0].mxu0
        %v2614 = vadd.f32 0.0, %v2613
        %v2615 = vpop.f32.mrb[0].mxu0
        %v2616 = vadd.f32 0.0, %v2615
        %2617 = vdwg.mxu0
        %s2618 = scalar_lea.vmem %s7, 8
        %v2619 = vld [vmem:[%s2618] sm:$0xf]
        %v2620 = vld [vmem:[%s2618 + $0x4] sm:$0x7]
        %v2623 = vunpack.c.l.b16 %v2619
        %v2624 = vunpack.c.l.b16 %v2620
        %v2625 = vpack.c.b16 %v2624, %v2623
        %v2627 = vsel %vm2417, %v2625, 0
        %2629 = vmatprep.subr.bf16.mxu0 %v2395
        %2630 = vmatpush1.bf16.msra.mxu0 %v2394
        %2631 = vmatprep.subr.bf16.mxu0 %v2426
        %2632 = vmatpush1.bf16.msra.mxu0 %v2423
        %2633 = vmatprep.subr.bf16.mxu0 0
        %2634 = vmatpush1.bf16.msra.mxu0 0
        %2635 = vmatprep.subr.bf16.mxu0 0
        %2636 = vmatpush1.bf16.msra.mxu0 0
        %2637 = vmatprep.subr.bf16.mxu0 0
        %2638 = vmatpush1.bf16.msra.mxu0 0
        %2639 = vmatprep.subr.bf16.mxu0 0
        %2640 = vmatpush1.bf16.msra.mxu0 0
        %2641 = vmatprep.subr.bf16.mxu0 0
        %2642 = vmatpush1.bf16.msra.mxu0 0
        %2643 = vmatprep.subr.bf16.mxu0 0
        %2644 = vmatpush1.bf16.msra.mxu0 0
        %2645 = vmatprep.subr.bf16.mxu0 0
        %2646 = vmatpush1.bf16.msra.mxu0 0
        %2647 = vmatprep.subr.bf16.mxu0 0
        %2648 = vmatpush1.bf16.msra.mxu0 0
        %2649 = vmatprep.subr.bf16.mxu0 0
        %2650 = vmatpush1.bf16.msra.mxu0 0
        %2651 = vmatprep.subr.bf16.mxu0 0
        %2652 = vmatpush1.bf16.msra.mxu0 0
        %2653 = vmatprep.subr.bf16.mxu0 0
        %2654 = vmatpush1.bf16.msra.mxu0 0
        %2655 = vmatprep.subr.bf16.mxu0 0
        %2656 = vmatpush1.bf16.msra.mxu0 0
        %2657 = vmatprep.subr.bf16.mxu0 0
        %2658 = vmatpush1.bf16.msra.mxu0 0
        %2659 = vmatprep.subr.bf16.mxu0 0
        %2660 = vmatpush1.bf16.msra.mxu0 0
        %2661 = vmatprep.mubr.bf16.mxu0 0
        %2662 = vmatmul.mubr.bf16.gmra.mrb[0].mxu0 %v2627
        %v2663 = vpop.f32.mrb[0].mxu0
        %v2664 = vadd.f32 0.0, %v2663
        %v2665 = vpop.f32.mrb[0].mxu0
        %v2666 = vadd.f32 0.0, %v2665
        %v2667 = vpop.f32.mrb[0].mxu0
        %v2668 = vadd.f32 0.0, %v2667
        %v2669 = vpop.f32.mrb[0].mxu0
        %v2670 = vadd.f32 0.0, %v2669
        %2671 = vdwg.mxu0
        %2672 = vmatprep.subr.bf16.mxu0 %v2397
        %2673 = vmatpush1.bf16.msra.mxu0 %v2396
        %2674 = vmatprep.subr.bf16.mxu0 %v2432
        %2675 = vmatpush1.bf16.msra.mxu0 %v2429
        %2676 = vmatprep.subr.bf16.mxu0 0
        %2677 = vmatpush1.bf16.msra.mxu0 0
        %2678 = vmatprep.subr.bf16.mxu0 0
        %2679 = vmatpush1.bf16.msra.mxu0 0
        %2680 = vmatprep.subr.bf16.mxu0 0
        %2681 = vmatpush1.bf16.msra.mxu0 0
        %2682 = vmatprep.subr.bf16.mxu0 0
        %2683 = vmatpush1.bf16.msra.mxu0 0
        %2684 = vmatprep.subr.bf16.mxu0 0
        %2685 = vmatpush1.bf16.msra.mxu0 0
        %2686 = vmatprep.subr.bf16.mxu0 0
        %2687 = vmatpush1.bf16.msra.mxu0 0
        %2688 = vmatprep.subr.bf16.mxu0 0
        %2689 = vmatpush1.bf16.msra.mxu0 0
        %2690 = vmatprep.subr.bf16.mxu0 0
        %2691 = vmatpush1.bf16.msra.mxu0 0
        %2692 = vmatprep.subr.bf16.mxu0 0
        %2693 = vmatpush1.bf16.msra.mxu0 0
        %2694 = vmatprep.subr.bf16.mxu0 0
        %2695 = vmatpush1.bf16.msra.mxu0 0
        %2696 = vmatprep.subr.bf16.mxu0 0
        %2697 = vmatpush1.bf16.msra.mxu0 0
        %2698 = vmatprep.subr.bf16.mxu0 0
        %2699 = vmatpush1.bf16.msra.mxu0 0
        %2700 = vmatprep.subr.bf16.mxu0 0
        %2701 = vmatpush1.bf16.msra.mxu0 0
        %2702 = vmatprep.subr.bf16.mxu0 0
        %2703 = vmatpush1.bf16.msra.mxu0 0
        %2704 = vmatprep.mubr.bf16.mxu0 0
        %2705 = vmatmul.mubr.bf16.gmra.mrb[0].mxu0 %v2627
        %v2706 = vpop.f32.mrb[0].mxu0
        %v2707 = vadd.f32 0.0, %v2706
        %v2708 = vpop.f32.mrb[0].mxu0
        %v2709 = vadd.f32 0.0, %v2708
        %v2710 = vpop.f32.mrb[0].mxu0
        %v2711 = vadd.f32 0.0, %v2710
        %v2712 = vpop.f32.mrb[0].mxu0
        %v2713 = vadd.f32 0.0, %v2712
        %2714 = vdwg.mxu0
        %2715 = vmatprep.subr.bf16.mxu0 %v2399
        %2716 = vmatpush1.bf16.msra.mxu0 %v2398
        %2717 = vmatprep.subr.bf16.mxu0 %v2438
        %2718 = vmatpush1.bf16.msra.mxu0 %v2435
        %2719 = vmatprep.subr.bf16.mxu0 0
        %2720 = vmatpush1.bf16.msra.mxu0 0
        %2721 = vmatprep.subr.bf16.mxu0 0
        %2722 = vmatpush1.bf16.msra.mxu0 0
        %2723 = vmatprep.subr.bf16.mxu0 0
        %2724 = vmatpush1.bf16.msra.mxu0 0
        %2725 = vmatprep.subr.bf16.mxu0 0
        %2726 = vmatpush1.bf16.msra.mxu0 0
        %2727 = vmatprep.subr.bf16.mxu0 0
        %2728 = vmatpush1.bf16.msra.mxu0 0
        %2729 = vmatprep.subr.bf16.mxu0 0
        %2730 = vmatpush1.bf16.msra.mxu0 0
        %2731 = vmatprep.subr.bf16.mxu0 0
        %2732 = vmatpush1.bf16.msra.mxu0 0
        %2733 = vmatprep.subr.bf16.mxu0 0
        %2734 = vmatpush1.bf16.msra.mxu0 0
        %2735 = vmatprep.subr.bf16.mxu0 0
        %2736 = vmatpush1.bf16.msra.mxu0 0
        %2737 = vmatprep.subr.bf16.mxu0 0
        %2738 = vmatpush1.bf16.msra.mxu0 0
        %2739 = vmatprep.subr.bf16.mxu0 0
        %2740 = vmatpush1.bf16.msra.mxu0 0
        %2741 = vmatprep.subr.bf16.mxu0 0
        %2742 = vmatpush1.bf16.msra.mxu0 0
        %2743 = vmatprep.subr.bf16.mxu0 0
        %2744 = vmatpush1.bf16.msra.mxu0 0
        %2745 = vmatprep.subr.bf16.mxu0 0
        %2746 = vmatpush1.bf16.msra.mxu0 0
        %2747 = vmatprep.mubr.bf16.mxu0 0
        %2748 = vmatmul.mubr.bf16.gmra.mrb[0].mxu0 %v2627
        %v2749 = vpop.f32.mrb[0].mxu0
        %v2750 = vadd.f32 0.0, %v2749
        %v2751 = vpop.f32.mrb[0].mxu0
        %v2752 = vadd.f32 0.0, %v2751
        %v2753 = vpop.f32.mrb[0].mxu0
        %v2754 = vadd.f32 0.0, %v2753
        %v2755 = vpop.f32.mrb[0].mxu0
        %v2756 = vadd.f32 0.0, %v2755
        %2757 = vdwg.mxu0
        %2758 = vmatprep.subr.bf16.mxu0 %v2401
        %2759 = vmatpush1.bf16.msra.mxu0 %v2400
        %2760 = vmatprep.subr.bf16.mxu0 %v2444
        %2761 = vmatpush1.bf16.msra.mxu0 %v2441
        %2762 = vmatprep.subr.bf16.mxu0 0
        %2763 = vmatpush1.bf16.msra.mxu0 0
        %2764 = vmatprep.subr.bf16.mxu0 0
        %2765 = vmatpush1.bf16.msra.mxu0 0
        %2766 = vmatprep.subr.bf16.mxu0 0
        %2767 = vmatpush1.bf16.msra.mxu0 0
        %2768 = vmatprep.subr.bf16.mxu0 0
        %2769 = vmatpush1.bf16.msra.mxu0 0
        %2770 = vmatprep.subr.bf16.mxu0 0
        %2771 = vmatpush1.bf16.msra.mxu0 0
        %2772 = vmatprep.subr.bf16.mxu0 0
        %2773 = vmatpush1.bf16.msra.mxu0 0
        %2774 = vmatprep.subr.bf16.mxu0 0
        %2775 = vmatpush1.bf16.msra.mxu0 0
        %2776 = vmatprep.subr.bf16.mxu0 0
        %2777 = vmatpush1.bf16.msra.mxu0 0
        %2778 = vmatprep.subr.bf16.mxu0 0
        %2779 = vmatpush1.bf16.msra.mxu0 0
        %2780 = vmatprep.subr.bf16.mxu0 0
        %2781 = vmatpush1.bf16.msra.mxu0 0
        %2782 = vmatprep.subr.bf16.mxu0 0
        %2783 = vmatpush1.bf16.msra.mxu0 0
        %2784 = vmatprep.subr.bf16.mxu0 0
        %2785 = vmatpush1.bf16.msra.mxu0 0
        %2786 = vmatprep.subr.bf16.mxu0 0
        %2787 = vmatpush1.bf16.msra.mxu0 0
        %2788 = vmatprep.subr.bf16.mxu0 0
        %2789 = vmatpush1.bf16.msra.mxu0 0
        %2790 = vmatprep.mubr.bf16.mxu0 0
        %2791 = vmatmul.mubr.bf16.gmra.mrb[0].mxu0 %v2627
        %v2792 = vpop.f32.mrb[0].mxu0
        %v2793 = vadd.f32 0.0, %v2792
        %v2794 = vpop.f32.mrb[0].mxu0
        %v2795 = vadd.f32 0.0, %v2794
        %v2796 = vpop.f32.mrb[0].mxu0
        %v2797 = vadd.f32 0.0, %v2796
        %v2798 = vpop.f32.mrb[0].mxu0
        %v2799 = vadd.f32 0.0, %v2798
        %2800 = vdwg.mxu0
        %v2801 = vmax.f32 %v2481, %v2664
        %v2802 = vmax.f32 %v2483, %v2666
        %v2803 = vmax.f32 %v2524, %v2707
        %v2804 = vmax.f32 %v2526, %v2709
        %v2805 = vmax.f32 %v2567, %v2750
        %v2806 = vmax.f32 %v2569, %v2752
        %v2807 = vmax.f32 %v2610, %v2793
        %v2808 = vmax.f32 %v2612, %v2795
        %v2809 = vmax.f32 %v2485, %v2668
        %v2810 = vmax.f32 %v2487, %v2670
        %v2811 = vmax.f32 %v2528, %v2711
        %v2812 = vmax.f32 %v2530, %v2713
        %v2813 = vmax.f32 %v2571, %v2754
        %v2814 = vmax.f32 %v2573, %v2756
        %v2815 = vmax.f32 %v2614, %v2797
        %v2816 = vmax.f32 %v2616, %v2799
        %v2817 = vld [vmem:[%s2] sm:$0x1]
        %v2819 = vlaneseq
        %v2820 = vshrl.u32 %v2819, 7
        %v2821 = vsub.s32 0, %v2820
        %v2822 = vrot.slane %v2817, %v2821
        %v2824 = vadd.f32 %v2801, %v2822
        %v2825 = vadd.f32 %v2809, %v2822
        %v2826 = vmax.f32 %v2824, 0.0
        %v2827 = vmax.f32 %v2825, 0.0
        %v2828 = vpack.c.bf16 %v2827, %v2826
        %v2829 = vld [vmem:[%s3] sm:$0xff]
        %v2830 = vld [vmem:[%s3 + $0x8] sm:$0xff]
        %v2831 = vld [vmem:[%s3 + $0x10] sm:$0xff]
        %v2832 = vld [vmem:[%s3 + $0x18] sm:$0xff]
        %v2833 = vld [vmem:[%s3 + $0x20] sm:$0xff]
        %v2834 = vld [vmem:[%s3 + $0x28] sm:$0xff]
        %v2835 = vld [vmem:[%s3 + $0x30] sm:$0xff]
        %v2836 = vld [vmem:[%s3 + $0x38] sm:$0xff]
        %v2837 = vld [vmem:[%s3 + $0x40] sm:$0xff]
        %v2838 = vld [vmem:[%s3 + $0x48] sm:$0xff]
        %v2839 = vld [vmem:[%s3 + $0x50] sm:$0xff]
        %v2840 = vld [vmem:[%s3 + $0x58] sm:$0xff]
        %v2841 = vld [vmem:[%s3 + $0x60] sm:$0xff]
        %v2842 = vld [vmem:[%s3 + $0x68] sm:$0xff]
        %v2843 = vld [vmem:[%s3 + $0x70] sm:$0xff]
        %v2844 = vld [vmem:[%s3 + $0x78] sm:$0xff]
        %s2845 = scalar_lea.vmem %s3, 128
        %v2846 = vld [vmem:[%s2845] sm:$0xff]
        %v2847 = vld [vmem:[%s2845 + $0x8] sm:$0xff]
        %v2848 = vld [vmem:[%s2845 + $0x10] sm:$0xff]
        %v2849 = vld [vmem:[%s2845 + $0x18] sm:$0xff]
        %v2850 = vld [vmem:[%s2845 + $0x20] sm:$0xff]
        %v2851 = vld [vmem:[%s2845 + $0x28] sm:$0xff]
        %v2852 = vld [vmem:[%s2845 + $0x30] sm:$0xff]
        %v2853 = vld [vmem:[%s2845 + $0x38] sm:$0xff]
        %v2854 = vld [vmem:[%s2845 + $0x40] sm:$0xff]
        %v2855 = vld [vmem:[%s2845 + $0x48] sm:$0xff]
        %v2856 = vld [vmem:[%s2845 + $0x50] sm:$0xff]
        %v2857 = vld [vmem:[%s2845 + $0x58] sm:$0xff]
        %v2858 = vld [vmem:[%s2845 + $0x60] sm:$0xff]
        %v2859 = vld [vmem:[%s2845 + $0x68] sm:$0xff]
        %v2860 = vld [vmem:[%s2845 + $0x70] sm:$0xff]
        %v2861 = vld [vmem:[%s2845 + $0x78] sm:$0xff]
        %v2863 = vshrl.u32 %v2828, 16
        %v2865 = vshll.u32 %v2828, 16
        %v2867 = vrot.slane %v2865, 1
        %v2868 = vor.u32 %v2863, %v2867
        %v2886 = vunpack.c.l.b16 %v2846
        %v2887 = vunpack.c.h.b16 %v2846
        %v2888 = vunpack.c.l.b16 %v2847
        %v2889 = vunpack.c.h.b16 %v2847
        %v2890 = vunpack.c.l.b16 %v2848
        %v2891 = vunpack.c.h.b16 %v2848
        %v2892 = vunpack.c.l.b16 %v2849
        %v2893 = vunpack.c.h.b16 %v2849
        %v2894 = vunpack.c.l.b16 %v2850
        %v2895 = vunpack.c.h.b16 %v2850
        %v2896 = vunpack.c.l.b16 %v2851
        %v2897 = vunpack.c.h.b16 %v2851
        %v2898 = vunpack.c.l.b16 %v2852
        %v2899 = vunpack.c.h.b16 %v2852
        %v2900 = vunpack.c.l.b16 %v2853
        %v2901 = vunpack.c.h.b16 %v2853
        %v2902 = vunpack.c.l.b16 %v2854
        %v2903 = vunpack.c.h.b16 %v2854
        %v2904 = vunpack.c.l.b16 %v2855
        %v2905 = vunpack.c.h.b16 %v2855
        %v2906 = vunpack.c.l.b16 %v2856
        %v2907 = vunpack.c.h.b16 %v2856
        %v2908 = vunpack.c.l.b16 %v2857
        %v2909 = vunpack.c.h.b16 %v2857
        %v2910 = vunpack.c.l.b16 %v2858
        %v2911 = vunpack.c.h.b16 %v2858
        %v2912 = vunpack.c.l.b16 %v2859
        %v2913 = vunpack.c.h.b16 %v2859
        %v2914 = vunpack.c.l.b16 %v2860
        %v2915 = vunpack.c.h.b16 %v2860
        %v2916 = vunpack.c.l.b16 %v2861
        %v2917 = vunpack.c.h.b16 %v2861
        %v2918 = vpack.c.b16 %v2888, %v2886
        %v2919 = vpack.c.b16 %v2889, %v2887
        %v2920 = vpack.c.b16 %v2892, %v2890
        %v2921 = vpack.c.b16 %v2893, %v2891
        %v2922 = vpack.c.b16 %v2896, %v2894
        %v2923 = vpack.c.b16 %v2897, %v2895
        %v2924 = vpack.c.b16 %v2900, %v2898
        %v2925 = vpack.c.b16 %v2901, %v2899
        %v2926 = vpack.c.b16 %v2904, %v2902
        %v2927 = vpack.c.b16 %v2905, %v2903
        %v2928 = vpack.c.b16 %v2908, %v2906
        %v2929 = vpack.c.b16 %v2909, %v2907
        %v2930 = vpack.c.b16 %v2912, %v2910
        %v2931 = vpack.c.b16 %v2913, %v2911
        %v2932 = vpack.c.b16 %v2916, %v2914
        %v2933 = vpack.c.b16 %v2917, %v2915
        %2950 = vmatprep.subr.bf16.mxu0 %v2919
        %2951 = vmatpush1.bf16.msra.mxu0 %v2918
        %2952 = vmatprep.subr.bf16.mxu0 %v2921
        %2953 = vmatpush1.bf16.msra.mxu0 %v2920
        %2954 = vmatprep.subr.bf16.mxu0 %v2923
        %2955 = vmatpush1.bf16.msra.mxu0 %v2922
        %2956 = vmatprep.subr.bf16.mxu0 %v2925
        %2957 = vmatpush1.bf16.msra.mxu0 %v2924
        %2958 = vmatprep.subr.bf16.mxu0 %v2927
        %2959 = vmatpush1.bf16.msra.mxu0 %v2926
        %2960 = vmatprep.subr.bf16.mxu0 %v2929
        %2961 = vmatpush1.bf16.msra.mxu0 %v2928
        %2962 = vmatprep.subr.bf16.mxu0 %v2931
        %2963 = vmatpush1.bf16.msra.mxu0 %v2930
        %2964 = vmatprep.subr.bf16.mxu0 %v2933
        %2965 = vmatpush1.bf16.msra.mxu0 %v2932
        %2966 = vmatprep.subr.bf16.mxu0 0
        %2967 = vmatpush1.bf16.msra.mxu0 0
        %2968 = vmatprep.subr.bf16.mxu0 0
        %2969 = vmatpush1.bf16.msra.mxu0 0
        %2970 = vmatprep.subr.bf16.mxu0 0
        %2971 = vmatpush1.bf16.msra.mxu0 0
        %2972 = vmatprep.subr.bf16.mxu0 0
        %2973 = vmatpush1.bf16.msra.mxu0 0
        %2974 = vmatprep.subr.bf16.mxu0 0
        %2975 = vmatpush1.bf16.msra.mxu0 0
        %2976 = vmatprep.subr.bf16.mxu0 0
        %2977 = vmatpush1.bf16.msra.mxu0 0
        %2978 = vmatprep.subr.bf16.mxu0 0
        %2979 = vmatpush1.bf16.msra.mxu0 0
        %2980 = vmatprep.subr.bf16.mxu0 0
        %2981 = vmatpush1.bf16.msra.mxu0 0
        %2982 = vmatprep.mubr.bf16.mxu0 0
        %2983 = vmatmul.mubr.bf16.gmra.mrb[0].mxu0 %v2868
        %v2984 = vpop.f32.mrb[0].mxu0
        %v2985 = vadd.f32 0.0, %v2984
        %v2986 = vpop.f32.mrb[0].mxu0
        %v2987 = vadd.f32 0.0, %v2986
        %v2988 = vpop.f32.mrb[0].mxu0
        %v2989 = vadd.f32 0.0, %v2988
        %v2990 = vpop.f32.mrb[0].mxu0
        %v2991 = vadd.f32 0.0, %v2990
        %2992 = vdwg.mxu0
        %v3009 = vunpack.c.l.b16 %v2829
        %v3010 = vunpack.c.h.b16 %v2829
        %v3011 = vunpack.c.l.b16 %v2830
        %v3012 = vunpack.c.h.b16 %v2830
        %v3013 = vunpack.c.l.b16 %v2831
        %v3014 = vunpack.c.h.b16 %v2831
        %v3015 = vunpack.c.l.b16 %v2832
        %v3016 = vunpack.c.h.b16 %v2832
        %v3017 = vunpack.c.l.b16 %v2833
        %v3018 = vunpack.c.h.b16 %v2833
        %v3019 = vunpack.c.l.b16 %v2834
        %v3020 = vunpack.c.h.b16 %v2834
        %v3021 = vunpack.c.l.b16 %v2835
        %v3022 = vunpack.c.h.b16 %v2835
        %v3023 = vunpack.c.l.b16 %v2836
        %v3024 = vunpack.c.h.b16 %v2836
        %v3025 = vunpack.c.l.b16 %v2837
        %v3026 = vunpack.c.h.b16 %v2837
        %v3027 = vunpack.c.l.b16 %v2838
        %v3028 = vunpack.c.h.b16 %v2838
        %v3029 = vunpack.c.l.b16 %v2839
        %v3030 = vunpack.c.h.b16 %v2839
        %v3031 = vunpack.c.l.b16 %v2840
        %v3032 = vunpack.c.h.b16 %v2840
        %v3033 = vunpack.c.l.b16 %v2841
        %v3034 = vunpack.c.h.b16 %v2841
        %v3035 = vunpack.c.l.b16 %v2842
        %v3036 = vunpack.c.h.b16 %v2842
        %v3037 = vunpack.c.l.b16 %v2843
        %v3038 = vunpack.c.h.b16 %v2843
        %v3039 = vunpack.c.l.b16 %v2844
        %v3040 = vunpack.c.h.b16 %v2844
        %v3041 = vpack.c.b16 %v3011, %v3009
        %v3042 = vpack.c.b16 %v3012, %v3010
        %v3043 = vpack.c.b16 %v3015, %v3013
        %v3044 = vpack.c.b16 %v3016, %v3014
        %v3045 = vpack.c.b16 %v3019, %v3017
        %v3046 = vpack.c.b16 %v3020, %v3018
        %v3047 = vpack.c.b16 %v3023, %v3021
        %v3048 = vpack.c.b16 %v3024, %v3022
        %v3049 = vpack.c.b16 %v3027, %v3025
        %v3050 = vpack.c.b16 %v3028, %v3026
        %v3051 = vpack.c.b16 %v3031, %v3029
        %v3052 = vpack.c.b16 %v3032, %v3030
        %v3053 = vpack.c.b16 %v3035, %v3033
        %v3054 = vpack.c.b16 %v3036, %v3034
        %v3055 = vpack.c.b16 %v3039, %v3037
        %v3056 = vpack.c.b16 %v3040, %v3038
        %3073 = vmatprep.subr.bf16.mxu0 %v3042
        %3074 = vmatpush1.bf16.msra.mxu0 %v3041
        %3075 = vmatprep.subr.bf16.mxu0 %v3044
        %3076 = vmatpush1.bf16.msra.mxu0 %v3043
        %3077 = vmatprep.subr.bf16.mxu0 %v3046
        %3078 = vmatpush1.bf16.msra.mxu0 %v3045
        %3079 = vmatprep.subr.bf16.mxu0 %v3048
        %3080 = vmatpush1.bf16.msra.mxu0 %v3047
        %3081 = vmatprep.subr.bf16.mxu0 %v3050
        %3082 = vmatpush1.bf16.msra.mxu0 %v3049
        %3083 = vmatprep.subr.bf16.mxu0 %v3052
        %3084 = vmatpush1.bf16.msra.mxu0 %v3051
        %3085 = vmatprep.subr.bf16.mxu0 %v3054
        %3086 = vmatpush1.bf16.msra.mxu0 %v3053
        %3087 = vmatprep.subr.bf16.mxu0 %v3056
        %3088 = vmatpush1.bf16.msra.mxu0 %v3055
        %3089 = vmatprep.subr.bf16.mxu0 0
        %3090 = vmatpush1.bf16.msra.mxu0 0
        %3091 = vmatprep.subr.bf16.mxu0 0
        %3092 = vmatpush1.bf16.msra.mxu0 0
        %3093 = vmatprep.subr.bf16.mxu0 0
        %3094 = vmatpush1.bf16.msra.mxu0 0
        %3095 = vmatprep.subr.bf16.mxu0 0
        %3096 = vmatpush1.bf16.msra.mxu0 0
        %3097 = vmatprep.subr.bf16.mxu0 0
        %3098 = vmatpush1.bf16.msra.mxu0 0
        %3099 = vmatprep.subr.bf16.mxu0 0
        %3100 = vmatpush1.bf16.msra.mxu0 0
        %3101 = vmatprep.subr.bf16.mxu0 0
        %3102 = vmatpush1.bf16.msra.mxu0 0
        %3103 = vmatprep.subr.bf16.mxu0 0
        %3104 = vmatpush1.bf16.msra.mxu0 0
        %3105 = vmatprep.mubr.bf16.mxu0 0
        %3106 = vmatmul.mubr.bf16.gmra.mrb[0].mxu0 %v2828
        %v3107 = vpop.f32.mrb[0].mxu0
        %v3108 = vadd.f32 %v2985, %v3107
        %v3109 = vpop.f32.mrb[0].mxu0
        %v3110 = vadd.f32 %v2987, %v3109
        %v3111 = vpop.f32.mrb[0].mxu0
        %v3112 = vadd.f32 %v2989, %v3111
        %v3113 = vpop.f32.mrb[0].mxu0
        %v3114 = vadd.f32 %v2991, %v3113
        %3115 = vdwg.mxu0
        %s3116 = scalar_lea.vmem %s3, 256
        %v3117 = vld [vmem:[%s3116] sm:$0xff]
        %v3118 = vld [vmem:[%s3116 + $0x8] sm:$0xff]
        %v3119 = vld [vmem:[%s3116 + $0x10] sm:$0xff]
        %v3120 = vld [vmem:[%s3116 + $0x18] sm:$0xff]
        %v3121 = vld [vmem:[%s3116 + $0x20] sm:$0xff]
        %v3122 = vld [vmem:[%s3116 + $0x28] sm:$0xff]
        %v3123 = vld [vmem:[%s3116 + $0x30] sm:$0xff]
        %v3124 = vld [vmem:[%s3116 + $0x38] sm:$0xff]
        %v3125 = vld [vmem:[%s3116 + $0x40] sm:$0xff]
        %v3126 = vld [vmem:[%s3116 + $0x48] sm:$0xff]
        %v3127 = vld [vmem:[%s3116 + $0x50] sm:$0xff]
        %v3128 = vld [vmem:[%s3116 + $0x58] sm:$0xff]
        %v3129 = vld [vmem:[%s3116 + $0x60] sm:$0xff]
        %v3130 = vld [vmem:[%s3116 + $0x68] sm:$0xff]
        %v3131 = vld [vmem:[%s3116 + $0x70] sm:$0xff]
        %v3132 = vld [vmem:[%s3116 + $0x78] sm:$0xff]
        %v3134 = vrot.slane %v2828, 1
        %v3152 = vunpack.c.l.b16 %v3117
        %v3153 = vunpack.c.h.b16 %v3117
        %v3154 = vunpack.c.l.b16 %v3118
        %v3155 = vunpack.c.h.b16 %v3118
        %v3156 = vunpack.c.l.b16 %v3119
        %v3157 = vunpack.c.h.b16 %v3119
        %v3158 = vunpack.c.l.b16 %v3120
        %v3159 = vunpack.c.h.b16 %v3120
        %v3160 = vunpack.c.l.b16 %v3121
        %v3161 = vunpack.c.h.b16 %v3121
        %v3162 = vunpack.c.l.b16 %v3122
        %v3163 = vunpack.c.h.b16 %v3122
        %v3164 = vunpack.c.l.b16 %v3123
        %v3165 = vunpack.c.h.b16 %v3123
        %v3166 = vunpack.c.l.b16 %v3124
        %v3167 = vunpack.c.h.b16 %v3124
        %v3168 = vunpack.c.l.b16 %v3125
        %v3169 = vunpack.c.h.b16 %v3125
        %v3170 = vunpack.c.l.b16 %v3126
        %v3171 = vunpack.c.h.b16 %v3126
        %v3172 = vunpack.c.l.b16 %v3127
        %v3173 = vunpack.c.h.b16 %v3127
        %v3174 = vunpack.c.l.b16 %v3128
        %v3175 = vunpack.c.h.b16 %v3128
        %v3176 = vunpack.c.l.b16 %v3129
        %v3177 = vunpack.c.h.b16 %v3129
        %v3178 = vunpack.c.l.b16 %v3130
        %v3179 = vunpack.c.h.b16 %v3130
        %v3180 = vunpack.c.l.b16 %v3131
        %v3181 = vunpack.c.h.b16 %v3131
        %v3182 = vunpack.c.l.b16 %v3132
        %v3183 = vunpack.c.h.b16 %v3132
        %v3184 = vpack.c.b16 %v3154, %v3152
        %v3185 = vpack.c.b16 %v3155, %v3153
        %v3186 = vpack.c.b16 %v3158, %v3156
        %v3187 = vpack.c.b16 %v3159, %v3157
        %v3188 = vpack.c.b16 %v3162, %v3160
        %v3189 = vpack.c.b16 %v3163, %v3161
        %v3190 = vpack.c.b16 %v3166, %v3164
        %v3191 = vpack.c.b16 %v3167, %v3165
        %v3192 = vpack.c.b16 %v3170, %v3168
        %v3193 = vpack.c.b16 %v3171, %v3169
        %v3194 = vpack.c.b16 %v3174, %v3172
        %v3195 = vpack.c.b16 %v3175, %v3173
        %v3196 = vpack.c.b16 %v3178, %v3176
        %v3197 = vpack.c.b16 %v3179, %v3177
        %v3198 = vpack.c.b16 %v3182, %v3180
        %v3199 = vpack.c.b16 %v3183, %v3181
        %3216 = vmatprep.subr.bf16.mxu0 %v3185
        %3217 = vmatpush1.bf16.msra.mxu0 %v3184
        %3218 = vmatprep.subr.bf16.mxu0 %v3187
        %3219 = vmatpush1.bf16.msra.mxu0 %v3186
        %3220 = vmatprep.subr.bf16.mxu0 %v3189
        %3221 = vmatpush1.bf16.msra.mxu0 %v3188
        %3222 = vmatprep.subr.bf16.mxu0 %v3191
        %3223 = vmatpush1.bf16.msra.mxu0 %v3190
        %3224 = vmatprep.subr.bf16.mxu0 %v3193
        %3225 = vmatpush1.bf16.msra.mxu0 %v3192
        %3226 = vmatprep.subr.bf16.mxu0 %v3195
        %3227 = vmatpush1.bf16.msra.mxu0 %v3194
        %3228 = vmatprep.subr.bf16.mxu0 %v3197
        %3229 = vmatpush1.bf16.msra.mxu0 %v3196
        %3230 = vmatprep.subr.bf16.mxu0 %v3199
        %3231 = vmatpush1.bf16.msra.mxu0 %v3198
        %3232 = vmatprep.subr.bf16.mxu0 0
        %3233 = vmatpush1.bf16.msra.mxu0 0
        %3234 = vmatprep.subr.bf16.mxu0 0
        %3235 = vmatpush1.bf16.msra.mxu0 0
        %3236 = vmatprep.subr.bf16.mxu0 0
        %3237 = vmatpush1.bf16.msra.mxu0 0
        %3238 = vmatprep.subr.bf16.mxu0 0
        %3239 = vmatpush1.bf16.msra.mxu0 0
        %3240 = vmatprep.subr.bf16.mxu0 0
        %3241 = vmatpush1.bf16.msra.mxu0 0
        %3242 = vmatprep.subr.bf16.mxu0 0
        %3243 = vmatpush1.bf16.msra.mxu0 0
        %3244 = vmatprep.subr.bf16.mxu0 0
        %3245 = vmatpush1.bf16.msra.mxu0 0
        %3246 = vmatprep.subr.bf16.mxu0 0
        %3247 = vmatpush1.bf16.msra.mxu0 0
        %3248 = vmatprep.mubr.bf16.mxu0 0
        %3249 = vmatmul.mubr.bf16.gmra.mrb[0].mxu0 %v3134
        %v3250 = vpop.f32.mrb[0].mxu0
        %v3251 = vadd.f32 0.0, %v3250
        %v3252 = vpop.f32.mrb[0].mxu0
        %v3253 = vadd.f32 0.0, %v3252
        %v3254 = vpop.f32.mrb[0].mxu0
        %v3255 = vadd.f32 0.0, %v3254
        %v3256 = vpop.f32.mrb[0].mxu0
        %v3257 = vadd.f32 0.0, %v3256
        %3258 = vdwg.mxu0
        %v3259 = vadd.f32 %v3108, %v3251
        %v3260 = vadd.f32 %v3110, %v3253
        %v3261 = vadd.f32 %v3112, %v3255
        %v3262 = vadd.f32 %v3114, %v3257
        %v3263 = vmax.f32 %v3259, %v3260
        %v3264 = vmax.f32 %v3261, %v3262
        %v3265 = vadd.f32 %v2802, %v2822
        %v3266 = vadd.f32 %v2810, %v2822
        %v3267 = vmax.f32 %v3265, 0.0
        %v3268 = vmax.f32 %v3266, 0.0
        %v3269 = vpack.c.bf16 %v3268, %v3267
        %v3271 = vshrl.u32 %v3269, 16
        %v3273 = vshll.u32 %v3269, 16
        %v3275 = vrot.slane %v3273, 1
        %v3276 = vor.u32 %v3271, %v3275
        %3278 = vmatprep.subr.bf16.mxu0 %v2919
        %3279 = vmatpush1.bf16.msra.mxu0 %v2918
        %3280 = vmatprep.subr.bf16.mxu0 %v2921
        %3281 = vmatpush1.bf16.msra.mxu0 %v2920
        %3282 = vmatprep.subr.bf16.mxu0 %v2923
        %3283 = vmatpush1.bf16.msra.mxu0 %v2922
        %3284 = vmatprep.subr.bf16.mxu0 %v2925
        %3285 = vmatpush1.bf16.msra.mxu0 %v2924
        %3286 = vmatprep.subr.bf16.mxu0 %v2927
        %3287 = vmatpush1.bf16.msra.mxu0 %v2926
        %3288 = vmatprep.subr.bf16.mxu0 %v2929
        %3289 = vmatpush1.bf16.msra.mxu0 %v2928
        %3290 = vmatprep.subr.bf16.mxu0 %v2931
        %3291 = vmatpush1.bf16.msra.mxu0 %v2930
        %3292 = vmatprep.subr.bf16.mxu0 %v2933
        %3293 = vmatpush1.bf16.msra.mxu0 %v2932
        %3294 = vmatprep.subr.bf16.mxu0 0
        %3295 = vmatpush1.bf16.msra.mxu0 0
        %3296 = vmatprep.subr.bf16.mxu0 0
        %3297 = vmatpush1.bf16.msra.mxu0 0
        %3298 = vmatprep.subr.bf16.mxu0 0
        %3299 = vmatpush1.bf16.msra.mxu0 0
        %3300 = vmatprep.subr.bf16.mxu0 0
        %3301 = vmatpush1.bf16.msra.mxu0 0
        %3302 = vmatprep.subr.bf16.mxu0 0
        %3303 = vmatpush1.bf16.msra.mxu0 0
        %3304 = vmatprep.subr.bf16.mxu0 0
        %3305 = vmatpush1.bf16.msra.mxu0 0
        %3306 = vmatprep.subr.bf16.mxu0 0
        %3307 = vmatpush1.bf16.msra.mxu0 0
        %3308 = vmatprep.subr.bf16.mxu0 0
        %3309 = vmatpush1.bf16.msra.mxu0 0
        %3310 = vmatprep.mubr.bf16.mxu0 0
        %3311 = vmatmul.mubr.bf16.gmra.mrb[0].mxu0 %v3276
        %v3312 = vpop.f32.mrb[0].mxu0
        %v3313 = vadd.f32 0.0, %v3312
        %v3314 = vpop.f32.mrb[0].mxu0
        %v3315 = vadd.f32 0.0, %v3314
        %v3316 = vpop.f32.mrb[0].mxu0
        %v3317 = vadd.f32 0.0, %v3316
        %v3318 = vpop.f32.mrb[0].mxu0
        %v3319 = vadd.f32 0.0, %v3318
        %3320 = vdwg.mxu0
        %3321 = vmatprep.subr.bf16.mxu0 %v3042
        %3322 = vmatpush1.bf16.msra.mxu0 %v3041
        %3323 = vmatprep.subr.bf16.mxu0 %v3044
        %3324 = vmatpush1.bf16.msra.mxu0 %v3043
        %3325 = vmatprep.subr.bf16.mxu0 %v3046
        %3326 = vmatpush1.bf16.msra.mxu0 %v3045
        %3327 = vmatprep.subr.bf16.mxu0 %v3048
        %3328 = vmatpush1.bf16.msra.mxu0 %v3047
        %3329 = vmatprep.subr.bf16.mxu0 %v3050
        %3330 = vmatpush1.bf16.msra.mxu0 %v3049
        %3331 = vmatprep.subr.bf16.mxu0 %v3052
        %3332 = vmatpush1.bf16.msra.mxu0 %v3051
        %3333 = vmatprep.subr.bf16.mxu0 %v3054
        %3334 = vmatpush1.bf16.msra.mxu0 %v3053
        %3335 = vmatprep.subr.bf16.mxu0 %v3056
        %3336 = vmatpush1.bf16.msra.mxu0 %v3055
        %3337 = vmatprep.subr.bf16.mxu0 0
        %3338 = vmatpush1.bf16.msra.mxu0 0
        %3339 = vmatprep.subr.bf16.mxu0 0
        %3340 = vmatpush1.bf16.msra.mxu0 0
        %3341 = vmatprep.subr.bf16.mxu0 0
        %3342 = vmatpush1.bf16.msra.mxu0 0
        %3343 = vmatprep.subr.bf16.mxu0 0
        %3344 = vmatpush1.bf16.msra.mxu0 0
        %3345 = vmatprep.subr.bf16.mxu0 0
        %3346 = vmatpush1.bf16.msra.mxu0 0
        %3347 = vmatprep.subr.bf16.mxu0 0
        %3348 = vmatpush1.bf16.msra.mxu0 0
        %3349 = vmatprep.subr.bf16.mxu0 0
        %3350 = vmatpush1.bf16.msra.mxu0 0
        %3351 = vmatprep.subr.bf16.mxu0 0
        %3352 = vmatpush1.bf16.msra.mxu0 0
        %3353 = vmatprep.mubr.bf16.mxu0 0
        %3354 = vmatmul.mubr.bf16.gmra.mrb[0].mxu0 %v3269
        %v3355 = vpop.f32.mrb[0].mxu0
        %v3356 = vadd.f32 %v3313, %v3355
        %v3357 = vpop.f32.mrb[0].mxu0
        %v3358 = vadd.f32 %v3315, %v3357
        %v3359 = vpop.f32.mrb[0].mxu0
        %v3360 = vadd.f32 %v3317, %v3359
        %v3361 = vpop.f32.mrb[0].mxu0
        %v3362 = vadd.f32 %v3319, %v3361
        %3363 = vdwg.mxu0
        %v3365 = vrot.slane %v3269, 1
        %3367 = vmatprep.subr.bf16.mxu0 %v3185
        %3368 = vmatpush1.bf16.msra.mxu0 %v3184
        %3369 = vmatprep.subr.bf16.mxu0 %v3187
        %3370 = vmatpush1.bf16.msra.mxu0 %v3186
        %3371 = vmatprep.subr.bf16.mxu0 %v3189
        %3372 = vmatpush1.bf16.msra.mxu0 %v3188
        %3373 = vmatprep.subr.bf16.mxu0 %v3191
        %3374 = vmatpush1.bf16.msra.mxu0 %v3190
        %3375 = vmatprep.subr.bf16.mxu0 %v3193
        %3376 = vmatpush1.bf16.msra.mxu0 %v3192
        %3377 = vmatprep.subr.bf16.mxu0 %v3195
        %3378 = vmatpush1.bf16.msra.mxu0 %v3194
        %3379 = vmatprep.subr.bf16.mxu0 %v3197
        %3380 = vmatpush1.bf16.msra.mxu0 %v3196
        %3381 = vmatprep.subr.bf16.mxu0 %v3199
        %3382 = vmatpush1.bf16.msra.mxu0 %v3198
        %3383 = vmatprep.subr.bf16.mxu0 0
        %3384 = vmatpush1.bf16.msra.mxu0 0
        %3385 = vmatprep.subr.bf16.mxu0 0
        %3386 = vmatpush1.bf16.msra.mxu0 0
        %3387 = vmatprep.subr.bf16.mxu0 0
        %3388 = vmatpush1.bf16.msra.mxu0 0
        %3389 = vmatprep.subr.bf16.mxu0 0
        %3390 = vmatpush1.bf16.msra.mxu0 0
        %3391 = vmatprep.subr.bf16.mxu0 0
        %3392 = vmatpush1.bf16.msra.mxu0 0
        %3393 = vmatprep.subr.bf16.mxu0 0
        %3394 = vmatpush1.bf16.msra.mxu0 0
        %3395 = vmatprep.subr.bf16.mxu0 0
        %3396 = vmatpush1.bf16.msra.mxu0 0
        %3397 = vmatprep.subr.bf16.mxu0 0
        %3398 = vmatpush1.bf16.msra.mxu0 0
        %3399 = vmatprep.mubr.bf16.mxu0 0
        %3400 = vmatmul.mubr.bf16.gmra.mrb[0].mxu0 %v3365
        %v3401 = vpop.f32.mrb[0].mxu0
        %v3402 = vadd.f32 0.0, %v3401
        %v3403 = vpop.f32.mrb[0].mxu0
        %v3404 = vadd.f32 0.0, %v3403
        %v3405 = vpop.f32.mrb[0].mxu0
        %v3406 = vadd.f32 0.0, %v3405
        %v3407 = vpop.f32.mrb[0].mxu0
        %v3408 = vadd.f32 0.0, %v3407
        %3409 = vdwg.mxu0
        %v3410 = vadd.f32 %v3356, %v3402
        %v3411 = vadd.f32 %v3358, %v3404
        %v3412 = vadd.f32 %v3360, %v3406
        %v3413 = vadd.f32 %v3362, %v3408
        %v3414 = vmax.f32 %v3410, %v3411
        %v3415 = vmax.f32 %v3412, %v3413
        %v3416 = vadd.f32 %v2803, %v2822
        %v3417 = vadd.f32 %v2811, %v2822
        %v3418 = vmax.f32 %v3416, 0.0
        %v3419 = vmax.f32 %v3417, 0.0
        %v3420 = vpack.c.bf16 %v3419, %v3418
        %v3422 = vshrl.u32 %v3420, 16
        %v3424 = vshll.u32 %v3420, 16
        %v3426 = vrot.slane %v3424, 1
        %v3427 = vor.u32 %v3422, %v3426
        %3429 = vmatprep.subr.bf16.mxu0 %v2919
        %3430 = vmatpush1.bf16.msra.mxu0 %v2918
        %3431 = vmatprep.subr.bf16.mxu0 %v2921
        %3432 = vmatpush1.bf16.msra.mxu0 %v2920
        %3433 = vmatprep.subr.bf16.mxu0 %v2923
        %3434 = vmatpush1.bf16.msra.mxu0 %v2922
        %3435 = vmatprep.subr.bf16.mxu0 %v2925
        %3436 = vmatpush1.bf16.msra.mxu0 %v2924
        %3437 = vmatprep.subr.bf16.mxu0 %v2927
        %3438 = vmatpush1.bf16.msra.mxu0 %v2926
        %3439 = vmatprep.subr.bf16.mxu0 %v2929
        %3440 = vmatpush1.bf16.msra.mxu0 %v2928
        %3441 = vmatprep.subr.bf16.mxu0 %v2931
        %3442 = vmatpush1.bf16.msra.mxu0 %v2930
        %3443 = vmatprep.subr.bf16.mxu0 %v2933
        %3444 = vmatpush1.bf16.msra.mxu0 %v2932
        %3445 = vmatprep.subr.bf16.mxu0 0
        %3446 = vmatpush1.bf16.msra.mxu0 0
        %3447 = vmatprep.subr.bf16.mxu0 0
        %3448 = vmatpush1.bf16.msra.mxu0 0
        %3449 = vmatprep.subr.bf16.mxu0 0
        %3450 = vmatpush1.bf16.msra.mxu0 0
        %3451 = vmatprep.subr.bf16.mxu0 0
        %3452 = vmatpush1.bf16.msra.mxu0 0
        %3453 = vmatprep.subr.bf16.mxu0 0
        %3454 = vmatpush1.bf16.msra.mxu0 0
        %3455 = vmatprep.subr.bf16.mxu0 0
        %3456 = vmatpush1.bf16.msra.mxu0 0
        %3457 = vmatprep.subr.bf16.mxu0 0
        %3458 = vmatpush1.bf16.msra.mxu0 0
        %3459 = vmatprep.subr.bf16.mxu0 0
        %3460 = vmatpush1.bf16.msra.mxu0 0
        %3461 = vmatprep.mubr.bf16.mxu0 0
        %3462 = vmatmul.mubr.bf16.gmra.mrb[0].mxu0 %v3427
        %v3463 = vpop.f32.mrb[0].mxu0
        %v3464 = vadd.f32 0.0, %v3463
        %v3465 = vpop.f32.mrb[0].mxu0
        %v3466 = vadd.f32 0.0, %v3465
        %v3467 = vpop.f32.mrb[0].mxu0
        %v3468 = vadd.f32 0.0, %v3467
        %v3469 = vpop.f32.mrb[0].mxu0
        %v3470 = vadd.f32 0.0, %v3469
        %3471 = vdwg.mxu0
        %3472 = vmatprep.subr.bf16.mxu0 %v3042
        %3473 = vmatpush1.bf16.msra.mxu0 %v3041
        %3474 = vmatprep.subr.bf16.mxu0 %v3044
        %3475 = vmatpush1.bf16.msra.mxu0 %v3043
        %3476 = vmatprep.subr.bf16.mxu0 %v3046
        %3477 = vmatpush1.bf16.msra.mxu0 %v3045
        %3478 = vmatprep.subr.bf16.mxu0 %v3048
        %3479 = vmatpush1.bf16.msra.mxu0 %v3047
        %3480 = vmatprep.subr.bf16.mxu0 %v3050
        %3481 = vmatpush1.bf16.msra.mxu0 %v3049
        %3482 = vmatprep.subr.bf16.mxu0 %v3052
        %3483 = vmatpush1.bf16.msra.mxu0 %v3051
        %3484 = vmatprep.subr.bf16.mxu0 %v3054
        %3485 = vmatpush1.bf16.msra.mxu0 %v3053
        %3486 = vmatprep.subr.bf16.mxu0 %v3056
        %3487 = vmatpush1.bf16.msra.mxu0 %v3055
        %3488 = vmatprep.subr.bf16.mxu0 0
        %3489 = vmatpush1.bf16.msra.mxu0 0
        %3490 = vmatprep.subr.bf16.mxu0 0
        %3491 = vmatpush1.bf16.msra.mxu0 0
        %3492 = vmatprep.subr.bf16.mxu0 0
        %3493 = vmatpush1.bf16.msra.mxu0 0
        %3494 = vmatprep.subr.bf16.mxu0 0
        %3495 = vmatpush1.bf16.msra.mxu0 0
        %3496 = vmatprep.subr.bf16.mxu0 0
        %3497 = vmatpush1.bf16.msra.mxu0 0
        %3498 = vmatprep.subr.bf16.mxu0 0
        %3499 = vmatpush1.bf16.msra.mxu0 0
        %3500 = vmatprep.subr.bf16.mxu0 0
        %3501 = vmatpush1.bf16.msra.mxu0 0
        %3502 = vmatprep.subr.bf16.mxu0 0
        %3503 = vmatpush1.bf16.msra.mxu0 0
        %3504 = vmatprep.mubr.bf16.mxu0 0
        %3505 = vmatmul.mubr.bf16.gmra.mrb[0].mxu0 %v3420
        %v3506 = vpop.f32.mrb[0].mxu0
        %v3507 = vadd.f32 %v3464, %v3506
        %v3508 = vpop.f32.mrb[0].mxu0
        %v3509 = vadd.f32 %v3466, %v3508
        %v3510 = vpop.f32.mrb[0].mxu0
        %v3511 = vadd.f32 %v3468, %v3510
        %v3512 = vpop.f32.mrb[0].mxu0
        %v3513 = vadd.f32 %v3470, %v3512
        %3514 = vdwg.mxu0
        %v3516 = vrot.slane %v3420, 1
        %3518 = vmatprep.subr.bf16.mxu0 %v3185
        %3519 = vmatpush1.bf16.msra.mxu0 %v3184
        %3520 = vmatprep.subr.bf16.mxu0 %v3187
        %3521 = vmatpush1.bf16.msra.mxu0 %v3186
        %3522 = vmatprep.subr.bf16.mxu0 %v3189
        %3523 = vmatpush1.bf16.msra.mxu0 %v3188
        %3524 = vmatprep.subr.bf16.mxu0 %v3191
        %3525 = vmatpush1.bf16.msra.mxu0 %v3190
        %3526 = vmatprep.subr.bf16.mxu0 %v3193
        %3527 = vmatpush1.bf16.msra.mxu0 %v3192
        %3528 = vmatprep.subr.bf16.mxu0 %v3195
        %3529 = vmatpush1.bf16.msra.mxu0 %v3194
        %3530 = vmatprep.subr.bf16.mxu0 %v3197
        %3531 = vmatpush1.bf16.msra.mxu0 %v3196
        %3532 = vmatprep.subr.bf16.mxu0 %v3199
        %3533 = vmatpush1.bf16.msra.mxu0 %v3198
        %3534 = vmatprep.subr.bf16.mxu0 0
        %3535 = vmatpush1.bf16.msra.mxu0 0
        %3536 = vmatprep.subr.bf16.mxu0 0
        %3537 = vmatpush1.bf16.msra.mxu0 0
        %3538 = vmatprep.subr.bf16.mxu0 0
        %3539 = vmatpush1.bf16.msra.mxu0 0
        %3540 = vmatprep.subr.bf16.mxu0 0
        %3541 = vmatpush1.bf16.msra.mxu0 0
        %3542 = vmatprep.subr.bf16.mxu0 0
        %3543 = vmatpush1.bf16.msra.mxu0 0
        %3544 = vmatprep.subr.bf16.mxu0 0
        %3545 = vmatpush1.bf16.msra.mxu0 0
        %3546 = vmatprep.subr.bf16.mxu0 0
        %3547 = vmatpush1.bf16.msra.mxu0 0
        %3548 = vmatprep.subr.bf16.mxu0 0
        %3549 = vmatpush1.bf16.msra.mxu0 0
        %3550 = vmatprep.mubr.bf16.mxu0 0
        %3551 = vmatmul.mubr.bf16.gmra.mrb[0].mxu0 %v3516
        %v3552 = vpop.f32.mrb[0].mxu0
        %v3553 = vadd.f32 0.0, %v3552
        %v3554 = vpop.f32.mrb[0].mxu0
        %v3555 = vadd.f32 0.0, %v3554
        %v3556 = vpop.f32.mrb[0].mxu0
        %v3557 = vadd.f32 0.0, %v3556
        %v3558 = vpop.f32.mrb[0].mxu0
        %v3559 = vadd.f32 0.0, %v3558
        %3560 = vdwg.mxu0
        %v3561 = vadd.f32 %v3507, %v3553
        %v3562 = vadd.f32 %v3509, %v3555
        %v3563 = vadd.f32 %v3511, %v3557
        %v3564 = vadd.f32 %v3513, %v3559
        %v3565 = vmax.f32 %v3561, %v3562
        %v3566 = vmax.f32 %v3563, %v3564
        %v3567 = vadd.f32 %v2804, %v2822
        %v3568 = vadd.f32 %v2812, %v2822
        %v3569 = vmax.f32 %v3567, 0.0
        %v3570 = vmax.f32 %v3568, 0.0
        %v3571 = vpack.c.bf16 %v3570, %v3569
        %v3573 = vshrl.u32 %v3571, 16
        %v3575 = vshll.u32 %v3571, 16
        %v3577 = vrot.slane %v3575, 1
        %v3578 = vor.u32 %v3573, %v3577
        %3580 = vmatprep.subr.bf16.mxu0 %v2919
        %3581 = vmatpush1.bf16.msra.mxu0 %v2918
        %3582 = vmatprep.subr.bf16.mxu0 %v2921
        %3583 = vmatpush1.bf16.msra.mxu0 %v2920
        %3584 = vmatprep.subr.bf16.mxu0 %v2923
        %3585 = vmatpush1.bf16.msra.mxu0 %v2922
        %3586 = vmatprep.subr.bf16.mxu0 %v2925
        %3587 = vmatpush1.bf16.msra.mxu0 %v2924
        %3588 = vmatprep.subr.bf16.mxu0 %v2927
        %3589 = vmatpush1.bf16.msra.mxu0 %v2926
        %3590 = vmatprep.subr.bf16.mxu0 %v2929
        %3591 = vmatpush1.bf16.msra.mxu0 %v2928
        %3592 = vmatprep.subr.bf16.mxu0 %v2931
        %3593 = vmatpush1.bf16.msra.mxu0 %v2930
        %3594 = vmatprep.subr.bf16.mxu0 %v2933
        %3595 = vmatpush1.bf16.msra.mxu0 %v2932
        %3596 = vmatprep.subr.bf16.mxu0 0
        %3597 = vmatpush1.bf16.msra.mxu0 0
        %3598 = vmatprep.subr.bf16.mxu0 0
        %3599 = vmatpush1.bf16.msra.mxu0 0
        %3600 = vmatprep.subr.bf16.mxu0 0
        %3601 = vmatpush1.bf16.msra.mxu0 0
        %3602 = vmatprep.subr.bf16.mxu0 0
        %3603 = vmatpush1.bf16.msra.mxu0 0
        %3604 = vmatprep.subr.bf16.mxu0 0
        %3605 = vmatpush1.bf16.msra.mxu0 0
        %3606 = vmatprep.subr.bf16.mxu0 0
        %3607 = vmatpush1.bf16.msra.mxu0 0
        %3608 = vmatprep.subr.bf16.mxu0 0
        %3609 = vmatpush1.bf16.msra.mxu0 0
        %3610 = vmatprep.subr.bf16.mxu0 0
        %3611 = vmatpush1.bf16.msra.mxu0 0
        %3612 = vmatprep.mubr.bf16.mxu0 0
        %3613 = vmatmul.mubr.bf16.gmra.mrb[0].mxu0 %v3578
        %v3614 = vpop.f32.mrb[0].mxu0
        %v3615 = vadd.f32 0.0, %v3614
        %v3616 = vpop.f32.mrb[0].mxu0
        %v3617 = vadd.f32 0.0, %v3616
        %v3618 = vpop.f32.mrb[0].mxu0
        %v3619 = vadd.f32 0.0, %v3618
        %v3620 = vpop.f32.mrb[0].mxu0
        %v3621 = vadd.f32 0.0, %v3620
        %3622 = vdwg.mxu0
        %3623 = vmatprep.subr.bf16.mxu0 %v3042
        %3624 = vmatpush1.bf16.msra.mxu0 %v3041
        %3625 = vmatprep.subr.bf16.mxu0 %v3044
        %3626 = vmatpush1.bf16.msra.mxu0 %v3043
        %3627 = vmatprep.subr.bf16.mxu0 %v3046
        %3628 = vmatpush1.bf16.msra.mxu0 %v3045
        %3629 = vmatprep.subr.bf16.mxu0 %v3048
        %3630 = vmatpush1.bf16.msra.mxu0 %v3047
        %3631 = vmatprep.subr.bf16.mxu0 %v3050
        %3632 = vmatpush1.bf16.msra.mxu0 %v3049
        %3633 = vmatprep.subr.bf16.mxu0 %v3052
        %3634 = vmatpush1.bf16.msra.mxu0 %v3051
        %3635 = vmatprep.subr.bf16.mxu0 %v3054
        %3636 = vmatpush1.bf16.msra.mxu0 %v3053
        %3637 = vmatprep.subr.bf16.mxu0 %v3056
        %3638 = vmatpush1.bf16.msra.mxu0 %v3055
        %3639 = vmatprep.subr.bf16.mxu0 0
        %3640 = vmatpush1.bf16.msra.mxu0 0
        %3641 = vmatprep.subr.bf16.mxu0 0
        %3642 = vmatpush1.bf16.msra.mxu0 0
        %3643 = vmatprep.subr.bf16.mxu0 0
        %3644 = vmatpush1.bf16.msra.mxu0 0
        %3645 = vmatprep.subr.bf16.mxu0 0
        %3646 = vmatpush1.bf16.msra.mxu0 0
        %3647 = vmatprep.subr.bf16.mxu0 0
        %3648 = vmatpush1.bf16.msra.mxu0 0
        %3649 = vmatprep.subr.bf16.mxu0 0
        %3650 = vmatpush1.bf16.msra.mxu0 0
        %3651 = vmatprep.subr.bf16.mxu0 0
        %3652 = vmatpush1.bf16.msra.mxu0 0
        %3653 = vmatprep.subr.bf16.mxu0 0
        %3654 = vmatpush1.bf16.msra.mxu0 0
        %3655 = vmatprep.mubr.bf16.mxu0 0
        %3656 = vmatmul.mubr.bf16.gmra.mrb[0].mxu0 %v3571
        %v3657 = vpop.f32.mrb[0].mxu0
        %v3658 = vadd.f32 %v3615, %v3657
        %v3659 = vpop.f32.mrb[0].mxu0
        %v3660 = vadd.f32 %v3617, %v3659
        %v3661 = vpop.f32.mrb[0].mxu0
        %v3662 = vadd.f32 %v3619, %v3661
        %v3663 = vpop.f32.mrb[0].mxu0
        %v3664 = vadd.f32 %v3621, %v3663
        %3665 = vdwg.mxu0
        %v3667 = vrot.slane %v3571, 1
        %3669 = vmatprep.subr.bf16.mxu0 %v3185
        %3670 = vmatpush1.bf16.msra.mxu0 %v3184
        %3671 = vmatprep.subr.bf16.mxu0 %v3187
        %3672 = vmatpush1.bf16.msra.mxu0 %v3186
        %3673 = vmatprep.subr.bf16.mxu0 %v3189
        %3674 = vmatpush1.bf16.msra.mxu0 %v3188
        %3675 = vmatprep.subr.bf16.mxu0 %v3191
        %3676 = vmatpush1.bf16.msra.mxu0 %v3190
        %3677 = vmatprep.subr.bf16.mxu0 %v3193
        %3678 = vmatpush1.bf16.msra.mxu0 %v3192
        %3679 = vmatprep.subr.bf16.mxu0 %v3195
        %3680 = vmatpush1.bf16.msra.mxu0 %v3194
        %3681 = vmatprep.subr.bf16.mxu0 %v3197
        %3682 = vmatpush1.bf16.msra.mxu0 %v3196
        %3683 = vmatprep.subr.bf16.mxu0 %v3199
        %3684 = vmatpush1.bf16.msra.mxu0 %v3198
        %3685 = vmatprep.subr.bf16.mxu0 0
        %3686 = vmatpush1.bf16.msra.mxu0 0
        %3687 = vmatprep.subr.bf16.mxu0 0
        %3688 = vmatpush1.bf16.msra.mxu0 0
        %3689 = vmatprep.subr.bf16.mxu0 0
        %3690 = vmatpush1.bf16.msra.mxu0 0
        %3691 = vmatprep.subr.bf16.mxu0 0
        %3692 = vmatpush1.bf16.msra.mxu0 0
        %3693 = vmatprep.subr.bf16.mxu0 0
        %3694 = vmatpush1.bf16.msra.mxu0 0
        %3695 = vmatprep.subr.bf16.mxu0 0
        %3696 = vmatpush1.bf16.msra.mxu0 0
        %3697 = vmatprep.subr.bf16.mxu0 0
        %3698 = vmatpush1.bf16.msra.mxu0 0
        %3699 = vmatprep.subr.bf16.mxu0 0
        %3700 = vmatpush1.bf16.msra.mxu0 0
        %3701 = vmatprep.mubr.bf16.mxu0 0
        %3702 = vmatmul.mubr.bf16.gmra.mrb[0].mxu0 %v3667
        %v3703 = vpop.f32.mrb[0].mxu0
        %v3704 = vadd.f32 0.0, %v3703
        %v3705 = vpop.f32.mrb[0].mxu0
        %v3706 = vadd.f32 0.0, %v3705
        %v3707 = vpop.f32.mrb[0].mxu0
        %v3708 = vadd.f32 0.0, %v3707
        %v3709 = vpop.f32.mrb[0].mxu0
        %v3710 = vadd.f32 0.0, %v3709
        %3711 = vdwg.mxu0
        %v3712 = vadd.f32 %v3658, %v3704
        %v3713 = vadd.f32 %v3660, %v3706
        %v3714 = vadd.f32 %v3662, %v3708
        %v3715 = vadd.f32 %v3664, %v3710
        %v3716 = vmax.f32 %v3712, %v3713
        %v3717 = vmax.f32 %v3714, %v3715
        %v3718 = vadd.f32 %v2805, %v2822
        %v3719 = vadd.f32 %v2813, %v2822
        %v3720 = vmax.f32 %v3718, 0.0
        %v3721 = vmax.f32 %v3719, 0.0
        %v3722 = vpack.c.bf16 %v3721, %v3720
        %v3724 = vshrl.u32 %v3722, 16
        %v3726 = vshll.u32 %v3722, 16
        %v3728 = vrot.slane %v3726, 1
        %v3729 = vor.u32 %v3724, %v3728
        %3731 = vmatprep.subr.bf16.mxu0 %v2919
        %3732 = vmatpush1.bf16.msra.mxu0 %v2918
        %3733 = vmatprep.subr.bf16.mxu0 %v2921
        %3734 = vmatpush1.bf16.msra.mxu0 %v2920
        %3735 = vmatprep.subr.bf16.mxu0 %v2923
        %3736 = vmatpush1.bf16.msra.mxu0 %v2922
        %3737 = vmatprep.subr.bf16.mxu0 %v2925
        %3738 = vmatpush1.bf16.msra.mxu0 %v2924
        %3739 = vmatprep.subr.bf16.mxu0 %v2927
        %3740 = vmatpush1.bf16.msra.mxu0 %v2926
        %3741 = vmatprep.subr.bf16.mxu0 %v2929
        %3742 = vmatpush1.bf16.msra.mxu0 %v2928
        %3743 = vmatprep.subr.bf16.mxu0 %v2931
        %3744 = vmatpush1.bf16.msra.mxu0 %v2930
        %3745 = vmatprep.subr.bf16.mxu0 %v2933
        %3746 = vmatpush1.bf16.msra.mxu0 %v2932
        %3747 = vmatprep.subr.bf16.mxu0 0
        %3748 = vmatpush1.bf16.msra.mxu0 0
        %3749 = vmatprep.subr.bf16.mxu0 0
        %3750 = vmatpush1.bf16.msra.mxu0 0
        %3751 = vmatprep.subr.bf16.mxu0 0
        %3752 = vmatpush1.bf16.msra.mxu0 0
        %3753 = vmatprep.subr.bf16.mxu0 0
        %3754 = vmatpush1.bf16.msra.mxu0 0
        %3755 = vmatprep.subr.bf16.mxu0 0
        %3756 = vmatpush1.bf16.msra.mxu0 0
        %3757 = vmatprep.subr.bf16.mxu0 0
        %3758 = vmatpush1.bf16.msra.mxu0 0
        %3759 = vmatprep.subr.bf16.mxu0 0
        %3760 = vmatpush1.bf16.msra.mxu0 0
        %3761 = vmatprep.subr.bf16.mxu0 0
        %3762 = vmatpush1.bf16.msra.mxu0 0
        %3763 = vmatprep.mubr.bf16.mxu0 0
        %3764 = vmatmul.mubr.bf16.gmra.mrb[0].mxu0 %v3729
        %v3765 = vpop.f32.mrb[0].mxu0
        %v3766 = vadd.f32 0.0, %v3765
        %v3767 = vpop.f32.mrb[0].mxu0
        %v3768 = vadd.f32 0.0, %v3767
        %v3769 = vpop.f32.mrb[0].mxu0
        %v3770 = vadd.f32 0.0, %v3769
        %v3771 = vpop.f32.mrb[0].mxu0
        %v3772 = vadd.f32 0.0, %v3771
        %3773 = vdwg.mxu0
        %3774 = vmatprep.subr.bf16.mxu0 %v3042
        %3775 = vmatpush1.bf16.msra.mxu0 %v3041
        %3776 = vmatprep.subr.bf16.mxu0 %v3044
        %3777 = vmatpush1.bf16.msra.mxu0 %v3043
        %3778 = vmatprep.subr.bf16.mxu0 %v3046
        %3779 = vmatpush1.bf16.msra.mxu0 %v3045
        %3780 = vmatprep.subr.bf16.mxu0 %v3048
        %3781 = vmatpush1.bf16.msra.mxu0 %v3047
        %3782 = vmatprep.subr.bf16.mxu0 %v3050
        %3783 = vmatpush1.bf16.msra.mxu0 %v3049
        %3784 = vmatprep.subr.bf16.mxu0 %v3052
        %3785 = vmatpush1.bf16.msra.mxu0 %v3051
        %3786 = vmatprep.subr.bf16.mxu0 %v3054
        %3787 = vmatpush1.bf16.msra.mxu0 %v3053
        %3788 = vmatprep.subr.bf16.mxu0 %v3056
        %3789 = vmatpush1.bf16.msra.mxu0 %v3055
        %3790 = vmatprep.subr.bf16.mxu0 0
        %3791 = vmatpush1.bf16.msra.mxu0 0
        %3792 = vmatprep.subr.bf16.mxu0 0
        %3793 = vmatpush1.bf16.msra.mxu0 0
        %3794 = vmatprep.subr.bf16.mxu0 0
        %3795 = vmatpush1.bf16.msra.mxu0 0
        %3796 = vmatprep.subr.bf16.mxu0 0
        %3797 = vmatpush1.bf16.msra.mxu0 0
        %3798 = vmatprep.subr.bf16.mxu0 0
        %3799 = vmatpush1.bf16.msra.mxu0 0
        %3800 = vmatprep.subr.bf16.mxu0 0
        %3801 = vmatpush1.bf16.msra.mxu0 0
        %3802 = vmatprep.subr.bf16.mxu0 0
        %3803 = vmatpush1.bf16.msra.mxu0 0
        %3804 = vmatprep.subr.bf16.mxu0 0
        %3805 = vmatpush1.bf16.msra.mxu0 0
        %3806 = vmatprep.mubr.bf16.mxu0 0
        %3807 = vmatmul.mubr.bf16.gmra.mrb[0].mxu0 %v3722
        %v3808 = vpop.f32.mrb[0].mxu0
        %v3809 = vadd.f32 %v3766, %v3808
        %v3810 = vpop.f32.mrb[0].mxu0
        %v3811 = vadd.f32 %v3768, %v3810
        %v3812 = vpop.f32.mrb[0].mxu0
        %v3813 = vadd.f32 %v3770, %v3812
        %v3814 = vpop.f32.mrb[0].mxu0
        %v3815 = vadd.f32 %v3772, %v3814
        %3816 = vdwg.mxu0
        %v3818 = vrot.slane %v3722, 1
        %3820 = vmatprep.subr.bf16.mxu0 %v3185
        %3821 = vmatpush1.bf16.msra.mxu0 %v3184
        %3822 = vmatprep.subr.bf16.mxu0 %v3187
        %3823 = vmatpush1.bf16.msra.mxu0 %v3186
        %3824 = vmatprep.subr.bf16.mxu0 %v3189
        %3825 = vmatpush1.bf16.msra.mxu0 %v3188
        %3826 = vmatprep.subr.bf16.mxu0 %v3191
        %3827 = vmatpush1.bf16.msra.mxu0 %v3190
        %3828 = vmatprep.subr.bf16.mxu0 %v3193
        %3829 = vmatpush1.bf16.msra.mxu0 %v3192
        %3830 = vmatprep.subr.bf16.mxu0 %v3195
        %3831 = vmatpush1.bf16.msra.mxu0 %v3194
        %3832 = vmatprep.subr.bf16.mxu0 %v3197
        %3833 = vmatpush1.bf16.msra.mxu0 %v3196
        %3834 = vmatprep.subr.bf16.mxu0 %v3199
        %3835 = vmatpush1.bf16.msra.mxu0 %v3198
        %3836 = vmatprep.subr.bf16.mxu0 0
        %3837 = vmatpush1.bf16.msra.mxu0 0
        %3838 = vmatprep.subr.bf16.mxu0 0
        %3839 = vmatpush1.bf16.msra.mxu0 0
        %3840 = vmatprep.subr.bf16.mxu0 0
        %3841 = vmatpush1.bf16.msra.mxu0 0
        %3842 = vmatprep.subr.bf16.mxu0 0
        %3843 = vmatpush1.bf16.msra.mxu0 0
        %3844 = vmatprep.subr.bf16.mxu0 0
        %3845 = vmatpush1.bf16.msra.mxu0 0
        %3846 = vmatprep.subr.bf16.mxu0 0
        %3847 = vmatpush1.bf16.msra.mxu0 0
        %3848 = vmatprep.subr.bf16.mxu0 0
        %3849 = vmatpush1.bf16.msra.mxu0 0
        %3850 = vmatprep.subr.bf16.mxu0 0
        %3851 = vmatpush1.bf16.msra.mxu0 0
        %3852 = vmatprep.mubr.bf16.mxu0 0
        %3853 = vmatmul.mubr.bf16.gmra.mrb[0].mxu0 %v3818
        %v3854 = vpop.f32.mrb[0].mxu0
        %v3855 = vadd.f32 0.0, %v3854
        %v3856 = vpop.f32.mrb[0].mxu0
        %v3857 = vadd.f32 0.0, %v3856
        %v3858 = vpop.f32.mrb[0].mxu0
        %v3859 = vadd.f32 0.0, %v3858
        %v3860 = vpop.f32.mrb[0].mxu0
        %v3861 = vadd.f32 0.0, %v3860
        %3862 = vdwg.mxu0
        %v3863 = vadd.f32 %v3809, %v3855
        %v3864 = vadd.f32 %v3811, %v3857
        %v3865 = vadd.f32 %v3813, %v3859
        %v3866 = vadd.f32 %v3815, %v3861
        %v3867 = vmax.f32 %v3863, %v3864
        %v3868 = vmax.f32 %v3865, %v3866
        %v3869 = vadd.f32 %v2806, %v2822
        %v3870 = vadd.f32 %v2814, %v2822
        %v3871 = vmax.f32 %v3869, 0.0
        %v3872 = vmax.f32 %v3870, 0.0
        %v3873 = vpack.c.bf16 %v3872, %v3871
        %v3875 = vshrl.u32 %v3873, 16
        %v3877 = vshll.u32 %v3873, 16
        %v3879 = vrot.slane %v3877, 1
        %v3880 = vor.u32 %v3875, %v3879
        %3882 = vmatprep.subr.bf16.mxu0 %v2919
        %3883 = vmatpush1.bf16.msra.mxu0 %v2918
        %3884 = vmatprep.subr.bf16.mxu0 %v2921
        %3885 = vmatpush1.bf16.msra.mxu0 %v2920
        %3886 = vmatprep.subr.bf16.mxu0 %v2923
        %3887 = vmatpush1.bf16.msra.mxu0 %v2922
        %3888 = vmatprep.subr.bf16.mxu0 %v2925
        %3889 = vmatpush1.bf16.msra.mxu0 %v2924
        %3890 = vmatprep.subr.bf16.mxu0 %v2927
        %3891 = vmatpush1.bf16.msra.mxu0 %v2926
        %3892 = vmatprep.subr.bf16.mxu0 %v2929
        %3893 = vmatpush1.bf16.msra.mxu0 %v2928
        %3894 = vmatprep.subr.bf16.mxu0 %v2931
        %3895 = vmatpush1.bf16.msra.mxu0 %v2930
        %3896 = vmatprep.subr.bf16.mxu0 %v2933
        %3897 = vmatpush1.bf16.msra.mxu0 %v2932
        %3898 = vmatprep.subr.bf16.mxu0 0
        %3899 = vmatpush1.bf16.msra.mxu0 0
        %3900 = vmatprep.subr.bf16.mxu0 0
        %3901 = vmatpush1.bf16.msra.mxu0 0
        %3902 = vmatprep.subr.bf16.mxu0 0
        %3903 = vmatpush1.bf16.msra.mxu0 0
        %3904 = vmatprep.subr.bf16.mxu0 0
        %3905 = vmatpush1.bf16.msra.mxu0 0
        %3906 = vmatprep.subr.bf16.mxu0 0
        %3907 = vmatpush1.bf16.msra.mxu0 0
        %3908 = vmatprep.subr.bf16.mxu0 0
        %3909 = vmatpush1.bf16.msra.mxu0 0
        %3910 = vmatprep.subr.bf16.mxu0 0
        %3911 = vmatpush1.bf16.msra.mxu0 0
        %3912 = vmatprep.subr.bf16.mxu0 0
        %3913 = vmatpush1.bf16.msra.mxu0 0
        %3914 = vmatprep.mubr.bf16.mxu0 0
        %3915 = vmatmul.mubr.bf16.gmra.mrb[0].mxu0 %v3880
        %v3916 = vpop.f32.mrb[0].mxu0
        %v3917 = vadd.f32 0.0, %v3916
        %v3918 = vpop.f32.mrb[0].mxu0
        %v3919 = vadd.f32 0.0, %v3918
        %v3920 = vpop.f32.mrb[0].mxu0
        %v3921 = vadd.f32 0.0, %v3920
        %v3922 = vpop.f32.mrb[0].mxu0
        %v3923 = vadd.f32 0.0, %v3922
        %3924 = vdwg.mxu0
        %3925 = vmatprep.subr.bf16.mxu0 %v3042
        %3926 = vmatpush1.bf16.msra.mxu0 %v3041
        %3927 = vmatprep.subr.bf16.mxu0 %v3044
        %3928 = vmatpush1.bf16.msra.mxu0 %v3043
        %3929 = vmatprep.subr.bf16.mxu0 %v3046
        %3930 = vmatpush1.bf16.msra.mxu0 %v3045
        %3931 = vmatprep.subr.bf16.mxu0 %v3048
        %3932 = vmatpush1.bf16.msra.mxu0 %v3047
        %3933 = vmatprep.subr.bf16.mxu0 %v3050
        %3934 = vmatpush1.bf16.msra.mxu0 %v3049
        %3935 = vmatprep.subr.bf16.mxu0 %v3052
        %3936 = vmatpush1.bf16.msra.mxu0 %v3051
        %3937 = vmatprep.subr.bf16.mxu0 %v3054
        %3938 = vmatpush1.bf16.msra.mxu0 %v3053
        %3939 = vmatprep.subr.bf16.mxu0 %v3056
        %3940 = vmatpush1.bf16.msra.mxu0 %v3055
        %3941 = vmatprep.subr.bf16.mxu0 0
        %3942 = vmatpush1.bf16.msra.mxu0 0
        %3943 = vmatprep.subr.bf16.mxu0 0
        %3944 = vmatpush1.bf16.msra.mxu0 0
        %3945 = vmatprep.subr.bf16.mxu0 0
        %3946 = vmatpush1.bf16.msra.mxu0 0
        %3947 = vmatprep.subr.bf16.mxu0 0
        %3948 = vmatpush1.bf16.msra.mxu0 0
        %3949 = vmatprep.subr.bf16.mxu0 0
        %3950 = vmatpush1.bf16.msra.mxu0 0
        %3951 = vmatprep.subr.bf16.mxu0 0
        %3952 = vmatpush1.bf16.msra.mxu0 0
        %3953 = vmatprep.subr.bf16.mxu0 0
        %3954 = vmatpush1.bf16.msra.mxu0 0
        %3955 = vmatprep.subr.bf16.mxu0 0
        %3956 = vmatpush1.bf16.msra.mxu0 0
        %3957 = vmatprep.mubr.bf16.mxu0 0
        %3958 = vmatmul.mubr.bf16.gmra.mrb[0].mxu0 %v3873
        %v3959 = vpop.f32.mrb[0].mxu0
        %v3960 = vadd.f32 %v3917, %v3959
        %v3961 = vpop.f32.mrb[0].mxu0
        %v3962 = vadd.f32 %v3919, %v3961
        %v3963 = vpop.f32.mrb[0].mxu0
        %v3964 = vadd.f32 %v3921, %v3963
        %v3965 = vpop.f32.mrb[0].mxu0
        %v3966 = vadd.f32 %v3923, %v3965
        %3967 = vdwg.mxu0
        %v3969 = vrot.slane %v3873, 1
        %3971 = vmatprep.subr.bf16.mxu0 %v3185
        %3972 = vmatpush1.bf16.msra.mxu0 %v3184
        %3973 = vmatprep.subr.bf16.mxu0 %v3187
        %3974 = vmatpush1.bf16.msra.mxu0 %v3186
        %3975 = vmatprep.subr.bf16.mxu0 %v3189
        %3976 = vmatpush1.bf16.msra.mxu0 %v3188
        %3977 = vmatprep.subr.bf16.mxu0 %v3191
        %3978 = vmatpush1.bf16.msra.mxu0 %v3190
        %3979 = vmatprep.subr.bf16.mxu0 %v3193
        %3980 = vmatpush1.bf16.msra.mxu0 %v3192
        %3981 = vmatprep.subr.bf16.mxu0 %v3195
        %3982 = vmatpush1.bf16.msra.mxu0 %v3194
        %3983 = vmatprep.subr.bf16.mxu0 %v3197
        %3984 = vmatpush1.bf16.msra.mxu0 %v3196
        %3985 = vmatprep.subr.bf16.mxu0 %v3199
        %3986 = vmatpush1.bf16.msra.mxu0 %v3198
        %3987 = vmatprep.subr.bf16.mxu0 0
        %3988 = vmatpush1.bf16.msra.mxu0 0
        %3989 = vmatprep.subr.bf16.mxu0 0
        %3990 = vmatpush1.bf16.msra.mxu0 0
        %3991 = vmatprep.subr.bf16.mxu0 0
        %3992 = vmatpush1.bf16.msra.mxu0 0
        %3993 = vmatprep.subr.bf16.mxu0 0
        %3994 = vmatpush1.bf16.msra.mxu0 0
        %3995 = vmatprep.subr.bf16.mxu0 0
        %3996 = vmatpush1.bf16.msra.mxu0 0
        %3997 = vmatprep.subr.bf16.mxu0 0
        %3998 = vmatpush1.bf16.msra.mxu0 0
        %3999 = vmatprep.subr.bf16.mxu0 0
        %4000 = vmatpush1.bf16.msra.mxu0 0
        %4001 = vmatprep.subr.bf16.mxu0 0
        %4002 = vmatpush1.bf16.msra.mxu0 0
        %4003 = vmatprep.mubr.bf16.mxu0 0
        %4004 = vmatmul.mubr.bf16.gmra.mrb[0].mxu0 %v3969
        %v4005 = vpop.f32.mrb[0].mxu0
        %v4006 = vadd.f32 0.0, %v4005
        %v4007 = vpop.f32.mrb[0].mxu0
        %v4008 = vadd.f32 0.0, %v4007
        %v4009 = vpop.f32.mrb[0].mxu0
        %v4010 = vadd.f32 0.0, %v4009
        %v4011 = vpop.f32.mrb[0].mxu0
        %v4012 = vadd.f32 0.0, %v4011
        %4013 = vdwg.mxu0
        %v4014 = vadd.f32 %v3960, %v4006
        %v4015 = vadd.f32 %v3962, %v4008
        %v4016 = vadd.f32 %v3964, %v4010
        %v4017 = vadd.f32 %v3966, %v4012
        %v4018 = vmax.f32 %v4014, %v4015
        %v4019 = vmax.f32 %v4016, %v4017
        %v4020 = vadd.f32 %v2807, %v2822
        %v4021 = vadd.f32 %v2815, %v2822
        %v4022 = vmax.f32 %v4020, 0.0
        %v4023 = vmax.f32 %v4021, 0.0
        %v4024 = vpack.c.bf16 %v4023, %v4022
        %v4026 = vshrl.u32 %v4024, 16
        %v4028 = vshll.u32 %v4024, 16
        %v4030 = vrot.slane %v4028, 1
        %v4031 = vor.u32 %v4026, %v4030
        %4033 = vmatprep.subr.bf16.mxu0 %v2919
        %4034 = vmatpush1.bf16.msra.mxu0 %v2918
        %4035 = vmatprep.subr.bf16.mxu0 %v2921
        %4036 = vmatpush1.bf16.msra.mxu0 %v2920
        %4037 = vmatprep.subr.bf16.mxu0 %v2923
        %4038 = vmatpush1.bf16.msra.mxu0 %v2922
        %4039 = vmatprep.subr.bf16.mxu0 %v2925
        %4040 = vmatpush1.bf16.msra.mxu0 %v2924
        %4041 = vmatprep.subr.bf16.mxu0 %v2927
        %4042 = vmatpush1.bf16.msra.mxu0 %v2926
        %4043 = vmatprep.subr.bf16.mxu0 %v2929
        %4044 = vmatpush1.bf16.msra.mxu0 %v2928
        %4045 = vmatprep.subr.bf16.mxu0 %v2931
        %4046 = vmatpush1.bf16.msra.mxu0 %v2930
        %4047 = vmatprep.subr.bf16.mxu0 %v2933
        %4048 = vmatpush1.bf16.msra.mxu0 %v2932
        %4049 = vmatprep.subr.bf16.mxu0 0
        %4050 = vmatpush1.bf16.msra.mxu0 0
        %4051 = vmatprep.subr.bf16.mxu0 0
        %4052 = vmatpush1.bf16.msra.mxu0 0
        %4053 = vmatprep.subr.bf16.mxu0 0
        %4054 = vmatpush1.bf16.msra.mxu0 0
        %4055 = vmatprep.subr.bf16.mxu0 0
        %4056 = vmatpush1.bf16.msra.mxu0 0
        %4057 = vmatprep.subr.bf16.mxu0 0
        %4058 = vmatpush1.bf16.msra.mxu0 0
        %4059 = vmatprep.subr.bf16.mxu0 0
        %4060 = vmatpush1.bf16.msra.mxu0 0
        %4061 = vmatprep.subr.bf16.mxu0 0
        %4062 = vmatpush1.bf16.msra.mxu0 0
        %4063 = vmatprep.subr.bf16.mxu0 0
        %4064 = vmatpush1.bf16.msra.mxu0 0
        %4065 = vmatprep.mubr.bf16.mxu0 0
        %4066 = vmatmul.mubr.bf16.gmra.mrb[0].mxu0 %v4031
        %v4067 = vpop.f32.mrb[0].mxu0
        %v4068 = vadd.f32 0.0, %v4067
        %v4069 = vpop.f32.mrb[0].mxu0
        %v4070 = vadd.f32 0.0, %v4069
        %v4071 = vpop.f32.mrb[0].mxu0
        %v4072 = vadd.f32 0.0, %v4071
        %v4073 = vpop.f32.mrb[0].mxu0
        %v4074 = vadd.f32 0.0, %v4073
        %4075 = vdwg.mxu0
        %4076 = vmatprep.subr.bf16.mxu0 %v3042
        %4077 = vmatpush1.bf16.msra.mxu0 %v3041
        %4078 = vmatprep.subr.bf16.mxu0 %v3044
        %4079 = vmatpush1.bf16.msra.mxu0 %v3043
        %4080 = vmatprep.subr.bf16.mxu0 %v3046
        %4081 = vmatpush1.bf16.msra.mxu0 %v3045
        %4082 = vmatprep.subr.bf16.mxu0 %v3048
        %4083 = vmatpush1.bf16.msra.mxu0 %v3047
        %4084 = vmatprep.subr.bf16.mxu0 %v3050
        %4085 = vmatpush1.bf16.msra.mxu0 %v3049
        %4086 = vmatprep.subr.bf16.mxu0 %v3052
        %4087 = vmatpush1.bf16.msra.mxu0 %v3051
        %4088 = vmatprep.subr.bf16.mxu0 %v3054
        %4089 = vmatpush1.bf16.msra.mxu0 %v3053
        %4090 = vmatprep.subr.bf16.mxu0 %v3056
        %4091 = vmatpush1.bf16.msra.mxu0 %v3055
        %4092 = vmatprep.subr.bf16.mxu0 0
        %4093 = vmatpush1.bf16.msra.mxu0 0
        %4094 = vmatprep.subr.bf16.mxu0 0
        %4095 = vmatpush1.bf16.msra.mxu0 0
        %4096 = vmatprep.subr.bf16.mxu0 0
        %4097 = vmatpush1.bf16.msra.mxu0 0
        %4098 = vmatprep.subr.bf16.mxu0 0
        %4099 = vmatpush1.bf16.msra.mxu0 0
        %4100 = vmatprep.subr.bf16.mxu0 0
        %4101 = vmatpush1.bf16.msra.mxu0 0
        %4102 = vmatprep.subr.bf16.mxu0 0
        %4103 = vmatpush1.bf16.msra.mxu0 0
        %4104 = vmatprep.subr.bf16.mxu0 0
        %4105 = vmatpush1.bf16.msra.mxu0 0
        %4106 = vmatprep.subr.bf16.mxu0 0
        %4107 = vmatpush1.bf16.msra.mxu0 0
        %4108 = vmatprep.mubr.bf16.mxu0 0
        %4109 = vmatmul.mubr.bf16.gmra.mrb[0].mxu0 %v4024
        %v4110 = vpop.f32.mrb[0].mxu0
        %v4111 = vadd.f32 %v4068, %v4110
        %v4112 = vpop.f32.mrb[0].mxu0
        %v4113 = vadd.f32 %v4070, %v4112
        %v4114 = vpop.f32.mrb[0].mxu0
        %v4115 = vadd.f32 %v4072, %v4114
        %v4116 = vpop.f32.mrb[0].mxu0
        %v4117 = vadd.f32 %v4074, %v4116
        %4118 = vdwg.mxu0
        %v4120 = vrot.slane %v4024, 1
        %4122 = vmatprep.subr.bf16.mxu0 %v3185
        %4123 = vmatpush1.bf16.msra.mxu0 %v3184
        %4124 = vmatprep.subr.bf16.mxu0 %v3187
        %4125 = vmatpush1.bf16.msra.mxu0 %v3186
        %4126 = vmatprep.subr.bf16.mxu0 %v3189
        %4127 = vmatpush1.bf16.msra.mxu0 %v3188
        %4128 = vmatprep.subr.bf16.mxu0 %v3191
        %4129 = vmatpush1.bf16.msra.mxu0 %v3190
        %4130 = vmatprep.subr.bf16.mxu0 %v3193
        %4131 = vmatpush1.bf16.msra.mxu0 %v3192
        %4132 = vmatprep.subr.bf16.mxu0 %v3195
        %4133 = vmatpush1.bf16.msra.mxu0 %v3194
        %4134 = vmatprep.subr.bf16.mxu0 %v3197
        %4135 = vmatpush1.bf16.msra.mxu0 %v3196
        %4136 = vmatprep.subr.bf16.mxu0 %v3199
        %4137 = vmatpush1.bf16.msra.mxu0 %v3198
        %4138 = vmatprep.subr.bf16.mxu0 0
        %4139 = vmatpush1.bf16.msra.mxu0 0
        %4140 = vmatprep.subr.bf16.mxu0 0
        %4141 = vmatpush1.bf16.msra.mxu0 0
        %4142 = vmatprep.subr.bf16.mxu0 0
        %4143 = vmatpush1.bf16.msra.mxu0 0
        %4144 = vmatprep.subr.bf16.mxu0 0
        %4145 = vmatpush1.bf16.msra.mxu0 0
        %4146 = vmatprep.subr.bf16.mxu0 0
        %4147 = vmatpush1.bf16.msra.mxu0 0
        %4148 = vmatprep.subr.bf16.mxu0 0
        %4149 = vmatpush1.bf16.msra.mxu0 0
        %4150 = vmatprep.subr.bf16.mxu0 0
        %4151 = vmatpush1.bf16.msra.mxu0 0
        %4152 = vmatprep.subr.bf16.mxu0 0
        %4153 = vmatpush1.bf16.msra.mxu0 0
        %4154 = vmatprep.mubr.bf16.mxu0 0
        %4155 = vmatmul.mubr.bf16.gmra.mrb[0].mxu0 %v4120
        %v4156 = vpop.f32.mrb[0].mxu0
        %v4157 = vadd.f32 0.0, %v4156
        %v4158 = vpop.f32.mrb[0].mxu0
        %v4159 = vadd.f32 0.0, %v4158
        %v4160 = vpop.f32.mrb[0].mxu0
        %v4161 = vadd.f32 0.0, %v4160
        %v4162 = vpop.f32.mrb[0].mxu0
        %v4163 = vadd.f32 0.0, %v4162
        %4164 = vdwg.mxu0
        %v4165 = vadd.f32 %v4111, %v4157
        %v4166 = vadd.f32 %v4113, %v4159
        %v4167 = vadd.f32 %v4115, %v4161
        %v4168 = vadd.f32 %v4117, %v4163
        %v4169 = vmax.f32 %v4165, %v4166
        %v4170 = vmax.f32 %v4167, %v4168
        %v4171 = vadd.f32 %v2808, %v2822
        %v4172 = vadd.f32 %v2816, %v2822
        %v4173 = vmax.f32 %v4171, 0.0
        %v4174 = vmax.f32 %v4172, 0.0
        %v4175 = vpack.c.bf16 %v4174, %v4173
        %v4177 = vshrl.u32 %v4175, 16
        %v4179 = vshll.u32 %v4175, 16
        %v4181 = vrot.slane %v4179, 1
        %v4182 = vor.u32 %v4177, %v4181
        %4184 = vmatprep.subr.bf16.mxu0 %v2919
        %4185 = vmatpush1.bf16.msra.mxu0 %v2918
        %4186 = vmatprep.subr.bf16.mxu0 %v2921
        %4187 = vmatpush1.bf16.msra.mxu0 %v2920
        %4188 = vmatprep.subr.bf16.mxu0 %v2923
        %4189 = vmatpush1.bf16.msra.mxu0 %v2922
        %4190 = vmatprep.subr.bf16.mxu0 %v2925
        %4191 = vmatpush1.bf16.msra.mxu0 %v2924
        %4192 = vmatprep.subr.bf16.mxu0 %v2927
        %4193 = vmatpush1.bf16.msra.mxu0 %v2926
        %4194 = vmatprep.subr.bf16.mxu0 %v2929
        %4195 = vmatpush1.bf16.msra.mxu0 %v2928
        %4196 = vmatprep.subr.bf16.mxu0 %v2931
        %4197 = vmatpush1.bf16.msra.mxu0 %v2930
        %4198 = vmatprep.subr.bf16.mxu0 %v2933
        %4199 = vmatpush1.bf16.msra.mxu0 %v2932
        %4200 = vmatprep.subr.bf16.mxu0 0
        %4201 = vmatpush1.bf16.msra.mxu0 0
        %4202 = vmatprep.subr.bf16.mxu0 0
        %4203 = vmatpush1.bf16.msra.mxu0 0
        %4204 = vmatprep.subr.bf16.mxu0 0
        %4205 = vmatpush1.bf16.msra.mxu0 0
        %4206 = vmatprep.subr.bf16.mxu0 0
        %4207 = vmatpush1.bf16.msra.mxu0 0
        %4208 = vmatprep.subr.bf16.mxu0 0
        %4209 = vmatpush1.bf16.msra.mxu0 0
        %4210 = vmatprep.subr.bf16.mxu0 0
        %4211 = vmatpush1.bf16.msra.mxu0 0
        %4212 = vmatprep.subr.bf16.mxu0 0
        %4213 = vmatpush1.bf16.msra.mxu0 0
        %4214 = vmatprep.subr.bf16.mxu0 0
        %4215 = vmatpush1.bf16.msra.mxu0 0
        %4216 = vmatprep.mubr.bf16.mxu0 0
        %4217 = vmatmul.mubr.bf16.gmra.mrb[0].mxu0 %v4182
        %v4218 = vpop.f32.mrb[0].mxu0
        %v4219 = vadd.f32 0.0, %v4218
        %v4220 = vpop.f32.mrb[0].mxu0
        %v4221 = vadd.f32 0.0, %v4220
        %v4222 = vpop.f32.mrb[0].mxu0
        %v4223 = vadd.f32 0.0, %v4222
        %v4224 = vpop.f32.mrb[0].mxu0
        %v4225 = vadd.f32 0.0, %v4224
        %4226 = vdwg.mxu0
        %4227 = vmatprep.subr.bf16.mxu0 %v3042
        %4228 = vmatpush1.bf16.msra.mxu0 %v3041
        %4229 = vmatprep.subr.bf16.mxu0 %v3044
        %4230 = vmatpush1.bf16.msra.mxu0 %v3043
        %4231 = vmatprep.subr.bf16.mxu0 %v3046
        %4232 = vmatpush1.bf16.msra.mxu0 %v3045
        %4233 = vmatprep.subr.bf16.mxu0 %v3048
        %4234 = vmatpush1.bf16.msra.mxu0 %v3047
        %4235 = vmatprep.subr.bf16.mxu0 %v3050
        %4236 = vmatpush1.bf16.msra.mxu0 %v3049
        %4237 = vmatprep.subr.bf16.mxu0 %v3052
        %4238 = vmatpush1.bf16.msra.mxu0 %v3051
        %4239 = vmatprep.subr.bf16.mxu0 %v3054
        %4240 = vmatpush1.bf16.msra.mxu0 %v3053
        %4241 = vmatprep.subr.bf16.mxu0 %v3056
        %4242 = vmatpush1.bf16.msra.mxu0 %v3055
        %4243 = vmatprep.subr.bf16.mxu0 0
        %4244 = vmatpush1.bf16.msra.mxu0 0
        %4245 = vmatprep.subr.bf16.mxu0 0
        %4246 = vmatpush1.bf16.msra.mxu0 0
        %4247 = vmatprep.subr.bf16.mxu0 0
        %4248 = vmatpush1.bf16.msra.mxu0 0
        %4249 = vmatprep.subr.bf16.mxu0 0
        %4250 = vmatpush1.bf16.msra.mxu0 0
        %4251 = vmatprep.subr.bf16.mxu0 0
        %4252 = vmatpush1.bf16.msra.mxu0 0
        %4253 = vmatprep.subr.bf16.mxu0 0
        %4254 = vmatpush1.bf16.msra.mxu0 0
        %4255 = vmatprep.subr.bf16.mxu0 0
        %4256 = vmatpush1.bf16.msra.mxu0 0
        %4257 = vmatprep.subr.bf16.mxu0 0
        %4258 = vmatpush1.bf16.msra.mxu0 0
        %4259 = vmatprep.mubr.bf16.mxu0 0
        %4260 = vmatmul.mubr.bf16.gmra.mrb[0].mxu0 %v4175
        %v4261 = vpop.f32.mrb[0].mxu0
        %v4262 = vadd.f32 %v4219, %v4261
        %v4263 = vpop.f32.mrb[0].mxu0
        %v4264 = vadd.f32 %v4221, %v4263
        %v4265 = vpop.f32.mrb[0].mxu0
        %v4266 = vadd.f32 %v4223, %v4265
        %v4267 = vpop.f32.mrb[0].mxu0
        %v4268 = vadd.f32 %v4225, %v4267
        %4269 = vdwg.mxu0
        %v4271 = vrot.slane %v4175, 1
        %4273 = vmatprep.subr.bf16.mxu0 %v3185
        %4274 = vmatpush1.bf16.msra.mxu0 %v3184
        %4275 = vmatprep.subr.bf16.mxu0 %v3187
        %4276 = vmatpush1.bf16.msra.mxu0 %v3186
        %4277 = vmatprep.subr.bf16.mxu0 %v3189
        %4278 = vmatpush1.bf16.msra.mxu0 %v3188
        %4279 = vmatprep.subr.bf16.mxu0 %v3191
        %4280 = vmatpush1.bf16.msra.mxu0 %v3190
        %4281 = vmatprep.subr.bf16.mxu0 %v3193
        %4282 = vmatpush1.bf16.msra.mxu0 %v3192
        %4283 = vmatprep.subr.bf16.mxu0 %v3195
        %4284 = vmatpush1.bf16.msra.mxu0 %v3194
        %4285 = vmatprep.subr.bf16.mxu0 %v3197
        %4286 = vmatpush1.bf16.msra.mxu0 %v3196
        %4287 = vmatprep.subr.bf16.mxu0 %v3199
        %4288 = vmatpush1.bf16.msra.mxu0 %v3198
        %4289 = vmatprep.subr.bf16.mxu0 0
        %4290 = vmatpush1.bf16.msra.mxu0 0
        %4291 = vmatprep.subr.bf16.mxu0 0
        %4292 = vmatpush1.bf16.msra.mxu0 0
        %4293 = vmatprep.subr.bf16.mxu0 0
        %4294 = vmatpush1.bf16.msra.mxu0 0
        %4295 = vmatprep.subr.bf16.mxu0 0
        %4296 = vmatpush1.bf16.msra.mxu0 0
        %4297 = vmatprep.subr.bf16.mxu0 0
        %4298 = vmatpush1.bf16.msra.mxu0 0
        %4299 = vmatprep.subr.bf16.mxu0 0
        %4300 = vmatpush1.bf16.msra.mxu0 0
        %4301 = vmatprep.subr.bf16.mxu0 0
        %4302 = vmatpush1.bf16.msra.mxu0 0
        %4303 = vmatprep.subr.bf16.mxu0 0
        %4304 = vmatpush1.bf16.msra.mxu0 0
        %4305 = vmatprep.mubr.bf16.mxu0 0
        %4306 = vmatmul.mubr.bf16.gmra.mrb[0].mxu0 %v4271
        %v4307 = vpop.f32.mrb[0].mxu0
        %v4308 = vadd.f32 0.0, %v4307
        %v4309 = vpop.f32.mrb[0].mxu0
        %v4310 = vadd.f32 0.0, %v4309
        %v4311 = vpop.f32.mrb[0].mxu0
        %v4312 = vadd.f32 0.0, %v4311
        %v4313 = vpop.f32.mrb[0].mxu0
        %v4314 = vadd.f32 0.0, %v4313
        %4315 = vdwg.mxu0
        %v4316 = vadd.f32 %v4262, %v4308
        %v4317 = vadd.f32 %v4264, %v4310
        %v4318 = vadd.f32 %v4266, %v4312
        %v4319 = vadd.f32 %v4268, %v4314
        %v4320 = vmax.f32 %v4316, %v4317
        %v4321 = vmax.f32 %v4318, %v4319
        %v4322 = vpack.c.bf16 %v3264, %v3263
        %v4323 = vpack.c.bf16 %v3415, %v3414
        %v4324 = vpack.c.bf16 %v3566, %v3565
        %v4325 = vpack.c.bf16 %v3717, %v3716
        %v4326 = vpack.c.bf16 %v3868, %v3867
        %v4327 = vpack.c.bf16 %v4019, %v4018
        %v4328 = vpack.c.bf16 %v4170, %v4169
        %v4329 = vpack.c.bf16 %v4321, %v4320
        %v4330 = vld [vmem:[%s8] sm:$0x7]
        %vm4331 = vcmask 97280
        %v4333 = vsel %vm4331, %v4330, 0
        %v4336 = vsel %vm2421, %v4322, 0
        %v4339 = vsel %vm2421, %v4323, 0
        %v4342 = vsel %vm2421, %v4324, 0
        %v4345 = vsel %vm2421, %v4325, 0
        %v4348 = vsel %vm2421, %v4326, 0
        %v4351 = vsel %vm2421, %v4327, 0
        %v4354 = vsel %vm2421, %v4328, 0
        %v4357 = vsel %vm2421, %v4329, 0
        %4359 = vmatprep.subr.bf16.mxu0 %v4339
        %4360 = vmatpush1.bf16.msra.mxu0 %v4336
        %4361 = vmatprep.subr.bf16.mxu0 0
        %4362 = vmatpush1.bf16.msra.mxu0 0
        %4363 = vmatprep.subr.bf16.mxu0 0
        %4364 = vmatpush1.bf16.msra.mxu0 0
        %4365 = vmatprep.subr.bf16.mxu0 0
        %4366 = vmatpush1.bf16.msra.mxu0 0
        %4367 = vmatprep.subr.bf16.mxu0 0
        %4368 = vmatpush1.bf16.msra.mxu0 0
        %4369 = vmatprep.subr.bf16.mxu0 0
        %4370 = vmatpush1.bf16.msra.mxu0 0
        %4371 = vmatprep.subr.bf16.mxu0 0
        %4372 = vmatpush1.bf16.msra.mxu0 0
        %4373 = vmatprep.subr.bf16.mxu0 0
        %4374 = vmatpush1.bf16.msra.mxu0 0
        %4375 = vmatprep.subr.bf16.mxu0 0
        %4376 = vmatpush1.bf16.msra.mxu0 0
        %4377 = vmatprep.subr.bf16.mxu0 0
        %4378 = vmatpush1.bf16.msra.mxu0 0
        %4379 = vmatprep.subr.bf16.mxu0 0
        %4380 = vmatpush1.bf16.msra.mxu0 0
        %4381 = vmatprep.subr.bf16.mxu0 0
        %4382 = vmatpush1.bf16.msra.mxu0 0
        %4383 = vmatprep.subr.bf16.mxu0 0
        %4384 = vmatpush1.bf16.msra.mxu0 0
        %4385 = vmatprep.subr.bf16.mxu0 0
        %4386 = vmatpush1.bf16.msra.mxu0 0
        %4387 = vmatprep.subr.bf16.mxu0 0
        %4388 = vmatpush1.bf16.msra.mxu0 0
        %4389 = vmatprep.subr.bf16.mxu0 0
        %4390 = vmatpush1.bf16.msra.mxu0 0
        %4391 = vmatprep.mubr.bf16.mxu0 0
        %4392 = vmatmul.mubr.bf16.gmra.mrb[0].mxu0 %v4333
        %v4393 = vpop.f32.mrb[0].mxu0
        %v4394 = vadd.f32 0.0, %v4393
        %v4395 = vpop.f32.mrb[0].mxu0
        %v4396 = vadd.f32 0.0, %v4395
        %v4397 = vpop.f32.mrb[0].mxu0
        %v4398 = vpop.f32.mrb[0].mxu0
        %4399 = vdwg.mxu0
        %4400 = vmatprep.subr.bf16.mxu0 %v4345
        %4401 = vmatpush1.bf16.msra.mxu0 %v4342
        %4402 = vmatprep.subr.bf16.mxu0 0
        %4403 = vmatpush1.bf16.msra.mxu0 0
        %4404 = vmatprep.subr.bf16.mxu0 0
        %4405 = vmatpush1.bf16.msra.mxu0 0
        %4406 = vmatprep.subr.bf16.mxu0 0
        %4407 = vmatpush1.bf16.msra.mxu0 0
        %4408 = vmatprep.subr.bf16.mxu0 0
        %4409 = vmatpush1.bf16.msra.mxu0 0
        %4410 = vmatprep.subr.bf16.mxu0 0
        %4411 = vmatpush1.bf16.msra.mxu0 0
        %4412 = vmatprep.subr.bf16.mxu0 0
        %4413 = vmatpush1.bf16.msra.mxu0 0
        %4414 = vmatprep.subr.bf16.mxu0 0
        %4415 = vmatpush1.bf16.msra.mxu0 0
        %4416 = vmatprep.subr.bf16.mxu0 0
        %4417 = vmatpush1.bf16.msra.mxu0 0
        %4418 = vmatprep.subr.bf16.mxu0 0
        %4419 = vmatpush1.bf16.msra.mxu0 0
        %4420 = vmatprep.subr.bf16.mxu0 0
        %4421 = vmatpush1.bf16.msra.mxu0 0
        %4422 = vmatprep.subr.bf16.mxu0 0
        %4423 = vmatpush1.bf16.msra.mxu0 0
        %4424 = vmatprep.subr.bf16.mxu0 0
        %4425 = vmatpush1.bf16.msra.mxu0 0
        %4426 = vmatprep.subr.bf16.mxu0 0
        %4427 = vmatpush1.bf16.msra.mxu0 0
        %4428 = vmatprep.subr.bf16.mxu0 0
        %4429 = vmatpush1.bf16.msra.mxu0 0
        %4430 = vmatprep.subr.bf16.mxu0 0
        %4431 = vmatpush1.bf16.msra.mxu0 0
        %4432 = vmatprep.mubr.bf16.mxu0 0
        %4433 = vmatmul.mubr.bf16.gmra.mrb[0].mxu0 %v4333
        %v4434 = vpop.f32.mrb[0].mxu0
        %v4435 = vadd.f32 0.0, %v4434
        %v4436 = vpop.f32.mrb[0].mxu0
        %v4437 = vadd.f32 0.0, %v4436
        %v4438 = vpop.f32.mrb[0].mxu0
        %v4439 = vpop.f32.mrb[0].mxu0
        %4440 = vdwg.mxu0
        %4441 = vmatprep.subr.bf16.mxu0 %v4351
        %4442 = vmatpush1.bf16.msra.mxu0 %v4348
        %4443 = vmatprep.subr.bf16.mxu0 0
        %4444 = vmatpush1.bf16.msra.mxu0 0
        %4445 = vmatprep.subr.bf16.mxu0 0
        %4446 = vmatpush1.bf16.msra.mxu0 0
        %4447 = vmatprep.subr.bf16.mxu0 0
        %4448 = vmatpush1.bf16.msra.mxu0 0
        %4449 = vmatprep.subr.bf16.mxu0 0
        %4450 = vmatpush1.bf16.msra.mxu0 0
        %4451 = vmatprep.subr.bf16.mxu0 0
        %4452 = vmatpush1.bf16.msra.mxu0 0
        %4453 = vmatprep.subr.bf16.mxu0 0
        %4454 = vmatpush1.bf16.msra.mxu0 0
        %4455 = vmatprep.subr.bf16.mxu0 0
        %4456 = vmatpush1.bf16.msra.mxu0 0
        %4457 = vmatprep.subr.bf16.mxu0 0
        %4458 = vmatpush1.bf16.msra.mxu0 0
        %4459 = vmatprep.subr.bf16.mxu0 0
        %4460 = vmatpush1.bf16.msra.mxu0 0
        %4461 = vmatprep.subr.bf16.mxu0 0
        %4462 = vmatpush1.bf16.msra.mxu0 0
        %4463 = vmatprep.subr.bf16.mxu0 0
        %4464 = vmatpush1.bf16.msra.mxu0 0
        %4465 = vmatprep.subr.bf16.mxu0 0
        %4466 = vmatpush1.bf16.msra.mxu0 0
        %4467 = vmatprep.subr.bf16.mxu0 0
        %4468 = vmatpush1.bf16.msra.mxu0 0
        %4469 = vmatprep.subr.bf16.mxu0 0
        %4470 = vmatpush1.bf16.msra.mxu0 0
        %4471 = vmatprep.subr.bf16.mxu0 0
        %4472 = vmatpush1.bf16.msra.mxu0 0
        %4473 = vmatprep.mubr.bf16.mxu0 0
        %4474 = vmatmul.mubr.bf16.gmra.mrb[0].mxu0 %v4333
        %v4475 = vpop.f32.mrb[0].mxu0
        %v4476 = vadd.f32 0.0, %v4475
        %v4477 = vpop.f32.mrb[0].mxu0
        %v4478 = vadd.f32 0.0, %v4477
        %v4479 = vpop.f32.mrb[0].mxu0
        %v4480 = vpop.f32.mrb[0].mxu0
        %4481 = vdwg.mxu0
        %4482 = vmatprep.subr.bf16.mxu0 %v4357
        %4483 = vmatpush1.bf16.msra.mxu0 %v4354
        %4484 = vmatprep.subr.bf16.mxu0 0
        %4485 = vmatpush1.bf16.msra.mxu0 0
        %4486 = vmatprep.subr.bf16.mxu0 0
        %4487 = vmatpush1.bf16.msra.mxu0 0
        %4488 = vmatprep.subr.bf16.mxu0 0
        %4489 = vmatpush1.bf16.msra.mxu0 0
        %4490 = vmatprep.subr.bf16.mxu0 0
        %4491 = vmatpush1.bf16.msra.mxu0 0
        %4492 = vmatprep.subr.bf16.mxu0 0
        %4493 = vmatpush1.bf16.msra.mxu0 0
        %4494 = vmatprep.subr.bf16.mxu0 0
        %4495 = vmatpush1.bf16.msra.mxu0 0
        %4496 = vmatprep.subr.bf16.mxu0 0
        %4497 = vmatpush1.bf16.msra.mxu0 0
        %4498 = vmatprep.subr.bf16.mxu0 0
        %4499 = vmatpush1.bf16.msra.mxu0 0
        %4500 = vmatprep.subr.bf16.mxu0 0
        %4501 = vmatpush1.bf16.msra.mxu0 0
        %4502 = vmatprep.subr.bf16.mxu0 0
        %4503 = vmatpush1.bf16.msra.mxu0 0
        %4504 = vmatprep.subr.bf16.mxu0 0
        %4505 = vmatpush1.bf16.msra.mxu0 0
        %4506 = vmatprep.subr.bf16.mxu0 0
        %4507 = vmatpush1.bf16.msra.mxu0 0
        %4508 = vmatprep.subr.bf16.mxu0 0
        %4509 = vmatpush1.bf16.msra.mxu0 0
        %4510 = vmatprep.subr.bf16.mxu0 0
        %4511 = vmatpush1.bf16.msra.mxu0 0
        %4512 = vmatprep.subr.bf16.mxu0 0
        %4513 = vmatpush1.bf16.msra.mxu0 0
        %4514 = vmatprep.mubr.bf16.mxu0 0
        %4515 = vmatmul.mubr.bf16.gmra.mrb[0].mxu0 %v4333
        %v4516 = vpop.f32.mrb[0].mxu0
        %v4517 = vadd.f32 0.0, %v4516
        %v4518 = vpop.f32.mrb[0].mxu0
        %v4519 = vadd.f32 0.0, %v4518
        %v4520 = vpop.f32.mrb[0].mxu0
        %v4521 = vpop.f32.mrb[0].mxu0
        %4522 = vdwg.mxu0
        %s4523 = scalar_lea.vmem %s8, 4
        %v4524 = vld [vmem:[%s4523] sm:$0x7]
        %v4526 = vsel %vm4331, %v4524, 0
        %4528 = vmatprep.subr.bf16.mxu0 %v4339
        %4529 = vmatpush1.bf16.msra.mxu0 %v4336
        %4530 = vmatprep.subr.bf16.mxu0 0
        %4531 = vmatpush1.bf16.msra.mxu0 0
        %4532 = vmatprep.subr.bf16.mxu0 0
        %4533 = vmatpush1.bf16.msra.mxu0 0
        %4534 = vmatprep.subr.bf16.mxu0 0
        %4535 = vmatpush1.bf16.msra.mxu0 0
        %4536 = vmatprep.subr.bf16.mxu0 0
        %4537 = vmatpush1.bf16.msra.mxu0 0
        %4538 = vmatprep.subr.bf16.mxu0 0
        %4539 = vmatpush1.bf16.msra.mxu0 0
        %4540 = vmatprep.subr.bf16.mxu0 0
        %4541 = vmatpush1.bf16.msra.mxu0 0
        %4542 = vmatprep.subr.bf16.mxu0 0
        %4543 = vmatpush1.bf16.msra.mxu0 0
        %4544 = vmatprep.subr.bf16.mxu0 0
        %4545 = vmatpush1.bf16.msra.mxu0 0
        %4546 = vmatprep.subr.bf16.mxu0 0
        %4547 = vmatpush1.bf16.msra.mxu0 0
        %4548 = vmatprep.subr.bf16.mxu0 0
        %4549 = vmatpush1.bf16.msra.mxu0 0
        %4550 = vmatprep.subr.bf16.mxu0 0
        %4551 = vmatpush1.bf16.msra.mxu0 0
        %4552 = vmatprep.subr.bf16.mxu0 0
        %4553 = vmatpush1.bf16.msra.mxu0 0
        %4554 = vmatprep.subr.bf16.mxu0 0
        %4555 = vmatpush1.bf16.msra.mxu0 0
        %4556 = vmatprep.subr.bf16.mxu0 0
        %4557 = vmatpush1.bf16.msra.mxu0 0
        %4558 = vmatprep.subr.bf16.mxu0 0
        %4559 = vmatpush1.bf16.msra.mxu0 0
        %4560 = vmatprep.mubr.bf16.mxu0 0
        %4561 = vmatmul.mubr.bf16.gmra.mrb[0].mxu0 %v4526
        %v4562 = vpop.f32.mrb[0].mxu0
        %v4563 = vadd.f32 0.0, %v4562
        %v4564 = vpop.f32.mrb[0].mxu0
        %v4565 = vadd.f32 0.0, %v4564
        %v4566 = vpop.f32.mrb[0].mxu0
        %v4567 = vpop.f32.mrb[0].mxu0
        %4568 = vdwg.mxu0
        %4569 = vmatprep.subr.bf16.mxu0 %v4345
        %4570 = vmatpush1.bf16.msra.mxu0 %v4342
        %4571 = vmatprep.subr.bf16.mxu0 0
        %4572 = vmatpush1.bf16.msra.mxu0 0
        %4573 = vmatprep.subr.bf16.mxu0 0
        %4574 = vmatpush1.bf16.msra.mxu0 0
        %4575 = vmatprep.subr.bf16.mxu0 0
        %4576 = vmatpush1.bf16.msra.mxu0 0
        %4577 = vmatprep.subr.bf16.mxu0 0
        %4578 = vmatpush1.bf16.msra.mxu0 0
        %4579 = vmatprep.subr.bf16.mxu0 0
        %4580 = vmatpush1.bf16.msra.mxu0 0
        %4581 = vmatprep.subr.bf16.mxu0 0
        %4582 = vmatpush1.bf16.msra.mxu0 0
        %4583 = vmatprep.subr.bf16.mxu0 0
        %4584 = vmatpush1.bf16.msra.mxu0 0
        %4585 = vmatprep.subr.bf16.mxu0 0
        %4586 = vmatpush1.bf16.msra.mxu0 0
        %4587 = vmatprep.subr.bf16.mxu0 0
        %4588 = vmatpush1.bf16.msra.mxu0 0
        %4589 = vmatprep.subr.bf16.mxu0 0
        %4590 = vmatpush1.bf16.msra.mxu0 0
        %4591 = vmatprep.subr.bf16.mxu0 0
        %4592 = vmatpush1.bf16.msra.mxu0 0
        %4593 = vmatprep.subr.bf16.mxu0 0
        %4594 = vmatpush1.bf16.msra.mxu0 0
        %4595 = vmatprep.subr.bf16.mxu0 0
        %4596 = vmatpush1.bf16.msra.mxu0 0
        %4597 = vmatprep.subr.bf16.mxu0 0
        %4598 = vmatpush1.bf16.msra.mxu0 0
        %4599 = vmatprep.subr.bf16.mxu0 0
        %4600 = vmatpush1.bf16.msra.mxu0 0
        %4601 = vmatprep.mubr.bf16.mxu0 0
        %4602 = vmatmul.mubr.bf16.gmra.mrb[0].mxu0 %v4526
        %v4603 = vpop.f32.mrb[0].mxu0
        %v4604 = vadd.f32 0.0, %v4603
        %v4605 = vpop.f32.mrb[0].mxu0
        %v4606 = vadd.f32 0.0, %v4605
        %v4607 = vpop.f32.mrb[0].mxu0
        %v4608 = vpop.f32.mrb[0].mxu0
        %4609 = vdwg.mxu0
        %4610 = vmatprep.subr.bf16.mxu0 %v4351
        %4611 = vmatpush1.bf16.msra.mxu0 %v4348
        %4612 = vmatprep.subr.bf16.mxu0 0
        %4613 = vmatpush1.bf16.msra.mxu0 0
        %4614 = vmatprep.subr.bf16.mxu0 0
        %4615 = vmatpush1.bf16.msra.mxu0 0
        %4616 = vmatprep.subr.bf16.mxu0 0
        %4617 = vmatpush1.bf16.msra.mxu0 0
        %4618 = vmatprep.subr.bf16.mxu0 0
        %4619 = vmatpush1.bf16.msra.mxu0 0
        %4620 = vmatprep.subr.bf16.mxu0 0
        %4621 = vmatpush1.bf16.msra.mxu0 0
        %4622 = vmatprep.subr.bf16.mxu0 0
        %4623 = vmatpush1.bf16.msra.mxu0 0
        %4624 = vmatprep.subr.bf16.mxu0 0
        %4625 = vmatpush1.bf16.msra.mxu0 0
        %4626 = vmatprep.subr.bf16.mxu0 0
        %4627 = vmatpush1.bf16.msra.mxu0 0
        %4628 = vmatprep.subr.bf16.mxu0 0
        %4629 = vmatpush1.bf16.msra.mxu0 0
        %4630 = vmatprep.subr.bf16.mxu0 0
        %4631 = vmatpush1.bf16.msra.mxu0 0
        %4632 = vmatprep.subr.bf16.mxu0 0
        %4633 = vmatpush1.bf16.msra.mxu0 0
        %4634 = vmatprep.subr.bf16.mxu0 0
        %4635 = vmatpush1.bf16.msra.mxu0 0
        %4636 = vmatprep.subr.bf16.mxu0 0
        %4637 = vmatpush1.bf16.msra.mxu0 0
        %4638 = vmatprep.subr.bf16.mxu0 0
        %4639 = vmatpush1.bf16.msra.mxu0 0
        %4640 = vmatprep.subr.bf16.mxu0 0
        %4641 = vmatpush1.bf16.msra.mxu0 0
        %4642 = vmatprep.mubr.bf16.mxu0 0
        %4643 = vmatmul.mubr.bf16.gmra.mrb[0].mxu0 %v4526
        %v4644 = vpop.f32.mrb[0].mxu0
        %v4645 = vadd.f32 0.0, %v4644
        %v4646 = vpop.f32.mrb[0].mxu0
        %v4647 = vadd.f32 0.0, %v4646
        %v4648 = vpop.f32.mrb[0].mxu0
        %v4649 = vpop.f32.mrb[0].mxu0
        %4650 = vdwg.mxu0
        %4651 = vmatprep.subr.bf16.mxu0 %v4357
        %4652 = vmatpush1.bf16.msra.mxu0 %v4354
        %4653 = vmatprep.subr.bf16.mxu0 0
        %4654 = vmatpush1.bf16.msra.mxu0 0
        %4655 = vmatprep.subr.bf16.mxu0 0
        %4656 = vmatpush1.bf16.msra.mxu0 0
        %4657 = vmatprep.subr.bf16.mxu0 0
        %4658 = vmatpush1.bf16.msra.mxu0 0
        %4659 = vmatprep.subr.bf16.mxu0 0
        %4660 = vmatpush1.bf16.msra.mxu0 0
        %4661 = vmatprep.subr.bf16.mxu0 0
        %4662 = vmatpush1.bf16.msra.mxu0 0
        %4663 = vmatprep.subr.bf16.mxu0 0
        %4664 = vmatpush1.bf16.msra.mxu0 0
        %4665 = vmatprep.subr.bf16.mxu0 0
        %4666 = vmatpush1.bf16.msra.mxu0 0
        %4667 = vmatprep.subr.bf16.mxu0 0
        %4668 = vmatpush1.bf16.msra.mxu0 0
        %4669 = vmatprep.subr.bf16.mxu0 0
        %4670 = vmatpush1.bf16.msra.mxu0 0
        %4671 = vmatprep.subr.bf16.mxu0 0
        %4672 = vmatpush1.bf16.msra.mxu0 0
        %4673 = vmatprep.subr.bf16.mxu0 0
        %4674 = vmatpush1.bf16.msra.mxu0 0
        %4675 = vmatprep.subr.bf16.mxu0 0
        %4676 = vmatpush1.bf16.msra.mxu0 0
        %4677 = vmatprep.subr.bf16.mxu0 0
        %4678 = vmatpush1.bf16.msra.mxu0 0
        %4679 = vmatprep.subr.bf16.mxu0 0
        %4680 = vmatpush1.bf16.msra.mxu0 0
        %4681 = vmatprep.subr.bf16.mxu0 0
        %4682 = vmatpush1.bf16.msra.mxu0 0
        %4683 = vmatprep.mubr.bf16.mxu0 0
        %4684 = vmatmul.mubr.bf16.gmra.mrb[0].mxu0 %v4526
        %v4685 = vpop.f32.mrb[0].mxu0
        %v4686 = vadd.f32 0.0, %v4685
        %v4687 = vpop.f32.mrb[0].mxu0
        %v4688 = vadd.f32 0.0, %v4687
        %v4689 = vpop.f32.mrb[0].mxu0
        %v4690 = vpop.f32.mrb[0].mxu0
        %4691 = vdwg.mxu0
        %v4692 = vmax.f32 %v4394, %v4563
        %v4693 = vmax.f32 %v4396, %v4565
        %v4694 = vmax.f32 %v4435, %v4604
        %v4695 = vmax.f32 %v4437, %v4606
        %v4696 = vmax.f32 %v4476, %v4645
        %v4697 = vmax.f32 %v4478, %v4647
        %v4698 = vmax.f32 %v4517, %v4686
        %v4699 = vmax.f32 %v4519, %v4688
        %v4700 = vld [vmem:[%s4] sm:$0x1]
        %v4701 = vld [vmem:[%s6] sm:$0x1]
        %v4703 = vlaneseq
        %v4704 = vshrl.u32 %v4703, 7
        %v4705 = vsub.s32 0, %v4704
        %v4706 = vrot.slane %v4700, %v4705
        %v4708 = vadd.f32 %v4692, %v4706
        %v4709 = vmax.f32 %v4708, 0.0
        %v4710 = vpack.c.bf16 %v4709, %v4709
        %v4711 = vld [vmem:[%s5] sm:$0xf]
        %v4712 = vld [vmem:[%s5 + $0x4] sm:$0xf]
        %v4713 = vld [vmem:[%s5 + $0x8] sm:$0xf]
        %v4714 = vld [vmem:[%s5 + $0xc] sm:$0xf]
        %v4715 = vld [vmem:[%s5 + $0x10] sm:$0xf]
        %v4716 = vld [vmem:[%s5 + $0x14] sm:$0xf]
        %v4717 = vld [vmem:[%s5 + $0x18] sm:$0xf]
        %v4718 = vld [vmem:[%s5 + $0x1c] sm:$0xf]
        %v4719 = vld [vmem:[%s5 + $0x20] sm:$0xf]
        %v4720 = vld [vmem:[%s5 + $0x24] sm:$0xf]
        %v4721 = vld [vmem:[%s5 + $0x28] sm:$0xf]
        %v4722 = vld [vmem:[%s5 + $0x2c] sm:$0xf]
        %v4723 = vld [vmem:[%s5 + $0x30] sm:$0xf]
        %v4724 = vld [vmem:[%s5 + $0x34] sm:$0xf]
        %v4725 = vld [vmem:[%s5 + $0x38] sm:$0xf]
        %v4726 = vld [vmem:[%s5 + $0x3c] sm:$0xf]
        %s4727 = scalar_lea.vmem %s5, 64
        %v4728 = vld [vmem:[%s4727] sm:$0xf]
        %v4729 = vld [vmem:[%s4727 + $0x4] sm:$0xf]
        %v4730 = vld [vmem:[%s4727 + $0x8] sm:$0xf]
        %v4731 = vld [vmem:[%s4727 + $0xc] sm:$0xf]
        %v4732 = vld [vmem:[%s4727 + $0x10] sm:$0xf]
        %v4733 = vld [vmem:[%s4727 + $0x14] sm:$0xf]
        %v4734 = vld [vmem:[%s4727 + $0x18] sm:$0xf]
        %v4735 = vld [vmem:[%s4727 + $0x1c] sm:$0xf]
        %v4736 = vld [vmem:[%s4727 + $0x20] sm:$0xf]
        %v4737 = vld [vmem:[%s4727 + $0x24] sm:$0xf]
        %v4738 = vld [vmem:[%s4727 + $0x28] sm:$0xf]
        %v4739 = vld [vmem:[%s4727 + $0x2c] sm:$0xf]
        %v4740 = vld [vmem:[%s4727 + $0x30] sm:$0xf]
        %v4741 = vld [vmem:[%s4727 + $0x34] sm:$0xf]
        %v4742 = vld [vmem:[%s4727 + $0x38] sm:$0xf]
        %v4743 = vld [vmem:[%s4727 + $0x3c] sm:$0xf]
        %v4745 = vshrl.u32 %v4710, 16
        %v4747 = vshll.u32 %v4710, 16
        %v4749 = vrot.slane %v4747, 1
        %v4750 = vor.u32 %v4745, %v4749
        %v4768 = vunpack.c.l.b16 %v4728
        %v4769 = vunpack.c.l.b16 %v4729
        %v4770 = vunpack.c.l.b16 %v4730
        %v4771 = vunpack.c.l.b16 %v4731
        %v4772 = vunpack.c.l.b16 %v4732
        %v4773 = vunpack.c.l.b16 %v4733
        %v4774 = vunpack.c.l.b16 %v4734
        %v4775 = vunpack.c.l.b16 %v4735
        %v4776 = vunpack.c.l.b16 %v4736
        %v4777 = vunpack.c.l.b16 %v4737
        %v4778 = vunpack.c.l.b16 %v4738
        %v4779 = vunpack.c.l.b16 %v4739
        %v4780 = vunpack.c.l.b16 %v4740
        %v4781 = vunpack.c.l.b16 %v4741
        %v4782 = vunpack.c.l.b16 %v4742
        %v4783 = vunpack.c.l.b16 %v4743
        %v4784 = vpack.c.b16 %v4769, %v4768
        %v4785 = vpack.c.b16 %v4771, %v4770
        %v4786 = vpack.c.b16 %v4773, %v4772
        %v4787 = vpack.c.b16 %v4775, %v4774
        %v4788 = vpack.c.b16 %v4777, %v4776
        %v4789 = vpack.c.b16 %v4779, %v4778
        %v4790 = vpack.c.b16 %v4781, %v4780
        %v4791 = vpack.c.b16 %v4783, %v4782
        %4800 = vmatprep.subr.bf16.mxu0 0
        %4801 = vmatpush1.bf16.msra.mxu0 %v4784
        %4802 = vmatprep.subr.bf16.mxu0 0
        %4803 = vmatpush1.bf16.msra.mxu0 %v4785
        %4804 = vmatprep.subr.bf16.mxu0 0
        %4805 = vmatpush1.bf16.msra.mxu0 %v4786
        %4806 = vmatprep.subr.bf16.mxu0 0
        %4807 = vmatpush1.bf16.msra.mxu0 %v4787
        %4808 = vmatprep.subr.bf16.mxu0 0
        %4809 = vmatpush1.bf16.msra.mxu0 %v4788
        %4810 = vmatprep.subr.bf16.mxu0 0
        %4811 = vmatpush1.bf16.msra.mxu0 %v4789
        %4812 = vmatprep.subr.bf16.mxu0 0
        %4813 = vmatpush1.bf16.msra.mxu0 %v4790
        %4814 = vmatprep.subr.bf16.mxu0 0
        %4815 = vmatpush1.bf16.msra.mxu0 %v4791
        %4816 = vmatprep.subr.bf16.mxu0 0
        %4817 = vmatpush1.bf16.msra.mxu0 0
        %4818 = vmatprep.subr.bf16.mxu0 0
        %4819 = vmatpush1.bf16.msra.mxu0 0
        %4820 = vmatprep.subr.bf16.mxu0 0
        %4821 = vmatpush1.bf16.msra.mxu0 0
        %4822 = vmatprep.subr.bf16.mxu0 0
        %4823 = vmatpush1.bf16.msra.mxu0 0
        %4824 = vmatprep.subr.bf16.mxu0 0
        %4825 = vmatpush1.bf16.msra.mxu0 0
        %4826 = vmatprep.subr.bf16.mxu0 0
        %4827 = vmatpush1.bf16.msra.mxu0 0
        %4828 = vmatprep.subr.bf16.mxu0 0
        %4829 = vmatpush1.bf16.msra.mxu0 0
        %4830 = vmatprep.subr.bf16.mxu0 0
        %4831 = vmatpush1.bf16.msra.mxu0 0
        %4832 = vmatprep.mubr.bf16.mxu0 0
        %4833 = vmatmul.mubr.bf16.gmra.mrb[0].mxu0 %v4750
        %v4834 = vpop.f32.mrb[0].mxu0
        %v4835 = vadd.f32 0.0, %v4834
        %v4836 = vpop.f32.mrb[0].mxu0
        %v4837 = vpop.f32.mrb[0].mxu0
        %v4838 = vpop.f32.mrb[0].mxu0
        %4839 = vdwg.mxu0
        %v4856 = vunpack.c.l.b16 %v4711
        %v4857 = vunpack.c.l.b16 %v4712
        %v4858 = vunpack.c.l.b16 %v4713
        %v4859 = vunpack.c.l.b16 %v4714
        %v4860 = vunpack.c.l.b16 %v4715
        %v4861 = vunpack.c.l.b16 %v4716
        %v4862 = vunpack.c.l.b16 %v4717
        %v4863 = vunpack.c.l.b16 %v4718
        %v4864 = vunpack.c.l.b16 %v4719
        %v4865 = vunpack.c.l.b16 %v4720
        %v4866 = vunpack.c.l.b16 %v4721
        %v4867 = vunpack.c.l.b16 %v4722
        %v4868 = vunpack.c.l.b16 %v4723
        %v4869 = vunpack.c.l.b16 %v4724
        %v4870 = vunpack.c.l.b16 %v4725
        %v4871 = vunpack.c.l.b16 %v4726
        %v4872 = vpack.c.b16 %v4857, %v4856
        %v4873 = vpack.c.b16 %v4859, %v4858
        %v4874 = vpack.c.b16 %v4861, %v4860
        %v4875 = vpack.c.b16 %v4863, %v4862
        %v4876 = vpack.c.b16 %v4865, %v4864
        %v4877 = vpack.c.b16 %v4867, %v4866
        %v4878 = vpack.c.b16 %v4869, %v4868
        %v4879 = vpack.c.b16 %v4871, %v4870
        %4888 = vmatprep.subr.bf16.mxu0 0
        %4889 = vmatpush1.bf16.msra.mxu0 %v4872
        %4890 = vmatprep.subr.bf16.mxu0 0
        %4891 = vmatpush1.bf16.msra.mxu0 %v4873
        %4892 = vmatprep.subr.bf16.mxu0 0
        %4893 = vmatpush1.bf16.msra.mxu0 %v4874
        %4894 = vmatprep.subr.bf16.mxu0 0
        %4895 = vmatpush1.bf16.msra.mxu0 %v4875
        %4896 = vmatprep.subr.bf16.mxu0 0
        %4897 = vmatpush1.bf16.msra.mxu0 %v4876
        %4898 = vmatprep.subr.bf16.mxu0 0
        %4899 = vmatpush1.bf16.msra.mxu0 %v4877
        %4900 = vmatprep.subr.bf16.mxu0 0
        %4901 = vmatpush1.bf16.msra.mxu0 %v4878
        %4902 = vmatprep.subr.bf16.mxu0 0
        %4903 = vmatpush1.bf16.msra.mxu0 %v4879
        %4904 = vmatprep.subr.bf16.mxu0 0
        %4905 = vmatpush1.bf16.msra.mxu0 0
        %4906 = vmatprep.subr.bf16.mxu0 0
        %4907 = vmatpush1.bf16.msra.mxu0 0
        %4908 = vmatprep.subr.bf16.mxu0 0
        %4909 = vmatpush1.bf16.msra.mxu0 0
        %4910 = vmatprep.subr.bf16.mxu0 0
        %4911 = vmatpush1.bf16.msra.mxu0 0
        %4912 = vmatprep.subr.bf16.mxu0 0
        %4913 = vmatpush1.bf16.msra.mxu0 0
        %4914 = vmatprep.subr.bf16.mxu0 0
        %4915 = vmatpush1.bf16.msra.mxu0 0
        %4916 = vmatprep.subr.bf16.mxu0 0
        %4917 = vmatpush1.bf16.msra.mxu0 0
        %4918 = vmatprep.subr.bf16.mxu0 0
        %4919 = vmatpush1.bf16.msra.mxu0 0
        %4920 = vmatprep.mubr.bf16.mxu0 0
        %4921 = vmatmul.mubr.bf16.gmra.mrb[0].mxu0 %v4710
        %v4922 = vpop.f32.mrb[0].mxu0
        %v4923 = vadd.f32 %v4835, %v4922
        %v4924 = vpop.f32.mrb[0].mxu0
        %v4925 = vpop.f32.mrb[0].mxu0
        %v4926 = vpop.f32.mrb[0].mxu0
        %4927 = vdwg.mxu0
        %s4928 = scalar_lea.vmem %s5, 128
        %v4929 = vld [vmem:[%s4928] sm:$0xf]
        %v4930 = vld [vmem:[%s4928 + $0x4] sm:$0xf]
        %v4931 = vld [vmem:[%s4928 + $0x8] sm:$0xf]
        %v4932 = vld [vmem:[%s4928 + $0xc] sm:$0xf]
        %v4933 = vld [vmem:[%s4928 + $0x10] sm:$0xf]
        %v4934 = vld [vmem:[%s4928 + $0x14] sm:$0xf]
        %v4935 = vld [vmem:[%s4928 + $0x18] sm:$0xf]
        %v4936 = vld [vmem:[%s4928 + $0x1c] sm:$0xf]
        %v4937 = vld [vmem:[%s4928 + $0x20] sm:$0xf]
        %v4938 = vld [vmem:[%s4928 + $0x24] sm:$0xf]
        %v4939 = vld [vmem:[%s4928 + $0x28] sm:$0xf]
        %v4940 = vld [vmem:[%s4928 + $0x2c] sm:$0xf]
        %v4941 = vld [vmem:[%s4928 + $0x30] sm:$0xf]
        %v4942 = vld [vmem:[%s4928 + $0x34] sm:$0xf]
        %v4943 = vld [vmem:[%s4928 + $0x38] sm:$0xf]
        %v4944 = vld [vmem:[%s4928 + $0x3c] sm:$0xf]
        %v4946 = vrot.slane %v4710, 1
        %v4964 = vunpack.c.l.b16 %v4929
        %v4965 = vunpack.c.l.b16 %v4930
        %v4966 = vunpack.c.l.b16 %v4931
        %v4967 = vunpack.c.l.b16 %v4932
        %v4968 = vunpack.c.l.b16 %v4933
        %v4969 = vunpack.c.l.b16 %v4934
        %v4970 = vunpack.c.l.b16 %v4935
        %v4971 = vunpack.c.l.b16 %v4936
        %v4972 = vunpack.c.l.b16 %v4937
        %v4973 = vunpack.c.l.b16 %v4938
        %v4974 = vunpack.c.l.b16 %v4939
        %v4975 = vunpack.c.l.b16 %v4940
        %v4976 = vunpack.c.l.b16 %v4941
        %v4977 = vunpack.c.l.b16 %v4942
        %v4978 = vunpack.c.l.b16 %v4943
        %v4979 = vunpack.c.l.b16 %v4944
        %v4980 = vpack.c.b16 %v4965, %v4964
        %v4981 = vpack.c.b16 %v4967, %v4966
        %v4982 = vpack.c.b16 %v4969, %v4968
        %v4983 = vpack.c.b16 %v4971, %v4970
        %v4984 = vpack.c.b16 %v4973, %v4972
        %v4985 = vpack.c.b16 %v4975, %v4974
        %v4986 = vpack.c.b16 %v4977, %v4976
        %v4987 = vpack.c.b16 %v4979, %v4978
        %4996 = vmatprep.subr.bf16.mxu0 0
        %4997 = vmatpush1.bf16.msra.mxu0 %v4980
        %4998 = vmatprep.subr.bf16.mxu0 0
        %4999 = vmatpush1.bf16.msra.mxu0 %v4981
        %5000 = vmatprep.subr.bf16.mxu0 0
        %5001 = vmatpush1.bf16.msra.mxu0 %v4982
        %5002 = vmatprep.subr.bf16.mxu0 0
        %5003 = vmatpush1.bf16.msra.mxu0 %v4983
        %5004 = vmatprep.subr.bf16.mxu0 0
        %5005 = vmatpush1.bf16.msra.mxu0 %v4984
        %5006 = vmatprep.subr.bf16.mxu0 0
        %5007 = vmatpush1.bf16.msra.mxu0 %v4985
        %5008 = vmatprep.subr.bf16.mxu0 0
        %5009 = vmatpush1.bf16.msra.mxu0 %v4986
        %5010 = vmatprep.subr.bf16.mxu0 0
        %5011 = vmatpush1.bf16.msra.mxu0 %v4987
        %5012 = vmatprep.subr.bf16.mxu0 0
        %5013 = vmatpush1.bf16.msra.mxu0 0
        %5014 = vmatprep.subr.bf16.mxu0 0
        %5015 = vmatpush1.bf16.msra.mxu0 0
        %5016 = vmatprep.subr.bf16.mxu0 0
        %5017 = vmatpush1.bf16.msra.mxu0 0
        %5018 = vmatprep.subr.bf16.mxu0 0
        %5019 = vmatpush1.bf16.msra.mxu0 0
        %5020 = vmatprep.subr.bf16.mxu0 0
        %5021 = vmatpush1.bf16.msra.mxu0 0
        %5022 = vmatprep.subr.bf16.mxu0 0
        %5023 = vmatpush1.bf16.msra.mxu0 0
        %5024 = vmatprep.subr.bf16.mxu0 0
        %5025 = vmatpush1.bf16.msra.mxu0 0
        %5026 = vmatprep.subr.bf16.mxu0 0
        %5027 = vmatpush1.bf16.msra.mxu0 0
        %5028 = vmatprep.mubr.bf16.mxu0 0
        %5029 = vmatmul.mubr.bf16.gmra.mrb[0].mxu0 %v4946
        %v5030 = vpop.f32.mrb[0].mxu0
        %v5031 = vadd.f32 0.0, %v5030
        %v5032 = vpop.f32.mrb[0].mxu0
        %v5033 = vpop.f32.mrb[0].mxu0
        %v5034 = vpop.f32.mrb[0].mxu0
        %5035 = vdwg.mxu0
        %v5036 = vadd.f32 %v4923, %v5031
        %v5038 = vlaneseq
        %v5039 = vshrl.u32 %v5038, 7
        %v5040 = vsub.s32 0, %v5039
        %v5041 = vrot.slane %v4701, %v5040
        %v5043 = vadd.f32 %v5036, %v5041
        %v5044 = vmax.f32 %v5043, 0.0
        %v5045 = vpack.c.bf16 %v5044, %v5044
        %v5048 = vunpack.c.l.s4 1966171168
        %v5049 = vunpack.c.0.s8 %v5048
        %v5050 = vlaneseq
        %v5051 = vshrl.u32 %v5050, 7
        %v5052 = vsub.s32 %v5049, %v5051
        %v5053 = vrot.slane %v5045, %v5052
        %v5054 = vcombine.high %v5053, %v5053
        %v5056 = vunpack.c.l.s4 1966171168
        %v5057 = vunpack.c.0.s8 %v5056
        %v5058 = vlaneseq
        %v5059 = vshrl.u32 %v5058, 7
        %v5060 = vsub.s32 %v5057, %v5059
        %v5061 = vrot.slane %v5053, %v5060
        %v5063 = vunpack.c.l.s4 1966171168
        %v5064 = vunpack.c.0.s8 %v5063
        %v5065 = vlaneseq
        %v5066 = vshrl.u32 %v5065, 7
        %v5067 = vsub.s32 %v5064, %v5066
        %v5068 = vrot.slane %v5054, %v5067
        %v5069 = vunpack.i.l.s16 %v5061
        %v5070 = vunpack.i.h.s16 %v5061
        %v5071 = vunpack.i.l.s16 %v5068
        %v5072 = vunpack.i.h.s16 %v5068
        %v5073 = vpack.i.b16 %v5069, %v5069
        %v5074 = vpack.i.b16 %v5070, %v5070
        %v5075 = vpack.i.b16 %v5071, %v5071
        %v5076 = vpack.i.b16 %v5072, %v5072
        %v5078 = vunpack.c.l.s4 286326784
        %v5079 = vunpack.c.0.s8 %v5078
        %v5080 = vlaneseq
        %v5081 = vshrl.u32 %v5080, 7
        %v5082 = vsub.s32 %v5079, %v5081
        %v5083 = vrot.slane %v5073, %v5082
        %v5085 = vunpack.c.l.s4 286326784
        %v5086 = vunpack.c.0.s8 %v5085
        %v5087 = vlaneseq
        %v5088 = vshrl.u32 %v5087, 7
        %v5089 = vsub.s32 %v5086, %v5088
        %v5090 = vrot.slane %v5074, %v5089
        %v5092 = vunpack.c.l.s4 286326784
        %v5093 = vunpack.c.0.s8 %v5092
        %v5094 = vlaneseq
        %v5095 = vshrl.u32 %v5094, 7
        %v5096 = vsub.s32 %v5093, %v5095
        %v5097 = vrot.slane %v5075, %v5096
        %v5099 = vunpack.c.l.s4 286326784
        %v5100 = vunpack.c.0.s8 %v5099
        %v5101 = vlaneseq
        %v5102 = vshrl.u32 %v5101, 7
        %v5103 = vsub.s32 %v5100, %v5102
        %v5104 = vrot.slane %v5076, %v5103
        %vm5109 = vcmask 1040384
        %vm5110 = vsmask.f32 256
        %vm5111 = vmand %vm5109, %vm5110
        %v5112 = vld [vmem:[#allocation2] sm:$0x1]
        %v5113 = vsel %vm5111, %v5083, %v5112
        %5114 = vst [vmem:[#allocation2] sm:$0x1] %v5113
        %v5115 = vld [vmem:[#allocation2 + $0x4] sm:$0x1]
        %v5116 = vsel %vm5111, %v5090, %v5115
        %5117 = vst [vmem:[#allocation2 + $0x4] sm:$0x1] %v5116
        %v5118 = vld [vmem:[#allocation2 + $0x8] sm:$0x1]
        %v5119 = vsel %vm5111, %v5097, %v5118
        %5120 = vst [vmem:[#allocation2 + $0x8] sm:$0x1] %v5119
        %v5121 = vld [vmem:[#allocation2 + $0xc] sm:$0x1]
        %v5122 = vsel %vm5111, %v5104, %v5121
        %5123 = vst [vmem:[#allocation2 + $0xc] sm:$0x1] %v5122
        %v5124 = vadd.f32 %v4693, %v4706
        %v5125 = vmax.f32 %v5124, 0.0
        %v5126 = vpack.c.bf16 %v5125, %v5125
        %v5127 = vld [vmem:[%s5] sm:$0xf]
        %v5128 = vld [vmem:[%s5 + $0x4] sm:$0xf]
        %v5129 = vld [vmem:[%s5 + $0x8] sm:$0xf]
        %v5130 = vld [vmem:[%s5 + $0xc] sm:$0xf]
        %v5131 = vld [vmem:[%s5 + $0x10] sm:$0xf]
        %v5132 = vld [vmem:[%s5 + $0x14] sm:$0xf]
        %v5133 = vld [vmem:[%s5 + $0x18] sm:$0xf]
        %v5134 = vld [vmem:[%s5 + $0x1c] sm:$0xf]
        %v5135 = vld [vmem:[%s5 + $0x20] sm:$0xf]
        %v5136 = vld [vmem:[%s5 + $0x24] sm:$0xf]
        %v5137 = vld [vmem:[%s5 + $0x28] sm:$0xf]
        %v5138 = vld [vmem:[%s5 + $0x2c] sm:$0xf]
        %v5139 = vld [vmem:[%s5 + $0x30] sm:$0xf]
        %v5140 = vld [vmem:[%s5 + $0x34] sm:$0xf]
        %v5141 = vld [vmem:[%s5 + $0x38] sm:$0xf]
        %v5142 = vld [vmem:[%s5 + $0x3c] sm:$0xf]
        %v5143 = vld [vmem:[%s4727] sm:$0xf]
        %v5144 = vld [vmem:[%s4727 + $0x4] sm:$0xf]
        %v5145 = vld [vmem:[%s4727 + $0x8] sm:$0xf]
        %v5146 = vld [vmem:[%s4727 + $0xc] sm:$0xf]
        %v5147 = vld [vmem:[%s4727 + $0x10] sm:$0xf]
        %v5148 = vld [vmem:[%s4727 + $0x14] sm:$0xf]
        %v5149 = vld [vmem:[%s4727 + $0x18] sm:$0xf]
        %v5150 = vld [vmem:[%s4727 + $0x1c] sm:$0xf]
        %v5151 = vld [vmem:[%s4727 + $0x20] sm:$0xf]
        %v5152 = vld [vmem:[%s4727 + $0x24] sm:$0xf]
        %v5153 = vld [vmem:[%s4727 + $0x28] sm:$0xf]
        %v5154 = vld [vmem:[%s4727 + $0x2c] sm:$0xf]
        %v5155 = vld [vmem:[%s4727 + $0x30] sm:$0xf]
        %v5156 = vld [vmem:[%s4727 + $0x34] sm:$0xf]
        %v5157 = vld [vmem:[%s4727 + $0x38] sm:$0xf]
        %v5158 = vld [vmem:[%s4727 + $0x3c] sm:$0xf]
        %v5160 = vshrl.u32 %v5126, 16
        %v5162 = vshll.u32 %v5126, 16
        %v5164 = vrot.slane %v5162, 1
        %v5165 = vor.u32 %v5160, %v5164
        %v5183 = vunpack.c.l.b16 %v5143
        %v5184 = vunpack.c.l.b16 %v5144
        %v5185 = vunpack.c.l.b16 %v5145
        %v5186 = vunpack.c.l.b16 %v5146
        %v5187 = vunpack.c.l.b16 %v5147
        %v5188 = vunpack.c.l.b16 %v5148
        %v5189 = vunpack.c.l.b16 %v5149
        %v5190 = vunpack.c.l.b16 %v5150
        %v5191 = vunpack.c.l.b16 %v5151
        %v5192 = vunpack.c.l.b16 %v5152
        %v5193 = vunpack.c.l.b16 %v5153
        %v5194 = vunpack.c.l.b16 %v5154
        %v5195 = vunpack.c.l.b16 %v5155
        %v5196 = vunpack.c.l.b16 %v5156
        %v5197 = vunpack.c.l.b16 %v5157
        %v5198 = vunpack.c.l.b16 %v5158
        %v5199 = vpack.c.b16 %v5184, %v5183
        %v5200 = vpack.c.b16 %v5186, %v5185
        %v5201 = vpack.c.b16 %v5188, %v5187
        %v5202 = vpack.c.b16 %v5190, %v5189
        %v5203 = vpack.c.b16 %v5192, %v5191
        %v5204 = vpack.c.b16 %v5194, %v5193
        %v5205 = vpack.c.b16 %v5196, %v5195
        %v5206 = vpack.c.b16 %v5198, %v5197
        %5215 = vmatprep.subr.bf16.mxu0 0
        %5216 = vmatpush1.bf16.msra.mxu0 %v5199
        %5217 = vmatprep.subr.bf16.mxu0 0
        %5218 = vmatpush1.bf16.msra.mxu0 %v5200
        %5219 = vmatprep.subr.bf16.mxu0 0
        %5220 = vmatpush1.bf16.msra.mxu0 %v5201
        %5221 = vmatprep.subr.bf16.mxu0 0
        %5222 = vmatpush1.bf16.msra.mxu0 %v5202
        %5223 = vmatprep.subr.bf16.mxu0 0
        %5224 = vmatpush1.bf16.msra.mxu0 %v5203
        %5225 = vmatprep.subr.bf16.mxu0 0
        %5226 = vmatpush1.bf16.msra.mxu0 %v5204
        %5227 = vmatprep.subr.bf16.mxu0 0
        %5228 = vmatpush1.bf16.msra.mxu0 %v5205
        %5229 = vmatprep.subr.bf16.mxu0 0
        %5230 = vmatpush1.bf16.msra.mxu0 %v5206
        %5231 = vmatprep.subr.bf16.mxu0 0
        %5232 = vmatpush1.bf16.msra.mxu0 0
        %5233 = vmatprep.subr.bf16.mxu0 0
        %5234 = vmatpush1.bf16.msra.mxu0 0
        %5235 = vmatprep.subr.bf16.mxu0 0
        %5236 = vmatpush1.bf16.msra.mxu0 0
        %5237 = vmatprep.subr.bf16.mxu0 0
        %5238 = vmatpush1.bf16.msra.mxu0 0
        %5239 = vmatprep.subr.bf16.mxu0 0
        %5240 = vmatpush1.bf16.msra.mxu0 0
        %5241 = vmatprep.subr.bf16.mxu0 0
        %5242 = vmatpush1.bf16.msra.mxu0 0
        %5243 = vmatprep.subr.bf16.mxu0 0
        %5244 = vmatpush1.bf16.msra.mxu0 0
        %5245 = vmatprep.subr.bf16.mxu0 0
        %5246 = vmatpush1.bf16.msra.mxu0 0
        %5247 = vmatprep.mubr.bf16.mxu0 0
        %5248 = vmatmul.mubr.bf16.gmra.mrb[0].mxu0 %v5165
        %v5249 = vpop.f32.mrb[0].mxu0
        %v5250 = vadd.f32 0.0, %v5249
        %v5251 = vpop.f32.mrb[0].mxu0
        %v5252 = vpop.f32.mrb[0].mxu0
        %v5253 = vpop.f32.mrb[0].mxu0
        %5254 = vdwg.mxu0
        %v5271 = vunpack.c.l.b16 %v5127
        %v5272 = vunpack.c.l.b16 %v5128
        %v5273 = vunpack.c.l.b16 %v5129
        %v5274 = vunpack.c.l.b16 %v5130
        %v5275 = vunpack.c.l.b16 %v5131
        %v5276 = vunpack.c.l.b16 %v5132
        %v5277 = vunpack.c.l.b16 %v5133
        %v5278 = vunpack.c.l.b16 %v5134
        %v5279 = vunpack.c.l.b16 %v5135
        %v5280 = vunpack.c.l.b16 %v5136
        %v5281 = vunpack.c.l.b16 %v5137
        %v5282 = vunpack.c.l.b16 %v5138
        %v5283 = vunpack.c.l.b16 %v5139
        %v5284 = vunpack.c.l.b16 %v5140
        %v5285 = vunpack.c.l.b16 %v5141
        %v5286 = vunpack.c.l.b16 %v5142
        %v5287 = vpack.c.b16 %v5272, %v5271
        %v5288 = vpack.c.b16 %v5274, %v5273
        %v5289 = vpack.c.b16 %v5276, %v5275
        %v5290 = vpack.c.b16 %v5278, %v5277
        %v5291 = vpack.c.b16 %v5280, %v5279
        %v5292 = vpack.c.b16 %v5282, %v5281
        %v5293 = vpack.c.b16 %v5284, %v5283
        %v5294 = vpack.c.b16 %v5286, %v5285
        %5303 = vmatprep.subr.bf16.mxu0 0
        %5304 = vmatpush1.bf16.msra.mxu0 %v5287
        %5305 = vmatprep.subr.bf16.mxu0 0
        %5306 = vmatpush1.bf16.msra.mxu0 %v5288
        %5307 = vmatprep.subr.bf16.mxu0 0
        %5308 = vmatpush1.bf16.msra.mxu0 %v5289
        %5309 = vmatprep.subr.bf16.mxu0 0
        %5310 = vmatpush1.bf16.msra.mxu0 %v5290
        %5311 = vmatprep.subr.bf16.mxu0 0
        %5312 = vmatpush1.bf16.msra.mxu0 %v5291
        %5313 = vmatprep.subr.bf16.mxu0 0
        %5314 = vmatpush1.bf16.msra.mxu0 %v5292
        %5315 = vmatprep.subr.bf16.mxu0 0
        %5316 = vmatpush1.bf16.msra.mxu0 %v5293
        %5317 = vmatprep.subr.bf16.mxu0 0
        %5318 = vmatpush1.bf16.msra.mxu0 %v5294
        %5319 = vmatprep.subr.bf16.mxu0 0
        %5320 = vmatpush1.bf16.msra.mxu0 0
        %5321 = vmatprep.subr.bf16.mxu0 0
        %5322 = vmatpush1.bf16.msra.mxu0 0
        %5323 = vmatprep.subr.bf16.mxu0 0
        %5324 = vmatpush1.bf16.msra.mxu0 0
        %5325 = vmatprep.subr.bf16.mxu0 0
        %5326 = vmatpush1.bf16.msra.mxu0 0
        %5327 = vmatprep.subr.bf16.mxu0 0
        %5328 = vmatpush1.bf16.msra.mxu0 0
        %5329 = vmatprep.subr.bf16.mxu0 0
        %5330 = vmatpush1.bf16.msra.mxu0 0
        %5331 = vmatprep.subr.bf16.mxu0 0
        %5332 = vmatpush1.bf16.msra.mxu0 0
        %5333 = vmatprep.subr.bf16.mxu0 0
        %5334 = vmatpush1.bf16.msra.mxu0 0
        %5335 = vmatprep.mubr.bf16.mxu0 0
        %5336 = vmatmul.mubr.bf16.gmra.mrb[0].mxu0 %v5126
        %v5337 = vpop.f32.mrb[0].mxu0
        %v5338 = vadd.f32 %v5250, %v5337
        %v5339 = vpop.f32.mrb[0].mxu0
        %v5340 = vpop.f32.mrb[0].mxu0
        %v5341 = vpop.f32.mrb[0].mxu0
        %5342 = vdwg.mxu0
        %v5343 = vld [vmem:[%s4928] sm:$0xf]
        %v5344 = vld [vmem:[%s4928 + $0x4] sm:$0xf]
        %v5345 = vld [vmem:[%s4928 + $0x8] sm:$0xf]
        %v5346 = vld [vmem:[%s4928 + $0xc] sm:$0xf]
        %v5347 = vld [vmem:[%s4928 + $0x10] sm:$0xf]
        %v5348 = vld [vmem:[%s4928 + $0x14] sm:$0xf]
        %v5349 = vld [vmem:[%s4928 + $0x18] sm:$0xf]
        %v5350 = vld [vmem:[%s4928 + $0x1c] sm:$0xf]
        %v5351 = vld [vmem:[%s4928 + $0x20] sm:$0xf]
        %v5352 = vld [vmem:[%s4928 + $0x24] sm:$0xf]
        %v5353 = vld [vmem:[%s4928 + $0x28] sm:$0xf]
        %v5354 = vld [vmem:[%s4928 + $0x2c] sm:$0xf]
        %v5355 = vld [vmem:[%s4928 + $0x30] sm:$0xf]
        %v5356 = vld [vmem:[%s4928 + $0x34] sm:$0xf]
        %v5357 = vld [vmem:[%s4928 + $0x38] sm:$0xf]
        %v5358 = vld [vmem:[%s4928 + $0x3c] sm:$0xf]
        %v5360 = vrot.slane %v5126, 1
        %v5378 = vunpack.c.l.b16 %v5343
        %v5379 = vunpack.c.l.b16 %v5344
        %v5380 = vunpack.c.l.b16 %v5345
        %v5381 = vunpack.c.l.b16 %v5346
        %v5382 = vunpack.c.l.b16 %v5347
        %v5383 = vunpack.c.l.b16 %v5348
        %v5384 = vunpack.c.l.b16 %v5349
        %v5385 = vunpack.c.l.b16 %v5350
        %v5386 = vunpack.c.l.b16 %v5351
        %v5387 = vunpack.c.l.b16 %v5352
        %v5388 = vunpack.c.l.b16 %v5353
        %v5389 = vunpack.c.l.b16 %v5354
        %v5390 = vunpack.c.l.b16 %v5355
        %v5391 = vunpack.c.l.b16 %v5356
        %v5392 = vunpack.c.l.b16 %v5357
        %v5393 = vunpack.c.l.b16 %v5358
        %v5394 = vpack.c.b16 %v5379, %v5378
        %v5395 = vpack.c.b16 %v5381, %v5380
        %v5396 = vpack.c.b16 %v5383, %v5382
        %v5397 = vpack.c.b16 %v5385, %v5384
        %v5398 = vpack.c.b16 %v5387, %v5386
        %v5399 = vpack.c.b16 %v5389, %v5388
        %v5400 = vpack.c.b16 %v5391, %v5390
        %v5401 = vpack.c.b16 %v5393, %v5392
        %5410 = vmatprep.subr.bf16.mxu0 0
        %5411 = vmatpush1.bf16.msra.mxu0 %v5394
        %5412 = vmatprep.subr.bf16.mxu0 0
        %5413 = vmatpush1.bf16.msra.mxu0 %v5395
        %5414 = vmatprep.subr.bf16.mxu0 0
        %5415 = vmatpush1.bf16.msra.mxu0 %v5396
        %5416 = vmatprep.subr.bf16.mxu0 0
        %5417 = vmatpush1.bf16.msra.mxu0 %v5397
        %5418 = vmatprep.subr.bf16.mxu0 0
        %5419 = vmatpush1.bf16.msra.mxu0 %v5398
        %5420 = vmatprep.subr.bf16.mxu0 0
        %5421 = vmatpush1.bf16.msra.mxu0 %v5399
        %5422 = vmatprep.subr.bf16.mxu0 0
        %5423 = vmatpush1.bf16.msra.mxu0 %v5400
        %5424 = vmatprep.subr.bf16.mxu0 0
        %5425 = vmatpush1.bf16.msra.mxu0 %v5401
        %5426 = vmatprep.subr.bf16.mxu0 0
        %5427 = vmatpush1.bf16.msra.mxu0 0
        %5428 = vmatprep.subr.bf16.mxu0 0
        %5429 = vmatpush1.bf16.msra.mxu0 0
        %5430 = vmatprep.subr.bf16.mxu0 0
        %5431 = vmatpush1.bf16.msra.mxu0 0
        %5432 = vmatprep.subr.bf16.mxu0 0
        %5433 = vmatpush1.bf16.msra.mxu0 0
        %5434 = vmatprep.subr.bf16.mxu0 0
        %5435 = vmatpush1.bf16.msra.mxu0 0
        %5436 = vmatprep.subr.bf16.mxu0 0
        %5437 = vmatpush1.bf16.msra.mxu0 0
        %5438 = vmatprep.subr.bf16.mxu0 0
        %5439 = vmatpush1.bf16.msra.mxu0 0
        %5440 = vmatprep.subr.bf16.mxu0 0
        %5441 = vmatpush1.bf16.msra.mxu0 0
        %5442 = vmatprep.mubr.bf16.mxu0 0
        %5443 = vmatmul.mubr.bf16.gmra.mrb[0].mxu0 %v5360
        %v5444 = vpop.f32.mrb[0].mxu0
        %v5445 = vadd.f32 0.0, %v5444
        %v5446 = vpop.f32.mrb[0].mxu0
        %v5447 = vpop.f32.mrb[0].mxu0
        %v5448 = vpop.f32.mrb[0].mxu0
        %5449 = vdwg.mxu0
        %v5450 = vadd.f32 %v5338, %v5445
        %v5451 = vadd.f32 %v5450, %v5041
        %v5452 = vmax.f32 %v5451, 0.0
        %v5453 = vpack.c.bf16 %v5452, %v5452
        %v5456 = vunpack.c.l.s4 1966171168
        %v5457 = vunpack.c.0.s8 %v5456
        %v5458 = vlaneseq
        %v5459 = vshrl.u32 %v5458, 7
        %v5460 = vsub.s32 %v5457, %v5459
        %v5461 = vrot.slane %v5453, %v5460
        %v5462 = vcombine.high %v5461, %v5461
        %v5464 = vunpack.c.l.s4 1966171168
        %v5465 = vunpack.c.0.s8 %v5464
        %v5466 = vlaneseq
        %v5467 = vshrl.u32 %v5466, 7
        %v5468 = vsub.s32 %v5465, %v5467
        %v5469 = vrot.slane %v5461, %v5468
        %v5471 = vunpack.c.l.s4 1966171168
        %v5472 = vunpack.c.0.s8 %v5471
        %v5473 = vlaneseq
        %v5474 = vshrl.u32 %v5473, 7
        %v5475 = vsub.s32 %v5472, %v5474
        %v5476 = vrot.slane %v5462, %v5475
        %v5477 = vunpack.i.l.s16 %v5469
        %v5478 = vunpack.i.h.s16 %v5469
        %v5479 = vunpack.i.l.s16 %v5476
        %v5480 = vunpack.i.h.s16 %v5476
        %v5481 = vpack.i.b16 %v5477, %v5477
        %v5482 = vpack.i.b16 %v5478, %v5478
        %v5483 = vpack.i.b16 %v5479, %v5479
        %v5484 = vpack.i.b16 %v5480, %v5480
        %v5486 = vunpack.c.l.s4 286326784
        %v5487 = vunpack.c.0.s8 %v5486
        %v5488 = vlaneseq
        %v5489 = vshrl.u32 %v5488, 7
        %v5490 = vsub.s32 %v5487, %v5489
        %v5491 = vrot.slane %v5481, %v5490
        %v5493 = vunpack.c.l.s4 286326784
        %v5494 = vunpack.c.0.s8 %v5493
        %v5495 = vlaneseq
        %v5496 = vshrl.u32 %v5495, 7
        %v5497 = vsub.s32 %v5494, %v5496
        %v5498 = vrot.slane %v5482, %v5497
        %v5500 = vunpack.c.l.s4 286326784
        %v5501 = vunpack.c.0.s8 %v5500
        %v5502 = vlaneseq
        %v5503 = vshrl.u32 %v5502, 7
        %v5504 = vsub.s32 %v5501, %v5503
        %v5505 = vrot.slane %v5483, %v5504
        %v5507 = vunpack.c.l.s4 286326784
        %v5508 = vunpack.c.0.s8 %v5507
        %v5509 = vlaneseq
        %v5510 = vshrl.u32 %v5509, 7
        %v5511 = vsub.s32 %v5508, %v5510
        %v5512 = vrot.slane %v5484, %v5511
        %vm5517 = vsmask.f32 7938
        %vm5518 = vmand %vm5109, %vm5517
        %v5519 = vld [vmem:[#allocation2] sm:$0x1]
        %v5520 = vsel %vm5518, %v5491, %v5519
        %5521 = vst [vmem:[#allocation2] sm:$0x1] %v5520
        %v5522 = vld [vmem:[#allocation2 + $0x4] sm:$0x1]
        %v5523 = vsel %vm5518, %v5498, %v5522
        %5524 = vst [vmem:[#allocation2 + $0x4] sm:$0x1] %v5523
        %v5525 = vld [vmem:[#allocation2 + $0x8] sm:$0x1]
        %v5526 = vsel %vm5518, %v5505, %v5525
        %5527 = vst [vmem:[#allocation2 + $0x8] sm:$0x1] %v5526
        %v5528 = vld [vmem:[#allocation2 + $0xc] sm:$0x1]
        %v5529 = vsel %vm5518, %v5512, %v5528
        %5530 = vst [vmem:[#allocation2 + $0xc] sm:$0x1] %v5529
        %v5531 = vadd.f32 %v4694, %v4706
        %v5532 = vmax.f32 %v5531, 0.0
        %v5533 = vpack.c.bf16 %v5532, %v5532
        %v5534 = vld [vmem:[%s5] sm:$0xf]
        %v5535 = vld [vmem:[%s5 + $0x4] sm:$0xf]
        %v5536 = vld [vmem:[%s5 + $0x8] sm:$0xf]
        %v5537 = vld [vmem:[%s5 + $0xc] sm:$0xf]
        %v5538 = vld [vmem:[%s5 + $0x10] sm:$0xf]
        %v5539 = vld [vmem:[%s5 + $0x14] sm:$0xf]
        %v5540 = vld [vmem:[%s5 + $0x18] sm:$0xf]
        %v5541 = vld [vmem:[%s5 + $0x1c] sm:$0xf]
        %v5542 = vld [vmem:[%s5 + $0x20] sm:$0xf]
        %v5543 = vld [vmem:[%s5 + $0x24] sm:$0xf]
        %v5544 = vld [vmem:[%s5 + $0x28] sm:$0xf]
        %v5545 = vld [vmem:[%s5 + $0x2c] sm:$0xf]
        %v5546 = vld [vmem:[%s5 + $0x30] sm:$0xf]
        %v5547 = vld [vmem:[%s5 + $0x34] sm:$0xf]
        %v5548 = vld [vmem:[%s5 + $0x38] sm:$0xf]
        %v5549 = vld [vmem:[%s5 + $0x3c] sm:$0xf]
        %v5550 = vld [vmem:[%s4727] sm:$0xf]
        %v5551 = vld [vmem:[%s4727 + $0x4] sm:$0xf]
        %v5552 = vld [vmem:[%s4727 + $0x8] sm:$0xf]
        %v5553 = vld [vmem:[%s4727 + $0xc] sm:$0xf]
        %v5554 = vld [vmem:[%s4727 + $0x10] sm:$0xf]
        %v5555 = vld [vmem:[%s4727 + $0x14] sm:$0xf]
        %v5556 = vld [vmem:[%s4727 + $0x18] sm:$0xf]
        %v5557 = vld [vmem:[%s4727 + $0x1c] sm:$0xf]
        %v5558 = vld [vmem:[%s4727 + $0x20] sm:$0xf]
        %v5559 = vld [vmem:[%s4727 + $0x24] sm:$0xf]
        %v5560 = vld [vmem:[%s4727 + $0x28] sm:$0xf]
        %v5561 = vld [vmem:[%s4727 + $0x2c] sm:$0xf]
        %v5562 = vld [vmem:[%s4727 + $0x30] sm:$0xf]
        %v5563 = vld [vmem:[%s4727 + $0x34] sm:$0xf]
        %v5564 = vld [vmem:[%s4727 + $0x38] sm:$0xf]
        %v5565 = vld [vmem:[%s4727 + $0x3c] sm:$0xf]
        %v5567 = vshrl.u32 %v5533, 16
        %v5569 = vshll.u32 %v5533, 16
        %v5571 = vrot.slane %v5569, 1
        %v5572 = vor.u32 %v5567, %v5571
        %v5590 = vunpack.c.l.b16 %v5550
        %v5591 = vunpack.c.l.b16 %v5551
        %v5592 = vunpack.c.l.b16 %v5552
        %v5593 = vunpack.c.l.b16 %v5553
        %v5594 = vunpack.c.l.b16 %v5554
        %v5595 = vunpack.c.l.b16 %v5555
        %v5596 = vunpack.c.l.b16 %v5556
        %v5597 = vunpack.c.l.b16 %v5557
        %v5598 = vunpack.c.l.b16 %v5558
        %v5599 = vunpack.c.l.b16 %v5559
        %v5600 = vunpack.c.l.b16 %v5560
        %v5601 = vunpack.c.l.b16 %v5561
        %v5602 = vunpack.c.l.b16 %v5562
        %v5603 = vunpack.c.l.b16 %v5563
        %v5604 = vunpack.c.l.b16 %v5564
        %v5605 = vunpack.c.l.b16 %v5565
        %v5606 = vpack.c.b16 %v5591, %v5590
        %v5607 = vpack.c.b16 %v5593, %v5592
        %v5608 = vpack.c.b16 %v5595, %v5594
        %v5609 = vpack.c.b16 %v5597, %v5596
        %v5610 = vpack.c.b16 %v5599, %v5598
        %v5611 = vpack.c.b16 %v5601, %v5600
        %v5612 = vpack.c.b16 %v5603, %v5602
        %v5613 = vpack.c.b16 %v5605, %v5604
        %5622 = vmatprep.subr.bf16.mxu0 0
        %5623 = vmatpush1.bf16.msra.mxu0 %v5606
        %5624 = vmatprep.subr.bf16.mxu0 0
        %5625 = vmatpush1.bf16.msra.mxu0 %v5607
        %5626 = vmatprep.subr.bf16.mxu0 0
        %5627 = vmatpush1.bf16.msra.mxu0 %v5608
        %5628 = vmatprep.subr.bf16.mxu0 0
        %5629 = vmatpush1.bf16.msra.mxu0 %v5609
        %5630 = vmatprep.subr.bf16.mxu0 0
        %5631 = vmatpush1.bf16.msra.mxu0 %v5610
        %5632 = vmatprep.subr.bf16.mxu0 0
        %5633 = vmatpush1.bf16.msra.mxu0 %v5611
        %5634 = vmatprep.subr.bf16.mxu0 0
        %5635 = vmatpush1.bf16.msra.mxu0 %v5612
        %5636 = vmatprep.subr.bf16.mxu0 0
        %5637 = vmatpush1.bf16.msra.mxu0 %v5613
        %5638 = vmatprep.subr.bf16.mxu0 0
        %5639 = vmatpush1.bf16.msra.mxu0 0
        %5640 = vmatprep.subr.bf16.mxu0 0
        %5641 = vmatpush1.bf16.msra.mxu0 0
        %5642 = vmatprep.subr.bf16.mxu0 0
        %5643 = vmatpush1.bf16.msra.mxu0 0
        %5644 = vmatprep.subr.bf16.mxu0 0
        %5645 = vmatpush1.bf16.msra.mxu0 0
        %5646 = vmatprep.subr.bf16.mxu0 0
        %5647 = vmatpush1.bf16.msra.mxu0 0
        %5648 = vmatprep.subr.bf16.mxu0 0
        %5649 = vmatpush1.bf16.msra.mxu0 0
        %5650 = vmatprep.subr.bf16.mxu0 0
        %5651 = vmatpush1.bf16.msra.mxu0 0
        %5652 = vmatprep.subr.bf16.mxu0 0
        %5653 = vmatpush1.bf16.msra.mxu0 0
        %5654 = vmatprep.mubr.bf16.mxu0 0
        %5655 = vmatmul.mubr.bf16.gmra.mrb[0].mxu0 %v5572
        %v5656 = vpop.f32.mrb[0].mxu0
        %v5657 = vadd.f32 0.0, %v5656
        %v5658 = vpop.f32.mrb[0].mxu0
        %v5659 = vpop.f32.mrb[0].mxu0
        %v5660 = vpop.f32.mrb[0].mxu0
        %5661 = vdwg.mxu0
        %v5678 = vunpack.c.l.b16 %v5534
        %v5679 = vunpack.c.l.b16 %v5535
        %v5680 = vunpack.c.l.b16 %v5536
        %v5681 = vunpack.c.l.b16 %v5537
        %v5682 = vunpack.c.l.b16 %v5538
        %v5683 = vunpack.c.l.b16 %v5539
        %v5684 = vunpack.c.l.b16 %v5540
        %v5685 = vunpack.c.l.b16 %v5541
        %v5686 = vunpack.c.l.b16 %v5542
        %v5687 = vunpack.c.l.b16 %v5543
        %v5688 = vunpack.c.l.b16 %v5544
        %v5689 = vunpack.c.l.b16 %v5545
        %v5690 = vunpack.c.l.b16 %v5546
        %v5691 = vunpack.c.l.b16 %v5547
        %v5692 = vunpack.c.l.b16 %v5548
        %v5693 = vunpack.c.l.b16 %v5549
        %v5694 = vpack.c.b16 %v5679, %v5678
        %v5695 = vpack.c.b16 %v5681, %v5680
        %v5696 = vpack.c.b16 %v5683, %v5682
        %v5697 = vpack.c.b16 %v5685, %v5684
        %v5698 = vpack.c.b16 %v5687, %v5686
        %v5699 = vpack.c.b16 %v5689, %v5688
        %v5700 = vpack.c.b16 %v5691, %v5690
        %v5701 = vpack.c.b16 %v5693, %v5692
        %5710 = vmatprep.subr.bf16.mxu0 0
        %5711 = vmatpush1.bf16.msra.mxu0 %v5694
        %5712 = vmatprep.subr.bf16.mxu0 0
        %5713 = vmatpush1.bf16.msra.mxu0 %v5695
        %5714 = vmatprep.subr.bf16.mxu0 0
        %5715 = vmatpush1.bf16.msra.mxu0 %v5696
        %5716 = vmatprep.subr.bf16.mxu0 0
        %5717 = vmatpush1.bf16.msra.mxu0 %v5697
        %5718 = vmatprep.subr.bf16.mxu0 0
        %5719 = vmatpush1.bf16.msra.mxu0 %v5698
        %5720 = vmatprep.subr.bf16.mxu0 0
        %5721 = vmatpush1.bf16.msra.mxu0 %v5699
        %5722 = vmatprep.subr.bf16.mxu0 0
        %5723 = vmatpush1.bf16.msra.mxu0 %v5700
        %5724 = vmatprep.subr.bf16.mxu0 0
        %5725 = vmatpush1.bf16.msra.mxu0 %v5701
        %5726 = vmatprep.subr.bf16.mxu0 0
        %5727 = vmatpush1.bf16.msra.mxu0 0
        %5728 = vmatprep.subr.bf16.mxu0 0
        %5729 = vmatpush1.bf16.msra.mxu0 0
        %5730 = vmatprep.subr.bf16.mxu0 0
        %5731 = vmatpush1.bf16.msra.mxu0 0
        %5732 = vmatprep.subr.bf16.mxu0 0
        %5733 = vmatpush1.bf16.msra.mxu0 0
        %5734 = vmatprep.subr.bf16.mxu0 0
        %5735 = vmatpush1.bf16.msra.mxu0 0
        %5736 = vmatprep.subr.bf16.mxu0 0
        %5737 = vmatpush1.bf16.msra.mxu0 0
        %5738 = vmatprep.subr.bf16.mxu0 0
        %5739 = vmatpush1.bf16.msra.mxu0 0
        %5740 = vmatprep.subr.bf16.mxu0 0
        %5741 = vmatpush1.bf16.msra.mxu0 0
        %5742 = vmatprep.mubr.bf16.mxu0 0
        %5743 = vmatmul.mubr.bf16.gmra.mrb[0].mxu0 %v5533
        %v5744 = vpop.f32.mrb[0].mxu0
        %v5745 = vadd.f32 %v5657, %v5744
        %v5746 = vpop.f32.mrb[0].mxu0
        %v5747 = vpop.f32.mrb[0].mxu0
        %v5748 = vpop.f32.mrb[0].mxu0
        %5749 = vdwg.mxu0
        %v5750 = vld [vmem:[%s4928] sm:$0xf]
        %v5751 = vld [vmem:[%s4928 + $0x4] sm:$0xf]
        %v5752 = vld [vmem:[%s4928 + $0x8] sm:$0xf]
        %v5753 = vld [vmem:[%s4928 + $0xc] sm:$0xf]
        %v5754 = vld [vmem:[%s4928 + $0x10] sm:$0xf]
        %v5755 = vld [vmem:[%s4928 + $0x14] sm:$0xf]
        %v5756 = vld [vmem:[%s4928 + $0x18] sm:$0xf]
        %v5757 = vld [vmem:[%s4928 + $0x1c] sm:$0xf]
        %v5758 = vld [vmem:[%s4928 + $0x20] sm:$0xf]
        %v5759 = vld [vmem:[%s4928 + $0x24] sm:$0xf]
        %v5760 = vld [vmem:[%s4928 + $0x28] sm:$0xf]
        %v5761 = vld [vmem:[%s4928 + $0x2c] sm:$0xf]
        %v5762 = vld [vmem:[%s4928 + $0x30] sm:$0xf]
        %v5763 = vld [vmem:[%s4928 + $0x34] sm:$0xf]
        %v5764 = vld [vmem:[%s4928 + $0x38] sm:$0xf]
        %v5765 = vld [vmem:[%s4928 + $0x3c] sm:$0xf]
        %v5767 = vrot.slane %v5533, 1
        %v5785 = vunpack.c.l.b16 %v5750
        %v5786 = vunpack.c.l.b16 %v5751
        %v5787 = vunpack.c.l.b16 %v5752
        %v5788 = vunpack.c.l.b16 %v5753
        %v5789 = vunpack.c.l.b16 %v5754
        %v5790 = vunpack.c.l.b16 %v5755
        %v5791 = vunpack.c.l.b16 %v5756
        %v5792 = vunpack.c.l.b16 %v5757
        %v5793 = vunpack.c.l.b16 %v5758
        %v5794 = vunpack.c.l.b16 %v5759
        %v5795 = vunpack.c.l.b16 %v5760
        %v5796 = vunpack.c.l.b16 %v5761
        %v5797 = vunpack.c.l.b16 %v5762
        %v5798 = vunpack.c.l.b16 %v5763
        %v5799 = vunpack.c.l.b16 %v5764
        %v5800 = vunpack.c.l.b16 %v5765
        %v5801 = vpack.c.b16 %v5786, %v5785
        %v5802 = vpack.c.b16 %v5788, %v5787
        %v5803 = vpack.c.b16 %v5790, %v5789
        %v5804 = vpack.c.b16 %v5792, %v5791
        %v5805 = vpack.c.b16 %v5794, %v5793
        %v5806 = vpack.c.b16 %v5796, %v5795
        %v5807 = vpack.c.b16 %v5798, %v5797
        %v5808 = vpack.c.b16 %v5800, %v5799
        %5817 = vmatprep.subr.bf16.mxu0 0
        %5818 = vmatpush1.bf16.msra.mxu0 %v5801
        %5819 = vmatprep.subr.bf16.mxu0 0
        %5820 = vmatpush1.bf16.msra.mxu0 %v5802
        %5821 = vmatprep.subr.bf16.mxu0 0
        %5822 = vmatpush1.bf16.msra.mxu0 %v5803
        %5823 = vmatprep.subr.bf16.mxu0 0
        %5824 = vmatpush1.bf16.msra.mxu0 %v5804
        %5825 = vmatprep.subr.bf16.mxu0 0
        %5826 = vmatpush1.bf16.msra.mxu0 %v5805
        %5827 = vmatprep.subr.bf16.mxu0 0
        %5828 = vmatpush1.bf16.msra.mxu0 %v5806
        %5829 = vmatprep.subr.bf16.mxu0 0
        %5830 = vmatpush1.bf16.msra.mxu0 %v5807
        %5831 = vmatprep.subr.bf16.mxu0 0
        %5832 = vmatpush1.bf16.msra.mxu0 %v5808
        %5833 = vmatprep.subr.bf16.mxu0 0
        %5834 = vmatpush1.bf16.msra.mxu0 0
        %5835 = vmatprep.subr.bf16.mxu0 0
        %5836 = vmatpush1.bf16.msra.mxu0 0
        %5837 = vmatprep.subr.bf16.mxu0 0
        %5838 = vmatpush1.bf16.msra.mxu0 0
        %5839 = vmatprep.subr.bf16.mxu0 0
        %5840 = vmatpush1.bf16.msra.mxu0 0
        %5841 = vmatprep.subr.bf16.mxu0 0
        %5842 = vmatpush1.bf16.msra.mxu0 0
        %5843 = vmatprep.subr.bf16.mxu0 0
        %5844 = vmatpush1.bf16.msra.mxu0 0
        %5845 = vmatprep.subr.bf16.mxu0 0
        %5846 = vmatpush1.bf16.msra.mxu0 0
        %5847 = vmatprep.subr.bf16.mxu0 0
        %5848 = vmatpush1.bf16.msra.mxu0 0
        %5849 = vmatprep.mubr.bf16.mxu0 0
        %5850 = vmatmul.mubr.bf16.gmra.mrb[0].mxu0 %v5767
        %v5851 = vpop.f32.mrb[0].mxu0
        %v5852 = vadd.f32 0.0, %v5851
        %v5853 = vpop.f32.mrb[0].mxu0
        %v5854 = vpop.f32.mrb[0].mxu0
        %v5855 = vpop.f32.mrb[0].mxu0
        %5856 = vdwg.mxu0
        %v5857 = vadd.f32 %v5745, %v5852
        %v5858 = vadd.f32 %v5857, %v5041
        %v5859 = vmax.f32 %v5858, 0.0
        %v5860 = vpack.c.bf16 %v5859, %v5859
        %v5863 = vunpack.c.l.s4 1966171168
        %v5864 = vunpack.c.0.s8 %v5863
        %v5865 = vlaneseq
        %v5866 = vshrl.u32 %v5865, 7
        %v5867 = vsub.s32 %v5864, %v5866
        %v5868 = vrot.slane %v5860, %v5867
        %v5869 = vcombine.high %v5868, %v5868
        %v5871 = vunpack.c.l.s4 1966171168
        %v5872 = vunpack.c.0.s8 %v5871
        %v5873 = vlaneseq
        %v5874 = vshrl.u32 %v5873, 7
        %v5875 = vsub.s32 %v5872, %v5874
        %v5876 = vrot.slane %v5868, %v5875
        %v5878 = vunpack.c.l.s4 1966171168
        %v5879 = vunpack.c.0.s8 %v5878
        %v5880 = vlaneseq
        %v5881 = vshrl.u32 %v5880, 7
        %v5882 = vsub.s32 %v5879, %v5881
        %v5883 = vrot.slane %v5869, %v5882
        %v5884 = vunpack.i.l.s16 %v5876
        %v5885 = vunpack.i.h.s16 %v5876
        %v5886 = vunpack.i.l.s16 %v5883
        %v5887 = vunpack.i.h.s16 %v5883
        %v5888 = vpack.i.b16 %v5884, %v5884
        %v5889 = vpack.i.b16 %v5885, %v5885
        %v5890 = vpack.i.b16 %v5886, %v5886
        %v5891 = vpack.i.b16 %v5887, %v5887
        %v5893 = vunpack.c.l.s4 286326784
        %v5894 = vunpack.c.0.s8 %v5893
        %v5895 = vlaneseq
        %v5896 = vshrl.u32 %v5895, 7
        %v5897 = vsub.s32 %v5894, %v5896
        %v5898 = vrot.slane %v5888, %v5897
        %v5900 = vunpack.c.l.s4 286326784
        %v5901 = vunpack.c.0.s8 %v5900
        %v5902 = vlaneseq
        %v5903 = vshrl.u32 %v5902, 7
        %v5904 = vsub.s32 %v5901, %v5903
        %v5905 = vrot.slane %v5889, %v5904
        %v5907 = vunpack.c.l.s4 286326784
        %v5908 = vunpack.c.0.s8 %v5907
        %v5909 = vlaneseq
        %v5910 = vshrl.u32 %v5909, 7
        %v5911 = vsub.s32 %v5908, %v5910
        %v5912 = vrot.slane %v5890, %v5911
        %v5914 = vunpack.c.l.s4 286326784
        %v5915 = vunpack.c.0.s8 %v5914
        %v5916 = vlaneseq
        %v5917 = vshrl.u32 %v5916, 7
        %v5918 = vsub.s32 %v5915, %v5917
        %v5919 = vrot.slane %v5891, %v5918
        %vm5924 = vcmask 1041409
        %vm5925 = vsmask.f32 1280
        %vm5926 = vmand %vm5924, %vm5925
        %v5927 = vld [vmem:[#allocation2] sm:$0x2]
        %v5928 = vsel %vm5926, %v5898, %v5927
        %5929 = vst [vmem:[#allocation2] sm:$0x2] %v5928
        %v5930 = vld [vmem:[#allocation2 + $0x4] sm:$0x2]
        %v5931 = vsel %vm5926, %v5905, %v5930
        %5932 = vst [vmem:[#allocation2 + $0x4] sm:$0x2] %v5931
        %v5933 = vld [vmem:[#allocation2 + $0x8] sm:$0x2]
        %v5934 = vsel %vm5926, %v5912, %v5933
        %5935 = vst [vmem:[#allocation2 + $0x8] sm:$0x2] %v5934
        %v5936 = vld [vmem:[#allocation2 + $0xc] sm:$0x2]
        %v5937 = vsel %vm5926, %v5919, %v5936
        %5938 = vst [vmem:[#allocation2 + $0xc] sm:$0x2] %v5937
        %v5939 = vadd.f32 %v4695, %v4706
        %v5940 = vmax.f32 %v5939, 0.0
        %v5941 = vpack.c.bf16 %v5940, %v5940
        %v5942 = vld [vmem:[%s5] sm:$0xf]
        %v5943 = vld [vmem:[%s5 + $0x4] sm:$0xf]
        %v5944 = vld [vmem:[%s5 + $0x8] sm:$0xf]
        %v5945 = vld [vmem:[%s5 + $0xc] sm:$0xf]
        %v5946 = vld [vmem:[%s5 + $0x10] sm:$0xf]
        %v5947 = vld [vmem:[%s5 + $0x14] sm:$0xf]
        %v5948 = vld [vmem:[%s5 + $0x18] sm:$0xf]
        %v5949 = vld [vmem:[%s5 + $0x1c] sm:$0xf]
        %v5950 = vld [vmem:[%s5 + $0x20] sm:$0xf]
        %v5951 = vld [vmem:[%s5 + $0x24] sm:$0xf]
        %v5952 = vld [vmem:[%s5 + $0x28] sm:$0xf]
        %v5953 = vld [vmem:[%s5 + $0x2c] sm:$0xf]
        %v5954 = vld [vmem:[%s5 + $0x30] sm:$0xf]
        %v5955 = vld [vmem:[%s5 + $0x34] sm:$0xf]
        %v5956 = vld [vmem:[%s5 + $0x38] sm:$0xf]
        %v5957 = vld [vmem:[%s5 + $0x3c] sm:$0xf]
        %v5958 = vld [vmem:[%s4727] sm:$0xf]
        %v5959 = vld [vmem:[%s4727 + $0x4] sm:$0xf]
        %v5960 = vld [vmem:[%s4727 + $0x8] sm:$0xf]
        %v5961 = vld [vmem:[%s4727 + $0xc] sm:$0xf]
        %v5962 = vld [vmem:[%s4727 + $0x10] sm:$0xf]
        %v5963 = vld [vmem:[%s4727 + $0x14] sm:$0xf]
        %v5964 = vld [vmem:[%s4727 + $0x18] sm:$0xf]
        %v5965 = vld [vmem:[%s4727 + $0x1c] sm:$0xf]
        %v5966 = vld [vmem:[%s4727 + $0x20] sm:$0xf]
        %v5967 = vld [vmem:[%s4727 + $0x24] sm:$0xf]
        %v5968 = vld [vmem:[%s4727 + $0x28] sm:$0xf]
        %v5969 = vld [vmem:[%s4727 + $0x2c] sm:$0xf]
        %v5970 = vld [vmem:[%s4727 + $0x30] sm:$0xf]
        %v5971 = vld [vmem:[%s4727 + $0x34] sm:$0xf]
        %v5972 = vld [vmem:[%s4727 + $0x38] sm:$0xf]
        %v5973 = vld [vmem:[%s4727 + $0x3c] sm:$0xf]
        %v5975 = vshrl.u32 %v5941, 16
        %v5977 = vshll.u32 %v5941, 16
        %v5979 = vrot.slane %v5977, 1
        %v5980 = vor.u32 %v5975, %v5979
        %v5998 = vunpack.c.l.b16 %v5958
        %v5999 = vunpack.c.l.b16 %v5959
        %v6000 = vunpack.c.l.b16 %v5960
        %v6001 = vunpack.c.l.b16 %v5961
        %v6002 = vunpack.c.l.b16 %v5962
        %v6003 = vunpack.c.l.b16 %v5963
        %v6004 = vunpack.c.l.b16 %v5964
        %v6005 = vunpack.c.l.b16 %v5965
        %v6006 = vunpack.c.l.b16 %v5966
        %v6007 = vunpack.c.l.b16 %v5967
        %v6008 = vunpack.c.l.b16 %v5968
        %v6009 = vunpack.c.l.b16 %v5969
        %v6010 = vunpack.c.l.b16 %v5970
        %v6011 = vunpack.c.l.b16 %v5971
        %v6012 = vunpack.c.l.b16 %v5972
        %v6013 = vunpack.c.l.b16 %v5973
        %v6014 = vpack.c.b16 %v5999, %v5998
        %v6015 = vpack.c.b16 %v6001, %v6000
        %v6016 = vpack.c.b16 %v6003, %v6002
        %v6017 = vpack.c.b16 %v6005, %v6004
        %v6018 = vpack.c.b16 %v6007, %v6006
        %v6019 = vpack.c.b16 %v6009, %v6008
        %v6020 = vpack.c.b16 %v6011, %v6010
        %v6021 = vpack.c.b16 %v6013, %v6012
        %6030 = vmatprep.subr.bf16.mxu0 0
        %6031 = vmatpush1.bf16.msra.mxu0 %v6014
        %6032 = vmatprep.subr.bf16.mxu0 0
        %6033 = vmatpush1.bf16.msra.mxu0 %v6015
        %6034 = vmatprep.subr.bf16.mxu0 0
        %6035 = vmatpush1.bf16.msra.mxu0 %v6016
        %6036 = vmatprep.subr.bf16.mxu0 0
        %6037 = vmatpush1.bf16.msra.mxu0 %v6017
        %6038 = vmatprep.subr.bf16.mxu0 0
        %6039 = vmatpush1.bf16.msra.mxu0 %v6018
        %6040 = vmatprep.subr.bf16.mxu0 0
        %6041 = vmatpush1.bf16.msra.mxu0 %v6019
        %6042 = vmatprep.subr.bf16.mxu0 0
        %6043 = vmatpush1.bf16.msra.mxu0 %v6020
        %6044 = vmatprep.subr.bf16.mxu0 0
        %6045 = vmatpush1.bf16.msra.mxu0 %v6021
        %6046 = vmatprep.subr.bf16.mxu0 0
        %6047 = vmatpush1.bf16.msra.mxu0 0
        %6048 = vmatprep.subr.bf16.mxu0 0
        %6049 = vmatpush1.bf16.msra.mxu0 0
        %6050 = vmatprep.subr.bf16.mxu0 0
        %6051 = vmatpush1.bf16.msra.mxu0 0
        %6052 = vmatprep.subr.bf16.mxu0 0
        %6053 = vmatpush1.bf16.msra.mxu0 0
        %6054 = vmatprep.subr.bf16.mxu0 0
        %6055 = vmatpush1.bf16.msra.mxu0 0
        %6056 = vmatprep.subr.bf16.mxu0 0
        %6057 = vmatpush1.bf16.msra.mxu0 0
        %6058 = vmatprep.subr.bf16.mxu0 0
        %6059 = vmatpush1.bf16.msra.mxu0 0
        %6060 = vmatprep.subr.bf16.mxu0 0
        %6061 = vmatpush1.bf16.msra.mxu0 0
        %6062 = vmatprep.mubr.bf16.mxu0 0
        %6063 = vmatmul.mubr.bf16.gmra.mrb[0].mxu0 %v5980
        %v6064 = vpop.f32.mrb[0].mxu0
        %v6065 = vadd.f32 0.0, %v6064
        %v6066 = vpop.f32.mrb[0].mxu0
        %v6067 = vpop.f32.mrb[0].mxu0
        %v6068 = vpop.f32.mrb[0].mxu0
        %6069 = vdwg.mxu0
        %v6086 = vunpack.c.l.b16 %v5942
        %v6087 = vunpack.c.l.b16 %v5943
        %v6088 = vunpack.c.l.b16 %v5944
        %v6089 = vunpack.c.l.b16 %v5945
        %v6090 = vunpack.c.l.b16 %v5946
        %v6091 = vunpack.c.l.b16 %v5947
        %v6092 = vunpack.c.l.b16 %v5948
        %v6093 = vunpack.c.l.b16 %v5949
        %v6094 = vunpack.c.l.b16 %v5950
        %v6095 = vunpack.c.l.b16 %v5951
        %v6096 = vunpack.c.l.b16 %v5952
        %v6097 = vunpack.c.l.b16 %v5953
        %v6098 = vunpack.c.l.b16 %v5954
        %v6099 = vunpack.c.l.b16 %v5955
        %v6100 = vunpack.c.l.b16 %v5956
        %v6101 = vunpack.c.l.b16 %v5957
        %v6102 = vpack.c.b16 %v6087, %v6086
        %v6103 = vpack.c.b16 %v6089, %v6088
        %v6104 = vpack.c.b16 %v6091, %v6090
        %v6105 = vpack.c.b16 %v6093, %v6092
        %v6106 = vpack.c.b16 %v6095, %v6094
        %v6107 = vpack.c.b16 %v6097, %v6096
        %v6108 = vpack.c.b16 %v6099, %v6098
        %v6109 = vpack.c.b16 %v6101, %v6100
        %6118 = vmatprep.subr.bf16.mxu0 0
        %6119 = vmatpush1.bf16.msra.mxu0 %v6102
        %6120 = vmatprep.subr.bf16.mxu0 0
        %6121 = vmatpush1.bf16.msra.mxu0 %v6103
        %6122 = vmatprep.subr.bf16.mxu0 0
        %6123 = vmatpush1.bf16.msra.mxu0 %v6104
        %6124 = vmatprep.subr.bf16.mxu0 0
        %6125 = vmatpush1.bf16.msra.mxu0 %v6105
        %6126 = vmatprep.subr.bf16.mxu0 0
        %6127 = vmatpush1.bf16.msra.mxu0 %v6106
        %6128 = vmatprep.subr.bf16.mxu0 0
        %6129 = vmatpush1.bf16.msra.mxu0 %v6107
        %6130 = vmatprep.subr.bf16.mxu0 0
        %6131 = vmatpush1.bf16.msra.mxu0 %v6108
        %6132 = vmatprep.subr.bf16.mxu0 0
        %6133 = vmatpush1.bf16.msra.mxu0 %v6109
        %6134 = vmatprep.subr.bf16.mxu0 0
        %6135 = vmatpush1.bf16.msra.mxu0 0
        %6136 = vmatprep.subr.bf16.mxu0 0
        %6137 = vmatpush1.bf16.msra.mxu0 0
        %6138 = vmatprep.subr.bf16.mxu0 0
        %6139 = vmatpush1.bf16.msra.mxu0 0
        %6140 = vmatprep.subr.bf16.mxu0 0
        %6141 = vmatpush1.bf16.msra.mxu0 0
        %6142 = vmatprep.subr.bf16.mxu0 0
        %6143 = vmatpush1.bf16.msra.mxu0 0
        %6144 = vmatprep.subr.bf16.mxu0 0
        %6145 = vmatpush1.bf16.msra.mxu0 0
        %6146 = vmatprep.subr.bf16.mxu0 0
        %6147 = vmatpush1.bf16.msra.mxu0 0
        %6148 = vmatprep.subr.bf16.mxu0 0
        %6149 = vmatpush1.bf16.msra.mxu0 0
        %6150 = vmatprep.mubr.bf16.mxu0 0
        %6151 = vmatmul.mubr.bf16.gmra.mrb[0].mxu0 %v5941
        %v6152 = vpop.f32.mrb[0].mxu0
        %v6153 = vadd.f32 %v6065, %v6152
        %v6154 = vpop.f32.mrb[0].mxu0
        %v6155 = vpop.f32.mrb[0].mxu0
        %v6156 = vpop.f32.mrb[0].mxu0
        %6157 = vdwg.mxu0
        %v6158 = vld [vmem:[%s4928] sm:$0xf]
        %v6159 = vld [vmem:[%s4928 + $0x4] sm:$0xf]
        %v6160 = vld [vmem:[%s4928 + $0x8] sm:$0xf]
        %v6161 = vld [vmem:[%s4928 + $0xc] sm:$0xf]
        %v6162 = vld [vmem:[%s4928 + $0x10] sm:$0xf]
        %v6163 = vld [vmem:[%s4928 + $0x14] sm:$0xf]
        %v6164 = vld [vmem:[%s4928 + $0x18] sm:$0xf]
        %v6165 = vld [vmem:[%s4928 + $0x1c] sm:$0xf]
        %v6166 = vld [vmem:[%s4928 + $0x20] sm:$0xf]
        %v6167 = vld [vmem:[%s4928 + $0x24] sm:$0xf]
        %v6168 = vld [vmem:[%s4928 + $0x28] sm:$0xf]
        %v6169 = vld [vmem:[%s4928 + $0x2c] sm:$0xf]
        %v6170 = vld [vmem:[%s4928 + $0x30] sm:$0xf]
        %v6171 = vld [vmem:[%s4928 + $0x34] sm:$0xf]
        %v6172 = vld [vmem:[%s4928 + $0x38] sm:$0xf]
        %v6173 = vld [vmem:[%s4928 + $0x3c] sm:$0xf]
        %v6175 = vrot.slane %v5941, 1
        %v6193 = vunpack.c.l.b16 %v6158
        %v6194 = vunpack.c.l.b16 %v6159
        %v6195 = vunpack.c.l.b16 %v6160
        %v6196 = vunpack.c.l.b16 %v6161
        %v6197 = vunpack.c.l.b16 %v6162
        %v6198 = vunpack.c.l.b16 %v6163
        %v6199 = vunpack.c.l.b16 %v6164
        %v6200 = vunpack.c.l.b16 %v6165
        %v6201 = vunpack.c.l.b16 %v6166
        %v6202 = vunpack.c.l.b16 %v6167
        %v6203 = vunpack.c.l.b16 %v6168
        %v6204 = vunpack.c.l.b16 %v6169
        %v6205 = vunpack.c.l.b16 %v6170
        %v6206 = vunpack.c.l.b16 %v6171
        %v6207 = vunpack.c.l.b16 %v6172
        %v6208 = vunpack.c.l.b16 %v6173
        %v6209 = vpack.c.b16 %v6194, %v6193
        %v6210 = vpack.c.b16 %v6196, %v6195
        %v6211 = vpack.c.b16 %v6198, %v6197
        %v6212 = vpack.c.b16 %v6200, %v6199
        %v6213 = vpack.c.b16 %v6202, %v6201
        %v6214 = vpack.c.b16 %v6204, %v6203
        %v6215 = vpack.c.b16 %v6206, %v6205
        %v6216 = vpack.c.b16 %v6208, %v6207
        %6225 = vmatprep.subr.bf16.mxu0 0
        %6226 = vmatpush1.bf16.msra.mxu0 %v6209
        %6227 = vmatprep.subr.bf16.mxu0 0
        %6228 = vmatpush1.bf16.msra.mxu0 %v6210
        %6229 = vmatprep.subr.bf16.mxu0 0
        %6230 = vmatpush1.bf16.msra.mxu0 %v6211
        %6231 = vmatprep.subr.bf16.mxu0 0
        %6232 = vmatpush1.bf16.msra.mxu0 %v6212
        %6233 = vmatprep.subr.bf16.mxu0 0
        %6234 = vmatpush1.bf16.msra.mxu0 %v6213
        %6235 = vmatprep.subr.bf16.mxu0 0
        %6236 = vmatpush1.bf16.msra.mxu0 %v6214
        %6237 = vmatprep.subr.bf16.mxu0 0
        %6238 = vmatpush1.bf16.msra.mxu0 %v6215
        %6239 = vmatprep.subr.bf16.mxu0 0
        %6240 = vmatpush1.bf16.msra.mxu0 %v6216
        %6241 = vmatprep.subr.bf16.mxu0 0
        %6242 = vmatpush1.bf16.msra.mxu0 0
        %6243 = vmatprep.subr.bf16.mxu0 0
        %6244 = vmatpush1.bf16.msra.mxu0 0
        %6245 = vmatprep.subr.bf16.mxu0 0
        %6246 = vmatpush1.bf16.msra.mxu0 0
        %6247 = vmatprep.subr.bf16.mxu0 0
        %6248 = vmatpush1.bf16.msra.mxu0 0
        %6249 = vmatprep.subr.bf16.mxu0 0
        %6250 = vmatpush1.bf16.msra.mxu0 0
        %6251 = vmatprep.subr.bf16.mxu0 0
        %6252 = vmatpush1.bf16.msra.mxu0 0
        %6253 = vmatprep.subr.bf16.mxu0 0
        %6254 = vmatpush1.bf16.msra.mxu0 0
        %6255 = vmatprep.subr.bf16.mxu0 0
        %6256 = vmatpush1.bf16.msra.mxu0 0
        %6257 = vmatprep.mubr.bf16.mxu0 0
        %6258 = vmatmul.mubr.bf16.gmra.mrb[0].mxu0 %v6175
        %v6259 = vpop.f32.mrb[0].mxu0
        %v6260 = vadd.f32 0.0, %v6259
        %v6261 = vpop.f32.mrb[0].mxu0
        %v6262 = vpop.f32.mrb[0].mxu0
        %v6263 = vpop.f32.mrb[0].mxu0
        %6264 = vdwg.mxu0
        %v6265 = vadd.f32 %v6153, %v6260
        %v6266 = vadd.f32 %v6265, %v5041
        %v6267 = vmax.f32 %v6266, 0.0
        %v6268 = vpack.c.bf16 %v6267, %v6267
        %v6271 = vunpack.c.l.s4 1966171168
        %v6272 = vunpack.c.0.s8 %v6271
        %v6273 = vlaneseq
        %v6274 = vshrl.u32 %v6273, 7
        %v6275 = vsub.s32 %v6272, %v6274
        %v6276 = vrot.slane %v6268, %v6275
        %v6277 = vcombine.high %v6276, %v6276
        %v6279 = vunpack.c.l.s4 1966171168
        %v6280 = vunpack.c.0.s8 %v6279
        %v6281 = vlaneseq
        %v6282 = vshrl.u32 %v6281, 7
        %v6283 = vsub.s32 %v6280, %v6282
        %v6284 = vrot.slane %v6276, %v6283
        %v6286 = vunpack.c.l.s4 1966171168
        %v6287 = vunpack.c.0.s8 %v6286
        %v6288 = vlaneseq
        %v6289 = vshrl.u32 %v6288, 7
        %v6290 = vsub.s32 %v6287, %v6289
        %v6291 = vrot.slane %v6277, %v6290
        %v6292 = vunpack.i.l.s16 %v6284
        %v6293 = vunpack.i.h.s16 %v6284
        %v6294 = vunpack.i.l.s16 %v6291
        %v6295 = vunpack.i.h.s16 %v6291
        %v6296 = vpack.i.b16 %v6292, %v6292
        %v6297 = vpack.i.b16 %v6293, %v6293
        %v6298 = vpack.i.b16 %v6294, %v6294
        %v6299 = vpack.i.b16 %v6295, %v6295
        %v6301 = vunpack.c.l.s4 286326784
        %v6302 = vunpack.c.0.s8 %v6301
        %v6303 = vlaneseq
        %v6304 = vshrl.u32 %v6303, 7
        %v6305 = vsub.s32 %v6302, %v6304
        %v6306 = vrot.slane %v6296, %v6305
        %v6308 = vunpack.c.l.s4 286326784
        %v6309 = vunpack.c.0.s8 %v6308
        %v6310 = vlaneseq
        %v6311 = vshrl.u32 %v6310, 7
        %v6312 = vsub.s32 %v6309, %v6311
        %v6313 = vrot.slane %v6297, %v6312
        %v6315 = vunpack.c.l.s4 286326784
        %v6316 = vunpack.c.0.s8 %v6315
        %v6317 = vlaneseq
        %v6318 = vshrl.u32 %v6317, 7
        %v6319 = vsub.s32 %v6316, %v6318
        %v6320 = vrot.slane %v6298, %v6319
        %v6322 = vunpack.c.l.s4 286326784
        %v6323 = vunpack.c.0.s8 %v6322
        %v6324 = vlaneseq
        %v6325 = vshrl.u32 %v6324, 7
        %v6326 = vsub.s32 %v6323, %v6325
        %v6327 = vrot.slane %v6299, %v6326
        %vm6332 = vsmask.f32 7942
        %vm6333 = vmand %vm5924, %vm6332
        %v6334 = vld [vmem:[#allocation2] sm:$0x2]
        %v6335 = vsel %vm6333, %v6306, %v6334
        %6336 = vst [vmem:[#allocation2] sm:$0x2] %v6335
        %v6337 = vld [vmem:[#allocation2 + $0x4] sm:$0x2]
        %v6338 = vsel %vm6333, %v6313, %v6337
        %6339 = vst [vmem:[#allocation2 + $0x4] sm:$0x2] %v6338
        %v6340 = vld [vmem:[#allocation2 + $0x8] sm:$0x2]
        %v6341 = vsel %vm6333, %v6320, %v6340
        %6342 = vst [vmem:[#allocation2 + $0x8] sm:$0x2] %v6341
        %v6343 = vld [vmem:[#allocation2 + $0xc] sm:$0x2]
        %v6344 = vsel %vm6333, %v6327, %v6343
        %6345 = vst [vmem:[#allocation2 + $0xc] sm:$0x2] %v6344
        %v6346 = vadd.f32 %v4696, %v4706
        %v6347 = vmax.f32 %v6346, 0.0
        %v6348 = vpack.c.bf16 %v6347, %v6347
        %v6349 = vld [vmem:[%s5] sm:$0xf]
        %v6350 = vld [vmem:[%s5 + $0x4] sm:$0xf]
        %v6351 = vld [vmem:[%s5 + $0x8] sm:$0xf]
        %v6352 = vld [vmem:[%s5 + $0xc] sm:$0xf]
        %v6353 = vld [vmem:[%s5 + $0x10] sm:$0xf]
        %v6354 = vld [vmem:[%s5 + $0x14] sm:$0xf]
        %v6355 = vld [vmem:[%s5 + $0x18] sm:$0xf]
        %v6356 = vld [vmem:[%s5 + $0x1c] sm:$0xf]
        %v6357 = vld [vmem:[%s5 + $0x20] sm:$0xf]
        %v6358 = vld [vmem:[%s5 + $0x24] sm:$0xf]
        %v6359 = vld [vmem:[%s5 + $0x28] sm:$0xf]
        %v6360 = vld [vmem:[%s5 + $0x2c] sm:$0xf]
        %v6361 = vld [vmem:[%s5 + $0x30] sm:$0xf]
        %v6362 = vld [vmem:[%s5 + $0x34] sm:$0xf]
        %v6363 = vld [vmem:[%s5 + $0x38] sm:$0xf]
        %v6364 = vld [vmem:[%s5 + $0x3c] sm:$0xf]
        %v6365 = vld [vmem:[%s4727] sm:$0xf]
        %v6366 = vld [vmem:[%s4727 + $0x4] sm:$0xf]
        %v6367 = vld [vmem:[%s4727 + $0x8] sm:$0xf]
        %v6368 = vld [vmem:[%s4727 + $0xc] sm:$0xf]
        %v6369 = vld [vmem:[%s4727 + $0x10] sm:$0xf]
        %v6370 = vld [vmem:[%s4727 + $0x14] sm:$0xf]
        %v6371 = vld [vmem:[%s4727 + $0x18] sm:$0xf]
        %v6372 = vld [vmem:[%s4727 + $0x1c] sm:$0xf]
        %v6373 = vld [vmem:[%s4727 + $0x20] sm:$0xf]
        %v6374 = vld [vmem:[%s4727 + $0x24] sm:$0xf]
        %v6375 = vld [vmem:[%s4727 + $0x28] sm:$0xf]
        %v6376 = vld [vmem:[%s4727 + $0x2c] sm:$0xf]
        %v6377 = vld [vmem:[%s4727 + $0x30] sm:$0xf]
        %v6378 = vld [vmem:[%s4727 + $0x34] sm:$0xf]
        %v6379 = vld [vmem:[%s4727 + $0x38] sm:$0xf]
        %v6380 = vld [vmem:[%s4727 + $0x3c] sm:$0xf]
        %v6382 = vshrl.u32 %v6348, 16
        %v6384 = vshll.u32 %v6348, 16
        %v6386 = vrot.slane %v6384, 1
        %v6387 = vor.u32 %v6382, %v6386
        %v6405 = vunpack.c.l.b16 %v6365
        %v6406 = vunpack.c.l.b16 %v6366
        %v6407 = vunpack.c.l.b16 %v6367
        %v6408 = vunpack.c.l.b16 %v6368
        %v6409 = vunpack.c.l.b16 %v6369
        %v6410 = vunpack.c.l.b16 %v6370
        %v6411 = vunpack.c.l.b16 %v6371
        %v6412 = vunpack.c.l.b16 %v6372
        %v6413 = vunpack.c.l.b16 %v6373
        %v6414 = vunpack.c.l.b16 %v6374
        %v6415 = vunpack.c.l.b16 %v6375
        %v6416 = vunpack.c.l.b16 %v6376
        %v6417 = vunpack.c.l.b16 %v6377
        %v6418 = vunpack.c.l.b16 %v6378
        %v6419 = vunpack.c.l.b16 %v6379
        %v6420 = vunpack.c.l.b16 %v6380
        %v6421 = vpack.c.b16 %v6406, %v6405
        %v6422 = vpack.c.b16 %v6408, %v6407
        %v6423 = vpack.c.b16 %v6410, %v6409
        %v6424 = vpack.c.b16 %v6412, %v6411
        %v6425 = vpack.c.b16 %v6414, %v6413
        %v6426 = vpack.c.b16 %v6416, %v6415
        %v6427 = vpack.c.b16 %v6418, %v6417
        %v6428 = vpack.c.b16 %v6420, %v6419
        %6437 = vmatprep.subr.bf16.mxu0 0
        %6438 = vmatpush1.bf16.msra.mxu0 %v6421
        %6439 = vmatprep.subr.bf16.mxu0 0
        %6440 = vmatpush1.bf16.msra.mxu0 %v6422
        %6441 = vmatprep.subr.bf16.mxu0 0
        %6442 = vmatpush1.bf16.msra.mxu0 %v6423
        %6443 = vmatprep.subr.bf16.mxu0 0
        %6444 = vmatpush1.bf16.msra.mxu0 %v6424
        %6445 = vmatprep.subr.bf16.mxu0 0
        %6446 = vmatpush1.bf16.msra.mxu0 %v6425
        %6447 = vmatprep.subr.bf16.mxu0 0
        %6448 = vmatpush1.bf16.msra.mxu0 %v6426
        %6449 = vmatprep.subr.bf16.mxu0 0
        %6450 = vmatpush1.bf16.msra.mxu0 %v6427
        %6451 = vmatprep.subr.bf16.mxu0 0
        %6452 = vmatpush1.bf16.msra.mxu0 %v6428
        %6453 = vmatprep.subr.bf16.mxu0 0
        %6454 = vmatpush1.bf16.msra.mxu0 0
        %6455 = vmatprep.subr.bf16.mxu0 0
        %6456 = vmatpush1.bf16.msra.mxu0 0
        %6457 = vmatprep.subr.bf16.mxu0 0
        %6458 = vmatpush1.bf16.msra.mxu0 0
        %6459 = vmatprep.subr.bf16.mxu0 0
        %6460 = vmatpush1.bf16.msra.mxu0 0
        %6461 = vmatprep.subr.bf16.mxu0 0
        %6462 = vmatpush1.bf16.msra.mxu0 0
        %6463 = vmatprep.subr.bf16.mxu0 0
        %6464 = vmatpush1.bf16.msra.mxu0 0
        %6465 = vmatprep.subr.bf16.mxu0 0
        %6466 = vmatpush1.bf16.msra.mxu0 0
        %6467 = vmatprep.subr.bf16.mxu0 0
        %6468 = vmatpush1.bf16.msra.mxu0 0
        %6469 = vmatprep.mubr.bf16.mxu0 0
        %6470 = vmatmul.mubr.bf16.gmra.mrb[0].mxu0 %v6387
        %v6471 = vpop.f32.mrb[0].mxu0
        %v6472 = vadd.f32 0.0, %v6471
        %v6473 = vpop.f32.mrb[0].mxu0
        %v6474 = vpop.f32.mrb[0].mxu0
        %v6475 = vpop.f32.mrb[0].mxu0
        %6476 = vdwg.mxu0
        %v6493 = vunpack.c.l.b16 %v6349
        %v6494 = vunpack.c.l.b16 %v6350
        %v6495 = vunpack.c.l.b16 %v6351
        %v6496 = vunpack.c.l.b16 %v6352
        %v6497 = vunpack.c.l.b16 %v6353
        %v6498 = vunpack.c.l.b16 %v6354
        %v6499 = vunpack.c.l.b16 %v6355
        %v6500 = vunpack.c.l.b16 %v6356
        %v6501 = vunpack.c.l.b16 %v6357
        %v6502 = vunpack.c.l.b16 %v6358
        %v6503 = vunpack.c.l.b16 %v6359
        %v6504 = vunpack.c.l.b16 %v6360
        %v6505 = vunpack.c.l.b16 %v6361
        %v6506 = vunpack.c.l.b16 %v6362
        %v6507 = vunpack.c.l.b16 %v6363
        %v6508 = vunpack.c.l.b16 %v6364
        %v6509 = vpack.c.b16 %v6494, %v6493
        %v6510 = vpack.c.b16 %v6496, %v6495
        %v6511 = vpack.c.b16 %v6498, %v6497
        %v6512 = vpack.c.b16 %v6500, %v6499
        %v6513 = vpack.c.b16 %v6502, %v6501
        %v6514 = vpack.c.b16 %v6504, %v6503
        %v6515 = vpack.c.b16 %v6506, %v6505
        %v6516 = vpack.c.b16 %v6508, %v6507
        %6525 = vmatprep.subr.bf16.mxu0 0
        %6526 = vmatpush1.bf16.msra.mxu0 %v6509
        %6527 = vmatprep.subr.bf16.mxu0 0
        %6528 = vmatpush1.bf16.msra.mxu0 %v6510
        %6529 = vmatprep.subr.bf16.mxu0 0
        %6530 = vmatpush1.bf16.msra.mxu0 %v6511
        %6531 = vmatprep.subr.bf16.mxu0 0
        %6532 = vmatpush1.bf16.msra.mxu0 %v6512
        %6533 = vmatprep.subr.bf16.mxu0 0
        %6534 = vmatpush1.bf16.msra.mxu0 %v6513
        %6535 = vmatprep.subr.bf16.mxu0 0
        %6536 = vmatpush1.bf16.msra.mxu0 %v6514
        %6537 = vmatprep.subr.bf16.mxu0 0
        %6538 = vmatpush1.bf16.msra.mxu0 %v6515
        %6539 = vmatprep.subr.bf16.mxu0 0
        %6540 = vmatpush1.bf16.msra.mxu0 %v6516
        %6541 = vmatprep.subr.bf16.mxu0 0
        %6542 = vmatpush1.bf16.msra.mxu0 0
        %6543 = vmatprep.subr.bf16.mxu0 0
        %6544 = vmatpush1.bf16.msra.mxu0 0
        %6545 = vmatprep.subr.bf16.mxu0 0
        %6546 = vmatpush1.bf16.msra.mxu0 0
        %6547 = vmatprep.subr.bf16.mxu0 0
        %6548 = vmatpush1.bf16.msra.mxu0 0
        %6549 = vmatprep.subr.bf16.mxu0 0
        %6550 = vmatpush1.bf16.msra.mxu0 0
        %6551 = vmatprep.subr.bf16.mxu0 0
        %6552 = vmatpush1.bf16.msra.mxu0 0
        %6553 = vmatprep.subr.bf16.mxu0 0
        %6554 = vmatpush1.bf16.msra.mxu0 0
        %6555 = vmatprep.subr.bf16.mxu0 0
        %6556 = vmatpush1.bf16.msra.mxu0 0
        %6557 = vmatprep.mubr.bf16.mxu0 0
        %6558 = vmatmul.mubr.bf16.gmra.mrb[0].mxu0 %v6348
        %v6559 = vpop.f32.mrb[0].mxu0
        %v6560 = vadd.f32 %v6472, %v6559
        %v6561 = vpop.f32.mrb[0].mxu0
        %v6562 = vpop.f32.mrb[0].mxu0
        %v6563 = vpop.f32.mrb[0].mxu0
        %6564 = vdwg.mxu0
        %v6565 = vld [vmem:[%s4928] sm:$0xf]
        %v6566 = vld [vmem:[%s4928 + $0x4] sm:$0xf]
        %v6567 = vld [vmem:[%s4928 + $0x8] sm:$0xf]
        %v6568 = vld [vmem:[%s4928 + $0xc] sm:$0xf]
        %v6569 = vld [vmem:[%s4928 + $0x10] sm:$0xf]
        %v6570 = vld [vmem:[%s4928 + $0x14] sm:$0xf]
        %v6571 = vld [vmem:[%s4928 + $0x18] sm:$0xf]
        %v6572 = vld [vmem:[%s4928 + $0x1c] sm:$0xf]
        %v6573 = vld [vmem:[%s4928 + $0x20] sm:$0xf]
        %v6574 = vld [vmem:[%s4928 + $0x24] sm:$0xf]
        %v6575 = vld [vmem:[%s4928 + $0x28] sm:$0xf]
        %v6576 = vld [vmem:[%s4928 + $0x2c] sm:$0xf]
        %v6577 = vld [vmem:[%s4928 + $0x30] sm:$0xf]
        %v6578 = vld [vmem:[%s4928 + $0x34] sm:$0xf]
        %v6579 = vld [vmem:[%s4928 + $0x38] sm:$0xf]
        %v6580 = vld [vmem:[%s4928 + $0x3c] sm:$0xf]
        %v6582 = vrot.slane %v6348, 1
        %v6600 = vunpack.c.l.b16 %v6565
        %v6601 = vunpack.c.l.b16 %v6566
        %v6602 = vunpack.c.l.b16 %v6567
        %v6603 = vunpack.c.l.b16 %v6568
        %v6604 = vunpack.c.l.b16 %v6569
        %v6605 = vunpack.c.l.b16 %v6570
        %v6606 = vunpack.c.l.b16 %v6571
        %v6607 = vunpack.c.l.b16 %v6572
        %v6608 = vunpack.c.l.b16 %v6573
        %v6609 = vunpack.c.l.b16 %v6574
        %v6610 = vunpack.c.l.b16 %v6575
        %v6611 = vunpack.c.l.b16 %v6576
        %v6612 = vunpack.c.l.b16 %v6577
        %v6613 = vunpack.c.l.b16 %v6578
        %v6614 = vunpack.c.l.b16 %v6579
        %v6615 = vunpack.c.l.b16 %v6580
        %v6616 = vpack.c.b16 %v6601, %v6600
        %v6617 = vpack.c.b16 %v6603, %v6602
        %v6618 = vpack.c.b16 %v6605, %v6604
        %v6619 = vpack.c.b16 %v6607, %v6606
        %v6620 = vpack.c.b16 %v6609, %v6608
        %v6621 = vpack.c.b16 %v6611, %v6610
        %v6622 = vpack.c.b16 %v6613, %v6612
        %v6623 = vpack.c.b16 %v6615, %v6614
        %6632 = vmatprep.subr.bf16.mxu0 0
        %6633 = vmatpush1.bf16.msra.mxu0 %v6616
        %6634 = vmatprep.subr.bf16.mxu0 0
        %6635 = vmatpush1.bf16.msra.mxu0 %v6617
        %6636 = vmatprep.subr.bf16.mxu0 0
        %6637 = vmatpush1.bf16.msra.mxu0 %v6618
        %6638 = vmatprep.subr.bf16.mxu0 0
        %6639 = vmatpush1.bf16.msra.mxu0 %v6619
        %6640 = vmatprep.subr.bf16.mxu0 0
        %6641 = vmatpush1.bf16.msra.mxu0 %v6620
        %6642 = vmatprep.subr.bf16.mxu0 0
        %6643 = vmatpush1.bf16.msra.mxu0 %v6621
        %6644 = vmatprep.subr.bf16.mxu0 0
        %6645 = vmatpush1.bf16.msra.mxu0 %v6622
        %6646 = vmatprep.subr.bf16.mxu0 0
        %6647 = vmatpush1.bf16.msra.mxu0 %v6623
        %6648 = vmatprep.subr.bf16.mxu0 0
        %6649 = vmatpush1.bf16.msra.mxu0 0
        %6650 = vmatprep.subr.bf16.mxu0 0
        %6651 = vmatpush1.bf16.msra.mxu0 0
        %6652 = vmatprep.subr.bf16.mxu0 0
        %6653 = vmatpush1.bf16.msra.mxu0 0
        %6654 = vmatprep.subr.bf16.mxu0 0
        %6655 = vmatpush1.bf16.msra.mxu0 0
        %6656 = vmatprep.subr.bf16.mxu0 0
        %6657 = vmatpush1.bf16.msra.mxu0 0
        %6658 = vmatprep.subr.bf16.mxu0 0
        %6659 = vmatpush1.bf16.msra.mxu0 0
        %6660 = vmatprep.subr.bf16.mxu0 0
        %6661 = vmatpush1.bf16.msra.mxu0 0
        %6662 = vmatprep.subr.bf16.mxu0 0
        %6663 = vmatpush1.bf16.msra.mxu0 0
        %6664 = vmatprep.mubr.bf16.mxu0 0
        %6665 = vmatmul.mubr.bf16.gmra.mrb[0].mxu0 %v6582
        %v6666 = vpop.f32.mrb[0].mxu0
        %v6667 = vadd.f32 0.0, %v6666
        %v6668 = vpop.f32.mrb[0].mxu0
        %v6669 = vpop.f32.mrb[0].mxu0
        %v6670 = vpop.f32.mrb[0].mxu0
        %6671 = vdwg.mxu0
        %v6672 = vadd.f32 %v6560, %v6667
        %v6673 = vadd.f32 %v6672, %v5041
        %v6674 = vmax.f32 %v6673, 0.0
        %v6675 = vpack.c.bf16 %v6674, %v6674
        %v6678 = vunpack.c.l.s4 1966171168
        %v6679 = vunpack.c.0.s8 %v6678
        %v6680 = vlaneseq
        %v6681 = vshrl.u32 %v6680, 7
        %v6682 = vsub.s32 %v6679, %v6681
        %v6683 = vrot.slane %v6675, %v6682
        %v6684 = vcombine.high %v6683, %v6683
        %v6686 = vunpack.c.l.s4 1966171168
        %v6687 = vunpack.c.0.s8 %v6686
        %v6688 = vlaneseq
        %v6689 = vshrl.u32 %v6688, 7
        %v6690 = vsub.s32 %v6687, %v6689
        %v6691 = vrot.slane %v6683, %v6690
        %v6693 = vunpack.c.l.s4 1966171168
        %v6694 = vunpack.c.0.s8 %v6693
        %v6695 = vlaneseq
        %v6696 = vshrl.u32 %v6695, 7
        %v6697 = vsub.s32 %v6694, %v6696
        %v6698 = vrot.slane %v6684, %v6697
        %v6699 = vunpack.i.l.s16 %v6691
        %v6700 = vunpack.i.h.s16 %v6691
        %v6701 = vunpack.i.l.s16 %v6698
        %v6702 = vunpack.i.h.s16 %v6698
        %v6703 = vpack.i.b16 %v6699, %v6699
        %v6704 = vpack.i.b16 %v6700, %v6700
        %v6705 = vpack.i.b16 %v6701, %v6701
        %v6706 = vpack.i.b16 %v6702, %v6702
        %v6708 = vunpack.c.l.s4 286326784
        %v6709 = vunpack.c.0.s8 %v6708
        %v6710 = vlaneseq
        %v6711 = vshrl.u32 %v6710, 7
        %v6712 = vsub.s32 %v6709, %v6711
        %v6713 = vrot.slane %v6703, %v6712
        %v6715 = vunpack.c.l.s4 286326784
        %v6716 = vunpack.c.0.s8 %v6715
        %v6717 = vlaneseq
        %v6718 = vshrl.u32 %v6717, 7
        %v6719 = vsub.s32 %v6716, %v6718
        %v6720 = vrot.slane %v6704, %v6719
        %v6722 = vunpack.c.l.s4 286326784
        %v6723 = vunpack.c.0.s8 %v6722
        %v6724 = vlaneseq
        %v6725 = vshrl.u32 %v6724, 7
        %v6726 = vsub.s32 %v6723, %v6725
        %v6727 = vrot.slane %v6705, %v6726
        %v6729 = vunpack.c.l.s4 286326784
        %v6730 = vunpack.c.0.s8 %v6729
        %v6731 = vlaneseq
        %v6732 = vshrl.u32 %v6731, 7
        %v6733 = vsub.s32 %v6730, %v6732
        %v6734 = vrot.slane %v6706, %v6733
        %vm6739 = vcmask 1042434
        %vm6740 = vsmask.f32 2304
        %vm6741 = vmand %vm6739, %vm6740
        %v6742 = vld [vmem:[#allocation2] sm:$0x4]
        %v6743 = vsel %vm6741, %v6713, %v6742
        %6744 = vst [vmem:[#allocation2] sm:$0x4] %v6743
        %v6745 = vld [vmem:[#allocation2 + $0x4] sm:$0x4]
        %v6746 = vsel %vm6741, %v6720, %v6745
        %6747 = vst [vmem:[#allocation2 + $0x4] sm:$0x4] %v6746
        %v6748 = vld [vmem:[#allocation2 + $0x8] sm:$0x4]
        %v6749 = vsel %vm6741, %v6727, %v6748
        %6750 = vst [vmem:[#allocation2 + $0x8] sm:$0x4] %v6749
        %v6751 = vld [vmem:[#allocation2 + $0xc] sm:$0x4]
        %v6752 = vsel %vm6741, %v6734, %v6751
        %6753 = vst [vmem:[#allocation2 + $0xc] sm:$0x4] %v6752
        %v6754 = vadd.f32 %v4697, %v4706
        %v6755 = vmax.f32 %v6754, 0.0
        %v6756 = vpack.c.bf16 %v6755, %v6755
        %v6757 = vld [vmem:[%s5] sm:$0xf]
        %v6758 = vld [vmem:[%s5 + $0x4] sm:$0xf]
        %v6759 = vld [vmem:[%s5 + $0x8] sm:$0xf]
        %v6760 = vld [vmem:[%s5 + $0xc] sm:$0xf]
        %v6761 = vld [vmem:[%s5 + $0x10] sm:$0xf]
        %v6762 = vld [vmem:[%s5 + $0x14] sm:$0xf]
        %v6763 = vld [vmem:[%s5 + $0x18] sm:$0xf]
        %v6764 = vld [vmem:[%s5 + $0x1c] sm:$0xf]
        %v6765 = vld [vmem:[%s5 + $0x20] sm:$0xf]
        %v6766 = vld [vmem:[%s5 + $0x24] sm:$0xf]
        %v6767 = vld [vmem:[%s5 + $0x28] sm:$0xf]
        %v6768 = vld [vmem:[%s5 + $0x2c] sm:$0xf]
        %v6769 = vld [vmem:[%s5 + $0x30] sm:$0xf]
        %v6770 = vld [vmem:[%s5 + $0x34] sm:$0xf]
        %v6771 = vld [vmem:[%s5 + $0x38] sm:$0xf]
        %v6772 = vld [vmem:[%s5 + $0x3c] sm:$0xf]
        %v6773 = vld [vmem:[%s4727] sm:$0xf]
        %v6774 = vld [vmem:[%s4727 + $0x4] sm:$0xf]
        %v6775 = vld [vmem:[%s4727 + $0x8] sm:$0xf]
        %v6776 = vld [vmem:[%s4727 + $0xc] sm:$0xf]
        %v6777 = vld [vmem:[%s4727 + $0x10] sm:$0xf]
        %v6778 = vld [vmem:[%s4727 + $0x14] sm:$0xf]
        %v6779 = vld [vmem:[%s4727 + $0x18] sm:$0xf]
        %v6780 = vld [vmem:[%s4727 + $0x1c] sm:$0xf]
        %v6781 = vld [vmem:[%s4727 + $0x20] sm:$0xf]
        %v6782 = vld [vmem:[%s4727 + $0x24] sm:$0xf]
        %v6783 = vld [vmem:[%s4727 + $0x28] sm:$0xf]
        %v6784 = vld [vmem:[%s4727 + $0x2c] sm:$0xf]
        %v6785 = vld [vmem:[%s4727 + $0x30] sm:$0xf]
        %v6786 = vld [vmem:[%s4727 + $0x34] sm:$0xf]
        %v6787 = vld [vmem:[%s4727 + $0x38] sm:$0xf]
        %v6788 = vld [vmem:[%s4727 + $0x3c] sm:$0xf]
        %v6790 = vshrl.u32 %v6756, 16
        %v6792 = vshll.u32 %v6756, 16
        %v6794 = vrot.slane %v6792, 1
        %v6795 = vor.u32 %v6790, %v6794
        %v6813 = vunpack.c.l.b16 %v6773
        %v6814 = vunpack.c.l.b16 %v6774
        %v6815 = vunpack.c.l.b16 %v6775
        %v6816 = vunpack.c.l.b16 %v6776
        %v6817 = vunpack.c.l.b16 %v6777
        %v6818 = vunpack.c.l.b16 %v6778
        %v6819 = vunpack.c.l.b16 %v6779
        %v6820 = vunpack.c.l.b16 %v6780
        %v6821 = vunpack.c.l.b16 %v6781
        %v6822 = vunpack.c.l.b16 %v6782
        %v6823 = vunpack.c.l.b16 %v6783
        %v6824 = vunpack.c.l.b16 %v6784
        %v6825 = vunpack.c.l.b16 %v6785
        %v6826 = vunpack.c.l.b16 %v6786
        %v6827 = vunpack.c.l.b16 %v6787
        %v6828 = vunpack.c.l.b16 %v6788
        %v6829 = vpack.c.b16 %v6814, %v6813
        %v6830 = vpack.c.b16 %v6816, %v6815
        %v6831 = vpack.c.b16 %v6818, %v6817
        %v6832 = vpack.c.b16 %v6820, %v6819
        %v6833 = vpack.c.b16 %v6822, %v6821
        %v6834 = vpack.c.b16 %v6824, %v6823
        %v6835 = vpack.c.b16 %v6826, %v6825
        %v6836 = vpack.c.b16 %v6828, %v6827
        %6845 = vmatprep.subr.bf16.mxu0 0
        %6846 = vmatpush1.bf16.msra.mxu0 %v6829
        %6847 = vmatprep.subr.bf16.mxu0 0
        %6848 = vmatpush1.bf16.msra.mxu0 %v6830
        %6849 = vmatprep.subr.bf16.mxu0 0
        %6850 = vmatpush1.bf16.msra.mxu0 %v6831
        %6851 = vmatprep.subr.bf16.mxu0 0
        %6852 = vmatpush1.bf16.msra.mxu0 %v6832
        %6853 = vmatprep.subr.bf16.mxu0 0
        %6854 = vmatpush1.bf16.msra.mxu0 %v6833
        %6855 = vmatprep.subr.bf16.mxu0 0
        %6856 = vmatpush1.bf16.msra.mxu0 %v6834
        %6857 = vmatprep.subr.bf16.mxu0 0
        %6858 = vmatpush1.bf16.msra.mxu0 %v6835
        %6859 = vmatprep.subr.bf16.mxu0 0
        %6860 = vmatpush1.bf16.msra.mxu0 %v6836
        %6861 = vmatprep.subr.bf16.mxu0 0
        %6862 = vmatpush1.bf16.msra.mxu0 0
        %6863 = vmatprep.subr.bf16.mxu0 0
        %6864 = vmatpush1.bf16.msra.mxu0 0
        %6865 = vmatprep.subr.bf16.mxu0 0
        %6866 = vmatpush1.bf16.msra.mxu0 0
        %6867 = vmatprep.subr.bf16.mxu0 0
        %6868 = vmatpush1.bf16.msra.mxu0 0
        %6869 = vmatprep.subr.bf16.mxu0 0
        %6870 = vmatpush1.bf16.msra.mxu0 0
        %6871 = vmatprep.subr.bf16.mxu0 0
        %6872 = vmatpush1.bf16.msra.mxu0 0
        %6873 = vmatprep.subr.bf16.mxu0 0
        %6874 = vmatpush1.bf16.msra.mxu0 0
        %6875 = vmatprep.subr.bf16.mxu0 0
        %6876 = vmatpush1.bf16.msra.mxu0 0
        %6877 = vmatprep.mubr.bf16.mxu0 0
        %6878 = vmatmul.mubr.bf16.gmra.mrb[0].mxu0 %v6795
        %v6879 = vpop.f32.mrb[0].mxu0
        %v6880 = vadd.f32 0.0, %v6879
        %v6881 = vpop.f32.mrb[0].mxu0
        %v6882 = vpop.f32.mrb[0].mxu0
        %v6883 = vpop.f32.mrb[0].mxu0
        %6884 = vdwg.mxu0
        %v6901 = vunpack.c.l.b16 %v6757
        %v6902 = vunpack.c.l.b16 %v6758
        %v6903 = vunpack.c.l.b16 %v6759
        %v6904 = vunpack.c.l.b16 %v6760
        %v6905 = vunpack.c.l.b16 %v6761
        %v6906 = vunpack.c.l.b16 %v6762
        %v6907 = vunpack.c.l.b16 %v6763
        %v6908 = vunpack.c.l.b16 %v6764
        %v6909 = vunpack.c.l.b16 %v6765
        %v6910 = vunpack.c.l.b16 %v6766
        %v6911 = vunpack.c.l.b16 %v6767
        %v6912 = vunpack.c.l.b16 %v6768
        %v6913 = vunpack.c.l.b16 %v6769
        %v6914 = vunpack.c.l.b16 %v6770
        %v6915 = vunpack.c.l.b16 %v6771
        %v6916 = vunpack.c.l.b16 %v6772
        %v6917 = vpack.c.b16 %v6902, %v6901
        %v6918 = vpack.c.b16 %v6904, %v6903
        %v6919 = vpack.c.b16 %v6906, %v6905
        %v6920 = vpack.c.b16 %v6908, %v6907
        %v6921 = vpack.c.b16 %v6910, %v6909
        %v6922 = vpack.c.b16 %v6912, %v6911
        %v6923 = vpack.c.b16 %v6914, %v6913
        %v6924 = vpack.c.b16 %v6916, %v6915
        %6933 = vmatprep.subr.bf16.mxu0 0
        %6934 = vmatpush1.bf16.msra.mxu0 %v6917
        %6935 = vmatprep.subr.bf16.mxu0 0
        %6936 = vmatpush1.bf16.msra.mxu0 %v6918
        %6937 = vmatprep.subr.bf16.mxu0 0
        %6938 = vmatpush1.bf16.msra.mxu0 %v6919
        %6939 = vmatprep.subr.bf16.mxu0 0
        %6940 = vmatpush1.bf16.msra.mxu0 %v6920
        %6941 = vmatprep.subr.bf16.mxu0 0
        %6942 = vmatpush1.bf16.msra.mxu0 %v6921
        %6943 = vmatprep.subr.bf16.mxu0 0
        %6944 = vmatpush1.bf16.msra.mxu0 %v6922
        %6945 = vmatprep.subr.bf16.mxu0 0
        %6946 = vmatpush1.bf16.msra.mxu0 %v6923
        %6947 = vmatprep.subr.bf16.mxu0 0
        %6948 = vmatpush1.bf16.msra.mxu0 %v6924
        %6949 = vmatprep.subr.bf16.mxu0 0
        %6950 = vmatpush1.bf16.msra.mxu0 0
        %6951 = vmatprep.subr.bf16.mxu0 0
        %6952 = vmatpush1.bf16.msra.mxu0 0
        %6953 = vmatprep.subr.bf16.mxu0 0
        %6954 = vmatpush1.bf16.msra.mxu0 0
        %6955 = vmatprep.subr.bf16.mxu0 0
        %6956 = vmatpush1.bf16.msra.mxu0 0
        %6957 = vmatprep.subr.bf16.mxu0 0
        %6958 = vmatpush1.bf16.msra.mxu0 0
        %6959 = vmatprep.subr.bf16.mxu0 0
        %6960 = vmatpush1.bf16.msra.mxu0 0
        %6961 = vmatprep.subr.bf16.mxu0 0
        %6962 = vmatpush1.bf16.msra.mxu0 0
        %6963 = vmatprep.subr.bf16.mxu0 0
        %6964 = vmatpush1.bf16.msra.mxu0 0
        %6965 = vmatprep.mubr.bf16.mxu0 0
        %6966 = vmatmul.mubr.bf16.gmra.mrb[0].mxu0 %v6756
        %v6967 = vpop.f32.mrb[0].mxu0
        %v6968 = vadd.f32 %v6880, %v6967
        %v6969 = vpop.f32.mrb[0].mxu0
        %v6970 = vpop.f32.mrb[0].mxu0
        %v6971 = vpop.f32.mrb[0].mxu0
        %6972 = vdwg.mxu0
        %v6973 = vld [vmem:[%s4928] sm:$0xf]
        %v6974 = vld [vmem:[%s4928 + $0x4] sm:$0xf]
        %v6975 = vld [vmem:[%s4928 + $0x8] sm:$0xf]
        %v6976 = vld [vmem:[%s4928 + $0xc] sm:$0xf]
        %v6977 = vld [vmem:[%s4928 + $0x10] sm:$0xf]
        %v6978 = vld [vmem:[%s4928 + $0x14] sm:$0xf]
        %v6979 = vld [vmem:[%s4928 + $0x18] sm:$0xf]
        %v6980 = vld [vmem:[%s4928 + $0x1c] sm:$0xf]
        %v6981 = vld [vmem:[%s4928 + $0x20] sm:$0xf]
        %v6982 = vld [vmem:[%s4928 + $0x24] sm:$0xf]
        %v6983 = vld [vmem:[%s4928 + $0x28] sm:$0xf]
        %v6984 = vld [vmem:[%s4928 + $0x2c] sm:$0xf]
        %v6985 = vld [vmem:[%s4928 + $0x30] sm:$0xf]
        %v6986 = vld [vmem:[%s4928 + $0x34] sm:$0xf]
        %v6987 = vld [vmem:[%s4928 + $0x38] sm:$0xf]
        %v6988 = vld [vmem:[%s4928 + $0x3c] sm:$0xf]
        %v6990 = vrot.slane %v6756, 1
        %v7008 = vunpack.c.l.b16 %v6973
        %v7009 = vunpack.c.l.b16 %v6974
        %v7010 = vunpack.c.l.b16 %v6975
        %v7011 = vunpack.c.l.b16 %v6976
        %v7012 = vunpack.c.l.b16 %v6977
        %v7013 = vunpack.c.l.b16 %v6978
        %v7014 = vunpack.c.l.b16 %v6979
        %v7015 = vunpack.c.l.b16 %v6980
        %v7016 = vunpack.c.l.b16 %v6981
        %v7017 = vunpack.c.l.b16 %v6982
        %v7018 = vunpack.c.l.b16 %v6983
        %v7019 = vunpack.c.l.b16 %v6984
        %v7020 = vunpack.c.l.b16 %v6985
        %v7021 = vunpack.c.l.b16 %v6986
        %v7022 = vunpack.c.l.b16 %v6987
        %v7023 = vunpack.c.l.b16 %v6988
        %v7024 = vpack.c.b16 %v7009, %v7008
        %v7025 = vpack.c.b16 %v7011, %v7010
        %v7026 = vpack.c.b16 %v7013, %v7012
        %v7027 = vpack.c.b16 %v7015, %v7014
        %v7028 = vpack.c.b16 %v7017, %v7016
        %v7029 = vpack.c.b16 %v7019, %v7018
        %v7030 = vpack.c.b16 %v7021, %v7020
        %v7031 = vpack.c.b16 %v7023, %v7022
        %7040 = vmatprep.subr.bf16.mxu0 0
        %7041 = vmatpush1.bf16.msra.mxu0 %v7024
        %7042 = vmatprep.subr.bf16.mxu0 0
        %7043 = vmatpush1.bf16.msra.mxu0 %v7025
        %7044 = vmatprep.subr.bf16.mxu0 0
        %7045 = vmatpush1.bf16.msra.mxu0 %v7026
        %7046 = vmatprep.subr.bf16.mxu0 0
        %7047 = vmatpush1.bf16.msra.mxu0 %v7027
        %7048 = vmatprep.subr.bf16.mxu0 0
        %7049 = vmatpush1.bf16.msra.mxu0 %v7028
        %7050 = vmatprep.subr.bf16.mxu0 0
        %7051 = vmatpush1.bf16.msra.mxu0 %v7029
        %7052 = vmatprep.subr.bf16.mxu0 0
        %7053 = vmatpush1.bf16.msra.mxu0 %v7030
        %7054 = vmatprep.subr.bf16.mxu0 0
        %7055 = vmatpush1.bf16.msra.mxu0 %v7031
        %7056 = vmatprep.subr.bf16.mxu0 0
        %7057 = vmatpush1.bf16.msra.mxu0 0
        %7058 = vmatprep.subr.bf16.mxu0 0
        %7059 = vmatpush1.bf16.msra.mxu0 0
        %7060 = vmatprep.subr.bf16.mxu0 0
        %7061 = vmatpush1.bf16.msra.mxu0 0
        %7062 = vmatprep.subr.bf16.mxu0 0
        %7063 = vmatpush1.bf16.msra.mxu0 0
        %7064 = vmatprep.subr.bf16.mxu0 0
        %7065 = vmatpush1.bf16.msra.mxu0 0
        %7066 = vmatprep.subr.bf16.mxu0 0
        %7067 = vmatpush1.bf16.msra.mxu0 0
        %7068 = vmatprep.subr.bf16.mxu0 0
        %7069 = vmatpush1.bf16.msra.mxu0 0
        %7070 = vmatprep.subr.bf16.mxu0 0
        %7071 = vmatpush1.bf16.msra.mxu0 0
        %7072 = vmatprep.mubr.bf16.mxu0 0
        %7073 = vmatmul.mubr.bf16.gmra.mrb[0].mxu0 %v6990
        %v7074 = vpop.f32.mrb[0].mxu0
        %v7075 = vadd.f32 0.0, %v7074
        %v7076 = vpop.f32.mrb[0].mxu0
        %v7077 = vpop.f32.mrb[0].mxu0
        %v7078 = vpop.f32.mrb[0].mxu0
        %7079 = vdwg.mxu0
        %v7080 = vadd.f32 %v6968, %v7075
        %v7081 = vadd.f32 %v7080, %v5041
        %v7082 = vmax.f32 %v7081, 0.0
        %v7083 = vpack.c.bf16 %v7082, %v7082
        %v7086 = vunpack.c.l.s4 1966171168
        %v7087 = vunpack.c.0.s8 %v7086
        %v7088 = vlaneseq
        %v7089 = vshrl.u32 %v7088, 7
        %v7090 = vsub.s32 %v7087, %v7089
        %v7091 = vrot.slane %v7083, %v7090
        %v7092 = vcombine.high %v7091, %v7091
        %v7094 = vunpack.c.l.s4 1966171168
        %v7095 = vunpack.c.0.s8 %v7094
        %v7096 = vlaneseq
        %v7097 = vshrl.u32 %v7096, 7
        %v7098 = vsub.s32 %v7095, %v7097
        %v7099 = vrot.slane %v7091, %v7098
        %v7101 = vunpack.c.l.s4 1966171168
        %v7102 = vunpack.c.0.s8 %v7101
        %v7103 = vlaneseq
        %v7104 = vshrl.u32 %v7103, 7
        %v7105 = vsub.s32 %v7102, %v7104
        %v7106 = vrot.slane %v7092, %v7105
        %v7107 = vunpack.i.l.s16 %v7099
        %v7108 = vunpack.i.h.s16 %v7099
        %v7109 = vunpack.i.l.s16 %v7106
        %v7110 = vunpack.i.h.s16 %v7106
        %v7111 = vpack.i.b16 %v7107, %v7107
        %v7112 = vpack.i.b16 %v7108, %v7108
        %v7113 = vpack.i.b16 %v7109, %v7109
        %v7114 = vpack.i.b16 %v7110, %v7110
        %v7116 = vunpack.c.l.s4 286326784
        %v7117 = vunpack.c.0.s8 %v7116
        %v7118 = vlaneseq
        %v7119 = vshrl.u32 %v7118, 7
        %v7120 = vsub.s32 %v7117, %v7119
        %v7121 = vrot.slane %v7111, %v7120
        %v7123 = vunpack.c.l.s4 286326784
        %v7124 = vunpack.c.0.s8 %v7123
        %v7125 = vlaneseq
        %v7126 = vshrl.u32 %v7125, 7
        %v7127 = vsub.s32 %v7124, %v7126
        %v7128 = vrot.slane %v7112, %v7127
        %v7130 = vunpack.c.l.s4 286326784
        %v7131 = vunpack.c.0.s8 %v7130
        %v7132 = vlaneseq
        %v7133 = vshrl.u32 %v7132, 7
        %v7134 = vsub.s32 %v7131, %v7133
        %v7135 = vrot.slane %v7113, %v7134
        %v7137 = vunpack.c.l.s4 286326784
        %v7138 = vunpack.c.0.s8 %v7137
        %v7139 = vlaneseq
        %v7140 = vshrl.u32 %v7139, 7
        %v7141 = vsub.s32 %v7138, %v7140
        %v7142 = vrot.slane %v7114, %v7141
        %vm7147 = vsmask.f32 7946
        %vm7148 = vmand %vm6739, %vm7147
        %v7149 = vld [vmem:[#allocation2] sm:$0x4]
        %v7150 = vsel %vm7148, %v7121, %v7149
        %7151 = vst [vmem:[#allocation2] sm:$0x4] %v7150
        %v7152 = vld [vmem:[#allocation2 + $0x4] sm:$0x4]
        %v7153 = vsel %vm7148, %v7128, %v7152
        %7154 = vst [vmem:[#allocation2 + $0x4] sm:$0x4] %v7153
        %v7155 = vld [vmem:[#allocation2 + $0x8] sm:$0x4]
        %v7156 = vsel %vm7148, %v7135, %v7155
        %7157 = vst [vmem:[#allocation2 + $0x8] sm:$0x4] %v7156
        %v7158 = vld [vmem:[#allocation2 + $0xc] sm:$0x4]
        %v7159 = vsel %vm7148, %v7142, %v7158
        %7160 = vst [vmem:[#allocation2 + $0xc] sm:$0x4] %v7159
        %v7161 = vadd.f32 %v4698, %v4706
        %v7162 = vmax.f32 %v7161, 0.0
        %v7163 = vpack.c.bf16 %v7162, %v7162
        %v7164 = vld [vmem:[%s5] sm:$0xf]
        %v7165 = vld [vmem:[%s5 + $0x4] sm:$0xf]
        %v7166 = vld [vmem:[%s5 + $0x8] sm:$0xf]
        %v7167 = vld [vmem:[%s5 + $0xc] sm:$0xf]
        %v7168 = vld [vmem:[%s5 + $0x10] sm:$0xf]
        %v7169 = vld [vmem:[%s5 + $0x14] sm:$0xf]
        %v7170 = vld [vmem:[%s5 + $0x18] sm:$0xf]
        %v7171 = vld [vmem:[%s5 + $0x1c] sm:$0xf]
        %v7172 = vld [vmem:[%s5 + $0x20] sm:$0xf]
        %v7173 = vld [vmem:[%s5 + $0x24] sm:$0xf]
        %v7174 = vld [vmem:[%s5 + $0x28] sm:$0xf]
        %v7175 = vld [vmem:[%s5 + $0x2c] sm:$0xf]
        %v7176 = vld [vmem:[%s5 + $0x30] sm:$0xf]
        %v7177 = vld [vmem:[%s5 + $0x34] sm:$0xf]
        %v7178 = vld [vmem:[%s5 + $0x38] sm:$0xf]
        %v7179 = vld [vmem:[%s5 + $0x3c] sm:$0xf]
        %v7180 = vld [vmem:[%s4727] sm:$0xf]
        %v7181 = vld [vmem:[%s4727 + $0x4] sm:$0xf]
        %v7182 = vld [vmem:[%s4727 + $0x8] sm:$0xf]
        %v7183 = vld [vmem:[%s4727 + $0xc] sm:$0xf]
        %v7184 = vld [vmem:[%s4727 + $0x10] sm:$0xf]
        %v7185 = vld [vmem:[%s4727 + $0x14] sm:$0xf]
        %v7186 = vld [vmem:[%s4727 + $0x18] sm:$0xf]
        %v7187 = vld [vmem:[%s4727 + $0x1c] sm:$0xf]
        %v7188 = vld [vmem:[%s4727 + $0x20] sm:$0xf]
        %v7189 = vld [vmem:[%s4727 + $0x24] sm:$0xf]
        %v7190 = vld [vmem:[%s4727 + $0x28] sm:$0xf]
        %v7191 = vld [vmem:[%s4727 + $0x2c] sm:$0xf]
        %v7192 = vld [vmem:[%s4727 + $0x30] sm:$0xf]
        %v7193 = vld [vmem:[%s4727 + $0x34] sm:$0xf]
        %v7194 = vld [vmem:[%s4727 + $0x38] sm:$0xf]
        %v7195 = vld [vmem:[%s4727 + $0x3c] sm:$0xf]
        %v7197 = vshrl.u32 %v7163, 16
        %v7199 = vshll.u32 %v7163, 16
        %v7201 = vrot.slane %v7199, 1
        %v7202 = vor.u32 %v7197, %v7201
        %v7220 = vunpack.c.l.b16 %v7180
        %v7221 = vunpack.c.l.b16 %v7181
        %v7222 = vunpack.c.l.b16 %v7182
        %v7223 = vunpack.c.l.b16 %v7183
        %v7224 = vunpack.c.l.b16 %v7184
        %v7225 = vunpack.c.l.b16 %v7185
        %v7226 = vunpack.c.l.b16 %v7186
        %v7227 = vunpack.c.l.b16 %v7187
        %v7228 = vunpack.c.l.b16 %v7188
        %v7229 = vunpack.c.l.b16 %v7189
        %v7230 = vunpack.c.l.b16 %v7190
        %v7231 = vunpack.c.l.b16 %v7191
        %v7232 = vunpack.c.l.b16 %v7192
        %v7233 = vunpack.c.l.b16 %v7193
        %v7234 = vunpack.c.l.b16 %v7194
        %v7235 = vunpack.c.l.b16 %v7195
        %v7236 = vpack.c.b16 %v7221, %v7220
        %v7237 = vpack.c.b16 %v7223, %v7222
        %v7238 = vpack.c.b16 %v7225, %v7224
        %v7239 = vpack.c.b16 %v7227, %v7226
        %v7240 = vpack.c.b16 %v7229, %v7228
        %v7241 = vpack.c.b16 %v7231, %v7230
        %v7242 = vpack.c.b16 %v7233, %v7232
        %v7243 = vpack.c.b16 %v7235, %v7234
        %7252 = vmatprep.subr.bf16.mxu0 0
        %7253 = vmatpush1.bf16.msra.mxu0 %v7236
        %7254 = vmatprep.subr.bf16.mxu0 0
        %7255 = vmatpush1.bf16.msra.mxu0 %v7237
        %7256 = vmatprep.subr.bf16.mxu0 0
        %7257 = vmatpush1.bf16.msra.mxu0 %v7238
        %7258 = vmatprep.subr.bf16.mxu0 0
        %7259 = vmatpush1.bf16.msra.mxu0 %v7239
        %7260 = vmatprep.subr.bf16.mxu0 0
        %7261 = vmatpush1.bf16.msra.mxu0 %v7240
        %7262 = vmatprep.subr.bf16.mxu0 0
        %7263 = vmatpush1.bf16.msra.mxu0 %v7241
        %7264 = vmatprep.subr.bf16.mxu0 0
        %7265 = vmatpush1.bf16.msra.mxu0 %v7242
        %7266 = vmatprep.subr.bf16.mxu0 0
        %7267 = vmatpush1.bf16.msra.mxu0 %v7243
        %7268 = vmatprep.subr.bf16.mxu0 0
        %7269 = vmatpush1.bf16.msra.mxu0 0
        %7270 = vmatprep.subr.bf16.mxu0 0
        %7271 = vmatpush1.bf16.msra.mxu0 0
        %7272 = vmatprep.subr.bf16.mxu0 0
        %7273 = vmatpush1.bf16.msra.mxu0 0
        %7274 = vmatprep.subr.bf16.mxu0 0
        %7275 = vmatpush1.bf16.msra.mxu0 0
        %7276 = vmatprep.subr.bf16.mxu0 0
        %7277 = vmatpush1.bf16.msra.mxu0 0
        %7278 = vmatprep.subr.bf16.mxu0 0
        %7279 = vmatpush1.bf16.msra.mxu0 0
        %7280 = vmatprep.subr.bf16.mxu0 0
        %7281 = vmatpush1.bf16.msra.mxu0 0
        %7282 = vmatprep.subr.bf16.mxu0 0
        %7283 = vmatpush1.bf16.msra.mxu0 0
        %7284 = vmatprep.mubr.bf16.mxu0 0
        %7285 = vmatmul.mubr.bf16.gmra.mrb[0].mxu0 %v7202
        %v7286 = vpop.f32.mrb[0].mxu0
        %v7287 = vadd.f32 0.0, %v7286
        %v7288 = vpop.f32.mrb[0].mxu0
        %v7289 = vpop.f32.mrb[0].mxu0
        %v7290 = vpop.f32.mrb[0].mxu0
        %7291 = vdwg.mxu0
        %v7308 = vunpack.c.l.b16 %v7164
        %v7309 = vunpack.c.l.b16 %v7165
        %v7310 = vunpack.c.l.b16 %v7166
        %v7311 = vunpack.c.l.b16 %v7167
        %v7312 = vunpack.c.l.b16 %v7168
        %v7313 = vunpack.c.l.b16 %v7169
        %v7314 = vunpack.c.l.b16 %v7170
        %v7315 = vunpack.c.l.b16 %v7171
        %v7316 = vunpack.c.l.b16 %v7172
        %v7317 = vunpack.c.l.b16 %v7173
        %v7318 = vunpack.c.l.b16 %v7174
        %v7319 = vunpack.c.l.b16 %v7175
        %v7320 = vunpack.c.l.b16 %v7176
        %v7321 = vunpack.c.l.b16 %v7177
        %v7322 = vunpack.c.l.b16 %v7178
        %v7323 = vunpack.c.l.b16 %v7179
        %v7324 = vpack.c.b16 %v7309, %v7308
        %v7325 = vpack.c.b16 %v7311, %v7310
        %v7326 = vpack.c.b16 %v7313, %v7312
        %v7327 = vpack.c.b16 %v7315, %v7314
        %v7328 = vpack.c.b16 %v7317, %v7316
        %v7329 = vpack.c.b16 %v7319, %v7318
        %v7330 = vpack.c.b16 %v7321, %v7320
        %v7331 = vpack.c.b16 %v7323, %v7322
        %7340 = vmatprep.subr.bf16.mxu0 0
        %7341 = vmatpush1.bf16.msra.mxu0 %v7324
        %7342 = vmatprep.subr.bf16.mxu0 0
        %7343 = vmatpush1.bf16.msra.mxu0 %v7325
        %7344 = vmatprep.subr.bf16.mxu0 0
        %7345 = vmatpush1.bf16.msra.mxu0 %v7326
        %7346 = vmatprep.subr.bf16.mxu0 0
        %7347 = vmatpush1.bf16.msra.mxu0 %v7327
        %7348 = vmatprep.subr.bf16.mxu0 0
        %7349 = vmatpush1.bf16.msra.mxu0 %v7328
        %7350 = vmatprep.subr.bf16.mxu0 0
        %7351 = vmatpush1.bf16.msra.mxu0 %v7329
        %7352 = vmatprep.subr.bf16.mxu0 0
        %7353 = vmatpush1.bf16.msra.mxu0 %v7330
        %7354 = vmatprep.subr.bf16.mxu0 0
        %7355 = vmatpush1.bf16.msra.mxu0 %v7331
        %7356 = vmatprep.subr.bf16.mxu0 0
        %7357 = vmatpush1.bf16.msra.mxu0 0
        %7358 = vmatprep.subr.bf16.mxu0 0
        %7359 = vmatpush1.bf16.msra.mxu0 0
        %7360 = vmatprep.subr.bf16.mxu0 0
        %7361 = vmatpush1.bf16.msra.mxu0 0
        %7362 = vmatprep.subr.bf16.mxu0 0
        %7363 = vmatpush1.bf16.msra.mxu0 0
        %7364 = vmatprep.subr.bf16.mxu0 0
        %7365 = vmatpush1.bf16.msra.mxu0 0
        %7366 = vmatprep.subr.bf16.mxu0 0
        %7367 = vmatpush1.bf16.msra.mxu0 0
        %7368 = vmatprep.subr.bf16.mxu0 0
        %7369 = vmatpush1.bf16.msra.mxu0 0
        %7370 = vmatprep.subr.bf16.mxu0 0
        %7371 = vmatpush1.bf16.msra.mxu0 0
        %7372 = vmatprep.mubr.bf16.mxu0 0
        %7373 = vmatmul.mubr.bf16.gmra.mrb[0].mxu0 %v7163
        %v7374 = vpop.f32.mrb[0].mxu0
        %v7375 = vadd.f32 %v7287, %v7374
        %v7376 = vpop.f32.mrb[0].mxu0
        %v7377 = vpop.f32.mrb[0].mxu0
        %v7378 = vpop.f32.mrb[0].mxu0
        %7379 = vdwg.mxu0
        %v7380 = vld [vmem:[%s4928] sm:$0xf]
        %v7381 = vld [vmem:[%s4928 + $0x4] sm:$0xf]
        %v7382 = vld [vmem:[%s4928 + $0x8] sm:$0xf]
        %v7383 = vld [vmem:[%s4928 + $0xc] sm:$0xf]
        %v7384 = vld [vmem:[%s4928 + $0x10] sm:$0xf]
        %v7385 = vld [vmem:[%s4928 + $0x14] sm:$0xf]
        %v7386 = vld [vmem:[%s4928 + $0x18] sm:$0xf]
        %v7387 = vld [vmem:[%s4928 + $0x1c] sm:$0xf]
        %v7388 = vld [vmem:[%s4928 + $0x20] sm:$0xf]
        %v7389 = vld [vmem:[%s4928 + $0x24] sm:$0xf]
        %v7390 = vld [vmem:[%s4928 + $0x28] sm:$0xf]
        %v7391 = vld [vmem:[%s4928 + $0x2c] sm:$0xf]
        %v7392 = vld [vmem:[%s4928 + $0x30] sm:$0xf]
        %v7393 = vld [vmem:[%s4928 + $0x34] sm:$0xf]
        %v7394 = vld [vmem:[%s4928 + $0x38] sm:$0xf]
        %v7395 = vld [vmem:[%s4928 + $0x3c] sm:$0xf]
        %v7397 = vrot.slane %v7163, 1
        %v7415 = vunpack.c.l.b16 %v7380
        %v7416 = vunpack.c.l.b16 %v7381
        %v7417 = vunpack.c.l.b16 %v7382
        %v7418 = vunpack.c.l.b16 %v7383
        %v7419 = vunpack.c.l.b16 %v7384
        %v7420 = vunpack.c.l.b16 %v7385
        %v7421 = vunpack.c.l.b16 %v7386
        %v7422 = vunpack.c.l.b16 %v7387
        %v7423 = vunpack.c.l.b16 %v7388
        %v7424 = vunpack.c.l.b16 %v7389
        %v7425 = vunpack.c.l.b16 %v7390
        %v7426 = vunpack.c.l.b16 %v7391
        %v7427 = vunpack.c.l.b16 %v7392
        %v7428 = vunpack.c.l.b16 %v7393
        %v7429 = vunpack.c.l.b16 %v7394
        %v7430 = vunpack.c.l.b16 %v7395
        %v7431 = vpack.c.b16 %v7416, %v7415
        %v7432 = vpack.c.b16 %v7418, %v7417
        %v7433 = vpack.c.b16 %v7420, %v7419
        %v7434 = vpack.c.b16 %v7422, %v7421
        %v7435 = vpack.c.b16 %v7424, %v7423
        %v7436 = vpack.c.b16 %v7426, %v7425
        %v7437 = vpack.c.b16 %v7428, %v7427
        %v7438 = vpack.c.b16 %v7430, %v7429
        %7447 = vmatprep.subr.bf16.mxu0 0
        %7448 = vmatpush1.bf16.msra.mxu0 %v7431
        %7449 = vmatprep.subr.bf16.mxu0 0
        %7450 = vmatpush1.bf16.msra.mxu0 %v7432
        %7451 = vmatprep.subr.bf16.mxu0 0
        %7452 = vmatpush1.bf16.msra.mxu0 %v7433
        %7453 = vmatprep.subr.bf16.mxu0 0
        %7454 = vmatpush1.bf16.msra.mxu0 %v7434
        %7455 = vmatprep.subr.bf16.mxu0 0
        %7456 = vmatpush1.bf16.msra.mxu0 %v7435
        %7457 = vmatprep.subr.bf16.mxu0 0
        %7458 = vmatpush1.bf16.msra.mxu0 %v7436
        %7459 = vmatprep.subr.bf16.mxu0 0
        %7460 = vmatpush1.bf16.msra.mxu0 %v7437
        %7461 = vmatprep.subr.bf16.mxu0 0
        %7462 = vmatpush1.bf16.msra.mxu0 %v7438
        %7463 = vmatprep.subr.bf16.mxu0 0
        %7464 = vmatpush1.bf16.msra.mxu0 0
        %7465 = vmatprep.subr.bf16.mxu0 0
        %7466 = vmatpush1.bf16.msra.mxu0 0
        %7467 = vmatprep.subr.bf16.mxu0 0
        %7468 = vmatpush1.bf16.msra.mxu0 0
        %7469 = vmatprep.subr.bf16.mxu0 0
        %7470 = vmatpush1.bf16.msra.mxu0 0
        %7471 = vmatprep.subr.bf16.mxu0 0
        %7472 = vmatpush1.bf16.msra.mxu0 0
        %7473 = vmatprep.subr.bf16.mxu0 0
        %7474 = vmatpush1.bf16.msra.mxu0 0
        %7475 = vmatprep.subr.bf16.mxu0 0
        %7476 = vmatpush1.bf16.msra.mxu0 0
        %7477 = vmatprep.subr.bf16.mxu0 0
        %7478 = vmatpush1.bf16.msra.mxu0 0
        %7479 = vmatprep.mubr.bf16.mxu0 0
        %7480 = vmatmul.mubr.bf16.gmra.mrb[0].mxu0 %v7397
        %v7481 = vpop.f32.mrb[0].mxu0
        %v7482 = vadd.f32 0.0, %v7481
        %v7483 = vpop.f32.mrb[0].mxu0
        %v7484 = vpop.f32.mrb[0].mxu0
        %v7485 = vpop.f32.mrb[0].mxu0
        %7486 = vdwg.mxu0
        %v7487 = vadd.f32 %v7375, %v7482
        %v7488 = vadd.f32 %v7487, %v5041
        %v7489 = vmax.f32 %v7488, 0.0
        %v7490 = vpack.c.bf16 %v7489, %v7489
        %v7493 = vunpack.c.l.s4 1966171168
        %v7494 = vunpack.c.0.s8 %v7493
        %v7495 = vlaneseq
        %v7496 = vshrl.u32 %v7495, 7
        %v7497 = vsub.s32 %v7494, %v7496
        %v7498 = vrot.slane %v7490, %v7497
        %v7499 = vcombine.high %v7498, %v7498
        %v7501 = vunpack.c.l.s4 1966171168
        %v7502 = vunpack.c.0.s8 %v7501
        %v7503 = vlaneseq
        %v7504 = vshrl.u32 %v7503, 7
        %v7505 = vsub.s32 %v7502, %v7504
        %v7506 = vrot.slane %v7498, %v7505
        %v7508 = vunpack.c.l.s4 1966171168
        %v7509 = vunpack.c.0.s8 %v7508
        %v7510 = vlaneseq
        %v7511 = vshrl.u32 %v7510, 7
        %v7512 = vsub.s32 %v7509, %v7511
        %v7513 = vrot.slane %v7499, %v7512
        %v7514 = vunpack.i.l.s16 %v7506
        %v7515 = vunpack.i.h.s16 %v7506
        %v7516 = vunpack.i.l.s16 %v7513
        %v7517 = vunpack.i.h.s16 %v7513
        %v7518 = vpack.i.b16 %v7514, %v7514
        %v7519 = vpack.i.b16 %v7515, %v7515
        %v7520 = vpack.i.b16 %v7516, %v7516
        %v7521 = vpack.i.b16 %v7517, %v7517
        %v7523 = vunpack.c.l.s4 286326784
        %v7524 = vunpack.c.0.s8 %v7523
        %v7525 = vlaneseq
        %v7526 = vshrl.u32 %v7525, 7
        %v7527 = vsub.s32 %v7524, %v7526
        %v7528 = vrot.slane %v7518, %v7527
        %v7530 = vunpack.c.l.s4 286326784
        %v7531 = vunpack.c.0.s8 %v7530
        %v7532 = vlaneseq
        %v7533 = vshrl.u32 %v7532, 7
        %v7534 = vsub.s32 %v7531, %v7533
        %v7535 = vrot.slane %v7519, %v7534
        %v7537 = vunpack.c.l.s4 286326784
        %v7538 = vunpack.c.0.s8 %v7537
        %v7539 = vlaneseq
        %v7540 = vshrl.u32 %v7539, 7
        %v7541 = vsub.s32 %v7538, %v7540
        %v7542 = vrot.slane %v7520, %v7541
        %v7544 = vunpack.c.l.s4 286326784
        %v7545 = vunpack.c.0.s8 %v7544
        %v7546 = vlaneseq
        %v7547 = vshrl.u32 %v7546, 7
        %v7548 = vsub.s32 %v7545, %v7547
        %v7549 = vrot.slane %v7521, %v7548
        %vm7554 = vcmask 1043459
        %vm7555 = vsmask.f32 3328
        %vm7556 = vmand %vm7554, %vm7555
        %v7557 = vld [vmem:[#allocation2] sm:$0x8]
        %v7558 = vsel %vm7556, %v7528, %v7557
        %7559 = vst [vmem:[#allocation2] sm:$0x8] %v7558
        %v7560 = vld [vmem:[#allocation2 + $0x4] sm:$0x8]
        %v7561 = vsel %vm7556, %v7535, %v7560
        %7562 = vst [vmem:[#allocation2 + $0x4] sm:$0x8] %v7561
        %v7563 = vld [vmem:[#allocation2 + $0x8] sm:$0x8]
        %v7564 = vsel %vm7556, %v7542, %v7563
        %7565 = vst [vmem:[#allocation2 + $0x8] sm:$0x8] %v7564
        %v7566 = vld [vmem:[#allocation2 + $0xc] sm:$0x8]
        %v7567 = vsel %vm7556, %v7549, %v7566
        %7568 = vst [vmem:[#allocation2 + $0xc] sm:$0x8] %v7567
        %v7569 = vadd.f32 %v4699, %v4706
        %v7570 = vmax.f32 %v7569, 0.0
        %v7571 = vpack.c.bf16 %v7570, %v7570
        %v7572 = vld [vmem:[%s5] sm:$0xf]
        %v7573 = vld [vmem:[%s5 + $0x4] sm:$0xf]
        %v7574 = vld [vmem:[%s5 + $0x8] sm:$0xf]
        %v7575 = vld [vmem:[%s5 + $0xc] sm:$0xf]
        %v7576 = vld [vmem:[%s5 + $0x10] sm:$0xf]
        %v7577 = vld [vmem:[%s5 + $0x14] sm:$0xf]
        %v7578 = vld [vmem:[%s5 + $0x18] sm:$0xf]
        %v7579 = vld [vmem:[%s5 + $0x1c] sm:$0xf]
        %v7580 = vld [vmem:[%s5 + $0x20] sm:$0xf]
        %v7581 = vld [vmem:[%s5 + $0x24] sm:$0xf]
        %v7582 = vld [vmem:[%s5 + $0x28] sm:$0xf]
        %v7583 = vld [vmem:[%s5 + $0x2c] sm:$0xf]
        %v7584 = vld [vmem:[%s5 + $0x30] sm:$0xf]
        %v7585 = vld [vmem:[%s5 + $0x34] sm:$0xf]
        %v7586 = vld [vmem:[%s5 + $0x38] sm:$0xf]
        %v7587 = vld [vmem:[%s5 + $0x3c] sm:$0xf]
        %v7588 = vld [vmem:[%s4727] sm:$0xf]
        %v7589 = vld [vmem:[%s4727 + $0x4] sm:$0xf]
        %v7590 = vld [vmem:[%s4727 + $0x8] sm:$0xf]
        %v7591 = vld [vmem:[%s4727 + $0xc] sm:$0xf]
        %v7592 = vld [vmem:[%s4727 + $0x10] sm:$0xf]
        %v7593 = vld [vmem:[%s4727 + $0x14] sm:$0xf]
        %v7594 = vld [vmem:[%s4727 + $0x18] sm:$0xf]
        %v7595 = vld [vmem:[%s4727 + $0x1c] sm:$0xf]
        %v7596 = vld [vmem:[%s4727 + $0x20] sm:$0xf]
        %v7597 = vld [vmem:[%s4727 + $0x24] sm:$0xf]
        %v7598 = vld [vmem:[%s4727 + $0x28] sm:$0xf]
        %v7599 = vld [vmem:[%s4727 + $0x2c] sm:$0xf]
        %v7600 = vld [vmem:[%s4727 + $0x30] sm:$0xf]
        %v7601 = vld [vmem:[%s4727 + $0x34] sm:$0xf]
        %v7602 = vld [vmem:[%s4727 + $0x38] sm:$0xf]
        %v7603 = vld [vmem:[%s4727 + $0x3c] sm:$0xf]
        %v7605 = vshrl.u32 %v7571, 16
        %v7607 = vshll.u32 %v7571, 16
        %v7609 = vrot.slane %v7607, 1
        %v7610 = vor.u32 %v7605, %v7609
        %v7628 = vunpack.c.l.b16 %v7588
        %v7629 = vunpack.c.l.b16 %v7589
        %v7630 = vunpack.c.l.b16 %v7590
        %v7631 = vunpack.c.l.b16 %v7591
        %v7632 = vunpack.c.l.b16 %v7592
        %v7633 = vunpack.c.l.b16 %v7593
        %v7634 = vunpack.c.l.b16 %v7594
        %v7635 = vunpack.c.l.b16 %v7595
        %v7636 = vunpack.c.l.b16 %v7596
        %v7637 = vunpack.c.l.b16 %v7597
        %v7638 = vunpack.c.l.b16 %v7598
        %v7639 = vunpack.c.l.b16 %v7599
        %v7640 = vunpack.c.l.b16 %v7600
        %v7641 = vunpack.c.l.b16 %v7601
        %v7642 = vunpack.c.l.b16 %v7602
        %v7643 = vunpack.c.l.b16 %v7603
        %v7644 = vpack.c.b16 %v7629, %v7628
        %v7645 = vpack.c.b16 %v7631, %v7630
        %v7646 = vpack.c.b16 %v7633, %v7632
        %v7647 = vpack.c.b16 %v7635, %v7634
        %v7648 = vpack.c.b16 %v7637, %v7636
        %v7649 = vpack.c.b16 %v7639, %v7638
        %v7650 = vpack.c.b16 %v7641, %v7640
        %v7651 = vpack.c.b16 %v7643, %v7642
        %7660 = vmatprep.subr.bf16.mxu0 0
        %7661 = vmatpush1.bf16.msra.mxu0 %v7644
        %7662 = vmatprep.subr.bf16.mxu0 0
        %7663 = vmatpush1.bf16.msra.mxu0 %v7645
        %7664 = vmatprep.subr.bf16.mxu0 0
        %7665 = vmatpush1.bf16.msra.mxu0 %v7646
        %7666 = vmatprep.subr.bf16.mxu0 0
        %7667 = vmatpush1.bf16.msra.mxu0 %v7647
        %7668 = vmatprep.subr.bf16.mxu0 0
        %7669 = vmatpush1.bf16.msra.mxu0 %v7648
        %7670 = vmatprep.subr.bf16.mxu0 0
        %7671 = vmatpush1.bf16.msra.mxu0 %v7649
        %7672 = vmatprep.subr.bf16.mxu0 0
        %7673 = vmatpush1.bf16.msra.mxu0 %v7650
        %7674 = vmatprep.subr.bf16.mxu0 0
        %7675 = vmatpush1.bf16.msra.mxu0 %v7651
        %7676 = vmatprep.subr.bf16.mxu0 0
        %7677 = vmatpush1.bf16.msra.mxu0 0
        %7678 = vmatprep.subr.bf16.mxu0 0
        %7679 = vmatpush1.bf16.msra.mxu0 0
        %7680 = vmatprep.subr.bf16.mxu0 0
        %7681 = vmatpush1.bf16.msra.mxu0 0
        %7682 = vmatprep.subr.bf16.mxu0 0
        %7683 = vmatpush1.bf16.msra.mxu0 0
        %7684 = vmatprep.subr.bf16.mxu0 0
        %7685 = vmatpush1.bf16.msra.mxu0 0
        %7686 = vmatprep.subr.bf16.mxu0 0
        %7687 = vmatpush1.bf16.msra.mxu0 0
        %7688 = vmatprep.subr.bf16.mxu0 0
        %7689 = vmatpush1.bf16.msra.mxu0 0
        %7690 = vmatprep.subr.bf16.mxu0 0
        %7691 = vmatpush1.bf16.msra.mxu0 0
        %7692 = vmatprep.mubr.bf16.mxu0 0
        %7693 = vmatmul.mubr.bf16.gmra.mrb[0].mxu0 %v7610
        %v7694 = vpop.f32.mrb[0].mxu0
        %v7695 = vadd.f32 0.0, %v7694
        %v7696 = vpop.f32.mrb[0].mxu0
        %v7697 = vpop.f32.mrb[0].mxu0
        %v7698 = vpop.f32.mrb[0].mxu0
        %7699 = vdwg.mxu0
        %v7716 = vunpack.c.l.b16 %v7572
        %v7717 = vunpack.c.l.b16 %v7573
        %v7718 = vunpack.c.l.b16 %v7574
        %v7719 = vunpack.c.l.b16 %v7575
        %v7720 = vunpack.c.l.b16 %v7576
        %v7721 = vunpack.c.l.b16 %v7577
        %v7722 = vunpack.c.l.b16 %v7578
        %v7723 = vunpack.c.l.b16 %v7579
        %v7724 = vunpack.c.l.b16 %v7580
        %v7725 = vunpack.c.l.b16 %v7581
        %v7726 = vunpack.c.l.b16 %v7582
        %v7727 = vunpack.c.l.b16 %v7583
        %v7728 = vunpack.c.l.b16 %v7584
        %v7729 = vunpack.c.l.b16 %v7585
        %v7730 = vunpack.c.l.b16 %v7586
        %v7731 = vunpack.c.l.b16 %v7587
        %v7732 = vpack.c.b16 %v7717, %v7716
        %v7733 = vpack.c.b16 %v7719, %v7718
        %v7734 = vpack.c.b16 %v7721, %v7720
        %v7735 = vpack.c.b16 %v7723, %v7722
        %v7736 = vpack.c.b16 %v7725, %v7724
        %v7737 = vpack.c.b16 %v7727, %v7726
        %v7738 = vpack.c.b16 %v7729, %v7728
        %v7739 = vpack.c.b16 %v7731, %v7730
        %7748 = vmatprep.subr.bf16.mxu0 0
        %7749 = vmatpush1.bf16.msra.mxu0 %v7732
        %7750 = vmatprep.subr.bf16.mxu0 0
        %7751 = vmatpush1.bf16.msra.mxu0 %v7733
        %7752 = vmatprep.subr.bf16.mxu0 0
        %7753 = vmatpush1.bf16.msra.mxu0 %v7734
        %7754 = vmatprep.subr.bf16.mxu0 0
        %7755 = vmatpush1.bf16.msra.mxu0 %v7735
        %7756 = vmatprep.subr.bf16.mxu0 0
        %7757 = vmatpush1.bf16.msra.mxu0 %v7736
        %7758 = vmatprep.subr.bf16.mxu0 0
        %7759 = vmatpush1.bf16.msra.mxu0 %v7737
        %7760 = vmatprep.subr.bf16.mxu0 0
        %7761 = vmatpush1.bf16.msra.mxu0 %v7738
        %7762 = vmatprep.subr.bf16.mxu0 0
        %7763 = vmatpush1.bf16.msra.mxu0 %v7739
        %7764 = vmatprep.subr.bf16.mxu0 0
        %7765 = vmatpush1.bf16.msra.mxu0 0
        %7766 = vmatprep.subr.bf16.mxu0 0
        %7767 = vmatpush1.bf16.msra.mxu0 0
        %7768 = vmatprep.subr.bf16.mxu0 0
        %7769 = vmatpush1.bf16.msra.mxu0 0
        %7770 = vmatprep.subr.bf16.mxu0 0
        %7771 = vmatpush1.bf16.msra.mxu0 0
        %7772 = vmatprep.subr.bf16.mxu0 0
        %7773 = vmatpush1.bf16.msra.mxu0 0
        %7774 = vmatprep.subr.bf16.mxu0 0
        %7775 = vmatpush1.bf16.msra.mxu0 0
        %7776 = vmatprep.subr.bf16.mxu0 0
        %7777 = vmatpush1.bf16.msra.mxu0 0
        %7778 = vmatprep.subr.bf16.mxu0 0
        %7779 = vmatpush1.bf16.msra.mxu0 0
        %7780 = vmatprep.mubr.bf16.mxu0 0
        %7781 = vmatmul.mubr.bf16.gmra.mrb[0].mxu0 %v7571
        %v7782 = vpop.f32.mrb[0].mxu0
        %v7783 = vadd.f32 %v7695, %v7782
        %v7784 = vpop.f32.mrb[0].mxu0
        %v7785 = vpop.f32.mrb[0].mxu0
        %v7786 = vpop.f32.mrb[0].mxu0
        %7787 = vdwg.mxu0
        %v7788 = vld [vmem:[%s4928] sm:$0xf]
        %v7789 = vld [vmem:[%s4928 + $0x4] sm:$0xf]
        %v7790 = vld [vmem:[%s4928 + $0x8] sm:$0xf]
        %v7791 = vld [vmem:[%s4928 + $0xc] sm:$0xf]
        %v7792 = vld [vmem:[%s4928 + $0x10] sm:$0xf]
        %v7793 = vld [vmem:[%s4928 + $0x14] sm:$0xf]
        %v7794 = vld [vmem:[%s4928 + $0x18] sm:$0xf]
        %v7795 = vld [vmem:[%s4928 + $0x1c] sm:$0xf]
        %v7796 = vld [vmem:[%s4928 + $0x20] sm:$0xf]
        %v7797 = vld [vmem:[%s4928 + $0x24] sm:$0xf]
        %v7798 = vld [vmem:[%s4928 + $0x28] sm:$0xf]
        %v7799 = vld [vmem:[%s4928 + $0x2c] sm:$0xf]
        %v7800 = vld [vmem:[%s4928 + $0x30] sm:$0xf]
        %v7801 = vld [vmem:[%s4928 + $0x34] sm:$0xf]
        %v7802 = vld [vmem:[%s4928 + $0x38] sm:$0xf]
        %v7803 = vld [vmem:[%s4928 + $0x3c] sm:$0xf]
        %v7805 = vrot.slane %v7571, 1
        %v7823 = vunpack.c.l.b16 %v7788
        %v7824 = vunpack.c.l.b16 %v7789
        %v7825 = vunpack.c.l.b16 %v7790
        %v7826 = vunpack.c.l.b16 %v7791
        %v7827 = vunpack.c.l.b16 %v7792
        %v7828 = vunpack.c.l.b16 %v7793
        %v7829 = vunpack.c.l.b16 %v7794
        %v7830 = vunpack.c.l.b16 %v7795
        %v7831 = vunpack.c.l.b16 %v7796
        %v7832 = vunpack.c.l.b16 %v7797
        %v7833 = vunpack.c.l.b16 %v7798
        %v7834 = vunpack.c.l.b16 %v7799
        %v7835 = vunpack.c.l.b16 %v7800
        %v7836 = vunpack.c.l.b16 %v7801
        %v7837 = vunpack.c.l.b16 %v7802
        %v7838 = vunpack.c.l.b16 %v7803
        %v7839 = vpack.c.b16 %v7824, %v7823
        %v7840 = vpack.c.b16 %v7826, %v7825
        %v7841 = vpack.c.b16 %v7828, %v7827
        %v7842 = vpack.c.b16 %v7830, %v7829
        %v7843 = vpack.c.b16 %v7832, %v7831
        %v7844 = vpack.c.b16 %v7834, %v7833
        %v7845 = vpack.c.b16 %v7836, %v7835
        %v7846 = vpack.c.b16 %v7838, %v7837
        %7855 = vmatprep.subr.bf16.mxu0 0
        %7856 = vmatpush1.bf16.msra.mxu0 %v7839
        %7857 = vmatprep.subr.bf16.mxu0 0
        %7858 = vmatpush1.bf16.msra.mxu0 %v7840
        %7859 = vmatprep.subr.bf16.mxu0 0
        %7860 = vmatpush1.bf16.msra.mxu0 %v7841
        %7861 = vmatprep.subr.bf16.mxu0 0
        %7862 = vmatpush1.bf16.msra.mxu0 %v7842
        %7863 = vmatprep.subr.bf16.mxu0 0
        %7864 = vmatpush1.bf16.msra.mxu0 %v7843
        %7865 = vmatprep.subr.bf16.mxu0 0
        %7866 = vmatpush1.bf16.msra.mxu0 %v7844
        %7867 = vmatprep.subr.bf16.mxu0 0
        %7868 = vmatpush1.bf16.msra.mxu0 %v7845
        %7869 = vmatprep.subr.bf16.mxu0 0
        %7870 = vmatpush1.bf16.msra.mxu0 %v7846
        %7871 = vmatprep.subr.bf16.mxu0 0
        %7872 = vmatpush1.bf16.msra.mxu0 0
        %7873 = vmatprep.subr.bf16.mxu0 0
        %7874 = vmatpush1.bf16.msra.mxu0 0
        %7875 = vmatprep.subr.bf16.mxu0 0
        %7876 = vmatpush1.bf16.msra.mxu0 0
        %7877 = vmatprep.subr.bf16.mxu0 0
        %7878 = vmatpush1.bf16.msra.mxu0 0
        %7879 = vmatprep.subr.bf16.mxu0 0
        %7880 = vmatpush1.bf16.msra.mxu0 0
        %7881 = vmatprep.subr.bf16.mxu0 0
        %7882 = vmatpush1.bf16.msra.mxu0 0
        %7883 = vmatprep.subr.bf16.mxu0 0
        %7884 = vmatpush1.bf16.msra.mxu0 0
        %7885 = vmatprep.subr.bf16.mxu0 0
        %7886 = vmatpush1.bf16.msra.mxu0 0
        %7887 = vmatprep.mubr.bf16.mxu0 0
        %7888 = vmatmul.mubr.bf16.gmra.mrb[0].mxu0 %v7805
        %v7889 = vpop.f32.mrb[0].mxu0
        %v7890 = vadd.f32 0.0, %v7889
        %v7891 = vpop.f32.mrb[0].mxu0
        %v7892 = vpop.f32.mrb[0].mxu0
        %v7893 = vpop.f32.mrb[0].mxu0
        %7894 = vdwg.mxu0
        %v7895 = vadd.f32 %v7783, %v7890
        %v7896 = vadd.f32 %v7895, %v5041
        %v7897 = vmax.f32 %v7896, 0.0
        %v7898 = vpack.c.bf16 %v7897, %v7897
        %v7901 = vunpack.c.l.s4 1966171168
        %v7902 = vunpack.c.0.s8 %v7901
        %v7903 = vlaneseq
        %v7904 = vshrl.u32 %v7903, 7
        %v7905 = vsub.s32 %v7902, %v7904
        %v7906 = vrot.slane %v7898, %v7905
        %v7907 = vcombine.high %v7906, %v7906
        %v7909 = vunpack.c.l.s4 1966171168
        %v7910 = vunpack.c.0.s8 %v7909
        %v7911 = vlaneseq
        %v7912 = vshrl.u32 %v7911, 7
        %v7913 = vsub.s32 %v7910, %v7912
        %v7914 = vrot.slane %v7906, %v7913
        %v7916 = vunpack.c.l.s4 1966171168
        %v7917 = vunpack.c.0.s8 %v7916
        %v7918 = vlaneseq
        %v7919 = vshrl.u32 %v7918, 7
        %v7920 = vsub.s32 %v7917, %v7919
        %v7921 = vrot.slane %v7907, %v7920
        %v7922 = vunpack.i.l.s16 %v7914
        %v7923 = vunpack.i.h.s16 %v7914
        %v7924 = vunpack.i.l.s16 %v7921
        %v7925 = vunpack.i.h.s16 %v7921
        %v7926 = vpack.i.b16 %v7922, %v7922
        %v7927 = vpack.i.b16 %v7923, %v7923
        %v7928 = vpack.i.b16 %v7924, %v7924
        %v7929 = vpack.i.b16 %v7925, %v7925
        %v7931 = vunpack.c.l.s4 286326784
        %v7932 = vunpack.c.0.s8 %v7931
        %v7933 = vlaneseq
        %v7934 = vshrl.u32 %v7933, 7
        %v7935 = vsub.s32 %v7932, %v7934
        %v7936 = vrot.slane %v7926, %v7935
        %v7938 = vunpack.c.l.s4 286326784
        %v7939 = vunpack.c.0.s8 %v7938
        %v7940 = vlaneseq
        %v7941 = vshrl.u32 %v7940, 7
        %v7942 = vsub.s32 %v7939, %v7941
        %v7943 = vrot.slane %v7927, %v7942
        %v7945 = vunpack.c.l.s4 286326784
        %v7946 = vunpack.c.0.s8 %v7945
        %v7947 = vlaneseq
        %v7948 = vshrl.u32 %v7947, 7
        %v7949 = vsub.s32 %v7946, %v7948
        %v7950 = vrot.slane %v7928, %v7949
        %v7952 = vunpack.c.l.s4 286326784
        %v7953 = vunpack.c.0.s8 %v7952
        %v7954 = vlaneseq
        %v7955 = vshrl.u32 %v7954, 7
        %v7956 = vsub.s32 %v7953, %v7955
        %v7957 = vrot.slane %v7929, %v7956
        %vm7962 = vsmask.f32 7950
        %vm7963 = vmand %vm7554, %vm7962
        %v7964 = vld [vmem:[#allocation2] sm:$0x8]
        %v7965 = vsel %vm7963, %v7936, %v7964
        %7966 = vst [vmem:[#allocation2] sm:$0x8] %v7965
        %v7967 = vld [vmem:[#allocation2 + $0x4] sm:$0x8]
        %v7968 = vsel %vm7963, %v7943, %v7967
        %7969 = vst [vmem:[#allocation2 + $0x4] sm:$0x8] %v7968
        %v7970 = vld [vmem:[#allocation2 + $0x8] sm:$0x8]
        %v7971 = vsel %vm7963, %v7950, %v7970
        %7972 = vst [vmem:[#allocation2 + $0x8] sm:$0x8] %v7971
        %v7973 = vld [vmem:[#allocation2 + $0xc] sm:$0x8]
        %v7974 = vsel %vm7963, %v7957, %v7973
        %7975 = vst [vmem:[#allocation2 + $0xc] sm:$0x8] %v7974
        %v7976 = vld [vmem:[%s10] sm:$0x1]
        %v7977 = vld [vmem:[#allocation2] sm:$0xf]
        %v7978 = vld [vmem:[%s9] sm:$0xf]
        %v7979 = vld [vmem:[%s9 + $0x4] sm:$0xf]
        %v7980 = vld [vmem:[%s9 + $0x8] sm:$0xf]
        %v7981 = vld [vmem:[%s9 + $0xc] sm:$0xf]
        %v7982 = vld [vmem:[%s9 + $0x10] sm:$0xf]
        %v7983 = vld [vmem:[%s9 + $0x14] sm:$0xf]
        %v7984 = vld [vmem:[%s9 + $0x18] sm:$0xf]
        %v7985 = vld [vmem:[%s9 + $0x1c] sm:$0xf]
        %v7986 = vld [vmem:[%s9 + $0x20] sm:$0xf]
        %v7987 = vld [vmem:[%s9 + $0x24] sm:$0xf]
        %v7988 = vld [vmem:[%s9 + $0x28] sm:$0xf]
        %v7989 = vld [vmem:[%s9 + $0x2c] sm:$0xf]
        %v7990 = vld [vmem:[%s9 + $0x30] sm:$0xf]
        %v7991 = vld [vmem:[%s9 + $0x34] sm:$0xf]
        %v7992 = vld [vmem:[%s9 + $0x38] sm:$0xf]
        %v7993 = vld [vmem:[%s9 + $0x3c] sm:$0xf]
        %v8010 = vunpack.c.l.b16 %v7978
        %v8011 = vunpack.c.l.b16 %v7979
        %v8012 = vunpack.c.l.b16 %v7980
        %v8013 = vunpack.c.l.b16 %v7981
        %v8014 = vunpack.c.l.b16 %v7982
        %v8015 = vunpack.c.l.b16 %v7983
        %v8016 = vunpack.c.l.b16 %v7984
        %v8017 = vunpack.c.l.b16 %v7985
        %v8018 = vunpack.c.l.b16 %v7986
        %v8019 = vunpack.c.l.b16 %v7987
        %v8020 = vunpack.c.l.b16 %v7988
        %v8021 = vunpack.c.l.b16 %v7989
        %v8022 = vunpack.c.l.b16 %v7990
        %v8023 = vunpack.c.l.b16 %v7991
        %v8024 = vunpack.c.l.b16 %v7992
        %v8025 = vunpack.c.l.b16 %v7993
        %v8026 = vpack.c.b16 %v8011, %v8010
        %v8027 = vpack.c.b16 %v8013, %v8012
        %v8028 = vpack.c.b16 %v8015, %v8014
        %v8029 = vpack.c.b16 %v8017, %v8016
        %v8030 = vpack.c.b16 %v8019, %v8018
        %v8031 = vpack.c.b16 %v8021, %v8020
        %v8032 = vpack.c.b16 %v8023, %v8022
        %v8033 = vpack.c.b16 %v8025, %v8024
        %8042 = vmatprep.subr.bf16.mxu0 0
        %8043 = vmatpush1.bf16.msra.mxu0 %v8026
        %8044 = vmatprep.subr.bf16.mxu0 0
        %8045 = vmatpush1.bf16.msra.mxu0 %v8027
        %8046 = vmatprep.subr.bf16.mxu0 0
        %8047 = vmatpush1.bf16.msra.mxu0 %v8028
        %8048 = vmatprep.subr.bf16.mxu0 0
        %8049 = vmatpush1.bf16.msra.mxu0 %v8029
        %8050 = vmatprep.subr.bf16.mxu0 0
        %8051 = vmatpush1.bf16.msra.mxu0 %v8030
        %8052 = vmatprep.subr.bf16.mxu0 0
        %8053 = vmatpush1.bf16.msra.mxu0 %v8031
        %8054 = vmatprep.subr.bf16.mxu0 0
        %8055 = vmatpush1.bf16.msra.mxu0 %v8032
        %8056 = vmatprep.subr.bf16.mxu0 0
        %8057 = vmatpush1.bf16.msra.mxu0 %v8033
        %8058 = vmatprep.subr.bf16.mxu0 0
        %8059 = vmatpush1.bf16.msra.mxu0 0
        %8060 = vmatprep.subr.bf16.mxu0 0
        %8061 = vmatpush1.bf16.msra.mxu0 0
        %8062 = vmatprep.subr.bf16.mxu0 0
        %8063 = vmatpush1.bf16.msra.mxu0 0
        %8064 = vmatprep.subr.bf16.mxu0 0
        %8065 = vmatpush1.bf16.msra.mxu0 0
        %8066 = vmatprep.subr.bf16.mxu0 0
        %8067 = vmatpush1.bf16.msra.mxu0 0
        %8068 = vmatprep.subr.bf16.mxu0 0
        %8069 = vmatpush1.bf16.msra.mxu0 0
        %8070 = vmatprep.subr.bf16.mxu0 0
        %8071 = vmatpush1.bf16.msra.mxu0 0
        %8072 = vmatprep.subr.bf16.mxu0 0
        %8073 = vmatpush1.bf16.msra.mxu0 0
        %8074 = vmatprep.mubr.bf16.mxu0 0
        %8075 = vmatmul.mubr.bf16.gmra.mrb[0].mxu0 %v7977
        %v8076 = vpop.f32.mrb[0].mxu0
        %v8077 = vadd.f32 0.0, %v8076
        %v8078 = vpop.f32.mrb[0].mxu0
        %v8079 = vpop.f32.mrb[0].mxu0
        %v8080 = vpop.f32.mrb[0].mxu0
        %8081 = vdwg.mxu0
        %v8083 = vlaneseq
        %v8084 = vshrl.u32 %v8083, 7
        %v8085 = vsub.s32 0, %v8084
        %v8086 = vrot.slane %v7976, %v8085
        %v8088 = vadd.f32 %v8086, %v8077
        %s8089 = scalar_lea.vmem [#allocation2], 4
        %v8090 = vld [vmem:[%s8089] sm:$0xf]
        %s8091 = scalar_lea.vmem %s9, 64
        %v8092 = vld [vmem:[%s8091] sm:$0xf]
        %v8093 = vld [vmem:[%s8091 + $0x4] sm:$0xf]
        %v8094 = vld [vmem:[%s8091 + $0x8] sm:$0xf]
        %v8095 = vld [vmem:[%s8091 + $0xc] sm:$0xf]
        %v8096 = vld [vmem:[%s8091 + $0x10] sm:$0xf]
        %v8097 = vld [vmem:[%s8091 + $0x14] sm:$0xf]
        %v8098 = vld [vmem:[%s8091 + $0x18] sm:$0xf]
        %v8099 = vld [vmem:[%s8091 + $0x1c] sm:$0xf]
        %v8100 = vld [vmem:[%s8091 + $0x20] sm:$0xf]
        %v8101 = vld [vmem:[%s8091 + $0x24] sm:$0xf]
        %v8102 = vld [vmem:[%s8091 + $0x28] sm:$0xf]
        %v8103 = vld [vmem:[%s8091 + $0x2c] sm:$0xf]
        %v8104 = vld [vmem:[%s8091 + $0x30] sm:$0xf]
        %v8105 = vld [vmem:[%s8091 + $0x34] sm:$0xf]
        %v8106 = vld [vmem:[%s8091 + $0x38] sm:$0xf]
        %v8107 = vld [vmem:[%s8091 + $0x3c] sm:$0xf]
        %v8124 = vunpack.c.l.b16 %v8092
        %v8125 = vunpack.c.l.b16 %v8093
        %v8126 = vunpack.c.l.b16 %v8094
        %v8127 = vunpack.c.l.b16 %v8095
        %v8128 = vunpack.c.l.b16 %v8096
        %v8129 = vunpack.c.l.b16 %v8097
        %v8130 = vunpack.c.l.b16 %v8098
        %v8131 = vunpack.c.l.b16 %v8099
        %v8132 = vunpack.c.l.b16 %v8100
        %v8133 = vunpack.c.l.b16 %v8101
        %v8134 = vunpack.c.l.b16 %v8102
        %v8135 = vunpack.c.l.b16 %v8103
        %v8136 = vunpack.c.l.b16 %v8104
        %v8137 = vunpack.c.l.b16 %v8105
        %v8138 = vunpack.c.l.b16 %v8106
        %v8139 = vunpack.c.l.b16 %v8107
        %v8140 = vpack.c.b16 %v8125, %v8124
        %v8141 = vpack.c.b16 %v8127, %v8126
        %v8142 = vpack.c.b16 %v8129, %v8128
        %v8143 = vpack.c.b16 %v8131, %v8130
        %v8144 = vpack.c.b16 %v8133, %v8132
        %v8145 = vpack.c.b16 %v8135, %v8134
        %v8146 = vpack.c.b16 %v8137, %v8136
        %v8147 = vpack.c.b16 %v8139, %v8138
        %8156 = vmatprep.subr.bf16.mxu0 0
        %8157 = vmatpush1.bf16.msra.mxu0 %v8140
        %8158 = vmatprep.subr.bf16.mxu0 0
        %8159 = vmatpush1.bf16.msra.mxu0 %v8141
        %8160 = vmatprep.subr.bf16.mxu0 0
        %8161 = vmatpush1.bf16.msra.mxu0 %v8142
        %8162 = vmatprep.subr.bf16.mxu0 0
        %8163 = vmatpush1.bf16.msra.mxu0 %v8143
        %8164 = vmatprep.subr.bf16.mxu0 0
        %8165 = vmatpush1.bf16.msra.mxu0 %v8144
        %8166 = vmatprep.subr.bf16.mxu0 0
        %8167 = vmatpush1.bf16.msra.mxu0 %v8145
        %8168 = vmatprep.subr.bf16.mxu0 0
        %8169 = vmatpush1.bf16.msra.mxu0 %v8146
        %8170 = vmatprep.subr.bf16.mxu0 0
        %8171 = vmatpush1.bf16.msra.mxu0 %v8147
        %8172 = vmatprep.subr.bf16.mxu0 0
        %8173 = vmatpush1.bf16.msra.mxu0 0
        %8174 = vmatprep.subr.bf16.mxu0 0
        %8175 = vmatpush1.bf16.msra.mxu0 0
        %8176 = vmatprep.subr.bf16.mxu0 0
        %8177 = vmatpush1.bf16.msra.mxu0 0
        %8178 = vmatprep.subr.bf16.mxu0 0
        %8179 = vmatpush1.bf16.msra.mxu0 0
        %8180 = vmatprep.subr.bf16.mxu0 0
        %8181 = vmatpush1.bf16.msra.mxu0 0
        %8182 = vmatprep.subr.bf16.mxu0 0
        %8183 = vmatpush1.bf16.msra.mxu0 0
        %8184 = vmatprep.subr.bf16.mxu0 0
        %8185 = vmatpush1.bf16.msra.mxu0 0
        %8186 = vmatprep.subr.bf16.mxu0 0
        %8187 = vmatpush1.bf16.msra.mxu0 0
        %8188 = vmatprep.mubr.bf16.mxu0 0
        %8189 = vmatmul.mubr.bf16.gmra.mrb[0].mxu0 %v8090
        %v8190 = vpop.f32.mrb[0].mxu0
        %v8191 = vadd.f32 0.0, %v8190
        %v8192 = vpop.f32.mrb[0].mxu0
        %v8193 = vpop.f32.mrb[0].mxu0
        %v8194 = vpop.f32.mrb[0].mxu0
        %8195 = vdwg.mxu0
        %v8196 = vadd.f32 %v8088, %v8191
        %s8197 = scalar_lea.vmem [#allocation2], 8
        %v8198 = vld [vmem:[%s8197] sm:$0xf]
        %s8199 = scalar_lea.vmem %s9, 128
        %v8200 = vld [vmem:[%s8199] sm:$0xf]
        %v8201 = vld [vmem:[%s8199 + $0x4] sm:$0xf]
        %v8202 = vld [vmem:[%s8199 + $0x8] sm:$0xf]
        %v8203 = vld [vmem:[%s8199 + $0xc] sm:$0xf]
        %v8204 = vld [vmem:[%s8199 + $0x10] sm:$0xf]
        %v8205 = vld [vmem:[%s8199 + $0x14] sm:$0xf]
        %v8206 = vld [vmem:[%s8199 + $0x18] sm:$0xf]
        %v8207 = vld [vmem:[%s8199 + $0x1c] sm:$0xf]
        %v8208 = vld [vmem:[%s8199 + $0x20] sm:$0xf]
        %v8209 = vld [vmem:[%s8199 + $0x24] sm:$0xf]
        %v8210 = vld [vmem:[%s8199 + $0x28] sm:$0xf]
        %v8211 = vld [vmem:[%s8199 + $0x2c] sm:$0xf]
        %v8212 = vld [vmem:[%s8199 + $0x30] sm:$0xf]
        %v8213 = vld [vmem:[%s8199 + $0x34] sm:$0xf]
        %v8214 = vld [vmem:[%s8199 + $0x38] sm:$0xf]
        %v8215 = vld [vmem:[%s8199 + $0x3c] sm:$0xf]
        %v8232 = vunpack.c.l.b16 %v8200
        %v8233 = vunpack.c.l.b16 %v8201
        %v8234 = vunpack.c.l.b16 %v8202
        %v8235 = vunpack.c.l.b16 %v8203
        %v8236 = vunpack.c.l.b16 %v8204
        %v8237 = vunpack.c.l.b16 %v8205
        %v8238 = vunpack.c.l.b16 %v8206
        %v8239 = vunpack.c.l.b16 %v8207
        %v8240 = vunpack.c.l.b16 %v8208
        %v8241 = vunpack.c.l.b16 %v8209
        %v8242 = vunpack.c.l.b16 %v8210
        %v8243 = vunpack.c.l.b16 %v8211
        %v8244 = vunpack.c.l.b16 %v8212
        %v8245 = vunpack.c.l.b16 %v8213
        %v8246 = vunpack.c.l.b16 %v8214
        %v8247 = vunpack.c.l.b16 %v8215
        %v8248 = vpack.c.b16 %v8233, %v8232
        %v8249 = vpack.c.b16 %v8235, %v8234
        %v8250 = vpack.c.b16 %v8237, %v8236
        %v8251 = vpack.c.b16 %v8239, %v8238
        %v8252 = vpack.c.b16 %v8241, %v8240
        %v8253 = vpack.c.b16 %v8243, %v8242
        %v8254 = vpack.c.b16 %v8245, %v8244
        %v8255 = vpack.c.b16 %v8247, %v8246
        %8264 = vmatprep.subr.bf16.mxu0 0
        %8265 = vmatpush1.bf16.msra.mxu0 %v8248
        %8266 = vmatprep.subr.bf16.mxu0 0
        %8267 = vmatpush1.bf16.msra.mxu0 %v8249
        %8268 = vmatprep.subr.bf16.mxu0 0
        %8269 = vmatpush1.bf16.msra.mxu0 %v8250
        %8270 = vmatprep.subr.bf16.mxu0 0
        %8271 = vmatpush1.bf16.msra.mxu0 %v8251
        %8272 = vmatprep.subr.bf16.mxu0 0
        %8273 = vmatpush1.bf16.msra.mxu0 %v8252
        %8274 = vmatprep.subr.bf16.mxu0 0
        %8275 = vmatpush1.bf16.msra.mxu0 %v8253
        %8276 = vmatprep.subr.bf16.mxu0 0
        %8277 = vmatpush1.bf16.msra.mxu0 %v8254
        %8278 = vmatprep.subr.bf16.mxu0 0
        %8279 = vmatpush1.bf16.msra.mxu0 %v8255
        %8280 = vmatprep.subr.bf16.mxu0 0
        %8281 = vmatpush1.bf16.msra.mxu0 0
        %8282 = vmatprep.subr.bf16.mxu0 0
        %8283 = vmatpush1.bf16.msra.mxu0 0
        %8284 = vmatprep.subr.bf16.mxu0 0
        %8285 = vmatpush1.bf16.msra.mxu0 0
        %8286 = vmatprep.subr.bf16.mxu0 0
        %8287 = vmatpush1.bf16.msra.mxu0 0
        %8288 = vmatprep.subr.bf16.mxu0 0
        %8289 = vmatpush1.bf16.msra.mxu0 0
        %8290 = vmatprep.subr.bf16.mxu0 0
        %8291 = vmatpush1.bf16.msra.mxu0 0
        %8292 = vmatprep.subr.bf16.mxu0 0
        %8293 = vmatpush1.bf16.msra.mxu0 0
        %8294 = vmatprep.subr.bf16.mxu0 0
        %8295 = vmatpush1.bf16.msra.mxu0 0
        %8296 = vmatprep.mubr.bf16.mxu0 0
        %8297 = vmatmul.mubr.bf16.gmra.mrb[0].mxu0 %v8198
        %v8298 = vpop.f32.mrb[0].mxu0
        %v8299 = vadd.f32 0.0, %v8298
        %v8300 = vpop.f32.mrb[0].mxu0
        %v8301 = vpop.f32.mrb[0].mxu0
        %v8302 = vpop.f32.mrb[0].mxu0
        %8303 = vdwg.mxu0
        %v8304 = vadd.f32 %v8196, %v8299
        %s8305 = scalar_lea.vmem [#allocation2], 12
        %v8306 = vld [vmem:[%s8305] sm:$0xf]
        %s8307 = scalar_lea.vmem %s9, 192
        %v8308 = vld [vmem:[%s8307] sm:$0xf]
        %v8309 = vld [vmem:[%s8307 + $0x4] sm:$0xf]
        %v8310 = vld [vmem:[%s8307 + $0x8] sm:$0xf]
        %v8311 = vld [vmem:[%s8307 + $0xc] sm:$0xf]
        %v8312 = vld [vmem:[%s8307 + $0x10] sm:$0xf]
        %v8313 = vld [vmem:[%s8307 + $0x14] sm:$0xf]
        %v8314 = vld [vmem:[%s8307 + $0x18] sm:$0xf]
        %v8315 = vld [vmem:[%s8307 + $0x1c] sm:$0xf]
        %v8316 = vld [vmem:[%s8307 + $0x20] sm:$0xf]
        %v8317 = vld [vmem:[%s8307 + $0x24] sm:$0xf]
        %v8318 = vld [vmem:[%s8307 + $0x28] sm:$0xf]
        %v8319 = vld [vmem:[%s8307 + $0x2c] sm:$0xf]
        %v8320 = vld [vmem:[%s8307 + $0x30] sm:$0xf]
        %v8321 = vld [vmem:[%s8307 + $0x34] sm:$0xf]
        %v8322 = vld [vmem:[%s8307 + $0x38] sm:$0xf]
        %v8323 = vld [vmem:[%s8307 + $0x3c] sm:$0xf]
        %v8340 = vunpack.c.l.b16 %v8308
        %v8341 = vunpack.c.l.b16 %v8309
        %v8342 = vunpack.c.l.b16 %v8310
        %v8343 = vunpack.c.l.b16 %v8311
        %v8344 = vunpack.c.l.b16 %v8312
        %v8345 = vunpack.c.l.b16 %v8313
        %v8346 = vunpack.c.l.b16 %v8314
        %v8347 = vunpack.c.l.b16 %v8315
        %v8348 = vunpack.c.l.b16 %v8316
        %v8349 = vunpack.c.l.b16 %v8317
        %v8350 = vunpack.c.l.b16 %v8318
        %v8351 = vunpack.c.l.b16 %v8319
        %v8352 = vunpack.c.l.b16 %v8320
        %v8353 = vunpack.c.l.b16 %v8321
        %v8354 = vunpack.c.l.b16 %v8322
        %v8355 = vunpack.c.l.b16 %v8323
        %v8356 = vpack.c.b16 %v8341, %v8340
        %v8357 = vpack.c.b16 %v8343, %v8342
        %v8358 = vpack.c.b16 %v8345, %v8344
        %v8359 = vpack.c.b16 %v8347, %v8346
        %v8360 = vpack.c.b16 %v8349, %v8348
        %v8361 = vpack.c.b16 %v8351, %v8350
        %v8362 = vpack.c.b16 %v8353, %v8352
        %v8363 = vpack.c.b16 %v8355, %v8354
        %8372 = vmatprep.subr.bf16.mxu0 0
        %8373 = vmatpush1.bf16.msra.mxu0 %v8356
        %8374 = vmatprep.subr.bf16.mxu0 0
        %8375 = vmatpush1.bf16.msra.mxu0 %v8357
        %8376 = vmatprep.subr.bf16.mxu0 0
        %8377 = vmatpush1.bf16.msra.mxu0 %v8358
        %8378 = vmatprep.subr.bf16.mxu0 0
        %8379 = vmatpush1.bf16.msra.mxu0 %v8359
        %8380 = vmatprep.subr.bf16.mxu0 0
        %8381 = vmatpush1.bf16.msra.mxu0 %v8360
        %8382 = vmatprep.subr.bf16.mxu0 0
        %8383 = vmatpush1.bf16.msra.mxu0 %v8361
        %8384 = vmatprep.subr.bf16.mxu0 0
        %8385 = vmatpush1.bf16.msra.mxu0 %v8362
        %8386 = vmatprep.subr.bf16.mxu0 0
        %8387 = vmatpush1.bf16.msra.mxu0 %v8363
        %8388 = vmatprep.subr.bf16.mxu0 0
        %8389 = vmatpush1.bf16.msra.mxu0 0
        %8390 = vmatprep.subr.bf16.mxu0 0
        %8391 = vmatpush1.bf16.msra.mxu0 0
        %8392 = vmatprep.subr.bf16.mxu0 0
        %8393 = vmatpush1.bf16.msra.mxu0 0
        %8394 = vmatprep.subr.bf16.mxu0 0
        %8395 = vmatpush1.bf16.msra.mxu0 0
        %8396 = vmatprep.subr.bf16.mxu0 0
        %8397 = vmatpush1.bf16.msra.mxu0 0
        %8398 = vmatprep.subr.bf16.mxu0 0
        %8399 = vmatpush1.bf16.msra.mxu0 0
        %8400 = vmatprep.subr.bf16.mxu0 0
        %8401 = vmatpush1.bf16.msra.mxu0 0
        %8402 = vmatprep.subr.bf16.mxu0 0
        %8403 = vmatpush1.bf16.msra.mxu0 0
        %8404 = vmatprep.mubr.bf16.mxu0 0
        %8405 = vmatmul.mubr.bf16.gmra.mrb[0].mxu0 %v8306
        %v8406 = vpop.f32.mrb[0].mxu0
        %v8407 = vadd.f32 0.0, %v8406
        %v8408 = vpop.f32.mrb[0].mxu0
        %v8409 = vpop.f32.mrb[0].mxu0
        %v8410 = vpop.f32.mrb[0].mxu0
        %8411 = vdwg.mxu0
        %v8412 = vadd.f32 %v8304, %v8407
        %v8413 = vmax.f32 %v8412, 0.0
        %v8414 = vpack.c.bf16 %v8413, %v8413
        %v8415 = vld [vmem:[%s11] sm:$0xf]
        %v8416 = vld [vmem:[%s11 + $0x4] sm:$0xf]
        %v8417 = vld [vmem:[%s11 + $0x8] sm:$0xf]
        %v8418 = vld [vmem:[%s11 + $0xc] sm:$0xf]
        %v8419 = vld [vmem:[%s11 + $0x10] sm:$0xf]
        %v8420 = vld [vmem:[%s11 + $0x14] sm:$0xf]
        %v8421 = vld [vmem:[%s11 + $0x18] sm:$0xf]
        %v8422 = vld [vmem:[%s11 + $0x1c] sm:$0xf]
        %v8423 = vld [vmem:[%s11 + $0x20] sm:$0xf]
        %v8424 = vld [vmem:[%s11 + $0x24] sm:$0xf]
        %v8425 = vld [vmem:[%s11 + $0x28] sm:$0xf]
        %v8426 = vld [vmem:[%s11 + $0x2c] sm:$0xf]
        %v8427 = vld [vmem:[%s11 + $0x30] sm:$0xf]
        %v8428 = vld [vmem:[%s11 + $0x34] sm:$0xf]
        %v8429 = vld [vmem:[%s11 + $0x38] sm:$0xf]
        %v8430 = vld [vmem:[%s12] sm:$0x1]
        %v8432 = vlaneseq
        %v8433 = vshrl.u32 %v8432, 7
        %v8434 = vsub.s32 0, %v8433
        %v8435 = vrot.slane %v8430, %v8434
        %v8452 = vunpack.c.l.b16 %v8415
        %v8453 = vunpack.c.l.b16 %v8416
        %v8454 = vunpack.c.l.b16 %v8417
        %v8455 = vunpack.c.l.b16 %v8418
        %v8456 = vunpack.c.l.b16 %v8419
        %v8457 = vunpack.c.l.b16 %v8420
        %v8458 = vunpack.c.l.b16 %v8421
        %v8459 = vunpack.c.l.b16 %v8422
        %v8460 = vunpack.c.l.b16 %v8423
        %v8461 = vunpack.c.l.b16 %v8424
        %v8462 = vunpack.c.l.b16 %v8425
        %v8463 = vunpack.c.l.b16 %v8426
        %v8464 = vunpack.c.l.b16 %v8427
        %v8465 = vunpack.c.l.b16 %v8428
        %v8466 = vunpack.c.l.b16 %v8429
        %v8467 = vpack.c.b16 %v8453, %v8452
        %v8468 = vpack.c.b16 %v8455, %v8454
        %v8469 = vpack.c.b16 %v8457, %v8456
        %v8470 = vpack.c.b16 %v8459, %v8458
        %v8471 = vpack.c.b16 %v8461, %v8460
        %v8472 = vpack.c.b16 %v8463, %v8462
        %v8473 = vpack.c.b16 %v8465, %v8464
        %v8474 = vpack.c.b16 %v8466, %v8466
        %vm8482 = vcmask 982016
        %v8484 = vsel %vm8482, %v8414, 0
        %vm8486 = vcmask 1043456
        %v8488 = vsel %vm8486, %v8474, 0
        %8490 = vmatprep.subr.bf16.mxu0 0
        %8491 = vmatpush1.bf16.msra.mxu0 %v8467
        %8492 = vmatprep.subr.bf16.mxu0 0
        %8493 = vmatpush1.bf16.msra.mxu0 %v8468
        %8494 = vmatprep.subr.bf16.mxu0 0
        %8495 = vmatpush1.bf16.msra.mxu0 %v8469
        %8496 = vmatprep.subr.bf16.mxu0 0
        %8497 = vmatpush1.bf16.msra.mxu0 %v8470
        %8498 = vmatprep.subr.bf16.mxu0 0
        %8499 = vmatpush1.bf16.msra.mxu0 %v8471
        %8500 = vmatprep.subr.bf16.mxu0 0
        %8501 = vmatpush1.bf16.msra.mxu0 %v8472
        %8502 = vmatprep.subr.bf16.mxu0 0
        %8503 = vmatpush1.bf16.msra.mxu0 %v8473
        %8504 = vmatprep.subr.bf16.mxu0 0
        %8505 = vmatpush1.bf16.msra.mxu0 %v8488
        %8506 = vmatprep.subr.bf16.mxu0 0
        %8507 = vmatpush1.bf16.msra.mxu0 0
        %8508 = vmatprep.subr.bf16.mxu0 0
        %8509 = vmatpush1.bf16.msra.mxu0 0
        %8510 = vmatprep.subr.bf16.mxu0 0
        %8511 = vmatpush1.bf16.msra.mxu0 0
        %8512 = vmatprep.subr.bf16.mxu0 0
        %8513 = vmatpush1.bf16.msra.mxu0 0
        %8514 = vmatprep.subr.bf16.mxu0 0
        %8515 = vmatpush1.bf16.msra.mxu0 0
        %8516 = vmatprep.subr.bf16.mxu0 0
        %8517 = vmatpush1.bf16.msra.mxu0 0
        %8518 = vmatprep.subr.bf16.mxu0 0
        %8519 = vmatpush1.bf16.msra.mxu0 0
        %8520 = vmatprep.subr.bf16.mxu0 0
        %8521 = vmatpush1.bf16.msra.mxu0 0
        %8522 = vmatprep.mubr.bf16.mxu0 0
        %8523 = vmatmul.mubr.bf16.gmra.mrb[0].mxu0 %v8484
        %v8524 = vpop.f32.mrb[0].mxu0
        %v8525 = vadd.f32 %v8435, %v8524
        %v8526 = vpop.f32.mrb[0].mxu0
        %v8527 = vpop.f32.mrb[0].mxu0
        %v8528 = vpop.f32.mrb[0].mxu0
        %8529 = vdwg.mxu0
        %v8530 = vmax.f32 %v8525, 0.0
        %v8531 = vpack.c.bf16 %v8530, %v8530
        %v8532 = vld [vmem:[%s13] sm:$0xf]
        %v8533 = vld [vmem:[%s13 + $0x4] sm:$0xf]
        %v8534 = vld [vmem:[%s13 + $0x8] sm:$0xf]
        %v8535 = vld [vmem:[%s13 + $0xc] sm:$0xf]
        %v8536 = vld [vmem:[%s13 + $0x10] sm:$0xf]
        %v8537 = vld [vmem:[%s13 + $0x14] sm:$0xf]
        %v8538 = vld [vmem:[%s13 + $0x18] sm:$0xf]
        %v8539 = vld [vmem:[%s13 + $0x1c] sm:$0xf]
        %v8540 = vld [vmem:[%s13 + $0x20] sm:$0xf]
        %v8541 = vld [vmem:[%s13 + $0x24] sm:$0xf]
        %v8542 = vld [vmem:[%s13 + $0x28] sm:$0x3]
        %v8543 = vld [vmem:[%s14] sm:$0x1]
        %v8545 = vlaneseq
        %v8546 = vshrl.u32 %v8545, 7
        %v8547 = vsub.s32 0, %v8546
        %v8548 = vrot.slane %v8543, %v8547
        %v8561 = vunpack.c.l.b16 %v8532
        %v8562 = vunpack.c.l.b16 %v8533
        %v8563 = vunpack.c.l.b16 %v8534
        %v8564 = vunpack.c.l.b16 %v8535
        %v8565 = vunpack.c.l.b16 %v8536
        %v8566 = vunpack.c.l.b16 %v8537
        %v8567 = vunpack.c.l.b16 %v8538
        %v8568 = vunpack.c.l.b16 %v8539
        %v8569 = vunpack.c.l.b16 %v8540
        %v8570 = vunpack.c.l.b16 %v8541
        %v8571 = vunpack.c.l.b16 %v8542
        %v8572 = vpack.c.b16 %v8562, %v8561
        %v8573 = vpack.c.b16 %v8564, %v8563
        %v8574 = vpack.c.b16 %v8566, %v8565
        %v8575 = vpack.c.b16 %v8568, %v8567
        %v8576 = vpack.c.b16 %v8570, %v8569
        %v8577 = vpack.c.b16 %v8571, %v8571
        %vm8583 = vcmask 687104
        %v8585 = vsel %vm8583, %v8531, 0
        %vm8587 = vcmask 1041408
        %v8589 = vsel %vm8587, %v8577, 0
        %8591 = vmatprep.subr.bf16.mxu0 0
        %8592 = vmatpush1.bf16.msra.mxu0 %v8572
        %8593 = vmatprep.subr.bf16.mxu0 0
        %8594 = vmatpush1.bf16.msra.mxu0 %v8573
        %8595 = vmatprep.subr.bf16.mxu0 0
        %8596 = vmatpush1.bf16.msra.mxu0 %v8574
        %8597 = vmatprep.subr.bf16.mxu0 0
        %8598 = vmatpush1.bf16.msra.mxu0 %v8575
        %8599 = vmatprep.subr.bf16.mxu0 0
        %8600 = vmatpush1.bf16.msra.mxu0 %v8576
        %8601 = vmatprep.subr.bf16.mxu0 0
        %8602 = vmatpush1.bf16.msra.mxu0 %v8589
        %8603 = vmatprep.subr.bf16.mxu0 0
        %8604 = vmatpush1.bf16.msra.mxu0 0
        %8605 = vmatprep.subr.bf16.mxu0 0
        %8606 = vmatpush1.bf16.msra.mxu0 0
        %8607 = vmatprep.subr.bf16.mxu0 0
        %8608 = vmatpush1.bf16.msra.mxu0 0
        %8609 = vmatprep.subr.bf16.mxu0 0
        %8610 = vmatpush1.bf16.msra.mxu0 0
        %8611 = vmatprep.subr.bf16.mxu0 0
        %8612 = vmatpush1.bf16.msra.mxu0 0
        %8613 = vmatprep.subr.bf16.mxu0 0
        %8614 = vmatpush1.bf16.msra.mxu0 0
        %8615 = vmatprep.subr.bf16.mxu0 0
        %8616 = vmatpush1.bf16.msra.mxu0 0
        %8617 = vmatprep.subr.bf16.mxu0 0
        %8618 = vmatpush1.bf16.msra.mxu0 0
        %8619 = vmatprep.subr.bf16.mxu0 0
        %8620 = vmatpush1.bf16.msra.mxu0 0
        %8621 = vmatprep.subr.bf16.mxu0 0
        %8622 = vmatpush1.bf16.msra.mxu0 0
        %8623 = vmatprep.mubr.bf16.mxu0 0
        %8624 = vmatmul.mubr.bf16.gmra.mrb[0].mxu0 %v8585
        %v8625 = vpop.f32.mrb[0].mxu0
        %v8626 = vadd.f32 %v8548, %v8625
        %v8627 = vpop.f32.mrb[0].mxu0
        %v8628 = vpop.f32.mrb[0].mxu0
        %v8629 = vpop.f32.mrb[0].mxu0
        %8630 = vdwg.mxu0
        %vm8631 = vcmask 80896
        %8632 = vst.msk [vmem:[%s490] sm:$0xff] %vm8631, %v8626
        %s8633 = sand.u32 %s357, 1
        %s8634 = scalar_lea.sflag [#allocation4], %s8633
        %s8635 = sand.u32 %s357, 1
        %s8636 = smul.addr %s8635, 8
        %s8637 = scalar_lea.vmem [#allocation3], %s8636
        // Predicated region
        $region81: #{net_forward.1} parent=79 // pred_check
          %p8638 = pneg %p367
        $region82: #{net_forward.1} parent=79 // pred_check_branch
          %8640 = sbr.rel (%p8638) target = $region84
        $region83: #{net_forward.1} parent=79 // pred_region
          %s8642 = ssub.s32 128, 128
          %8643 = vsyncadd %s8634, %s8642
          %s8644 = smul.addr %s29, 128
          %s8645 = scalar_lea.hbm %s15, %s8644
          %s8647 = sshll.u32 %s8637, 4
          %s8648 = int_to_ptr.vmem [resolvable:$true] %s8647
          %8650 = dma.vmem_to_hbm [thread:$0]  %s8648, 128, %s8645, %s8634
        $region84: #{net_forward.1} parent=79 // pred_fallthru
          _
      $region80: #{net_forward.1} parent=5 // pred_fallthru
        _
      %p8651 = scmp.le.s32.totalorder 2, %s24
      // Predicated region
      $region85: #{net_forward.1} parent=5 // pred_check
        %p8652 = pneg %p8651
      $region86: #{net_forward.1} parent=5 // pred_check_branch
        %8654 = sbr.rel (%p8652) target = $region88
      $region87: #{net_forward.1} parent=5 // pred_region
        %s8655 = ssub.s32 %s24, 2
        // Predicated region
        $region89: #{net_forward.1} parent=87 // pred_check
          %p8656 = pneg %p373
        $region90: #{net_forward.1} parent=87 // pred_check_branch
          %8658 = sbr.rel (%p8656) target = $region92
        $region91: #{net_forward.1} parent=87 // pred_region
          %s8659 = sand.u32 %s358, 1
          %s8660 = scalar_lea.sflag [#allocation4], %s8659
          %s8661 = sand.u32 %s358, 1
          %s8662 = smul.addr %s8661, 8
          %s8663 = scalar_lea.vmem [#allocation3], %s8662
          %8664 = dma.done %s8660, 128
        $region92: #{net_forward.1} parent=87 // pred_fallthru
          _
      $region88: #{net_forward.1} parent=5 // pred_fallthru
        _
    $region6: #{net_forward.1} parent=1 // loop_footer
      %s28 = sadd.s32 1, %s24
    $region7: #{net_forward.1} parent=1 // loop_footer_branch
      %23 = sbr.rel target = $region3
    $region8: #{net_forward.1} parent=1 // loop_exit
      _
    %8665 = vsyncpa [#allocation4], 1
    %s8666 = scalar_lea.sflag [#allocation4], 1
    %8667 = vsyncpa %s8666, 1

</llo_original>
